<compile_context>
chip_gen: v6e
topology: v6e:2x2x1
jax: 0.10.0
libtpu: 0.0.40
codegen_flags: <defaults>
</compile_context>

<pallas_src>
import math

import jax
import jax.numpy as jnp
from jax.experimental import pallas as pl
from jax.experimental.pallas import tpu as pltpu


_MAX_UNROLL_STEPS = 16          # static-unroll cap for the in-kernel time loop


def st_block5_kernel(x_ref, lapT_ref, wxT_ref, whT_ref, b_ref, out_ref,
                     px_ref, h_ref, c_ref):
    """One batch element x Tt consecutive time steps (channel-major).

    x_ref   : (1, Tt*c_in, N)      input slab, rows ordered (t, c), lanes = nodes
    lapT_ref: (K, N, N)            lapT[k] = T_k(supports)^T
    wxT_ref : (K, 4*c_out, c_in)   x-part of the 1x1 conv weight (gate-permuted)
    whT_ref : (K, 4*c_out, c_out)  h-part of the 1x1 conv weight (gate-permuted)
    b_ref   : (4*c_out, 1)         conv bias (gate-permuted)
    out_ref : (1, Tt, c_out, N)    output slab (channel-major, lane-dense)
    px_ref  : (Tt, 4*c_out, N) f32 hoisted input projection (+bias)
    h_ref, c_ref : (c_out, N) f32  recurrent state (per-core scratch)
    """
    tq = pl.program_id(1)

    @pl.when(tq == 0)
    def _():
        h_ref[...] = jnp.zeros_like(h_ref)
        c_ref[...] = jnp.zeros_like(c_ref)

    Tt = out_ref.shape[1]
    co = out_ref.shape[2]
    N = out_ref.shape[3]
    K = lapT_ref.shape[0]
    ci = wxT_ref.shape[2]
    O = 4 * co
    mm = lapT_ref.dtype                       # MXU operand dtype
    f32 = jnp.float32

    # Hoisted once (JAX does not CSE broadcast_in_dim inside the unroll).
    bias = jnp.broadcast_to(b_ref[...].astype(f32), (O, N))

    # ------------------------------------------------------------------
    # Phase 1 — hoisted input projection (off the serial critical path):
    #   px[s] = bias + sum_k WxT_k @ (x_chan[s] @ lapT_k)
    # The Chebyshev matmuls for x run over the *whole* Tt block at once.
    # ------------------------------------------------------------------
    x_flat = x_ref[0].astype(mm)                                 # (Tt*ci, N)
    vx = [jnp.dot(x_flat, lapT_ref[k],
                  preferred_element_type=f32).astype(mm)
          for k in range(K)]                                     # K big matmuls
    for s in range(Tt):
        acc = bias
        for k in range(K):
            acc = acc + jnp.dot(wxT_ref[k], vx[k][s * ci:(s + 1) * ci, :],
                                preferred_element_type=f32)
        px_ref[s] = acc                                          # (O, N) f32

    # ------------------------------------------------------------------
    # Phase 2 — recurrence: only the h-dependent half of the projection.
    # Gate rows are pre-permuted to [i, f, o, j].
    # ------------------------------------------------------------------
    h = h_ref[...]                                               # (co, N) f32
    c = c_ref[...]                                               # (co, N) f32
    for s in range(Tt):
        hm = h.astype(mm)
        fea = px_ref[s]                                          # (O, N) f32
        for k in range(K):
            t = jnp.dot(hm, lapT_ref[k],
                        preferred_element_type=f32).astype(mm)   # (co, N)
            fea = fea + jnp.dot(whT_ref[k], t,
                                preferred_element_type=f32)      # (O, N)
        sig = jax.nn.sigmoid(fea[0:3 * co, :])   # i, f, o in one sigmoid pass
        gi = sig[0:co, :]
        gf = sig[co:2 * co, :]
        go = sig[2 * co:3 * co, :]
        gj = jnp.tanh(fea[3 * co:4 * co, :])
        c = c * gf + gi * gj
        h = jnp.tanh(c) * go
        out_ref[0, s] = h.astype(out_ref.dtype)                  # lane-dense store

    h_ref[...] = h
    c_ref[...] = c


def _cheby_stack(supports, K):
    """Stack of the K Chebyshev polynomials used by gcn_conv_hop: [I, L, ...].

    The original PyTorch module always emits [I, L] first, so it only makes
    sense for K >= 2 (with K == 1 the PyTorch Conv1d would reject the channel
    count)."""
    assert K >= 2, "gcn_conv_hop requires K >= 2 (it always emits [I, L])"
    N = supports.shape[0]
    L0 = jnp.eye(N, dtype=supports.dtype)
    L1 = supports
    Ls = [L0, L1]
    for _ in range(2, K):
        L2 = 2.0 * supports @ L1 - L0
        L0, L1 = L1, L2
        Ls.append(L2)
    return jnp.stack(Ls, 0)          # (K, N, N)


def _tile_bytes(rows, cols, itemsize):
    """VMEM footprint of a (rows, cols) tile after (8, 128) padding."""
    r = -(-rows // 8) * 8
    c = -(-cols // 128) * 128
    return r * c * itemsize


def _device_vmem_capacity():
    try:
        info = pltpu.get_tpu_info()
        cap = getattr(info, "vmem_capacity_bytes", 0)
        if cap:
            return int(cap)
    except Exception:
        pass
    return 64 * 1024 * 1024          # conservative fallback (v7x per-core VMEM)


def _vmem_need_bytes(Tt, N, c_in, c_out, K, mm_bytes, x_bytes, out_bytes):
    O = 4 * c_out
    b = 0
    b += 2 * _tile_bytes(Tt * c_in, N, x_bytes)          # x block (double-buffered)
    b += 2 * Tt * _tile_bytes(c_out, N, out_bytes)       # out block (double-buffered)
    b += 2 * K * _tile_bytes(N, N, mm_bytes)             # lapT
    b += 2 * K * _tile_bytes(O, c_in, mm_bytes)          # WxT
    b += 2 * K * _tile_bytes(O, c_out, mm_bytes)         # WhT
    b += 2 * _tile_bytes(O, 1, 4)                        # bias
    b += Tt * _tile_bytes(O, N, 4)                       # px scratch
    b += 2 * _tile_bytes(c_out, N, 4)                    # h, c state
    return b


def _choose_time_block(T, N, c_in, c_out, K, mm_bytes, x_bytes, out_bytes,
                       vmem_cap):
    """Largest time block that fits the VMEM budget (prefer divisors of T)."""
    budget = max(4 * 1024 * 1024, int(0.45 * vmem_cap))
    max_steps = 1
    for t in range(1, min(T, _MAX_UNROLL_STEPS) + 1):
        if _vmem_need_bytes(t, N, c_in, c_out, K, mm_bytes, x_bytes,
                            out_bytes) <= budget:
            max_steps = t
    best_div = max(d for d in range(1, max_steps + 1) if T % d == 0)
    if best_div * 2 >= max_steps:
        return best_div              # exact divisor, no padded time steps
    return max_steps                 # pad the time axis instead of degenerating


def st_block_5(x, supports, w, b, c_out, K, *, time_block=None,
               matmul_dtype=jnp.bfloat16):
    """Pallas forward of ST_BLOCK_5.

    x        : (B, c_in, N, T)   (same layout as the PyTorch module)
    supports : (N, N)            graph support / Laplacian
    w        : (4*c_out, K*(c_in+c_out))  1x1 Conv1d weight
    b        : (4*c_out,) or (4*c_out, 1) 1x1 Conv1d bias
    returns  : (B, c_out, N, T)

    matmul_dtype: MXU operand dtype (bfloat16 default; accumulation and all
    gate / state math stay float32).  Pass jnp.float32 for f32-exact matmuls.
    """
    B, c_in, N, T = x.shape
    C = c_in + c_out
    O = 4 * c_out
    co = c_out
    mm = jnp.dtype(matmul_dtype)
    f32 = jnp.float32

    # ---- one-time host-side layout plumbing --------------------------------
    cheb = _cheby_stack(supports.astype(f32), K)             # (K, N, N)
    lapT = jnp.swapaxes(cheb, -1, -2).astype(mm)             # lapT[k] = T_k^T

    # Conv1d weight: flattened gcn channel index is c*K + k.
    w3 = jnp.reshape(w.astype(f32), (O, C, K))               # [o, c, k]
    # Gate permutation [i, j, f, o] -> [i, f, o, j].
    perm = jnp.concatenate([jnp.arange(0, co), jnp.arange(2 * co, 3 * co),
                            jnp.arange(3 * co, 4 * co), jnp.arange(co, 2 * co)])
    w3 = w3[perm]
    wxT = jnp.transpose(w3[:, :c_in, :], (2, 0, 1)).astype(mm)   # (K, O, c_in)
    whT = jnp.transpose(w3[:, c_in:, :], (2, 0, 1)).astype(mm)   # (K, O, c_out)
    bias_col = jnp.reshape(b.astype(f32), (O,))[perm].reshape(O, 1)

    # ---- time blocking / VMEM budget ----------------------------------------
    x_bytes = min(jnp.dtype(x.dtype).itemsize, mm.itemsize)
    out_bytes = jnp.dtype(x.dtype).itemsize
    vmem_cap = _device_vmem_capacity()
    if time_block is None:
        Tt = _choose_time_block(T, N, c_in, c_out, K, mm.itemsize, x_bytes,
                                out_bytes, vmem_cap)
    else:
        Tt = int(time_block)
    pad = (-T) % Tt
    Tp = T + pad

    need = _vmem_need_bytes(Tt, N, c_in, c_out, K, mm.itemsize, x_bytes,
                            out_bytes)
    vmem_limit = int(min(0.92 * vmem_cap,
                         max(32 * 1024 * 1024, 1.5 * need + (4 << 20))))

    # x: (B, c_in, N, T) -> channel-major, time-major slab (B, Tp*c_in, N).
    # NOTE(synk): this transpose (and the inverse on the output) is a full HBM
    # pass; callers able to produce/consume the (B, T, c, N) layouts directly
    # should do so and skip them.
    x_btcn = jnp.transpose(x, (0, 3, 1, 2))                  # (B, T, c_in, N)
    if pad:
        x_btcn = jnp.pad(x_btcn, ((0, 0), (0, pad), (0, 0), (0, 0)))
    x_slab = jnp.reshape(x_btcn, (B, Tp * c_in, N))
    if mm.itemsize < jnp.dtype(x_slab.dtype).itemsize:
        x_slab = x_slab.astype(mm)       # halve the input DMA in bf16 mode

    out = pl.pallas_call(
        st_block5_kernel,
        out_shape=jax.ShapeDtypeStruct((B, Tp, c_out, N), x.dtype),
        grid_spec=pltpu.PrefetchScalarGridSpec(
            num_scalar_prefetch=0,
            grid=(B, Tp // Tt),
            in_specs=[
                pl.BlockSpec((1, Tt * c_in, N), lambda bi, ti: (bi, ti, 0)),
                pl.BlockSpec((K, N, N), lambda bi, ti: (0, 0, 0)),
                pl.BlockSpec((K, O, c_in), lambda bi, ti: (0, 0, 0)),
                pl.BlockSpec((K, O, c_out), lambda bi, ti: (0, 0, 0)),
                pl.BlockSpec((O, 1), lambda bi, ti: (0, 0)),
            ],
            out_specs=pl.BlockSpec((1, Tt, c_out, N),
                                   lambda bi, ti: (bi, ti, 0, 0)),
            scratch_shapes=[
                pltpu.VMEM((Tt, O, N), jnp.float32),   # hoisted px (+bias)
                pltpu.VMEM((c_out, N), jnp.float32),   # h state
                pltpu.VMEM((c_out, N), jnp.float32),   # c state
            ],
        ),
        compiler_params=pltpu.CompilerParams(
            # batch elements are independent -> parallel (2 TCs on v7x);
            # time carries the recurrence -> must stay sequential.
            dimension_semantics=("parallel", "arbitrary"),
            vmem_limit_bytes=vmem_limit),
    )(x_slab, lapT, wxT, whT, bias_col)

    if pad:
        out = out[:, :T]
    return jnp.transpose(out, (0, 2, 3, 1))                  # (B, c_out, N, T)


def st_block_5_ref(x, supports, w, b, c_out, K):
    """Pure-JAX reference mirroring the PyTorch forward (float32)."""
    B, c_in, N, T = x.shape
    lap_t = jnp.swapaxes(_cheby_stack(supports, K), -1, -2)
    h = jnp.zeros((B, c_out, N), x.dtype)
    c = jnp.zeros((B, c_out, N), x.dtype)
    bias = jnp.reshape(b, (1, 4 * c_out, 1))
    outs = []
    for k in range(T):
        inp = x[:, :, :, k]
        tem1 = jnp.concatenate([inp, h], axis=1)
        xe = jnp.einsum('bcn,knq->bckq', tem1, lap_t)
        x_flat = xe.reshape(B, -1, N)
        fea = jnp.einsum('of,bfn->bon', w, x_flat) + bias
        gi, gj, gf, go = jnp.split(fea, 4, axis=1)
        c = c * jax.nn.sigmoid(gf) + jax.nn.sigmoid(gi) * jnp.tanh(gj)
        h = jnp.tanh(c) * jax.nn.sigmoid(go)
        outs.append(h)
    return jnp.stack(outs, -1)


if __name__ == "__main__":
    # Small shapes consistent with the module.
    B, c_in, c_out, N, T, K = 2, 4, 4, 16, 8, 3
    C_tot = c_in + c_out                 # gcn_conv input channels
    F_in = K * C_tot                     # Conv1d in-channels
    F_out = 4 * c_out                    # Conv1d out-channels (i, j, f, o)

    key = jax.random.PRNGKey(0)
    kx, ka, kw, kb = jax.random.split(key, 4)

    x = jax.random.normal(kx, (B, c_in, N, T), dtype=jnp.float32)
    adj = 0.1 * jax.random.normal(ka, (N, N), dtype=jnp.float32)
    adj = 0.5 * (adj + adj.T)            # symmetric support / Laplacian-like

    bound = 1.0 / math.sqrt(F_in)        # Conv1d default init range
    w = jax.random.uniform(kw, (F_out, F_in), jnp.float32, -bound, bound)
    b = jax.random.uniform(kb, (F_out, 1), jnp.float32, -bound, bound)

    ref = st_block_5_ref(x, adj, w, b, c_out, K)

    # f32 MXU operands: tight agreement with the pure-JAX / PyTorch reference.
    out_f32 = jax.block_until_ready(
        st_block_5(x, adj, w, b, c_out, K, matmul_dtype=jnp.float32))
    assert out_f32.shape == (B, c_out, N, T)
    err_f32 = float(jnp.max(jnp.abs(out_f32 - ref)))
    assert jnp.allclose(out_f32, ref, atol=1e-3, rtol=1e-3), err_f32

    # Default path: bf16 MXU operands (f32 accumulation / gate / state math).
    out_bf16 = jax.block_until_ready(st_block_5(x, adj, w, b, c_out, K))
    err_bf16 = float(jnp.max(jnp.abs(out_bf16 - ref)))
    assert out_bf16.shape == (B, c_out, N, T)
    assert jnp.allclose(out_bf16, ref, atol=5e-2, rtol=5e-2), err_bf16

    print("KERNEL_OK")
</pallas_src>

<mosaic_0001>
module attributes {stable_mosaic.version = 11 : i64} {
  func.func @st_block5_kernel(%arg0: i32, %arg1: i32, %arg2: memref<1x32x16xf32, #tpu.memory_space<vmem>>, %arg3: memref<3x16x16xf32, #tpu.memory_space<vmem>>, %arg4: memref<3x16x4xf32, #tpu.memory_space<vmem>>, %arg5: memref<3x16x4xf32, #tpu.memory_space<vmem>>, %arg6: memref<16x1xf32, #tpu.memory_space<vmem>>, %arg7: memref<1x8x4x16xf32, #tpu.memory_space<vmem>>, %arg8: memref<8x16x16xf32, #tpu.memory_space<vmem>>, %arg9: memref<4x16xf32, #tpu.memory_space<vmem>>, %arg10: memref<4x16xf32, #tpu.memory_space<vmem>>) attributes {dimension_semantics = [#tpu.dimension_semantics<parallel>, #tpu.dimension_semantics<arbitrary>], iteration_bounds = array<i64: 2, 1>, scalar_prefetch = 0 : i64, scratch_operands = 3 : i64, tpu.core_type = #tpu.core_type<tc>, window_params = [{transform_indices = @transform_0, window_bounds = array<i64: 1, 32, 16>}, {pipeline_mode = #tpu.pipeline_mode<synchronous>, transform_indices = @transform_1, window_bounds = array<i64: 3, 16, 16>}, {pipeline_mode = #tpu.pipeline_mode<synchronous>, transform_indices = @transform_2, window_bounds = array<i64: 3, 16, 4>}, {pipeline_mode = #tpu.pipeline_mode<synchronous>, transform_indices = @transform_3, window_bounds = array<i64: 3, 16, 4>}, {pipeline_mode = #tpu.pipeline_mode<synchronous>, transform_indices = @transform_4, window_bounds = array<i64: 16, 1>}, {transform_indices = @transform_5, window_bounds = array<i64: 1, 8, 4, 16>}]} {
    %c0_i32 = arith.constant 0 : i32
    %0 = arith.cmpi eq, %arg1, %c0_i32 : i32
    %1 = arith.extui %0 : i1 to i32
    %c0_i32_0 = arith.constant 0 : i32
    %2 = arith.cmpi ne, %1, %c0_i32_0 : i32
    scf.if %2 {
      %cst_393 = arith.constant 0.000000e+00 : f32
      %501 = vector.broadcast %cst_393 : f32 to vector<4x16xf32>
      %c0_394 = arith.constant 0 : index
      %c0_395 = arith.constant 0 : index
      %502 = vector.load %arg9[%c0_394, %c0_395] : memref<4x16xf32, #tpu.memory_space<vmem>>, vector<4x16xf32>
      tpu.vector_store %arg9[%c0_394, %c0_395], %501 {strides = array<i32>} : memref<4x16xf32, #tpu.memory_space<vmem>>, vector<4x16xf32>,
      %cst_396 = arith.constant 0.000000e+00 : f32
      %503 = vector.broadcast %cst_396 : f32 to vector<4x16xf32>
      %c0_397 = arith.constant 0 : index
      %c0_398 = arith.constant 0 : index
      %504 = vector.load %arg10[%c0_397, %c0_398] : memref<4x16xf32, #tpu.memory_space<vmem>>, vector<4x16xf32>
      tpu.vector_store %arg10[%c0_397, %c0_398], %503 {strides = array<i32>} : memref<4x16xf32, #tpu.memory_space<vmem>>, vector<4x16xf32>,
    } else {
    }
    %c0 = arith.constant 0 : index
    %c0_1 = arith.constant 0 : index
    %3 = vector.load %arg6[%c0, %c0_1] : memref<16x1xf32, #tpu.memory_space<vmem>>, vector<16x1xf32>
    %4 = vector.shape_cast %3 : vector<16x1xf32> to vector<16x1xf32>
    %5 = vector.broadcast %4 : vector<16x1xf32> to vector<16x16xf32>
    %c0_2 = arith.constant 0 : index
    %c0_3 = arith.constant 0 : index
    %c0_4 = arith.constant 0 : index
    %6 = vector.load %arg2[%c0_2, %c0_3, %c0_4] : memref<1x32x16xf32, #tpu.memory_space<vmem>>, vector<1x32x16xf32>
    %7 = vector.shape_cast %6 : vector<1x32x16xf32> to vector<32x16xf32>
    %c0_5 = arith.constant 0 : index
    %c0_6 = arith.constant 0 : index
    %c0_7 = arith.constant 0 : index
    %8 = vector.load %arg3[%c0_5, %c0_6, %c0_7] : memref<3x16x16xf32, #tpu.memory_space<vmem>>, vector<1x16x16xf32>
    %9 = vector.shape_cast %8 : vector<1x16x16xf32> to vector<16x16xf32>
    %cst = arith.constant dense<0.000000e+00> : vector<32x16xf32>
    %10 = tpu.matmul %7, %9, %cst {dimension_numbers = #tpu.dot_dimension_numbers<[1], [0], [0], [1], [0, 0, 1, 1], [], []>} : vector<32x16xf32>, vector<16x16xf32>, vector<32x16xf32> -> vector<32x16xf32>
    %c1 = arith.constant 1 : index
    %c0_8 = arith.constant 0 : index
    %c0_9 = arith.constant 0 : index
    %11 = vector.load %arg3[%c1, %c0_8, %c0_9] : memref<3x16x16xf32, #tpu.memory_space<vmem>>, vector<1x16x16xf32>
    %12 = vector.shape_cast %11 : vector<1x16x16xf32> to vector<16x16xf32>
    %cst_10 = arith.constant dense<0.000000e+00> : vector<32x16xf32>
    %13 = tpu.matmul %7, %12, %cst_10 {dimension_numbers = #tpu.dot_dimension_numbers<[1], [0], [0], [1], [0, 0, 1, 1], [], []>} : vector<32x16xf32>, vector<16x16xf32>, vector<32x16xf32> -> vector<32x16xf32>
    %c2 = arith.constant 2 : index
    %c0_11 = arith.constant 0 : index
    %c0_12 = arith.constant 0 : index
    %14 = vector.load %arg3[%c2, %c0_11, %c0_12] : memref<3x16x16xf32, #tpu.memory_space<vmem>>, vector<1x16x16xf32>
    %15 = vector.shape_cast %14 : vector<1x16x16xf32> to vector<16x16xf32>
    %cst_13 = arith.constant dense<0.000000e+00> : vector<32x16xf32>
    %16 = tpu.matmul %7, %15, %cst_13 {dimension_numbers = #tpu.dot_dimension_numbers<[1], [0], [0], [1], [0, 0, 1, 1], [], []>} : vector<32x16xf32>, vector<16x16xf32>, vector<32x16xf32> -> vector<32x16xf32>
    %c0_14 = arith.constant 0 : index
    %c0_15 = arith.constant 0 : index
    %c0_16 = arith.constant 0 : index
    %17 = vector.load %arg4[%c0_14, %c0_15, %c0_16] : memref<3x16x4xf32, #tpu.memory_space<vmem>>, vector<1x16x4xf32>
    %18 = vector.shape_cast %17 : vector<1x16x4xf32> to vector<16x4xf32>
    %19 = vector.extract_strided_slice %10 {offsets = [0, 0], sizes = [4, 16], strides = [1, 1]} : vector<32x16xf32> to vector<4x16xf32>
    %cst_17 = arith.constant dense<0.000000e+00> : vector<16x16xf32>
    %20 = tpu.matmul %18, %19, %cst_17 {dimension_numbers = #tpu.dot_dimension_numbers<[1], [0], [0], [1], [0, 0, 1, 1], [], []>} : vector<16x4xf32>, vector<4x16xf32>, vector<16x16xf32> -> vector<16x16xf32>
    %21 = arith.addf %5, %20 : vector<16x16xf32>
    %c1_18 = arith.constant 1 : index
    %c0_19 = arith.constant 0 : index
    %c0_20 = arith.constant 0 : index
    %22 = vector.load %arg4[%c1_18, %c0_19, %c0_20] : memref<3x16x4xf32, #tpu.memory_space<vmem>>, vector<1x16x4xf32>
    %23 = vector.shape_cast %22 : vector<1x16x4xf32> to vector<16x4xf32>
    %24 = vector.extract_strided_slice %13 {offsets = [0, 0], sizes = [4, 16], strides = [1, 1]} : vector<32x16xf32> to vector<4x16xf32>
    %cst_21 = arith.constant dense<0.000000e+00> : vector<16x16xf32>
    %25 = tpu.matmul %23, %24, %cst_21 {dimension_numbers = #tpu.dot_dimension_numbers<[1], [0], [0], [1], [0, 0, 1, 1], [], []>} : vector<16x4xf32>, vector<4x16xf32>, vector<16x16xf32> -> vector<16x16xf32>
    %26 = arith.addf %21, %25 : vector<16x16xf32>
    %c2_22 = arith.constant 2 : index
    %c0_23 = arith.constant 0 : index
    %c0_24 = arith.constant 0 : index
    %27 = vector.load %arg4[%c2_22, %c0_23, %c0_24] : memref<3x16x4xf32, #tpu.memory_space<vmem>>, vector<1x16x4xf32>
    %28 = vector.shape_cast %27 : vector<1x16x4xf32> to vector<16x4xf32>
    %29 = vector.extract_strided_slice %16 {offsets = [0, 0], sizes = [4, 16], strides = [1, 1]} : vector<32x16xf32> to vector<4x16xf32>
    %cst_25 = arith.constant dense<0.000000e+00> : vector<16x16xf32>
    %30 = tpu.matmul %28, %29, %cst_25 {dimension_numbers = #tpu.dot_dimension_numbers<[1], [0], [0], [1], [0, 0, 1, 1], [], []>} : vector<16x4xf32>, vector<4x16xf32>, vector<16x16xf32> -> vector<16x16xf32>
    %31 = arith.addf %26, %30 : vector<16x16xf32>
    %c0_26 = arith.constant 0 : index
    %c0_27 = arith.constant 0 : index
    %c0_28 = arith.constant 0 : index
    %32 = vector.load %arg8[%c0_26, %c0_27, %c0_28] : memref<8x16x16xf32, #tpu.memory_space<vmem>>, vector<1x16x16xf32>
    %33 = vector.shape_cast %32 : vector<1x16x16xf32> to vector<16x16xf32>
    %34 = vector.shape_cast %31 : vector<16x16xf32> to vector<1x16x16xf32>
    tpu.vector_store %arg8[%c0_26, %c0_27, %c0_28], %34 {strides = array<i32>} : memref<8x16x16xf32, #tpu.memory_space<vmem>>, vector<1x16x16xf32>,
    %c0_29 = arith.constant 0 : index
    %c0_30 = arith.constant 0 : index
    %c0_31 = arith.constant 0 : index
    %35 = vector.load %arg4[%c0_29, %c0_30, %c0_31] : memref<3x16x4xf32, #tpu.memory_space<vmem>>, vector<1x16x4xf32>
    %36 = vector.shape_cast %35 : vector<1x16x4xf32> to vector<16x4xf32>
    %37 = vector.extract_strided_slice %10 {offsets = [4, 0], sizes = [4, 16], strides = [1, 1]} : vector<32x16xf32> to vector<4x16xf32>
    %cst_32 = arith.constant dense<0.000000e+00> : vector<16x16xf32>
    %38 = tpu.matmul %36, %37, %cst_32 {dimension_numbers = #tpu.dot_dimension_numbers<[1], [0], [0], [1], [0, 0, 1, 1], [], []>} : vector<16x4xf32>, vector<4x16xf32>, vector<16x16xf32> -> vector<16x16xf32>
    %39 = arith.addf %5, %38 : vector<16x16xf32>
    %c1_33 = arith.constant 1 : index
    %c0_34 = arith.constant 0 : index
    %c0_35 = arith.constant 0 : index
    %40 = vector.load %arg4[%c1_33, %c0_34, %c0_35] : memref<3x16x4xf32, #tpu.memory_space<vmem>>, vector<1x16x4xf32>
    %41 = vector.shape_cast %40 : vector<1x16x4xf32> to vector<16x4xf32>
    %42 = vector.extract_strided_slice %13 {offsets = [4, 0], sizes = [4, 16], strides = [1, 1]} : vector<32x16xf32> to vector<4x16xf32>
    %cst_36 = arith.constant dense<0.000000e+00> : vector<16x16xf32>
    %43 = tpu.matmul %41, %42, %cst_36 {dimension_numbers = #tpu.dot_dimension_numbers<[1], [0], [0], [1], [0, 0, 1, 1], [], []>} : vector<16x4xf32>, vector<4x16xf32>, vector<16x16xf32> -> vector<16x16xf32>
    %44 = arith.addf %39, %43 : vector<16x16xf32>
    %c2_37 = arith.constant 2 : index
    %c0_38 = arith.constant 0 : index
    %c0_39 = arith.constant 0 : index
    %45 = vector.load %arg4[%c2_37, %c0_38, %c0_39] : memref<3x16x4xf32, #tpu.memory_space<vmem>>, vector<1x16x4xf32>
    %46 = vector.shape_cast %45 : vector<1x16x4xf32> to vector<16x4xf32>
    %47 = vector.extract_strided_slice %16 {offsets = [4, 0], sizes = [4, 16], strides = [1, 1]} : vector<32x16xf32> to vector<4x16xf32>
    %cst_40 = arith.constant dense<0.000000e+00> : vector<16x16xf32>
    %48 = tpu.matmul %46, %47, %cst_40 {dimension_numbers = #tpu.dot_dimension_numbers<[1], [0], [0], [1], [0, 0, 1, 1], [], []>} : vector<16x4xf32>, vector<4x16xf32>, vector<16x16xf32> -> vector<16x16xf32>
    %49 = arith.addf %44, %48 : vector<16x16xf32>
    %c1_41 = arith.constant 1 : index
    %c0_42 = arith.constant 0 : index
    %c0_43 = arith.constant 0 : index
    %50 = vector.load %arg8[%c1_41, %c0_42, %c0_43] : memref<8x16x16xf32, #tpu.memory_space<vmem>>, vector<1x16x16xf32>
    %51 = vector.shape_cast %50 : vector<1x16x16xf32> to vector<16x16xf32>
    %52 = vector.shape_cast %49 : vector<16x16xf32> to vector<1x16x16xf32>
    tpu.vector_store %arg8[%c1_41, %c0_42, %c0_43], %52 {strides = array<i32>} : memref<8x16x16xf32, #tpu.memory_space<vmem>>, vector<1x16x16xf32>,
    %c0_44 = arith.constant 0 : index
    %c0_45 = arith.constant 0 : index
    %c0_46 = arith.constant 0 : index
    %53 = vector.load %arg4[%c0_44, %c0_45, %c0_46] : memref<3x16x4xf32, #tpu.memory_space<vmem>>, vector<1x16x4xf32>
    %54 = vector.shape_cast %53 : vector<1x16x4xf32> to vector<16x4xf32>
    %55 = vector.extract_strided_slice %10 {offsets = [8, 0], sizes = [4, 16], strides = [1, 1]} : vector<32x16xf32> to vector<4x16xf32>
    %cst_47 = arith.constant dense<0.000000e+00> : vector<16x16xf32>
    %56 = tpu.matmul %54, %55, %cst_47 {dimension_numbers = #tpu.dot_dimension_numbers<[1], [0], [0], [1], [0, 0, 1, 1], [], []>} : vector<16x4xf32>, vector<4x16xf32>, vector<16x16xf32> -> vector<16x16xf32>
    %57 = arith.addf %5, %56 : vector<16x16xf32>
    %c1_48 = arith.constant 1 : index
    %c0_49 = arith.constant 0 : index
    %c0_50 = arith.constant 0 : index
    %58 = vector.load %arg4[%c1_48, %c0_49, %c0_50] : memref<3x16x4xf32, #tpu.memory_space<vmem>>, vector<1x16x4xf32>
    %59 = vector.shape_cast %58 : vector<1x16x4xf32> to vector<16x4xf32>
    %60 = vector.extract_strided_slice %13 {offsets = [8, 0], sizes = [4, 16], strides = [1, 1]} : vector<32x16xf32> to vector<4x16xf32>
    %cst_51 = arith.constant dense<0.000000e+00> : vector<16x16xf32>
    %61 = tpu.matmul %59, %60, %cst_51 {dimension_numbers = #tpu.dot_dimension_numbers<[1], [0], [0], [1], [0, 0, 1, 1], [], []>} : vector<16x4xf32>, vector<4x16xf32>, vector<16x16xf32> -> vector<16x16xf32>
    %62 = arith.addf %57, %61 : vector<16x16xf32>
    %c2_52 = arith.constant 2 : index
    %c0_53 = arith.constant 0 : index
    %c0_54 = arith.constant 0 : index
    %63 = vector.load %arg4[%c2_52, %c0_53, %c0_54] : memref<3x16x4xf32, #tpu.memory_space<vmem>>, vector<1x16x4xf32>
    %64 = vector.shape_cast %63 : vector<1x16x4xf32> to vector<16x4xf32>
    %65 = vector.extract_strided_slice %16 {offsets = [8, 0], sizes = [4, 16], strides = [1, 1]} : vector<32x16xf32> to vector<4x16xf32>
    %cst_55 = arith.constant dense<0.000000e+00> : vector<16x16xf32>
    %66 = tpu.matmul %64, %65, %cst_55 {dimension_numbers = #tpu.dot_dimension_numbers<[1], [0], [0], [1], [0, 0, 1, 1], [], []>} : vector<16x4xf32>, vector<4x16xf32>, vector<16x16xf32> -> vector<16x16xf32>
    %67 = arith.addf %62, %66 : vector<16x16xf32>
    %c2_56 = arith.constant 2 : index
    %c0_57 = arith.constant 0 : index
    %c0_58 = arith.constant 0 : index
    %68 = vector.load %arg8[%c2_56, %c0_57, %c0_58] : memref<8x16x16xf32, #tpu.memory_space<vmem>>, vector<1x16x16xf32>
    %69 = vector.shape_cast %68 : vector<1x16x16xf32> to vector<16x16xf32>
    %70 = vector.shape_cast %67 : vector<16x16xf32> to vector<1x16x16xf32>
    tpu.vector_store %arg8[%c2_56, %c0_57, %c0_58], %70 {strides = array<i32>} : memref<8x16x16xf32, #tpu.memory_space<vmem>>, vector<1x16x16xf32>,
    %c0_59 = arith.constant 0 : index
    %c0_60 = arith.constant 0 : index
    %c0_61 = arith.constant 0 : index
    %71 = vector.load %arg4[%c0_59, %c0_60, %c0_61] : memref<3x16x4xf32, #tpu.memory_space<vmem>>, vector<1x16x4xf32>
    %72 = vector.shape_cast %71 : vector<1x16x4xf32> to vector<16x4xf32>
    %73 = vector.extract_strided_slice %10 {offsets = [12, 0], sizes = [4, 16], strides = [1, 1]} : vector<32x16xf32> to vector<4x16xf32>
    %cst_62 = arith.constant dense<0.000000e+00> : vector<16x16xf32>
    %74 = tpu.matmul %72, %73, %cst_62 {dimension_numbers = #tpu.dot_dimension_numbers<[1], [0], [0], [1], [0, 0, 1, 1], [], []>} : vector<16x4xf32>, vector<4x16xf32>, vector<16x16xf32> -> vector<16x16xf32>
    %75 = arith.addf %5, %74 : vector<16x16xf32>
    %c1_63 = arith.constant 1 : index
    %c0_64 = arith.constant 0 : index
    %c0_65 = arith.constant 0 : index
    %76 = vector.load %arg4[%c1_63, %c0_64, %c0_65] : memref<3x16x4xf32, #tpu.memory_space<vmem>>, vector<1x16x4xf32>
    %77 = vector.shape_cast %76 : vector<1x16x4xf32> to vector<16x4xf32>
    %78 = vector.extract_strided_slice %13 {offsets = [12, 0], sizes = [4, 16], strides = [1, 1]} : vector<32x16xf32> to vector<4x16xf32>
    %cst_66 = arith.constant dense<0.000000e+00> : vector<16x16xf32>
    %79 = tpu.matmul %77, %78, %cst_66 {dimension_numbers = #tpu.dot_dimension_numbers<[1], [0], [0], [1], [0, 0, 1, 1], [], []>} : vector<16x4xf32>, vector<4x16xf32>, vector<16x16xf32> -> vector<16x16xf32>
    %80 = arith.addf %75, %79 : vector<16x16xf32>
    %c2_67 = arith.constant 2 : index
    %c0_68 = arith.constant 0 : index
    %c0_69 = arith.constant 0 : index
    %81 = vector.load %arg4[%c2_67, %c0_68, %c0_69] : memref<3x16x4xf32, #tpu.memory_space<vmem>>, vector<1x16x4xf32>
    %82 = vector.shape_cast %81 : vector<1x16x4xf32> to vector<16x4xf32>
    %83 = vector.extract_strided_slice %16 {offsets = [12, 0], sizes = [4, 16], strides = [1, 1]} : vector<32x16xf32> to vector<4x16xf32>
    %cst_70 = arith.constant dense<0.000000e+00> : vector<16x16xf32>
    %84 = tpu.matmul %82, %83, %cst_70 {dimension_numbers = #tpu.dot_dimension_numbers<[1], [0], [0], [1], [0, 0, 1, 1], [], []>} : vector<16x4xf32>, vector<4x16xf32>, vector<16x16xf32> -> vector<16x16xf32>
    %85 = arith.addf %80, %84 : vector<16x16xf32>
    %c3 = arith.constant 3 : index
    %c0_71 = arith.constant 0 : index
    %c0_72 = arith.constant 0 : index
    %86 = vector.load %arg8[%c3, %c0_71, %c0_72] : memref<8x16x16xf32, #tpu.memory_space<vmem>>, vector<1x16x16xf32>
    %87 = vector.shape_cast %86 : vector<1x16x16xf32> to vector<16x16xf32>
    %88 = vector.shape_cast %85 : vector<16x16xf32> to vector<1x16x16xf32>
    tpu.vector_store %arg8[%c3, %c0_71, %c0_72], %88 {strides = array<i32>} : memref<8x16x16xf32, #tpu.memory_space<vmem>>, vector<1x16x16xf32>,
    %c0_73 = arith.constant 0 : index
    %c0_74 = arith.constant 0 : index
    %c0_75 = arith.constant 0 : index
    %89 = vector.load %arg4[%c0_73, %c0_74, %c0_75] : memref<3x16x4xf32, #tpu.memory_space<vmem>>, vector<1x16x4xf32>
    %90 = vector.shape_cast %89 : vector<1x16x4xf32> to vector<16x4xf32>
    %91 = vector.extract_strided_slice %10 {offsets = [16, 0], sizes = [4, 16], strides = [1, 1]} : vector<32x16xf32> to vector<4x16xf32>
    %cst_76 = arith.constant dense<0.000000e+00> : vector<16x16xf32>
    %92 = tpu.matmul %90, %91, %cst_76 {dimension_numbers = #tpu.dot_dimension_numbers<[1], [0], [0], [1], [0, 0, 1, 1], [], []>} : vector<16x4xf32>, vector<4x16xf32>, vector<16x16xf32> -> vector<16x16xf32>
    %93 = arith.addf %5, %92 : vector<16x16xf32>
    %c1_77 = arith.constant 1 : index
    %c0_78 = arith.constant 0 : index
    %c0_79 = arith.constant 0 : index
    %94 = vector.load %arg4[%c1_77, %c0_78, %c0_79] : memref<3x16x4xf32, #tpu.memory_space<vmem>>, vector<1x16x4xf32>
    %95 = vector.shape_cast %94 : vector<1x16x4xf32> to vector<16x4xf32>
    %96 = vector.extract_strided_slice %13 {offsets = [16, 0], sizes = [4, 16], strides = [1, 1]} : vector<32x16xf32> to vector<4x16xf32>
    %cst_80 = arith.constant dense<0.000000e+00> : vector<16x16xf32>
    %97 = tpu.matmul %95, %96, %cst_80 {dimension_numbers = #tpu.dot_dimension_numbers<[1], [0], [0], [1], [0, 0, 1, 1], [], []>} : vector<16x4xf32>, vector<4x16xf32>, vector<16x16xf32> -> vector<16x16xf32>
    %98 = arith.addf %93, %97 : vector<16x16xf32>
    %c2_81 = arith.constant 2 : index
    %c0_82 = arith.constant 0 : index
    %c0_83 = arith.constant 0 : index
    %99 = vector.load %arg4[%c2_81, %c0_82, %c0_83] : memref<3x16x4xf32, #tpu.memory_space<vmem>>, vector<1x16x4xf32>
    %100 = vector.shape_cast %99 : vector<1x16x4xf32> to vector<16x4xf32>
    %101 = vector.extract_strided_slice %16 {offsets = [16, 0], sizes = [4, 16], strides = [1, 1]} : vector<32x16xf32> to vector<4x16xf32>
    %cst_84 = arith.constant dense<0.000000e+00> : vector<16x16xf32>
    %102 = tpu.matmul %100, %101, %cst_84 {dimension_numbers = #tpu.dot_dimension_numbers<[1], [0], [0], [1], [0, 0, 1, 1], [], []>} : vector<16x4xf32>, vector<4x16xf32>, vector<16x16xf32> -> vector<16x16xf32>
    %103 = arith.addf %98, %102 : vector<16x16xf32>
    %c4 = arith.constant 4 : index
    %c0_85 = arith.constant 0 : index
    %c0_86 = arith.constant 0 : index
    %104 = vector.load %arg8[%c4, %c0_85, %c0_86] : memref<8x16x16xf32, #tpu.memory_space<vmem>>, vector<1x16x16xf32>
    %105 = vector.shape_cast %104 : vector<1x16x16xf32> to vector<16x16xf32>
    %106 = vector.shape_cast %103 : vector<16x16xf32> to vector<1x16x16xf32>
    tpu.vector_store %arg8[%c4, %c0_85, %c0_86], %106 {strides = array<i32>} : memref<8x16x16xf32, #tpu.memory_space<vmem>>, vector<1x16x16xf32>,
    %c0_87 = arith.constant 0 : index
    %c0_88 = arith.constant 0 : index
    %c0_89 = arith.constant 0 : index
    %107 = vector.load %arg4[%c0_87, %c0_88, %c0_89] : memref<3x16x4xf32, #tpu.memory_space<vmem>>, vector<1x16x4xf32>
    %108 = vector.shape_cast %107 : vector<1x16x4xf32> to vector<16x4xf32>
    %109 = vector.extract_strided_slice %10 {offsets = [20, 0], sizes = [4, 16], strides = [1, 1]} : vector<32x16xf32> to vector<4x16xf32>
    %cst_90 = arith.constant dense<0.000000e+00> : vector<16x16xf32>
    %110 = tpu.matmul %108, %109, %cst_90 {dimension_numbers = #tpu.dot_dimension_numbers<[1], [0], [0], [1], [0, 0, 1, 1], [], []>} : vector<16x4xf32>, vector<4x16xf32>, vector<16x16xf32> -> vector<16x16xf32>
    %111 = arith.addf %5, %110 : vector<16x16xf32>
    %c1_91 = arith.constant 1 : index
    %c0_92 = arith.constant 0 : index
    %c0_93 = arith.constant 0 : index
    %112 = vector.load %arg4[%c1_91, %c0_92, %c0_93] : memref<3x16x4xf32, #tpu.memory_space<vmem>>, vector<1x16x4xf32>
    %113 = vector.shape_cast %112 : vector<1x16x4xf32> to vector<16x4xf32>
    %114 = vector.extract_strided_slice %13 {offsets = [20, 0], sizes = [4, 16], strides = [1, 1]} : vector<32x16xf32> to vector<4x16xf32>
    %cst_94 = arith.constant dense<0.000000e+00> : vector<16x16xf32>
    %115 = tpu.matmul %113, %114, %cst_94 {dimension_numbers = #tpu.dot_dimension_numbers<[1], [0], [0], [1], [0, 0, 1, 1], [], []>} : vector<16x4xf32>, vector<4x16xf32>, vector<16x16xf32> -> vector<16x16xf32>
    %116 = arith.addf %111, %115 : vector<16x16xf32>
    %c2_95 = arith.constant 2 : index
    %c0_96 = arith.constant 0 : index
    %c0_97 = arith.constant 0 : index
    %117 = vector.load %arg4[%c2_95, %c0_96, %c0_97] : memref<3x16x4xf32, #tpu.memory_space<vmem>>, vector<1x16x4xf32>
    %118 = vector.shape_cast %117 : vector<1x16x4xf32> to vector<16x4xf32>
    %119 = vector.extract_strided_slice %16 {offsets = [20, 0], sizes = [4, 16], strides = [1, 1]} : vector<32x16xf32> to vector<4x16xf32>
    %cst_98 = arith.constant dense<0.000000e+00> : vector<16x16xf32>
    %120 = tpu.matmul %118, %119, %cst_98 {dimension_numbers = #tpu.dot_dimension_numbers<[1], [0], [0], [1], [0, 0, 1, 1], [], []>} : vector<16x4xf32>, vector<4x16xf32>, vector<16x16xf32> -> vector<16x16xf32>
    %121 = arith.addf %116, %120 : vector<16x16xf32>
    %c5 = arith.constant 5 : index
    %c0_99 = arith.constant 0 : index
    %c0_100 = arith.constant 0 : index
    %122 = vector.load %arg8[%c5, %c0_99, %c0_100] : memref<8x16x16xf32, #tpu.memory_space<vmem>>, vector<1x16x16xf32>
    %123 = vector.shape_cast %122 : vector<1x16x16xf32> to vector<16x16xf32>
    %124 = vector.shape_cast %121 : vector<16x16xf32> to vector<1x16x16xf32>
    tpu.vector_store %arg8[%c5, %c0_99, %c0_100], %124 {strides = array<i32>} : memref<8x16x16xf32, #tpu.memory_space<vmem>>, vector<1x16x16xf32>,
    %c0_101 = arith.constant 0 : index
    %c0_102 = arith.constant 0 : index
    %c0_103 = arith.constant 0 : index
    %125 = vector.load %arg4[%c0_101, %c0_102, %c0_103] : memref<3x16x4xf32, #tpu.memory_space<vmem>>, vector<1x16x4xf32>
    %126 = vector.shape_cast %125 : vector<1x16x4xf32> to vector<16x4xf32>
    %127 = vector.extract_strided_slice %10 {offsets = [24, 0], sizes = [4, 16], strides = [1, 1]} : vector<32x16xf32> to vector<4x16xf32>
    %cst_104 = arith.constant dense<0.000000e+00> : vector<16x16xf32>
    %128 = tpu.matmul %126, %127, %cst_104 {dimension_numbers = #tpu.dot_dimension_numbers<[1], [0], [0], [1], [0, 0, 1, 1], [], []>} : vector<16x4xf32>, vector<4x16xf32>, vector<16x16xf32> -> vector<16x16xf32>
    %129 = arith.addf %5, %128 : vector<16x16xf32>
    %c1_105 = arith.constant 1 : index
    %c0_106 = arith.constant 0 : index
    %c0_107 = arith.constant 0 : index
    %130 = vector.load %arg4[%c1_105, %c0_106, %c0_107] : memref<3x16x4xf32, #tpu.memory_space<vmem>>, vector<1x16x4xf32>
    %131 = vector.shape_cast %130 : vector<1x16x4xf32> to vector<16x4xf32>
    %132 = vector.extract_strided_slice %13 {offsets = [24, 0], sizes = [4, 16], strides = [1, 1]} : vector<32x16xf32> to vector<4x16xf32>
    %cst_108 = arith.constant dense<0.000000e+00> : vector<16x16xf32>
    %133 = tpu.matmul %131, %132, %cst_108 {dimension_numbers = #tpu.dot_dimension_numbers<[1], [0], [0], [1], [0, 0, 1, 1], [], []>} : vector<16x4xf32>, vector<4x16xf32>, vector<16x16xf32> -> vector<16x16xf32>
    %134 = arith.addf %129, %133 : vector<16x16xf32>
    %c2_109 = arith.constant 2 : index
    %c0_110 = arith.constant 0 : index
    %c0_111 = arith.constant 0 : index
    %135 = vector.load %arg4[%c2_109, %c0_110, %c0_111] : memref<3x16x4xf32, #tpu.memory_space<vmem>>, vector<1x16x4xf32>
    %136 = vector.shape_cast %135 : vector<1x16x4xf32> to vector<16x4xf32>
    %137 = vector.extract_strided_slice %16 {offsets = [24, 0], sizes = [4, 16], strides = [1, 1]} : vector<32x16xf32> to vector<4x16xf32>
    %cst_112 = arith.constant dense<0.000000e+00> : vector<16x16xf32>
    %138 = tpu.matmul %136, %137, %cst_112 {dimension_numbers = #tpu.dot_dimension_numbers<[1], [0], [0], [1], [0, 0, 1, 1], [], []>} : vector<16x4xf32>, vector<4x16xf32>, vector<16x16xf32> -> vector<16x16xf32>
    %139 = arith.addf %134, %138 : vector<16x16xf32>
    %c6 = arith.constant 6 : index
    %c0_113 = arith.constant 0 : index
    %c0_114 = arith.constant 0 : index
    %140 = vector.load %arg8[%c6, %c0_113, %c0_114] : memref<8x16x16xf32, #tpu.memory_space<vmem>>, vector<1x16x16xf32>
    %141 = vector.shape_cast %140 : vector<1x16x16xf32> to vector<16x16xf32>
    %142 = vector.shape_cast %139 : vector<16x16xf32> to vector<1x16x16xf32>
    tpu.vector_store %arg8[%c6, %c0_113, %c0_114], %142 {strides = array<i32>} : memref<8x16x16xf32, #tpu.memory_space<vmem>>, vector<1x16x16xf32>,
    %c0_115 = arith.constant 0 : index
    %c0_116 = arith.constant 0 : index
    %c0_117 = arith.constant 0 : index
    %143 = vector.load %arg4[%c0_115, %c0_116, %c0_117] : memref<3x16x4xf32, #tpu.memory_space<vmem>>, vector<1x16x4xf32>
    %144 = vector.shape_cast %143 : vector<1x16x4xf32> to vector<16x4xf32>
    %145 = vector.extract_strided_slice %10 {offsets = [28, 0], sizes = [4, 16], strides = [1, 1]} : vector<32x16xf32> to vector<4x16xf32>
    %cst_118 = arith.constant dense<0.000000e+00> : vector<16x16xf32>
    %146 = tpu.matmul %144, %145, %cst_118 {dimension_numbers = #tpu.dot_dimension_numbers<[1], [0], [0], [1], [0, 0, 1, 1], [], []>} : vector<16x4xf32>, vector<4x16xf32>, vector<16x16xf32> -> vector<16x16xf32>
    %147 = arith.addf %5, %146 : vector<16x16xf32>
    %c1_119 = arith.constant 1 : index
    %c0_120 = arith.constant 0 : index
    %c0_121 = arith.constant 0 : index
    %148 = vector.load %arg4[%c1_119, %c0_120, %c0_121] : memref<3x16x4xf32, #tpu.memory_space<vmem>>, vector<1x16x4xf32>
    %149 = vector.shape_cast %148 : vector<1x16x4xf32> to vector<16x4xf32>
    %150 = vector.extract_strided_slice %13 {offsets = [28, 0], sizes = [4, 16], strides = [1, 1]} : vector<32x16xf32> to vector<4x16xf32>
    %cst_122 = arith.constant dense<0.000000e+00> : vector<16x16xf32>
    %151 = tpu.matmul %149, %150, %cst_122 {dimension_numbers = #tpu.dot_dimension_numbers<[1], [0], [0], [1], [0, 0, 1, 1], [], []>} : vector<16x4xf32>, vector<4x16xf32>, vector<16x16xf32> -> vector<16x16xf32>
    %152 = arith.addf %147, %151 : vector<16x16xf32>
    %c2_123 = arith.constant 2 : index
    %c0_124 = arith.constant 0 : index
    %c0_125 = arith.constant 0 : index
    %153 = vector.load %arg4[%c2_123, %c0_124, %c0_125] : memref<3x16x4xf32, #tpu.memory_space<vmem>>, vector<1x16x4xf32>
    %154 = vector.shape_cast %153 : vector<1x16x4xf32> to vector<16x4xf32>
    %155 = vector.extract_strided_slice %16 {offsets = [28, 0], sizes = [4, 16], strides = [1, 1]} : vector<32x16xf32> to vector<4x16xf32>
    %cst_126 = arith.constant dense<0.000000e+00> : vector<16x16xf32>
    %156 = tpu.matmul %154, %155, %cst_126 {dimension_numbers = #tpu.dot_dimension_numbers<[1], [0], [0], [1], [0, 0, 1, 1], [], []>} : vector<16x4xf32>, vector<4x16xf32>, vector<16x16xf32> -> vector<16x16xf32>
    %157 = arith.addf %152, %156 : vector<16x16xf32>
    %c7 = arith.constant 7 : index
    %c0_127 = arith.constant 0 : index
    %c0_128 = arith.constant 0 : index
    %158 = vector.load %arg8[%c7, %c0_127, %c0_128] : memref<8x16x16xf32, #tpu.memory_space<vmem>>, vector<1x16x16xf32>
    %159 = vector.shape_cast %158 : vector<1x16x16xf32> to vector<16x16xf32>
    %160 = vector.shape_cast %157 : vector<16x16xf32> to vector<1x16x16xf32>
    tpu.vector_store %arg8[%c7, %c0_127, %c0_128], %160 {strides = array<i32>} : memref<8x16x16xf32, #tpu.memory_space<vmem>>, vector<1x16x16xf32>,
    %c0_129 = arith.constant 0 : index
    %c0_130 = arith.constant 0 : index
    %161 = vector.load %arg9[%c0_129, %c0_130] : memref<4x16xf32, #tpu.memory_space<vmem>>, vector<4x16xf32>
    %c0_131 = arith.constant 0 : index
    %c0_132 = arith.constant 0 : index
    %162 = vector.load %arg10[%c0_131, %c0_132] : memref<4x16xf32, #tpu.memory_space<vmem>>, vector<4x16xf32>
    %c0_133 = arith.constant 0 : index
    %c0_134 = arith.constant 0 : index
    %c0_135 = arith.constant 0 : index
    %163 = vector.load %arg8[%c0_133, %c0_134, %c0_135] : memref<8x16x16xf32, #tpu.memory_space<vmem>>, vector<1x16x16xf32>
    %164 = vector.shape_cast %163 : vector<1x16x16xf32> to vector<16x16xf32>
    %c0_136 = arith.constant 0 : index
    %c0_137 = arith.constant 0 : index
    %c0_138 = arith.constant 0 : index
    %165 = vector.load %arg3[%c0_136, %c0_137, %c0_138] : memref<3x16x16xf32, #tpu.memory_space<vmem>>, vector<1x16x16xf32>
    %166 = vector.shape_cast %165 : vector<1x16x16xf32> to vector<16x16xf32>
    %cst_139 = arith.constant dense<0.000000e+00> : vector<4x16xf32>
    %167 = tpu.matmul %161, %166, %cst_139 {dimension_numbers = #tpu.dot_dimension_numbers<[1], [0], [0], [1], [0, 0, 1, 1], [], []>} : vector<4x16xf32>, vector<16x16xf32>, vector<4x16xf32> -> vector<4x16xf32>
    %c0_140 = arith.constant 0 : index
    %c0_141 = arith.constant 0 : index
    %c0_142 = arith.constant 0 : index
    %168 = vector.load %arg5[%c0_140, %c0_141, %c0_142] : memref<3x16x4xf32, #tpu.memory_space<vmem>>, vector<1x16x4xf32>
    %169 = vector.shape_cast %168 : vector<1x16x4xf32> to vector<16x4xf32>
    %cst_143 = arith.constant dense<0.000000e+00> : vector<16x16xf32>
    %170 = tpu.matmul %169, %167, %cst_143 {dimension_numbers = #tpu.dot_dimension_numbers<[1], [0], [0], [1], [0, 0, 1, 1], [], []>} : vector<16x4xf32>, vector<4x16xf32>, vector<16x16xf32> -> vector<16x16xf32>
    %171 = arith.addf %164, %170 : vector<16x16xf32>
    %c1_144 = arith.constant 1 : index
    %c0_145 = arith.constant 0 : index
    %c0_146 = arith.constant 0 : index
    %172 = vector.load %arg3[%c1_144, %c0_145, %c0_146] : memref<3x16x16xf32, #tpu.memory_space<vmem>>, vector<1x16x16xf32>
    %173 = vector.shape_cast %172 : vector<1x16x16xf32> to vector<16x16xf32>
    %cst_147 = arith.constant dense<0.000000e+00> : vector<4x16xf32>
    %174 = tpu.matmul %161, %173, %cst_147 {dimension_numbers = #tpu.dot_dimension_numbers<[1], [0], [0], [1], [0, 0, 1, 1], [], []>} : vector<4x16xf32>, vector<16x16xf32>, vector<4x16xf32> -> vector<4x16xf32>
    %c1_148 = arith.constant 1 : index
    %c0_149 = arith.constant 0 : index
    %c0_150 = arith.constant 0 : index
    %175 = vector.load %arg5[%c1_148, %c0_149, %c0_150] : memref<3x16x4xf32, #tpu.memory_space<vmem>>, vector<1x16x4xf32>
    %176 = vector.shape_cast %175 : vector<1x16x4xf32> to vector<16x4xf32>
    %cst_151 = arith.constant dense<0.000000e+00> : vector<16x16xf32>
    %177 = tpu.matmul %176, %174, %cst_151 {dimension_numbers = #tpu.dot_dimension_numbers<[1], [0], [0], [1], [0, 0, 1, 1], [], []>} : vector<16x4xf32>, vector<4x16xf32>, vector<16x16xf32> -> vector<16x16xf32>
    %178 = arith.addf %171, %177 : vector<16x16xf32>
    %c2_152 = arith.constant 2 : index
    %c0_153 = arith.constant 0 : index
    %c0_154 = arith.constant 0 : index
    %179 = vector.load %arg3[%c2_152, %c0_153, %c0_154] : memref<3x16x16xf32, #tpu.memory_space<vmem>>, vector<1x16x16xf32>
    %180 = vector.shape_cast %179 : vector<1x16x16xf32> to vector<16x16xf32>
    %cst_155 = arith.constant dense<0.000000e+00> : vector<4x16xf32>
    %181 = tpu.matmul %161, %180, %cst_155 {dimension_numbers = #tpu.dot_dimension_numbers<[1], [0], [0], [1], [0, 0, 1, 1], [], []>} : vector<4x16xf32>, vector<16x16xf32>, vector<4x16xf32> -> vector<4x16xf32>
    %c2_156 = arith.constant 2 : index
    %c0_157 = arith.constant 0 : index
    %c0_158 = arith.constant 0 : index
    %182 = vector.load %arg5[%c2_156, %c0_157, %c0_158] : memref<3x16x4xf32, #tpu.memory_space<vmem>>, vector<1x16x4xf32>
    %183 = vector.shape_cast %182 : vector<1x16x4xf32> to vector<16x4xf32>
    %cst_159 = arith.constant dense<0.000000e+00> : vector<16x16xf32>
    %184 = tpu.matmul %183, %181, %cst_159 {dimension_numbers = #tpu.dot_dimension_numbers<[1], [0], [0], [1], [0, 0, 1, 1], [], []>} : vector<16x4xf32>, vector<4x16xf32>, vector<16x16xf32> -> vector<16x16xf32>
    %185 = arith.addf %178, %184 : vector<16x16xf32>
    %186 = vector.extract_strided_slice %185 {offsets = [0, 0], sizes = [12, 16], strides = [1, 1]} : vector<16x16xf32> to vector<12x16xf32>
    %187 = arith.negf %186 : vector<12x16xf32>
    %188 = math.exp %187 : vector<12x16xf32>
    %cst_160 = arith.constant 1.000000e+00 : f32
    %189 = vector.broadcast %cst_160 : f32 to vector<12x16xf32>
    %190 = arith.addf %189, %188 : vector<12x16xf32>
    %191 = arith.divf %189, %190 : vector<12x16xf32>
    %192 = vector.extract_strided_slice %191 {offsets = [0, 0], sizes = [4, 16], strides = [1, 1]} : vector<12x16xf32> to vector<4x16xf32>
    %193 = vector.extract_strided_slice %191 {offsets = [4, 0], sizes = [4, 16], strides = [1, 1]} : vector<12x16xf32> to vector<4x16xf32>
    %194 = vector.extract_strided_slice %191 {offsets = [8, 0], sizes = [4, 16], strides = [1, 1]} : vector<12x16xf32> to vector<4x16xf32>
    %195 = vector.extract_strided_slice %185 {offsets = [12, 0], sizes = [4, 16], strides = [1, 1]} : vector<16x16xf32> to vector<4x16xf32>
    %196 = math.tanh %195 : vector<4x16xf32>
    %197 = arith.mulf %162, %193 : vector<4x16xf32>
    %198 = arith.mulf %192, %196 : vector<4x16xf32>
    %199 = arith.addf %197, %198 : vector<4x16xf32>
    %200 = math.tanh %199 : vector<4x16xf32>
    %201 = arith.mulf %200, %194 : vector<4x16xf32>
    %c0_161 = arith.constant 0 : index
    %c0_162 = arith.constant 0 : index
    %c0_163 = arith.constant 0 : index
    %c0_164 = arith.constant 0 : index
    %202 = vector.load %arg7[%c0_161, %c0_162, %c0_163, %c0_164] : memref<1x8x4x16xf32, #tpu.memory_space<vmem>>, vector<1x1x4x16xf32>
    %203 = vector.shape_cast %202 : vector<1x1x4x16xf32> to vector<4x16xf32>
    %204 = vector.shape_cast %201 : vector<4x16xf32> to vector<1x1x4x16xf32>
    tpu.vector_store %arg7[%c0_161, %c0_162, %c0_163, %c0_164], %204 {strides = array<i32>} : memref<1x8x4x16xf32, #tpu.memory_space<vmem>>, vector<1x1x4x16xf32>,
    %c1_165 = arith.constant 1 : index
    %c0_166 = arith.constant 0 : index
    %c0_167 = arith.constant 0 : index
    %205 = vector.load %arg8[%c1_165, %c0_166, %c0_167] : memref<8x16x16xf32, #tpu.memory_space<vmem>>, vector<1x16x16xf32>
    %206 = vector.shape_cast %205 : vector<1x16x16xf32> to vector<16x16xf32>
    %c0_168 = arith.constant 0 : index
    %c0_169 = arith.constant 0 : index
    %c0_170 = arith.constant 0 : index
    %207 = vector.load %arg3[%c0_168, %c0_169, %c0_170] : memref<3x16x16xf32, #tpu.memory_space<vmem>>, vector<1x16x16xf32>
    %208 = vector.shape_cast %207 : vector<1x16x16xf32> to vector<16x16xf32>
    %cst_171 = arith.constant dense<0.000000e+00> : vector<4x16xf32>
    %209 = tpu.matmul %201, %208, %cst_171 {dimension_numbers = #tpu.dot_dimension_numbers<[1], [0], [0], [1], [0, 0, 1, 1], [], []>} : vector<4x16xf32>, vector<16x16xf32>, vector<4x16xf32> -> vector<4x16xf32>
    %c0_172 = arith.constant 0 : index
    %c0_173 = arith.constant 0 : index
    %c0_174 = arith.constant 0 : index
    %210 = vector.load %arg5[%c0_172, %c0_173, %c0_174] : memref<3x16x4xf32, #tpu.memory_space<vmem>>, vector<1x16x4xf32>
    %211 = vector.shape_cast %210 : vector<1x16x4xf32> to vector<16x4xf32>
    %cst_175 = arith.constant dense<0.000000e+00> : vector<16x16xf32>
    %212 = tpu.matmul %211, %209, %cst_175 {dimension_numbers = #tpu.dot_dimension_numbers<[1], [0], [0], [1], [0, 0, 1, 1], [], []>} : vector<16x4xf32>, vector<4x16xf32>, vector<16x16xf32> -> vector<16x16xf32>
    %213 = arith.addf %206, %212 : vector<16x16xf32>
    %c1_176 = arith.constant 1 : index
    %c0_177 = arith.constant 0 : index
    %c0_178 = arith.constant 0 : index
    %214 = vector.load %arg3[%c1_176, %c0_177, %c0_178] : memref<3x16x16xf32, #tpu.memory_space<vmem>>, vector<1x16x16xf32>
    %215 = vector.shape_cast %214 : vector<1x16x16xf32> to vector<16x16xf32>
    %cst_179 = arith.constant dense<0.000000e+00> : vector<4x16xf32>
    %216 = tpu.matmul %201, %215, %cst_179 {dimension_numbers = #tpu.dot_dimension_numbers<[1], [0], [0], [1], [0, 0, 1, 1], [], []>} : vector<4x16xf32>, vector<16x16xf32>, vector<4x16xf32> -> vector<4x16xf32>
    %c1_180 = arith.constant 1 : index
    %c0_181 = arith.constant 0 : index
    %c0_182 = arith.constant 0 : index
    %217 = vector.load %arg5[%c1_180, %c0_181, %c0_182] : memref<3x16x4xf32, #tpu.memory_space<vmem>>, vector<1x16x4xf32>
    %218 = vector.shape_cast %217 : vector<1x16x4xf32> to vector<16x4xf32>
    %cst_183 = arith.constant dense<0.000000e+00> : vector<16x16xf32>
    %219 = tpu.matmul %218, %216, %cst_183 {dimension_numbers = #tpu.dot_dimension_numbers<[1], [0], [0], [1], [0, 0, 1, 1], [], []>} : vector<16x4xf32>, vector<4x16xf32>, vector<16x16xf32> -> vector<16x16xf32>
    %220 = arith.addf %213, %219 : vector<16x16xf32>
    %c2_184 = arith.constant 2 : index
    %c0_185 = arith.constant 0 : index
    %c0_186 = arith.constant 0 : index
    %221 = vector.load %arg3[%c2_184, %c0_185, %c0_186] : memref<3x16x16xf32, #tpu.memory_space<vmem>>, vector<1x16x16xf32>
    %222 = vector.shape_cast %221 : vector<1x16x16xf32> to vector<16x16xf32>
    %cst_187 = arith.constant dense<0.000000e+00> : vector<4x16xf32>
    %223 = tpu.matmul %201, %222, %cst_187 {dimension_numbers = #tpu.dot_dimension_numbers<[1], [0], [0], [1], [0, 0, 1, 1], [], []>} : vector<4x16xf32>, vector<16x16xf32>, vector<4x16xf32> -> vector<4x16xf32>
    %c2_188 = arith.constant 2 : index
    %c0_189 = arith.constant 0 : index
    %c0_190 = arith.constant 0 : index
    %224 = vector.load %arg5[%c2_188, %c0_189, %c0_190] : memref<3x16x4xf32, #tpu.memory_space<vmem>>, vector<1x16x4xf32>
    %225 = vector.shape_cast %224 : vector<1x16x4xf32> to vector<16x4xf32>
    %cst_191 = arith.constant dense<0.000000e+00> : vector<16x16xf32>
    %226 = tpu.matmul %225, %223, %cst_191 {dimension_numbers = #tpu.dot_dimension_numbers<[1], [0], [0], [1], [0, 0, 1, 1], [], []>} : vector<16x4xf32>, vector<4x16xf32>, vector<16x16xf32> -> vector<16x16xf32>
    %227 = arith.addf %220, %226 : vector<16x16xf32>
    %228 = vector.extract_strided_slice %227 {offsets = [0, 0], sizes = [12, 16], strides = [1, 1]} : vector<16x16xf32> to vector<12x16xf32>
    %229 = arith.negf %228 : vector<12x16xf32>
    %230 = math.exp %229 : vector<12x16xf32>
    %cst_192 = arith.constant 1.000000e+00 : f32
    %231 = vector.broadcast %cst_192 : f32 to vector<12x16xf32>
    %232 = arith.addf %231, %230 : vector<12x16xf32>
    %233 = arith.divf %231, %232 : vector<12x16xf32>
    %234 = vector.extract_strided_slice %233 {offsets = [0, 0], sizes = [4, 16], strides = [1, 1]} : vector<12x16xf32> to vector<4x16xf32>
    %235 = vector.extract_strided_slice %233 {offsets = [4, 0], sizes = [4, 16], strides = [1, 1]} : vector<12x16xf32> to vector<4x16xf32>
    %236 = vector.extract_strided_slice %233 {offsets = [8, 0], sizes = [4, 16], strides = [1, 1]} : vector<12x16xf32> to vector<4x16xf32>
    %237 = vector.extract_strided_slice %227 {offsets = [12, 0], sizes = [4, 16], strides = [1, 1]} : vector<16x16xf32> to vector<4x16xf32>
    %238 = math.tanh %237 : vector<4x16xf32>
    %239 = arith.mulf %199, %235 : vector<4x16xf32>
    %240 = arith.mulf %234, %238 : vector<4x16xf32>
    %241 = arith.addf %239, %240 : vector<4x16xf32>
    %242 = math.tanh %241 : vector<4x16xf32>
    %243 = arith.mulf %242, %236 : vector<4x16xf32>
    %c0_193 = arith.constant 0 : index
    %c1_194 = arith.constant 1 : index
    %c0_195 = arith.constant 0 : index
    %c0_196 = arith.constant 0 : index
    %244 = vector.load %arg7[%c0_193, %c1_194, %c0_195, %c0_196] : memref<1x8x4x16xf32, #tpu.memory_space<vmem>>, vector<1x1x4x16xf32>
    %245 = vector.shape_cast %244 : vector<1x1x4x16xf32> to vector<4x16xf32>
    %246 = vector.shape_cast %243 : vector<4x16xf32> to vector<1x1x4x16xf32>
    tpu.vector_store %arg7[%c0_193, %c1_194, %c0_195, %c0_196], %246 {strides = array<i32>} : memref<1x8x4x16xf32, #tpu.memory_space<vmem>>, vector<1x1x4x16xf32>,
    %c2_197 = arith.constant 2 : index
    %c0_198 = arith.constant 0 : index
    %c0_199 = arith.constant 0 : index
    %247 = vector.load %arg8[%c2_197, %c0_198, %c0_199] : memref<8x16x16xf32, #tpu.memory_space<vmem>>, vector<1x16x16xf32>
    %248 = vector.shape_cast %247 : vector<1x16x16xf32> to vector<16x16xf32>
    %c0_200 = arith.constant 0 : index
    %c0_201 = arith.constant 0 : index
    %c0_202 = arith.constant 0 : index
    %249 = vector.load %arg3[%c0_200, %c0_201, %c0_202] : memref<3x16x16xf32, #tpu.memory_space<vmem>>, vector<1x16x16xf32>
    %250 = vector.shape_cast %249 : vector<1x16x16xf32> to vector<16x16xf32>
    %cst_203 = arith.constant dense<0.000000e+00> : vector<4x16xf32>
    %251 = tpu.matmul %243, %250, %cst_203 {dimension_numbers = #tpu.dot_dimension_numbers<[1], [0], [0], [1], [0, 0, 1, 1], [], []>} : vector<4x16xf32>, vector<16x16xf32>, vector<4x16xf32> -> vector<4x16xf32>
    %c0_204 = arith.constant 0 : index
    %c0_205 = arith.constant 0 : index
    %c0_206 = arith.constant 0 : index
    %252 = vector.load %arg5[%c0_204, %c0_205, %c0_206] : memref<3x16x4xf32, #tpu.memory_space<vmem>>, vector<1x16x4xf32>
    %253 = vector.shape_cast %252 : vector<1x16x4xf32> to vector<16x4xf32>
    %cst_207 = arith.constant dense<0.000000e+00> : vector<16x16xf32>
    %254 = tpu.matmul %253, %251, %cst_207 {dimension_numbers = #tpu.dot_dimension_numbers<[1], [0], [0], [1], [0, 0, 1, 1], [], []>} : vector<16x4xf32>, vector<4x16xf32>, vector<16x16xf32> -> vector<16x16xf32>
    %255 = arith.addf %248, %254 : vector<16x16xf32>
    %c1_208 = arith.constant 1 : index
    %c0_209 = arith.constant 0 : index
    %c0_210 = arith.constant 0 : index
    %256 = vector.load %arg3[%c1_208, %c0_209, %c0_210] : memref<3x16x16xf32, #tpu.memory_space<vmem>>, vector<1x16x16xf32>
    %257 = vector.shape_cast %256 : vector<1x16x16xf32> to vector<16x16xf32>
    %cst_211 = arith.constant dense<0.000000e+00> : vector<4x16xf32>
    %258 = tpu.matmul %243, %257, %cst_211 {dimension_numbers = #tpu.dot_dimension_numbers<[1], [0], [0], [1], [0, 0, 1, 1], [], []>} : vector<4x16xf32>, vector<16x16xf32>, vector<4x16xf32> -> vector<4x16xf32>
    %c1_212 = arith.constant 1 : index
    %c0_213 = arith.constant 0 : index
    %c0_214 = arith.constant 0 : index
    %259 = vector.load %arg5[%c1_212, %c0_213, %c0_214] : memref<3x16x4xf32, #tpu.memory_space<vmem>>, vector<1x16x4xf32>
    %260 = vector.shape_cast %259 : vector<1x16x4xf32> to vector<16x4xf32>
    %cst_215 = arith.constant dense<0.000000e+00> : vector<16x16xf32>
    %261 = tpu.matmul %260, %258, %cst_215 {dimension_numbers = #tpu.dot_dimension_numbers<[1], [0], [0], [1], [0, 0, 1, 1], [], []>} : vector<16x4xf32>, vector<4x16xf32>, vector<16x16xf32> -> vector<16x16xf32>
    %262 = arith.addf %255, %261 : vector<16x16xf32>
    %c2_216 = arith.constant 2 : index
    %c0_217 = arith.constant 0 : index
    %c0_218 = arith.constant 0 : index
    %263 = vector.load %arg3[%c2_216, %c0_217, %c0_218] : memref<3x16x16xf32, #tpu.memory_space<vmem>>, vector<1x16x16xf32>
    %264 = vector.shape_cast %263 : vector<1x16x16xf32> to vector<16x16xf32>
    %cst_219 = arith.constant dense<0.000000e+00> : vector<4x16xf32>
    %265 = tpu.matmul %243, %264, %cst_219 {dimension_numbers = #tpu.dot_dimension_numbers<[1], [0], [0], [1], [0, 0, 1, 1], [], []>} : vector<4x16xf32>, vector<16x16xf32>, vector<4x16xf32> -> vector<4x16xf32>
    %c2_220 = arith.constant 2 : index
    %c0_221 = arith.constant 0 : index
    %c0_222 = arith.constant 0 : index
    %266 = vector.load %arg5[%c2_220, %c0_221, %c0_222] : memref<3x16x4xf32, #tpu.memory_space<vmem>>, vector<1x16x4xf32>
    %267 = vector.shape_cast %266 : vector<1x16x4xf32> to vector<16x4xf32>
    %cst_223 = arith.constant dense<0.000000e+00> : vector<16x16xf32>
    %268 = tpu.matmul %267, %265, %cst_223 {dimension_numbers = #tpu.dot_dimension_numbers<[1], [0], [0], [1], [0, 0, 1, 1], [], []>} : vector<16x4xf32>, vector<4x16xf32>, vector<16x16xf32> -> vector<16x16xf32>
    %269 = arith.addf %262, %268 : vector<16x16xf32>
    %270 = vector.extract_strided_slice %269 {offsets = [0, 0], sizes = [12, 16], strides = [1, 1]} : vector<16x16xf32> to vector<12x16xf32>
    %271 = arith.negf %270 : vector<12x16xf32>
    %272 = math.exp %271 : vector<12x16xf32>
    %cst_224 = arith.constant 1.000000e+00 : f32
    %273 = vector.broadcast %cst_224 : f32 to vector<12x16xf32>
    %274 = arith.addf %273, %272 : vector<12x16xf32>
    %275 = arith.divf %273, %274 : vector<12x16xf32>
    %276 = vector.extract_strided_slice %275 {offsets = [0, 0], sizes = [4, 16], strides = [1, 1]} : vector<12x16xf32> to vector<4x16xf32>
    %277 = vector.extract_strided_slice %275 {offsets = [4, 0], sizes = [4, 16], strides = [1, 1]} : vector<12x16xf32> to vector<4x16xf32>
    %278 = vector.extract_strided_slice %275 {offsets = [8, 0], sizes = [4, 16], strides = [1, 1]} : vector<12x16xf32> to vector<4x16xf32>
    %279 = vector.extract_strided_slice %269 {offsets = [12, 0], sizes = [4, 16], strides = [1, 1]} : vector<16x16xf32> to vector<4x16xf32>
    %280 = math.tanh %279 : vector<4x16xf32>
    %281 = arith.mulf %241, %277 : vector<4x16xf32>
    %282 = arith.mulf %276, %280 : vector<4x16xf32>
    %283 = arith.addf %281, %282 : vector<4x16xf32>
    %284 = math.tanh %283 : vector<4x16xf32>
    %285 = arith.mulf %284, %278 : vector<4x16xf32>
    %c0_225 = arith.constant 0 : index
    %c2_226 = arith.constant 2 : index
    %c0_227 = arith.constant 0 : index
    %c0_228 = arith.constant 0 : index
    %286 = vector.load %arg7[%c0_225, %c2_226, %c0_227, %c0_228] : memref<1x8x4x16xf32, #tpu.memory_space<vmem>>, vector<1x1x4x16xf32>
    %287 = vector.shape_cast %286 : vector<1x1x4x16xf32> to vector<4x16xf32>
    %288 = vector.shape_cast %285 : vector<4x16xf32> to vector<1x1x4x16xf32>
    tpu.vector_store %arg7[%c0_225, %c2_226, %c0_227, %c0_228], %288 {strides = array<i32>} : memref<1x8x4x16xf32, #tpu.memory_space<vmem>>, vector<1x1x4x16xf32>,
    %c3_229 = arith.constant 3 : index
    %c0_230 = arith.constant 0 : index
    %c0_231 = arith.constant 0 : index
    %289 = vector.load %arg8[%c3_229, %c0_230, %c0_231] : memref<8x16x16xf32, #tpu.memory_space<vmem>>, vector<1x16x16xf32>
    %290 = vector.shape_cast %289 : vector<1x16x16xf32> to vector<16x16xf32>
    %c0_232 = arith.constant 0 : index
    %c0_233 = arith.constant 0 : index
    %c0_234 = arith.constant 0 : index
    %291 = vector.load %arg3[%c0_232, %c0_233, %c0_234] : memref<3x16x16xf32, #tpu.memory_space<vmem>>, vector<1x16x16xf32>
    %292 = vector.shape_cast %291 : vector<1x16x16xf32> to vector<16x16xf32>
    %cst_235 = arith.constant dense<0.000000e+00> : vector<4x16xf32>
    %293 = tpu.matmul %285, %292, %cst_235 {dimension_numbers = #tpu.dot_dimension_numbers<[1], [0], [0], [1], [0, 0, 1, 1], [], []>} : vector<4x16xf32>, vector<16x16xf32>, vector<4x16xf32> -> vector<4x16xf32>
    %c0_236 = arith.constant 0 : index
    %c0_237 = arith.constant 0 : index
    %c0_238 = arith.constant 0 : index
    %294 = vector.load %arg5[%c0_236, %c0_237, %c0_238] : memref<3x16x4xf32, #tpu.memory_space<vmem>>, vector<1x16x4xf32>
    %295 = vector.shape_cast %294 : vector<1x16x4xf32> to vector<16x4xf32>
    %cst_239 = arith.constant dense<0.000000e+00> : vector<16x16xf32>
    %296 = tpu.matmul %295, %293, %cst_239 {dimension_numbers = #tpu.dot_dimension_numbers<[1], [0], [0], [1], [0, 0, 1, 1], [], []>} : vector<16x4xf32>, vector<4x16xf32>, vector<16x16xf32> -> vector<16x16xf32>
    %297 = arith.addf %290, %296 : vector<16x16xf32>
    %c1_240 = arith.constant 1 : index
    %c0_241 = arith.constant 0 : index
    %c0_242 = arith.constant 0 : index
    %298 = vector.load %arg3[%c1_240, %c0_241, %c0_242] : memref<3x16x16xf32, #tpu.memory_space<vmem>>, vector<1x16x16xf32>
    %299 = vector.shape_cast %298 : vector<1x16x16xf32> to vector<16x16xf32>
    %cst_243 = arith.constant dense<0.000000e+00> : vector<4x16xf32>
    %300 = tpu.matmul %285, %299, %cst_243 {dimension_numbers = #tpu.dot_dimension_numbers<[1], [0], [0], [1], [0, 0, 1, 1], [], []>} : vector<4x16xf32>, vector<16x16xf32>, vector<4x16xf32> -> vector<4x16xf32>
    %c1_244 = arith.constant 1 : index
    %c0_245 = arith.constant 0 : index
    %c0_246 = arith.constant 0 : index
    %301 = vector.load %arg5[%c1_244, %c0_245, %c0_246] : memref<3x16x4xf32, #tpu.memory_space<vmem>>, vector<1x16x4xf32>
    %302 = vector.shape_cast %301 : vector<1x16x4xf32> to vector<16x4xf32>
    %cst_247 = arith.constant dense<0.000000e+00> : vector<16x16xf32>
    %303 = tpu.matmul %302, %300, %cst_247 {dimension_numbers = #tpu.dot_dimension_numbers<[1], [0], [0], [1], [0, 0, 1, 1], [], []>} : vector<16x4xf32>, vector<4x16xf32>, vector<16x16xf32> -> vector<16x16xf32>
    %304 = arith.addf %297, %303 : vector<16x16xf32>
    %c2_248 = arith.constant 2 : index
    %c0_249 = arith.constant 0 : index
    %c0_250 = arith.constant 0 : index
    %305 = vector.load %arg3[%c2_248, %c0_249, %c0_250] : memref<3x16x16xf32, #tpu.memory_space<vmem>>, vector<1x16x16xf32>
    %306 = vector.shape_cast %305 : vector<1x16x16xf32> to vector<16x16xf32>
    %cst_251 = arith.constant dense<0.000000e+00> : vector<4x16xf32>
    %307 = tpu.matmul %285, %306, %cst_251 {dimension_numbers = #tpu.dot_dimension_numbers<[1], [0], [0], [1], [0, 0, 1, 1], [], []>} : vector<4x16xf32>, vector<16x16xf32>, vector<4x16xf32> -> vector<4x16xf32>
    %c2_252 = arith.constant 2 : index
    %c0_253 = arith.constant 0 : index
    %c0_254 = arith.constant 0 : index
    %308 = vector.load %arg5[%c2_252, %c0_253, %c0_254] : memref<3x16x4xf32, #tpu.memory_space<vmem>>, vector<1x16x4xf32>
    %309 = vector.shape_cast %308 : vector<1x16x4xf32> to vector<16x4xf32>
    %cst_255 = arith.constant dense<0.000000e+00> : vector<16x16xf32>
    %310 = tpu.matmul %309, %307, %cst_255 {dimension_numbers = #tpu.dot_dimension_numbers<[1], [0], [0], [1], [0, 0, 1, 1], [], []>} : vector<16x4xf32>, vector<4x16xf32>, vector<16x16xf32> -> vector<16x16xf32>
    %311 = arith.addf %304, %310 : vector<16x16xf32>
    %312 = vector.extract_strided_slice %311 {offsets = [0, 0], sizes = [12, 16], strides = [1, 1]} : vector<16x16xf32> to vector<12x16xf32>
    %313 = arith.negf %312 : vector<12x16xf32>
    %314 = math.exp %313 : vector<12x16xf32>
    %cst_256 = arith.constant 1.000000e+00 : f32
    %315 = vector.broadcast %cst_256 : f32 to vector<12x16xf32>
    %316 = arith.addf %315, %314 : vector<12x16xf32>
    %317 = arith.divf %315, %316 : vector<12x16xf32>
    %318 = vector.extract_strided_slice %317 {offsets = [0, 0], sizes = [4, 16], strides = [1, 1]} : vector<12x16xf32> to vector<4x16xf32>
    %319 = vector.extract_strided_slice %317 {offsets = [4, 0], sizes = [4, 16], strides = [1, 1]} : vector<12x16xf32> to vector<4x16xf32>
    %320 = vector.extract_strided_slice %317 {offsets = [8, 0], sizes = [4, 16], strides = [1, 1]} : vector<12x16xf32> to vector<4x16xf32>
    %321 = vector.extract_strided_slice %311 {offsets = [12, 0], sizes = [4, 16], strides = [1, 1]} : vector<16x16xf32> to vector<4x16xf32>
    %322 = math.tanh %321 : vector<4x16xf32>
    %323 = arith.mulf %283, %319 : vector<4x16xf32>
    %324 = arith.mulf %318, %322 : vector<4x16xf32>
    %325 = arith.addf %323, %324 : vector<4x16xf32>
    %326 = math.tanh %325 : vector<4x16xf32>
    %327 = arith.mulf %326, %320 : vector<4x16xf32>
    %c0_257 = arith.constant 0 : index
    %c3_258 = arith.constant 3 : index
    %c0_259 = arith.constant 0 : index
    %c0_260 = arith.constant 0 : index
    %328 = vector.load %arg7[%c0_257, %c3_258, %c0_259, %c0_260] : memref<1x8x4x16xf32, #tpu.memory_space<vmem>>, vector<1x1x4x16xf32>
    %329 = vector.shape_cast %328 : vector<1x1x4x16xf32> to vector<4x16xf32>
    %330 = vector.shape_cast %327 : vector<4x16xf32> to vector<1x1x4x16xf32>
    tpu.vector_store %arg7[%c0_257, %c3_258, %c0_259, %c0_260], %330 {strides = array<i32>} : memref<1x8x4x16xf32, #tpu.memory_space<vmem>>, vector<1x1x4x16xf32>,
    %c4_261 = arith.constant 4 : index
    %c0_262 = arith.constant 0 : index
    %c0_263 = arith.constant 0 : index
    %331 = vector.load %arg8[%c4_261, %c0_262, %c0_263] : memref<8x16x16xf32, #tpu.memory_space<vmem>>, vector<1x16x16xf32>
    %332 = vector.shape_cast %331 : vector<1x16x16xf32> to vector<16x16xf32>
    %c0_264 = arith.constant 0 : index
    %c0_265 = arith.constant 0 : index
    %c0_266 = arith.constant 0 : index
    %333 = vector.load %arg3[%c0_264, %c0_265, %c0_266] : memref<3x16x16xf32, #tpu.memory_space<vmem>>, vector<1x16x16xf32>
    %334 = vector.shape_cast %333 : vector<1x16x16xf32> to vector<16x16xf32>
    %cst_267 = arith.constant dense<0.000000e+00> : vector<4x16xf32>
    %335 = tpu.matmul %327, %334, %cst_267 {dimension_numbers = #tpu.dot_dimension_numbers<[1], [0], [0], [1], [0, 0, 1, 1], [], []>} : vector<4x16xf32>, vector<16x16xf32>, vector<4x16xf32> -> vector<4x16xf32>
    %c0_268 = arith.constant 0 : index
    %c0_269 = arith.constant 0 : index
    %c0_270 = arith.constant 0 : index
    %336 = vector.load %arg5[%c0_268, %c0_269, %c0_270] : memref<3x16x4xf32, #tpu.memory_space<vmem>>, vector<1x16x4xf32>
    %337 = vector.shape_cast %336 : vector<1x16x4xf32> to vector<16x4xf32>
    %cst_271 = arith.constant dense<0.000000e+00> : vector<16x16xf32>
    %338 = tpu.matmul %337, %335, %cst_271 {dimension_numbers = #tpu.dot_dimension_numbers<[1], [0], [0], [1], [0, 0, 1, 1], [], []>} : vector<16x4xf32>, vector<4x16xf32>, vector<16x16xf32> -> vector<16x16xf32>
    %339 = arith.addf %332, %338 : vector<16x16xf32>
    %c1_272 = arith.constant 1 : index
    %c0_273 = arith.constant 0 : index
    %c0_274 = arith.constant 0 : index
    %340 = vector.load %arg3[%c1_272, %c0_273, %c0_274] : memref<3x16x16xf32, #tpu.memory_space<vmem>>, vector<1x16x16xf32>
    %341 = vector.shape_cast %340 : vector<1x16x16xf32> to vector<16x16xf32>
    %cst_275 = arith.constant dense<0.000000e+00> : vector<4x16xf32>
    %342 = tpu.matmul %327, %341, %cst_275 {dimension_numbers = #tpu.dot_dimension_numbers<[1], [0], [0], [1], [0, 0, 1, 1], [], []>} : vector<4x16xf32>, vector<16x16xf32>, vector<4x16xf32> -> vector<4x16xf32>
    %c1_276 = arith.constant 1 : index
    %c0_277 = arith.constant 0 : index
    %c0_278 = arith.constant 0 : index
    %343 = vector.load %arg5[%c1_276, %c0_277, %c0_278] : memref<3x16x4xf32, #tpu.memory_space<vmem>>, vector<1x16x4xf32>
    %344 = vector.shape_cast %343 : vector<1x16x4xf32> to vector<16x4xf32>
    %cst_279 = arith.constant dense<0.000000e+00> : vector<16x16xf32>
    %345 = tpu.matmul %344, %342, %cst_279 {dimension_numbers = #tpu.dot_dimension_numbers<[1], [0], [0], [1], [0, 0, 1, 1], [], []>} : vector<16x4xf32>, vector<4x16xf32>, vector<16x16xf32> -> vector<16x16xf32>
    %346 = arith.addf %339, %345 : vector<16x16xf32>
    %c2_280 = arith.constant 2 : index
    %c0_281 = arith.constant 0 : index
    %c0_282 = arith.constant 0 : index
    %347 = vector.load %arg3[%c2_280, %c0_281, %c0_282] : memref<3x16x16xf32, #tpu.memory_space<vmem>>, vector<1x16x16xf32>
    %348 = vector.shape_cast %347 : vector<1x16x16xf32> to vector<16x16xf32>
    %cst_283 = arith.constant dense<0.000000e+00> : vector<4x16xf32>
    %349 = tpu.matmul %327, %348, %cst_283 {dimension_numbers = #tpu.dot_dimension_numbers<[1], [0], [0], [1], [0, 0, 1, 1], [], []>} : vector<4x16xf32>, vector<16x16xf32>, vector<4x16xf32> -> vector<4x16xf32>
    %c2_284 = arith.constant 2 : index
    %c0_285 = arith.constant 0 : index
    %c0_286 = arith.constant 0 : index
    %350 = vector.load %arg5[%c2_284, %c0_285, %c0_286] : memref<3x16x4xf32, #tpu.memory_space<vmem>>, vector<1x16x4xf32>
    %351 = vector.shape_cast %350 : vector<1x16x4xf32> to vector<16x4xf32>
    %cst_287 = arith.constant dense<0.000000e+00> : vector<16x16xf32>
    %352 = tpu.matmul %351, %349, %cst_287 {dimension_numbers = #tpu.dot_dimension_numbers<[1], [0], [0], [1], [0, 0, 1, 1], [], []>} : vector<16x4xf32>, vector<4x16xf32>, vector<16x16xf32> -> vector<16x16xf32>
    %353 = arith.addf %346, %352 : vector<16x16xf32>
    %354 = vector.extract_strided_slice %353 {offsets = [0, 0], sizes = [12, 16], strides = [1, 1]} : vector<16x16xf32> to vector<12x16xf32>
    %355 = arith.negf %354 : vector<12x16xf32>
    %356 = math.exp %355 : vector<12x16xf32>
    %cst_288 = arith.constant 1.000000e+00 : f32
    %357 = vector.broadcast %cst_288 : f32 to vector<12x16xf32>
    %358 = arith.addf %357, %356 : vector<12x16xf32>
    %359 = arith.divf %357, %358 : vector<12x16xf32>
    %360 = vector.extract_strided_slice %359 {offsets = [0, 0], sizes = [4, 16], strides = [1, 1]} : vector<12x16xf32> to vector<4x16xf32>
    %361 = vector.extract_strided_slice %359 {offsets = [4, 0], sizes = [4, 16], strides = [1, 1]} : vector<12x16xf32> to vector<4x16xf32>
    %362 = vector.extract_strided_slice %359 {offsets = [8, 0], sizes = [4, 16], strides = [1, 1]} : vector<12x16xf32> to vector<4x16xf32>
    %363 = vector.extract_strided_slice %353 {offsets = [12, 0], sizes = [4, 16], strides = [1, 1]} : vector<16x16xf32> to vector<4x16xf32>
    %364 = math.tanh %363 : vector<4x16xf32>
    %365 = arith.mulf %325, %361 : vector<4x16xf32>
    %366 = arith.mulf %360, %364 : vector<4x16xf32>
    %367 = arith.addf %365, %366 : vector<4x16xf32>
    %368 = math.tanh %367 : vector<4x16xf32>
    %369 = arith.mulf %368, %362 : vector<4x16xf32>
    %c0_289 = arith.constant 0 : index
    %c4_290 = arith.constant 4 : index
    %c0_291 = arith.constant 0 : index
    %c0_292 = arith.constant 0 : index
    %370 = vector.load %arg7[%c0_289, %c4_290, %c0_291, %c0_292] : memref<1x8x4x16xf32, #tpu.memory_space<vmem>>, vector<1x1x4x16xf32>
    %371 = vector.shape_cast %370 : vector<1x1x4x16xf32> to vector<4x16xf32>
    %372 = vector.shape_cast %369 : vector<4x16xf32> to vector<1x1x4x16xf32>
    tpu.vector_store %arg7[%c0_289, %c4_290, %c0_291, %c0_292], %372 {strides = array<i32>} : memref<1x8x4x16xf32, #tpu.memory_space<vmem>>, vector<1x1x4x16xf32>,
    %c5_293 = arith.constant 5 : index
    %c0_294 = arith.constant 0 : index
    %c0_295 = arith.constant 0 : index
    %373 = vector.load %arg8[%c5_293, %c0_294, %c0_295] : memref<8x16x16xf32, #tpu.memory_space<vmem>>, vector<1x16x16xf32>
    %374 = vector.shape_cast %373 : vector<1x16x16xf32> to vector<16x16xf32>
    %c0_296 = arith.constant 0 : index
    %c0_297 = arith.constant 0 : index
    %c0_298 = arith.constant 0 : index
    %375 = vector.load %arg3[%c0_296, %c0_297, %c0_298] : memref<3x16x16xf32, #tpu.memory_space<vmem>>, vector<1x16x16xf32>
    %376 = vector.shape_cast %375 : vector<1x16x16xf32> to vector<16x16xf32>
    %cst_299 = arith.constant dense<0.000000e+00> : vector<4x16xf32>
    %377 = tpu.matmul %369, %376, %cst_299 {dimension_numbers = #tpu.dot_dimension_numbers<[1], [0], [0], [1], [0, 0, 1, 1], [], []>} : vector<4x16xf32>, vector<16x16xf32>, vector<4x16xf32> -> vector<4x16xf32>
    %c0_300 = arith.constant 0 : index
    %c0_301 = arith.constant 0 : index
    %c0_302 = arith.constant 0 : index
    %378 = vector.load %arg5[%c0_300, %c0_301, %c0_302] : memref<3x16x4xf32, #tpu.memory_space<vmem>>, vector<1x16x4xf32>
    %379 = vector.shape_cast %378 : vector<1x16x4xf32> to vector<16x4xf32>
    %cst_303 = arith.constant dense<0.000000e+00> : vector<16x16xf32>
    %380 = tpu.matmul %379, %377, %cst_303 {dimension_numbers = #tpu.dot_dimension_numbers<[1], [0], [0], [1], [0, 0, 1, 1], [], []>} : vector<16x4xf32>, vector<4x16xf32>, vector<16x16xf32> -> vector<16x16xf32>
    %381 = arith.addf %374, %380 : vector<16x16xf32>
    %c1_304 = arith.constant 1 : index
    %c0_305 = arith.constant 0 : index
    %c0_306 = arith.constant 0 : index
    %382 = vector.load %arg3[%c1_304, %c0_305, %c0_306] : memref<3x16x16xf32, #tpu.memory_space<vmem>>, vector<1x16x16xf32>
    %383 = vector.shape_cast %382 : vector<1x16x16xf32> to vector<16x16xf32>
    %cst_307 = arith.constant dense<0.000000e+00> : vector<4x16xf32>
    %384 = tpu.matmul %369, %383, %cst_307 {dimension_numbers = #tpu.dot_dimension_numbers<[1], [0], [0], [1], [0, 0, 1, 1], [], []>} : vector<4x16xf32>, vector<16x16xf32>, vector<4x16xf32> -> vector<4x16xf32>
    %c1_308 = arith.constant 1 : index
    %c0_309 = arith.constant 0 : index
    %c0_310 = arith.constant 0 : index
    %385 = vector.load %arg5[%c1_308, %c0_309, %c0_310] : memref<3x16x4xf32, #tpu.memory_space<vmem>>, vector<1x16x4xf32>
    %386 = vector.shape_cast %385 : vector<1x16x4xf32> to vector<16x4xf32>
    %cst_311 = arith.constant dense<0.000000e+00> : vector<16x16xf32>
    %387 = tpu.matmul %386, %384, %cst_311 {dimension_numbers = #tpu.dot_dimension_numbers<[1], [0], [0], [1], [0, 0, 1, 1], [], []>} : vector<16x4xf32>, vector<4x16xf32>, vector<16x16xf32> -> vector<16x16xf32>
    %388 = arith.addf %381, %387 : vector<16x16xf32>
    %c2_312 = arith.constant 2 : index
    %c0_313 = arith.constant 0 : index
    %c0_314 = arith.constant 0 : index
    %389 = vector.load %arg3[%c2_312, %c0_313, %c0_314] : memref<3x16x16xf32, #tpu.memory_space<vmem>>, vector<1x16x16xf32>
    %390 = vector.shape_cast %389 : vector<1x16x16xf32> to vector<16x16xf32>
    %cst_315 = arith.constant dense<0.000000e+00> : vector<4x16xf32>
    %391 = tpu.matmul %369, %390, %cst_315 {dimension_numbers = #tpu.dot_dimension_numbers<[1], [0], [0], [1], [0, 0, 1, 1], [], []>} : vector<4x16xf32>, vector<16x16xf32>, vector<4x16xf32> -> vector<4x16xf32>
    %c2_316 = arith.constant 2 : index
    %c0_317 = arith.constant 0 : index
    %c0_318 = arith.constant 0 : index
    %392 = vector.load %arg5[%c2_316, %c0_317, %c0_318] : memref<3x16x4xf32, #tpu.memory_space<vmem>>, vector<1x16x4xf32>
    %393 = vector.shape_cast %392 : vector<1x16x4xf32> to vector<16x4xf32>
    %cst_319 = arith.constant dense<0.000000e+00> : vector<16x16xf32>
    %394 = tpu.matmul %393, %391, %cst_319 {dimension_numbers = #tpu.dot_dimension_numbers<[1], [0], [0], [1], [0, 0, 1, 1], [], []>} : vector<16x4xf32>, vector<4x16xf32>, vector<16x16xf32> -> vector<16x16xf32>
    %395 = arith.addf %388, %394 : vector<16x16xf32>
    %396 = vector.extract_strided_slice %395 {offsets = [0, 0], sizes = [12, 16], strides = [1, 1]} : vector<16x16xf32> to vector<12x16xf32>
    %397 = arith.negf %396 : vector<12x16xf32>
    %398 = math.exp %397 : vector<12x16xf32>
    %cst_320 = arith.constant 1.000000e+00 : f32
    %399 = vector.broadcast %cst_320 : f32 to vector<12x16xf32>
    %400 = arith.addf %399, %398 : vector<12x16xf32>
    %401 = arith.divf %399, %400 : vector<12x16xf32>
    %402 = vector.extract_strided_slice %401 {offsets = [0, 0], sizes = [4, 16], strides = [1, 1]} : vector<12x16xf32> to vector<4x16xf32>
    %403 = vector.extract_strided_slice %401 {offsets = [4, 0], sizes = [4, 16], strides = [1, 1]} : vector<12x16xf32> to vector<4x16xf32>
    %404 = vector.extract_strided_slice %401 {offsets = [8, 0], sizes = [4, 16], strides = [1, 1]} : vector<12x16xf32> to vector<4x16xf32>
    %405 = vector.extract_strided_slice %395 {offsets = [12, 0], sizes = [4, 16], strides = [1, 1]} : vector<16x16xf32> to vector<4x16xf32>
    %406 = math.tanh %405 : vector<4x16xf32>
    %407 = arith.mulf %367, %403 : vector<4x16xf32>
    %408 = arith.mulf %402, %406 : vector<4x16xf32>
    %409 = arith.addf %407, %408 : vector<4x16xf32>
    %410 = math.tanh %409 : vector<4x16xf32>
    %411 = arith.mulf %410, %404 : vector<4x16xf32>
    %c0_321 = arith.constant 0 : index
    %c5_322 = arith.constant 5 : index
    %c0_323 = arith.constant 0 : index
    %c0_324 = arith.constant 0 : index
    %412 = vector.load %arg7[%c0_321, %c5_322, %c0_323, %c0_324] : memref<1x8x4x16xf32, #tpu.memory_space<vmem>>, vector<1x1x4x16xf32>
    %413 = vector.shape_cast %412 : vector<1x1x4x16xf32> to vector<4x16xf32>
    %414 = vector.shape_cast %411 : vector<4x16xf32> to vector<1x1x4x16xf32>
    tpu.vector_store %arg7[%c0_321, %c5_322, %c0_323, %c0_324], %414 {strides = array<i32>} : memref<1x8x4x16xf32, #tpu.memory_space<vmem>>, vector<1x1x4x16xf32>,
    %c6_325 = arith.constant 6 : index
    %c0_326 = arith.constant 0 : index
    %c0_327 = arith.constant 0 : index
    %415 = vector.load %arg8[%c6_325, %c0_326, %c0_327] : memref<8x16x16xf32, #tpu.memory_space<vmem>>, vector<1x16x16xf32>
    %416 = vector.shape_cast %415 : vector<1x16x16xf32> to vector<16x16xf32>
    %c0_328 = arith.constant 0 : index
    %c0_329 = arith.constant 0 : index
    %c0_330 = arith.constant 0 : index
    %417 = vector.load %arg3[%c0_328, %c0_329, %c0_330] : memref<3x16x16xf32, #tpu.memory_space<vmem>>, vector<1x16x16xf32>
    %418 = vector.shape_cast %417 : vector<1x16x16xf32> to vector<16x16xf32>
    %cst_331 = arith.constant dense<0.000000e+00> : vector<4x16xf32>
    %419 = tpu.matmul %411, %418, %cst_331 {dimension_numbers = #tpu.dot_dimension_numbers<[1], [0], [0], [1], [0, 0, 1, 1], [], []>} : vector<4x16xf32>, vector<16x16xf32>, vector<4x16xf32> -> vector<4x16xf32>
    %c0_332 = arith.constant 0 : index
    %c0_333 = arith.constant 0 : index
    %c0_334 = arith.constant 0 : index
    %420 = vector.load %arg5[%c0_332, %c0_333, %c0_334] : memref<3x16x4xf32, #tpu.memory_space<vmem>>, vector<1x16x4xf32>
    %421 = vector.shape_cast %420 : vector<1x16x4xf32> to vector<16x4xf32>
    %cst_335 = arith.constant dense<0.000000e+00> : vector<16x16xf32>
    %422 = tpu.matmul %421, %419, %cst_335 {dimension_numbers = #tpu.dot_dimension_numbers<[1], [0], [0], [1], [0, 0, 1, 1], [], []>} : vector<16x4xf32>, vector<4x16xf32>, vector<16x16xf32> -> vector<16x16xf32>
    %423 = arith.addf %416, %422 : vector<16x16xf32>
    %c1_336 = arith.constant 1 : index
    %c0_337 = arith.constant 0 : index
    %c0_338 = arith.constant 0 : index
    %424 = vector.load %arg3[%c1_336, %c0_337, %c0_338] : memref<3x16x16xf32, #tpu.memory_space<vmem>>, vector<1x16x16xf32>
    %425 = vector.shape_cast %424 : vector<1x16x16xf32> to vector<16x16xf32>
    %cst_339 = arith.constant dense<0.000000e+00> : vector<4x16xf32>
    %426 = tpu.matmul %411, %425, %cst_339 {dimension_numbers = #tpu.dot_dimension_numbers<[1], [0], [0], [1], [0, 0, 1, 1], [], []>} : vector<4x16xf32>, vector<16x16xf32>, vector<4x16xf32> -> vector<4x16xf32>
    %c1_340 = arith.constant 1 : index
    %c0_341 = arith.constant 0 : index
    %c0_342 = arith.constant 0 : index
    %427 = vector.load %arg5[%c1_340, %c0_341, %c0_342] : memref<3x16x4xf32, #tpu.memory_space<vmem>>, vector<1x16x4xf32>
    %428 = vector.shape_cast %427 : vector<1x16x4xf32> to vector<16x4xf32>
    %cst_343 = arith.constant dense<0.000000e+00> : vector<16x16xf32>
    %429 = tpu.matmul %428, %426, %cst_343 {dimension_numbers = #tpu.dot_dimension_numbers<[1], [0], [0], [1], [0, 0, 1, 1], [], []>} : vector<16x4xf32>, vector<4x16xf32>, vector<16x16xf32> -> vector<16x16xf32>
    %430 = arith.addf %423, %429 : vector<16x16xf32>
    %c2_344 = arith.constant 2 : index
    %c0_345 = arith.constant 0 : index
    %c0_346 = arith.constant 0 : index
    %431 = vector.load %arg3[%c2_344, %c0_345, %c0_346] : memref<3x16x16xf32, #tpu.memory_space<vmem>>, vector<1x16x16xf32>
    %432 = vector.shape_cast %431 : vector<1x16x16xf32> to vector<16x16xf32>
    %cst_347 = arith.constant dense<0.000000e+00> : vector<4x16xf32>
    %433 = tpu.matmul %411, %432, %cst_347 {dimension_numbers = #tpu.dot_dimension_numbers<[1], [0], [0], [1], [0, 0, 1, 1], [], []>} : vector<4x16xf32>, vector<16x16xf32>, vector<4x16xf32> -> vector<4x16xf32>
    %c2_348 = arith.constant 2 : index
    %c0_349 = arith.constant 0 : index
    %c0_350 = arith.constant 0 : index
    %434 = vector.load %arg5[%c2_348, %c0_349, %c0_350] : memref<3x16x4xf32, #tpu.memory_space<vmem>>, vector<1x16x4xf32>
    %435 = vector.shape_cast %434 : vector<1x16x4xf32> to vector<16x4xf32>
    %cst_351 = arith.constant dense<0.000000e+00> : vector<16x16xf32>
    %436 = tpu.matmul %435, %433, %cst_351 {dimension_numbers = #tpu.dot_dimension_numbers<[1], [0], [0], [1], [0, 0, 1, 1], [], []>} : vector<16x4xf32>, vector<4x16xf32>, vector<16x16xf32> -> vector<16x16xf32>
    %437 = arith.addf %430, %436 : vector<16x16xf32>
    %438 = vector.extract_strided_slice %437 {offsets = [0, 0], sizes = [12, 16], strides = [1, 1]} : vector<16x16xf32> to vector<12x16xf32>
    %439 = arith.negf %438 : vector<12x16xf32>
    %440 = math.exp %439 : vector<12x16xf32>
    %cst_352 = arith.constant 1.000000e+00 : f32
    %441 = vector.broadcast %cst_352 : f32 to vector<12x16xf32>
    %442 = arith.addf %441, %440 : vector<12x16xf32>
    %443 = arith.divf %441, %442 : vector<12x16xf32>
    %444 = vector.extract_strided_slice %443 {offsets = [0, 0], sizes = [4, 16], strides = [1, 1]} : vector<12x16xf32> to vector<4x16xf32>
    %445 = vector.extract_strided_slice %443 {offsets = [4, 0], sizes = [4, 16], strides = [1, 1]} : vector<12x16xf32> to vector<4x16xf32>
    %446 = vector.extract_strided_slice %443 {offsets = [8, 0], sizes = [4, 16], strides = [1, 1]} : vector<12x16xf32> to vector<4x16xf32>
    %447 = vector.extract_strided_slice %437 {offsets = [12, 0], sizes = [4, 16], strides = [1, 1]} : vector<16x16xf32> to vector<4x16xf32>
    %448 = math.tanh %447 : vector<4x16xf32>
    %449 = arith.mulf %409, %445 : vector<4x16xf32>
    %450 = arith.mulf %444, %448 : vector<4x16xf32>
    %451 = arith.addf %449, %450 : vector<4x16xf32>
    %452 = math.tanh %451 : vector<4x16xf32>
    %453 = arith.mulf %452, %446 : vector<4x16xf32>
    %c0_353 = arith.constant 0 : index
    %c6_354 = arith.constant 6 : index
    %c0_355 = arith.constant 0 : index
    %c0_356 = arith.constant 0 : index
    %454 = vector.load %arg7[%c0_353, %c6_354, %c0_355, %c0_356] : memref<1x8x4x16xf32, #tpu.memory_space<vmem>>, vector<1x1x4x16xf32>
    %455 = vector.shape_cast %454 : vector<1x1x4x16xf32> to vector<4x16xf32>
    %456 = vector.shape_cast %453 : vector<4x16xf32> to vector<1x1x4x16xf32>
    tpu.vector_store %arg7[%c0_353, %c6_354, %c0_355, %c0_356], %456 {strides = array<i32>} : memref<1x8x4x16xf32, #tpu.memory_space<vmem>>, vector<1x1x4x16xf32>,
    %c7_357 = arith.constant 7 : index
    %c0_358 = arith.constant 0 : index
    %c0_359 = arith.constant 0 : index
    %457 = vector.load %arg8[%c7_357, %c0_358, %c0_359] : memref<8x16x16xf32, #tpu.memory_space<vmem>>, vector<1x16x16xf32>
    %458 = vector.shape_cast %457 : vector<1x16x16xf32> to vector<16x16xf32>
    %c0_360 = arith.constant 0 : index
    %c0_361 = arith.constant 0 : index
    %c0_362 = arith.constant 0 : index
    %459 = vector.load %arg3[%c0_360, %c0_361, %c0_362] : memref<3x16x16xf32, #tpu.memory_space<vmem>>, vector<1x16x16xf32>
    %460 = vector.shape_cast %459 : vector<1x16x16xf32> to vector<16x16xf32>
    %cst_363 = arith.constant dense<0.000000e+00> : vector<4x16xf32>
    %461 = tpu.matmul %453, %460, %cst_363 {dimension_numbers = #tpu.dot_dimension_numbers<[1], [0], [0], [1], [0, 0, 1, 1], [], []>} : vector<4x16xf32>, vector<16x16xf32>, vector<4x16xf32> -> vector<4x16xf32>
    %c0_364 = arith.constant 0 : index
    %c0_365 = arith.constant 0 : index
    %c0_366 = arith.constant 0 : index
    %462 = vector.load %arg5[%c0_364, %c0_365, %c0_366] : memref<3x16x4xf32, #tpu.memory_space<vmem>>, vector<1x16x4xf32>
    %463 = vector.shape_cast %462 : vector<1x16x4xf32> to vector<16x4xf32>
    %cst_367 = arith.constant dense<0.000000e+00> : vector<16x16xf32>
    %464 = tpu.matmul %463, %461, %cst_367 {dimension_numbers = #tpu.dot_dimension_numbers<[1], [0], [0], [1], [0, 0, 1, 1], [], []>} : vector<16x4xf32>, vector<4x16xf32>, vector<16x16xf32> -> vector<16x16xf32>
    %465 = arith.addf %458, %464 : vector<16x16xf32>
    %c1_368 = arith.constant 1 : index
    %c0_369 = arith.constant 0 : index
    %c0_370 = arith.constant 0 : index
    %466 = vector.load %arg3[%c1_368, %c0_369, %c0_370] : memref<3x16x16xf32, #tpu.memory_space<vmem>>, vector<1x16x16xf32>
    %467 = vector.shape_cast %466 : vector<1x16x16xf32> to vector<16x16xf32>
    %cst_371 = arith.constant dense<0.000000e+00> : vector<4x16xf32>
    %468 = tpu.matmul %453, %467, %cst_371 {dimension_numbers = #tpu.dot_dimension_numbers<[1], [0], [0], [1], [0, 0, 1, 1], [], []>} : vector<4x16xf32>, vector<16x16xf32>, vector<4x16xf32> -> vector<4x16xf32>
    %c1_372 = arith.constant 1 : index
    %c0_373 = arith.constant 0 : index
    %c0_374 = arith.constant 0 : index
    %469 = vector.load %arg5[%c1_372, %c0_373, %c0_374] : memref<3x16x4xf32, #tpu.memory_space<vmem>>, vector<1x16x4xf32>
    %470 = vector.shape_cast %469 : vector<1x16x4xf32> to vector<16x4xf32>
    %cst_375 = arith.constant dense<0.000000e+00> : vector<16x16xf32>
    %471 = tpu.matmul %470, %468, %cst_375 {dimension_numbers = #tpu.dot_dimension_numbers<[1], [0], [0], [1], [0, 0, 1, 1], [], []>} : vector<16x4xf32>, vector<4x16xf32>, vector<16x16xf32> -> vector<16x16xf32>
    %472 = arith.addf %465, %471 : vector<16x16xf32>
    %c2_376 = arith.constant 2 : index
    %c0_377 = arith.constant 0 : index
    %c0_378 = arith.constant 0 : index
    %473 = vector.load %arg3[%c2_376, %c0_377, %c0_378] : memref<3x16x16xf32, #tpu.memory_space<vmem>>, vector<1x16x16xf32>
    %474 = vector.shape_cast %473 : vector<1x16x16xf32> to vector<16x16xf32>
    %cst_379 = arith.constant dense<0.000000e+00> : vector<4x16xf32>
    %475 = tpu.matmul %453, %474, %cst_379 {dimension_numbers = #tpu.dot_dimension_numbers<[1], [0], [0], [1], [0, 0, 1, 1], [], []>} : vector<4x16xf32>, vector<16x16xf32>, vector<4x16xf32> -> vector<4x16xf32>
    %c2_380 = arith.constant 2 : index
    %c0_381 = arith.constant 0 : index
    %c0_382 = arith.constant 0 : index
    %476 = vector.load %arg5[%c2_380, %c0_381, %c0_382] : memref<3x16x4xf32, #tpu.memory_space<vmem>>, vector<1x16x4xf32>
    %477 = vector.shape_cast %476 : vector<1x16x4xf32> to vector<16x4xf32>
    %cst_383 = arith.constant dense<0.000000e+00> : vector<16x16xf32>
    %478 = tpu.matmul %477, %475, %cst_383 {dimension_numbers = #tpu.dot_dimension_numbers<[1], [0], [0], [1], [0, 0, 1, 1], [], []>} : vector<16x4xf32>, vector<4x16xf32>, vector<16x16xf32> -> vector<16x16xf32>
    %479 = arith.addf %472, %478 : vector<16x16xf32>
    %480 = vector.extract_strided_slice %479 {offsets = [0, 0], sizes = [12, 16], strides = [1, 1]} : vector<16x16xf32> to vector<12x16xf32>
    %481 = arith.negf %480 : vector<12x16xf32>
    %482 = math.exp %481 : vector<12x16xf32>
    %cst_384 = arith.constant 1.000000e+00 : f32
    %483 = vector.broadcast %cst_384 : f32 to vector<12x16xf32>
    %484 = arith.addf %483, %482 : vector<12x16xf32>
    %485 = arith.divf %483, %484 : vector<12x16xf32>
    %486 = vector.extract_strided_slice %485 {offsets = [0, 0], sizes = [4, 16], strides = [1, 1]} : vector<12x16xf32> to vector<4x16xf32>
    %487 = vector.extract_strided_slice %485 {offsets = [4, 0], sizes = [4, 16], strides = [1, 1]} : vector<12x16xf32> to vector<4x16xf32>
    %488 = vector.extract_strided_slice %485 {offsets = [8, 0], sizes = [4, 16], strides = [1, 1]} : vector<12x16xf32> to vector<4x16xf32>
    %489 = vector.extract_strided_slice %479 {offsets = [12, 0], sizes = [4, 16], strides = [1, 1]} : vector<16x16xf32> to vector<4x16xf32>
    %490 = math.tanh %489 : vector<4x16xf32>
    %491 = arith.mulf %451, %487 : vector<4x16xf32>
    %492 = arith.mulf %486, %490 : vector<4x16xf32>
    %493 = arith.addf %491, %492 : vector<4x16xf32>
    %494 = math.tanh %493 : vector<4x16xf32>
    %495 = arith.mulf %494, %488 : vector<4x16xf32>
    %c0_385 = arith.constant 0 : index
    %c7_386 = arith.constant 7 : index
    %c0_387 = arith.constant 0 : index
    %c0_388 = arith.constant 0 : index
    %496 = vector.load %arg7[%c0_385, %c7_386, %c0_387, %c0_388] : memref<1x8x4x16xf32, #tpu.memory_space<vmem>>, vector<1x1x4x16xf32>
    %497 = vector.shape_cast %496 : vector<1x1x4x16xf32> to vector<4x16xf32>
    %498 = vector.shape_cast %495 : vector<4x16xf32> to vector<1x1x4x16xf32>
    tpu.vector_store %arg7[%c0_385, %c7_386, %c0_387, %c0_388], %498 {strides = array<i32>} : memref<1x8x4x16xf32, #tpu.memory_space<vmem>>, vector<1x1x4x16xf32>,
    %c0_389 = arith.constant 0 : index
    %c0_390 = arith.constant 0 : index
    %499 = vector.load %arg9[%c0_389, %c0_390] : memref<4x16xf32, #tpu.memory_space<vmem>>, vector<4x16xf32>
    tpu.vector_store %arg9[%c0_389, %c0_390], %495 {strides = array<i32>} : memref<4x16xf32, #tpu.memory_space<vmem>>, vector<4x16xf32>,
    %c0_391 = arith.constant 0 : index
    %c0_392 = arith.constant 0 : index
    %500 = vector.load %arg10[%c0_391, %c0_392] : memref<4x16xf32, #tpu.memory_space<vmem>>, vector<4x16xf32>
    tpu.vector_store %arg10[%c0_391, %c0_392], %493 {strides = array<i32>} : memref<4x16xf32, #tpu.memory_space<vmem>>, vector<4x16xf32>,
    return
  }
  func.func @transform_0(%arg0: i32, %arg1: i32) -> (i32, i32, i32) {
    %c0_i32 = arith.constant 0 : i32
    %c0_i32_0 = arith.constant 0 : i32
    return %arg0, %arg1, %c0_i32 : i32, i32, i32
  }
  func.func @transform_1(%arg0: i32, %arg1: i32) -> (i32, i32, i32) {
    %c0_i32 = arith.constant 0 : i32
    %c0_i32_0 = arith.constant 0 : i32
    %c0_i32_1 = arith.constant 0 : i32
    %c0_i32_2 = arith.constant 0 : i32
    return %c0_i32, %c0_i32_0, %c0_i32_1 : i32, i32, i32
  }
  func.func @transform_2(%arg0: i32, %arg1: i32) -> (i32, i32, i32) {
    %c0_i32 = arith.constant 0 : i32
    %c0_i32_0 = arith.constant 0 : i32
    %c0_i32_1 = arith.constant 0 : i32
    %c0_i32_2 = arith.constant 0 : i32
    return %c0_i32, %c0_i32_0, %c0_i32_1 : i32, i32, i32
  }
  func.func @transform_3(%arg0: i32, %arg1: i32) -> (i32, i32, i32) {
    %c0_i32 = arith.constant 0 : i32
    %c0_i32_0 = arith.constant 0 : i32
    %c0_i32_1 = arith.constant 0 : i32
    %c0_i32_2 = arith.constant 0 : i32
    return %c0_i32, %c0_i32_0, %c0_i32_1 : i32, i32, i32
  }
  func.func @transform_4(%arg0: i32, %arg1: i32) -> (i32, i32) {
    %c0_i32 = arith.constant 0 : i32
    %c0_i32_0 = arith.constant 0 : i32
    %c0_i32_1 = arith.constant 0 : i32
    return %c0_i32, %c0_i32_0 : i32, i32
  }
  func.func @transform_5(%arg0: i32, %arg1: i32) -> (i32, i32, i32, i32) {
    %c0_i32 = arith.constant 0 : i32
    %c0_i32_0 = arith.constant 0 : i32
    %c0_i32_1 = arith.constant 0 : i32
    return %arg0, %arg1, %c0_i32, %c0_i32_0 : i32, i32, i32, i32
  }
}

</mosaic_0001>

<llo_original>
// kernel: tpu_custom_call.1
$region0: #{tpu_custom_call.1}
  #allocation0 [shape = 'u32[]', space=smem, size = 0x4, offset = 0x4, fixed_abs, tag = 'smem constant byte address 0x4 - core index']
  #allocation1 [shape = 'u32[144,128]{1,0:T(1,128)}', space=vmem, size = 0x12000, scoped, tag = 'internal scratch']
  #allocation2 [shape = 'f32[8,16,16]{2,1,0:T(8,128)}', space=vmem, size = 0x10000, scoped, tag = 'scratch operand']
  #allocation3 [shape = 'f32[4,16]{1,0:T(4,128)}', space=vmem, size = 0x800, scoped, tag = 'scratch operand']
  #allocation4 [shape = 'f32[4,16]{1,0:T(4,128)}', space=vmem, size = 0x800, scoped, tag = 'scratch operand']
  %s0 = inlined_call_operand.vmem [shape: f32[2,32,16], index: 0, kind: input, shape index: {}]
  %s1 = inlined_call_operand.vmem [shape: f32[3,16,16], index: 1, kind: input, shape index: {}]
  %s2 = inlined_call_operand.vmem [shape: f32[3,16,4], index: 2, kind: input, shape index: {}]
  %s3 = inlined_call_operand.vmem [shape: f32[3,16,4], index: 3, kind: input, shape index: {}]
  %s4 = inlined_call_operand.vmem [shape: f32[16,1], index: 4, kind: input, shape index: {}]
  %s5 = inlined_call_operand.hbm [shape: f32[2,8,4,16], index: 5, kind: output, shape index: {}]
  %s6 = sld [smem:[#allocation0]]
  $region57: #{tpu_custom_call.1} parent=0
    _
  %s8 = ssub.s32 1, %s6
  %s9 = scalar_select 0, %s8, %s6
  $region1: #{tpu_custom_call.1} parent=0
    #allocation5 [shape = 'u8[32768]{0}', space=vmem, size = 0x8000, scoped, tag = 'output window, operand 0']
    #allocation6 [shape = 's32[2]{0}', space=sflag, size = 0x8, scoped, tag = 'scoped memory for tpu_custom_call.1']
    %10 = vsyncpa [#allocation6], 0
    %s11 = scalar_lea.sflag [#allocation6], 1
    %12 = vsyncpa %s11, 0
    loop: start=0, step=1, limit=4
    $region2: #{tpu_custom_call.1} parent=1 // loop_pre_header
      _
    $region3: #{tpu_custom_call.1} parent=1 // loop_header
      %s14 = sphi 0, %s18
      %p15 = scmp.ge.s32.totalorder %s14, 4
      %s21 = sphi 0, %s33
      %s22 = sphi 0, %s29
      %s23 = sphi 0, %s21
      %s24 = sphi 0, %s22
      %s25 = sphi 0, %s23
      %s26 = sphi 0, %s24
      %s38 = sphi 0, %s40
      %s41 = sphi 0, %s38
      %s42 = sphi 0, %s41
      %s58 = sphi 0, %s42
      %s62 = sphi 0, %s62
      %s64 = sphi 0, %s62
      %s65 = sphi 0, %s64
      %s79 = sphi 0, %s65
      %s83 = sphi 0, %s83
      %s85 = sphi 0, %s83
      %s86 = sphi 0, %s85
      %s100 = sphi 0, %s86
      %s104 = sphi 0, %s104
      %s106 = sphi 0, %s104
      %s107 = sphi 0, %s106
      %s121 = sphi 0, %s107
      %s125 = sphi 0, %s125
      %s127 = sphi 0, %s125
      %s128 = sphi 0, %s127
      %s142 = sphi 0, %s128
      %s150 = sphi 0, %s152
      %s153 = sphi 0, %s150
      %s154 = sphi 0, %s153
      %s170 = sphi 0, %s154
    $region4: #{tpu_custom_call.1} parent=1 // loop_header_branch
      %17 = sbr.rel (%p15) target = $region8
    $region5: #{tpu_custom_call.1} parent=1 // loop_body
      %s19 = ssub.s32 %s14, 1
      %s20 = ssub.s32 %s14, 2
      %s27 = sadd.s32 1, %s22
      %p28 = scmp.ge.s32.totalorder %s27, 1
      %s29 = scalar_select %p28, 0, %s27
      %s30 = sadd.s32 1, %s21
      %s31 = scalar_select %p28, %s30, %s21
      %p32 = scmp.ge.s32.totalorder %s31, 2
      %s33 = scalar_select %p32, 0, %s31
      %s34 = ssub.s32 %s21, %s33
      %s35 = ssub.s32 %s22, %s29
      %s36 = sor.u32 %s34, %s35
      %p37 = scmp.eq.s32.totalorder %s36, 0
      %s39 = sadd.s32 %s38, 1
      %s40 = scalar_select %p37, %s38, %s39
      %p43 = pneg %p37
      %p44 = scmp.eq.s32.totalorder %s14, 1
      %p45 = por %p43, %p44
      %p46 = scmp.ne.s32.totalorder %s38, %s41
      %p47 = scmp.eq.s32.totalorder %s14, 0
      %p48 = por %p46, %p47
      %p49 = scmp.ne.s32.totalorder %s38, %s41
      %p50 = scmp.eq.s32.totalorder %s19, 1
      %p51 = por %p49, %p50
      %p52 = scmp.ne.s32.totalorder %s41, %s42
      %p53 = scmp.eq.s32.totalorder %s19, 0
      %p54 = por %p52, %p53
      %p55 = scmp.ne.s32.totalorder %s41, %s42
      %p56 = scmp.eq.s32.totalorder %s20, 1
      %p57 = por %p55, %p56
      %p59 = scmp.ne.s32.totalorder %s42, %s58
      %p60 = scmp.eq.s32.totalorder %s20, 0
      %p61 = por %p59, %p60
      %s63 = sadd.s32 %s62, 1
      %p66 = scmp.eq.s32.totalorder %s14, 1
      %p67 = scmp.ne.s32.totalorder %s62, %s64
      %p68 = scmp.eq.s32.totalorder %s14, 0
      %p69 = por %p67, %p68
      %p70 = scmp.ne.s32.totalorder %s62, %s64
      %p71 = scmp.eq.s32.totalorder %s19, 1
      %p72 = por %p70, %p71
      %p73 = scmp.ne.s32.totalorder %s64, %s65
      %p74 = scmp.eq.s32.totalorder %s19, 0
      %p75 = por %p73, %p74
      %p76 = scmp.ne.s32.totalorder %s64, %s65
      %p77 = scmp.eq.s32.totalorder %s20, 1
      %p78 = por %p76, %p77
      %p80 = scmp.ne.s32.totalorder %s65, %s79
      %p81 = scmp.eq.s32.totalorder %s20, 0
      %p82 = por %p80, %p81
      %s84 = sadd.s32 %s83, 1
      %p87 = scmp.eq.s32.totalorder %s14, 1
      %p88 = scmp.ne.s32.totalorder %s83, %s85
      %p89 = scmp.eq.s32.totalorder %s14, 0
      %p90 = por %p88, %p89
      %p91 = scmp.ne.s32.totalorder %s83, %s85
      %p92 = scmp.eq.s32.totalorder %s19, 1
      %p93 = por %p91, %p92
      %p94 = scmp.ne.s32.totalorder %s85, %s86
      %p95 = scmp.eq.s32.totalorder %s19, 0
      %p96 = por %p94, %p95
      %p97 = scmp.ne.s32.totalorder %s85, %s86
      %p98 = scmp.eq.s32.totalorder %s20, 1
      %p99 = por %p97, %p98
      %p101 = scmp.ne.s32.totalorder %s86, %s100
      %p102 = scmp.eq.s32.totalorder %s20, 0
      %p103 = por %p101, %p102
      %s105 = sadd.s32 %s104, 1
      %p108 = scmp.eq.s32.totalorder %s14, 1
      %p109 = scmp.ne.s32.totalorder %s104, %s106
      %p110 = scmp.eq.s32.totalorder %s14, 0
      %p111 = por %p109, %p110
      %p112 = scmp.ne.s32.totalorder %s104, %s106
      %p113 = scmp.eq.s32.totalorder %s19, 1
      %p114 = por %p112, %p113
      %p115 = scmp.ne.s32.totalorder %s106, %s107
      %p116 = scmp.eq.s32.totalorder %s19, 0
      %p117 = por %p115, %p116
      %p118 = scmp.ne.s32.totalorder %s106, %s107
      %p119 = scmp.eq.s32.totalorder %s20, 1
      %p120 = por %p118, %p119
      %p122 = scmp.ne.s32.totalorder %s107, %s121
      %p123 = scmp.eq.s32.totalorder %s20, 0
      %p124 = por %p122, %p123
      %s126 = sadd.s32 %s125, 1
      %p129 = scmp.eq.s32.totalorder %s14, 1
      %p130 = scmp.ne.s32.totalorder %s125, %s127
      %p131 = scmp.eq.s32.totalorder %s14, 0
      %p132 = por %p130, %p131
      %p133 = scmp.ne.s32.totalorder %s125, %s127
      %p134 = scmp.eq.s32.totalorder %s19, 1
      %p135 = por %p133, %p134
      %p136 = scmp.ne.s32.totalorder %s127, %s128
      %p137 = scmp.eq.s32.totalorder %s19, 0
      %p138 = por %p136, %p137
      %p139 = scmp.ne.s32.totalorder %s127, %s128
      %p140 = scmp.eq.s32.totalorder %s20, 1
      %p141 = por %p139, %p140
      %p143 = scmp.ne.s32.totalorder %s128, %s142
      %p144 = scmp.eq.s32.totalorder %s20, 0
      %p145 = por %p143, %p144
      %s146 = ssub.s32 %s21, %s33
      %s147 = ssub.s32 %s22, %s29
      %s148 = sor.u32 %s146, %s147
      %p149 = scmp.eq.s32.totalorder %s148, 0
      %s151 = sadd.s32 %s150, 1
      %s152 = scalar_select %p149, %s150, %s151
      %p155 = pneg %p149
      %p156 = scmp.eq.s32.totalorder %s14, 1
      %p157 = por %p155, %p156
      %p158 = scmp.ne.s32.totalorder %s150, %s153
      %p159 = scmp.eq.s32.totalorder %s14, 0
      %p160 = por %p158, %p159
      %p161 = scmp.ne.s32.totalorder %s150, %s153
      %p162 = scmp.eq.s32.totalorder %s19, 1
      %p163 = por %p161, %p162
      %p164 = scmp.ne.s32.totalorder %s153, %s154
      %p165 = scmp.eq.s32.totalorder %s19, 0
      %p166 = por %p164, %p165
      %p167 = scmp.ne.s32.totalorder %s153, %s154
      %p168 = scmp.eq.s32.totalorder %s20, 1
      %p169 = por %p167, %p168
      %p171 = scmp.ne.s32.totalorder %s154, %s170
      %p172 = scmp.eq.s32.totalorder %s20, 0
      %p173 = por %p171, %p172
      %p174 = scmp.le.s32.totalorder 1, %s14
      %p175 = scmp.lt.s32.totalorder %s14, 3
      %p176 = pnand %p174, %p175
      %p177 = pneg %p176
      // Predicated region
      $region9: #{tpu_custom_call.1} parent=5 // pred_check
        _
      $region10: #{tpu_custom_call.1} parent=5 // pred_check_branch
        %179 = sbr.rel (%p176) target = $region12
      $region11: #{tpu_custom_call.1} parent=5 // pred_region
        %s180 = ssub.s32 %s14, 1
        // Predicated region
        $region13: #{tpu_custom_call.1} parent=11 // pred_check
          %p181 = pneg %p75
        $region14: #{tpu_custom_call.1} parent=11 // pred_check_branch
          %183 = sbr.rel (%p181) target = $region16
        $region15: #{tpu_custom_call.1} parent=11 // pred_region
          _
        $region16: #{tpu_custom_call.1} parent=11 // pred_fallthru
          _
        // Predicated region
        $region17: #{tpu_custom_call.1} parent=11 // pred_check
          %p184 = pneg %p96
        $region18: #{tpu_custom_call.1} parent=11 // pred_check_branch
          %186 = sbr.rel (%p184) target = $region20
        $region19: #{tpu_custom_call.1} parent=11 // pred_region
          _
        $region20: #{tpu_custom_call.1} parent=11 // pred_fallthru
          _
        // Predicated region
        $region21: #{tpu_custom_call.1} parent=11 // pred_check
          %p187 = pneg %p117
        $region22: #{tpu_custom_call.1} parent=11 // pred_check_branch
          %189 = sbr.rel (%p187) target = $region24
        $region23: #{tpu_custom_call.1} parent=11 // pred_region
          _
        $region24: #{tpu_custom_call.1} parent=11 // pred_fallthru
          _
        // Predicated region
        $region25: #{tpu_custom_call.1} parent=11 // pred_check
          %p190 = pneg %p138
        $region26: #{tpu_custom_call.1} parent=11 // pred_check_branch
          %192 = sbr.rel (%p190) target = $region28
        $region27: #{tpu_custom_call.1} parent=11 // pred_region
          _
        $region28: #{tpu_custom_call.1} parent=11 // pred_fallthru
          _
      $region12: #{tpu_custom_call.1} parent=5 // pred_fallthru
        _
      %p193 = scmp.lt.s32.totalorder %s14, 2
      // Predicated region
      $region29: #{tpu_custom_call.1} parent=5 // pred_check
        %p194 = pneg %p193
      $region30: #{tpu_custom_call.1} parent=5 // pred_check_branch
        %196 = sbr.rel (%p194) target = $region32
      $region31: #{tpu_custom_call.1} parent=5 // pred_region
        // Predicated region
        $region33: #{tpu_custom_call.1} parent=31 // pred_check
          %p197 = pneg %p48
        $region34: #{tpu_custom_call.1} parent=31 // pred_check_branch
          %199 = sbr.rel (%p197) target = $region36
        $region35: #{tpu_custom_call.1} parent=31 // pred_region
          %s200 = smul.u32 4, %s22
          %p201 = scmp.lt.s32.totalorder %s21, 1
          %s202 = scalar_select %p201, %s21, 1
          %p203 = scmp.lt.s32.totalorder %s200, 3
          %s204 = scalar_select %p203, %s200, 3
          %s205 = smul.addr %s202, 4
          %s206 = sadd.s32 %s204, %s205
          %s207 = smul.addr %s206, 8
          %s208 = scalar_lea.vmem %s0, %s207
          %s209 = smul.u32 4, %s22
        $region36: #{tpu_custom_call.1} parent=31 // pred_fallthru
          _
      $region32: #{tpu_custom_call.1} parent=5 // pred_fallthru
        _
      %p210 = scmp.le.s32.totalorder 1, %s14
      %p211 = scmp.lt.s32.totalorder %s14, 3
      %p212 = pnand %p210, %p211
      %p213 = pneg %p212
      // Predicated region
      $region37: #{tpu_custom_call.1} parent=5 // pred_check
        _
      $region38: #{tpu_custom_call.1} parent=5 // pred_check_branch
        %215 = sbr.rel (%p212) target = $region40
      $region39: #{tpu_custom_call.1} parent=5 // pred_region
        %s216 = ssub.s32 %s14, 1
        %s217 = smul.u32 4, %s24
        %p218 = scmp.lt.s32.totalorder %s23, 1
        %s219 = scalar_select %p218, %s23, 1
        %p220 = scmp.lt.s32.totalorder %s217, 3
        %s221 = scalar_select %p220, %s217, 3
        %s222 = smul.addr %s219, 4
        %s223 = sadd.s32 %s221, %s222
        %s224 = smul.addr %s223, 8
        %s225 = scalar_lea.vmem %s0, %s224
        %p226 = pneg %p54
        %p227 = pneg %p51
        %p228 = pneg %p75
        %p229 = pneg %p72
        %p230 = pneg %p96
        %p231 = pneg %p93
        %p232 = pneg %p117
        %p233 = pneg %p114
        %p234 = pneg %p138
        %p235 = pneg %p135
        %p236 = pneg %p166
        %p237 = pneg %p163
        %s238 = sand.u32 %s153, 1
        %s239 = scalar_lea.sflag [#allocation6], %s238
        %s240 = sand.u32 %s153, 1
        %s241 = smul.addr %s240, 32
        %s242 = scalar_lea.vmem [#allocation5], %s241
        %s243 = smul.u32 4, %s24
        %p244 = scmp.lt.s32.totalorder %s23, 1
        %s245 = scalar_select %p244, %s23, 1
        %p246 = scmp.lt.s32.totalorder %s243, 3
        %s247 = scalar_select %p246, %s243, 3
        %s248 = smul.addr %s245, 4
        %s249 = sadd.s32 %s247, %s248
        %s250 = smul.addr %s249, 8
        %s251 = scalar_lea.vmem %s0, %s250
        %s252 = smul.u32 4, %s24
        %s253 = smul.u32 8, %s24
        %p254 = scmp.eq.s32.totalorder %s24, 0
        // Predicated region
        $region41: #{tpu_custom_call.1} parent=39 // pred_check
          %p255 = pneg %p254
        $region42: #{tpu_custom_call.1} parent=39 // pred_check_branch
          %257 = sbr.rel (%p255) target = $region44
        $region43: #{tpu_custom_call.1} parent=39 // pred_region
          %vm258 = vcmask 125952
          %259 = vst.msk [vmem:[#allocation3] sm:$0xf] %vm258, 0.0
          %260 = vst.msk [vmem:[#allocation4] sm:$0xf] %vm258, 0.0
        $region44: #{tpu_custom_call.1} parent=39 // pred_fallthru
          _
        %v261 = vld [vmem:[%s4] sm:$0xff]
        %v262 = vld [vmem:[%s4 + $0x8] sm:$0xff]
        %264 = vset.pattern.permute.xlu0 0
        %265 = vperm.xlu0 %264, %v261
        %v266 = vpop.permute.xlu0 %265
        %269 = vset.pattern.permute.xlu0 0
        %270 = vperm.xlu0 %269, %v262
        %v271 = vpop.permute.xlu0 %270
        %v273 = vld [vmem:[%s251] sm:$0xff]
        %v274 = vld [vmem:[%s251 + $0x8] sm:$0xff]
        %v275 = vld [vmem:[%s251 + $0x10] sm:$0xff]
        %v276 = vld [vmem:[%s251 + $0x18] sm:$0xff]
        %v277 = vld [vmem:[%s1] sm:$0xff]
        %v278 = vld [vmem:[%s1 + $0x8] sm:$0xff]
        %vm279 = vcmask 130048
        %v281 = vsel %vm279, %v273, 0
        %v284 = vsel %vm279, %v274, 0
        %v287 = vsel %vm279, %v275, 0
        %v290 = vsel %vm279, %v276, 0
        %292 = vmatprep.subr.mxu0 0.0
        %293 = vmatpush1.msra.mxu0 0.0
        %294 = vmatprep.subr.mxu0 0.0
        %295 = vmatpush1.msra.mxu0 0.0
        %296 = vmatprep.subr.mxu0 0.0
        %297 = vmatpush1.msra.mxu0 0.0
        %298 = vmatprep.subr.mxu0 0.0
        %299 = vmatpush1.msra.mxu0 0.0
        %300 = vmatprep.subr.mxu0 0.0
        %301 = vmatpush1.msra.mxu0 0.0
        %302 = vmatprep.subr.mxu0 0.0
        %303 = vmatpush1.msra.mxu0 0.0
        %304 = vmatprep.subr.mxu0 0.0
        %305 = vmatpush1.msra.mxu0 0.0
        %306 = vmatprep.subr.mxu0 0.0
        %307 = vmatpush1.msra.mxu0 0.0
        %308 = vmatprep.subr.mxu0 0.0
        %309 = vmatpush1.msra.mxu0 0.0
        %310 = vmatprep.subr.mxu0 0.0
        %311 = vmatpush1.msra.mxu0 0.0
        %312 = vmatprep.subr.mxu0 0.0
        %313 = vmatpush1.msra.mxu0 0.0
        %314 = vmatprep.subr.mxu0 0.0
        %315 = vmatpush1.msra.mxu0 0.0
        %316 = vmatprep.subr.mxu0 0.0
        %317 = vmatpush1.msra.mxu0 0.0
        %318 = vmatprep.subr.mxu0 0.0
        %319 = vmatpush1.msra.mxu0 0.0
        %320 = vmatprep.subr.mxu0 0.0
        %321 = vmatpush1.msra.mxu0 %v278
        %322 = vmatprep.subr.mxu0 0.0
        %323 = vmatpush1.msra.mxu0 %v277
        %324 = vmatprep.subr.mxu0 0.0
        %325 = vmatpush2.msra.mxu0 0.0
        %326 = vmatprep.subr.mxu0 0.0
        %327 = vmatpush2.msra.mxu0 0.0
        %328 = vmatprep.subr.mxu0 0.0
        %329 = vmatpush2.msra.mxu0 0.0
        %330 = vmatprep.subr.mxu0 0.0
        %331 = vmatpush2.msra.mxu0 0.0
        %332 = vmatprep.subr.mxu0 0.0
        %333 = vmatpush2.msra.mxu0 0.0
        %334 = vmatprep.subr.mxu0 0.0
        %335 = vmatpush2.msra.mxu0 0.0
        %336 = vmatprep.subr.mxu0 0.0
        %337 = vmatpush2.msra.mxu0 0.0
        %338 = vmatprep.subr.mxu0 0.0
        %339 = vmatpush2.msra.mxu0 0.0
        %340 = vmatprep.subr.mxu0 0.0
        %341 = vmatpush2.msra.mxu0 0.0
        %342 = vmatprep.subr.mxu0 0.0
        %343 = vmatpush2.msra.mxu0 0.0
        %344 = vmatprep.subr.mxu0 0.0
        %345 = vmatpush2.msra.mxu0 0.0
        %346 = vmatprep.subr.mxu0 0.0
        %347 = vmatpush2.msra.mxu0 0.0
        %348 = vmatprep.subr.mxu0 0.0
        %349 = vmatpush2.msra.mxu0 0.0
        %350 = vmatprep.subr.mxu0 0.0
        %351 = vmatpush2.msra.mxu0 0.0
        %352 = vmatprep.subr.mxu0 0.0
        %353 = vmatpush2.msra.mxu0 0.0
        %354 = vmatprep.subr.mxu0 0.0
        %355 = vmatpush2.msra.mxu0 0.0
        %356 = vmatprep.mubr.f32.mxu0 0.0
        %357 = vmatmul.mubr.f32.gmra.mxu0 %v281
        %v358 = vpop.f32.mrf.mxu0
        %v359 = vadd.f32 0.0, %v358
        %v360 = vpop.f32.mrf.mxu0
        %361 = vmatprep.mubr.f32.mxu0 0.0
        %362 = vmatmul.mubr.f32.gmra.mxu0 %v284
        %v363 = vpop.f32.mrf.mxu0
        %v364 = vadd.f32 0.0, %v363
        %v365 = vpop.f32.mrf.mxu0
        %366 = vmatprep.mubr.f32.mxu0 0.0
        %367 = vmatmul.mubr.f32.gmra.mxu0 %v287
        %v368 = vpop.f32.mrf.mxu0
        %v369 = vadd.f32 0.0, %v368
        %v370 = vpop.f32.mrf.mxu0
        %371 = vmatprep.mubr.f32.mxu0 0.0
        %372 = vmatmul.mubr.f32.gmra.mxu0 %v290
        %v373 = vpop.f32.mrf.mxu0
        %v374 = vadd.f32 0.0, %v373
        %v375 = vpop.f32.mrf.mxu0
        %376 = vdwg.mxu0
        %s377 = scalar_lea.vmem %s1, 16
        %v378 = vld [vmem:[%s377] sm:$0xff]
        %v379 = vld [vmem:[%s377 + $0x8] sm:$0xff]
        %380 = vmatprep.subr.mxu0 0.0
        %381 = vmatpush1.msra.mxu0 0.0
        %382 = vmatprep.subr.mxu0 0.0
        %383 = vmatpush1.msra.mxu0 0.0
        %384 = vmatprep.subr.mxu0 0.0
        %385 = vmatpush1.msra.mxu0 0.0
        %386 = vmatprep.subr.mxu0 0.0
        %387 = vmatpush1.msra.mxu0 0.0
        %388 = vmatprep.subr.mxu0 0.0
        %389 = vmatpush1.msra.mxu0 0.0
        %390 = vmatprep.subr.mxu0 0.0
        %391 = vmatpush1.msra.mxu0 0.0
        %392 = vmatprep.subr.mxu0 0.0
        %393 = vmatpush1.msra.mxu0 0.0
        %394 = vmatprep.subr.mxu0 0.0
        %395 = vmatpush1.msra.mxu0 0.0
        %396 = vmatprep.subr.mxu0 0.0
        %397 = vmatpush1.msra.mxu0 0.0
        %398 = vmatprep.subr.mxu0 0.0
        %399 = vmatpush1.msra.mxu0 0.0
        %400 = vmatprep.subr.mxu0 0.0
        %401 = vmatpush1.msra.mxu0 0.0
        %402 = vmatprep.subr.mxu0 0.0
        %403 = vmatpush1.msra.mxu0 0.0
        %404 = vmatprep.subr.mxu0 0.0
        %405 = vmatpush1.msra.mxu0 0.0
        %406 = vmatprep.subr.mxu0 0.0
        %407 = vmatpush1.msra.mxu0 0.0
        %408 = vmatprep.subr.mxu0 0.0
        %409 = vmatpush1.msra.mxu0 %v379
        %410 = vmatprep.subr.mxu0 0.0
        %411 = vmatpush1.msra.mxu0 %v378
        %412 = vmatprep.subr.mxu0 0.0
        %413 = vmatpush2.msra.mxu0 0.0
        %414 = vmatprep.subr.mxu0 0.0
        %415 = vmatpush2.msra.mxu0 0.0
        %416 = vmatprep.subr.mxu0 0.0
        %417 = vmatpush2.msra.mxu0 0.0
        %418 = vmatprep.subr.mxu0 0.0
        %419 = vmatpush2.msra.mxu0 0.0
        %420 = vmatprep.subr.mxu0 0.0
        %421 = vmatpush2.msra.mxu0 0.0
        %422 = vmatprep.subr.mxu0 0.0
        %423 = vmatpush2.msra.mxu0 0.0
        %424 = vmatprep.subr.mxu0 0.0
        %425 = vmatpush2.msra.mxu0 0.0
        %426 = vmatprep.subr.mxu0 0.0
        %427 = vmatpush2.msra.mxu0 0.0
        %428 = vmatprep.subr.mxu0 0.0
        %429 = vmatpush2.msra.mxu0 0.0
        %430 = vmatprep.subr.mxu0 0.0
        %431 = vmatpush2.msra.mxu0 0.0
        %432 = vmatprep.subr.mxu0 0.0
        %433 = vmatpush2.msra.mxu0 0.0
        %434 = vmatprep.subr.mxu0 0.0
        %435 = vmatpush2.msra.mxu0 0.0
        %436 = vmatprep.subr.mxu0 0.0
        %437 = vmatpush2.msra.mxu0 0.0
        %438 = vmatprep.subr.mxu0 0.0
        %439 = vmatpush2.msra.mxu0 0.0
        %440 = vmatprep.subr.mxu0 0.0
        %441 = vmatpush2.msra.mxu0 0.0
        %442 = vmatprep.subr.mxu0 0.0
        %443 = vmatpush2.msra.mxu0 0.0
        %444 = vmatprep.mubr.f32.mxu0 0.0
        %445 = vmatmul.mubr.f32.gmra.mxu0 %v281
        %v446 = vpop.f32.mrf.mxu0
        %v447 = vadd.f32 0.0, %v446
        %v448 = vpop.f32.mrf.mxu0
        %449 = vmatprep.mubr.f32.mxu0 0.0
        %450 = vmatmul.mubr.f32.gmra.mxu0 %v284
        %v451 = vpop.f32.mrf.mxu0
        %v452 = vadd.f32 0.0, %v451
        %v453 = vpop.f32.mrf.mxu0
        %454 = vmatprep.mubr.f32.mxu0 0.0
        %455 = vmatmul.mubr.f32.gmra.mxu0 %v287
        %v456 = vpop.f32.mrf.mxu0
        %v457 = vadd.f32 0.0, %v456
        %v458 = vpop.f32.mrf.mxu0
        %459 = vmatprep.mubr.f32.mxu0 0.0
        %460 = vmatmul.mubr.f32.gmra.mxu0 %v290
        %v461 = vpop.f32.mrf.mxu0
        %v462 = vadd.f32 0.0, %v461
        %v463 = vpop.f32.mrf.mxu0
        %464 = vdwg.mxu0
        %s465 = scalar_lea.vmem %s1, 32
        %v466 = vld [vmem:[%s465] sm:$0xff]
        %v467 = vld [vmem:[%s465 + $0x8] sm:$0xff]
        %468 = vmatprep.subr.mxu0 0.0
        %469 = vmatpush1.msra.mxu0 0.0
        %470 = vmatprep.subr.mxu0 0.0
        %471 = vmatpush1.msra.mxu0 0.0
        %472 = vmatprep.subr.mxu0 0.0
        %473 = vmatpush1.msra.mxu0 0.0
        %474 = vmatprep.subr.mxu0 0.0
        %475 = vmatpush1.msra.mxu0 0.0
        %476 = vmatprep.subr.mxu0 0.0
        %477 = vmatpush1.msra.mxu0 0.0
        %478 = vmatprep.subr.mxu0 0.0
        %479 = vmatpush1.msra.mxu0 0.0
        %480 = vmatprep.subr.mxu0 0.0
        %481 = vmatpush1.msra.mxu0 0.0
        %482 = vmatprep.subr.mxu0 0.0
        %483 = vmatpush1.msra.mxu0 0.0
        %484 = vmatprep.subr.mxu0 0.0
        %485 = vmatpush1.msra.mxu0 0.0
        %486 = vmatprep.subr.mxu0 0.0
        %487 = vmatpush1.msra.mxu0 0.0
        %488 = vmatprep.subr.mxu0 0.0
        %489 = vmatpush1.msra.mxu0 0.0
        %490 = vmatprep.subr.mxu0 0.0
        %491 = vmatpush1.msra.mxu0 0.0
        %492 = vmatprep.subr.mxu0 0.0
        %493 = vmatpush1.msra.mxu0 0.0
        %494 = vmatprep.subr.mxu0 0.0
        %495 = vmatpush1.msra.mxu0 0.0
        %496 = vmatprep.subr.mxu0 0.0
        %497 = vmatpush1.msra.mxu0 %v467
        %498 = vmatprep.subr.mxu0 0.0
        %499 = vmatpush1.msra.mxu0 %v466
        %500 = vmatprep.subr.mxu0 0.0
        %501 = vmatpush2.msra.mxu0 0.0
        %502 = vmatprep.subr.mxu0 0.0
        %503 = vmatpush2.msra.mxu0 0.0
        %504 = vmatprep.subr.mxu0 0.0
        %505 = vmatpush2.msra.mxu0 0.0
        %506 = vmatprep.subr.mxu0 0.0
        %507 = vmatpush2.msra.mxu0 0.0
        %508 = vmatprep.subr.mxu0 0.0
        %509 = vmatpush2.msra.mxu0 0.0
        %510 = vmatprep.subr.mxu0 0.0
        %511 = vmatpush2.msra.mxu0 0.0
        %512 = vmatprep.subr.mxu0 0.0
        %513 = vmatpush2.msra.mxu0 0.0
        %514 = vmatprep.subr.mxu0 0.0
        %515 = vmatpush2.msra.mxu0 0.0
        %516 = vmatprep.subr.mxu0 0.0
        %517 = vmatpush2.msra.mxu0 0.0
        %518 = vmatprep.subr.mxu0 0.0
        %519 = vmatpush2.msra.mxu0 0.0
        %520 = vmatprep.subr.mxu0 0.0
        %521 = vmatpush2.msra.mxu0 0.0
        %522 = vmatprep.subr.mxu0 0.0
        %523 = vmatpush2.msra.mxu0 0.0
        %524 = vmatprep.subr.mxu0 0.0
        %525 = vmatpush2.msra.mxu0 0.0
        %526 = vmatprep.subr.mxu0 0.0
        %527 = vmatpush2.msra.mxu0 0.0
        %528 = vmatprep.subr.mxu0 0.0
        %529 = vmatpush2.msra.mxu0 0.0
        %530 = vmatprep.subr.mxu0 0.0
        %531 = vmatpush2.msra.mxu0 0.0
        %532 = vmatprep.mubr.f32.mxu0 0.0
        %533 = vmatmul.mubr.f32.gmra.mxu0 %v281
        %v534 = vpop.f32.mrf.mxu0
        %v535 = vadd.f32 0.0, %v534
        %v536 = vpop.f32.mrf.mxu0
        %537 = vmatprep.mubr.f32.mxu0 0.0
        %538 = vmatmul.mubr.f32.gmra.mxu0 %v284
        %v539 = vpop.f32.mrf.mxu0
        %v540 = vadd.f32 0.0, %v539
        %v541 = vpop.f32.mrf.mxu0
        %542 = vmatprep.mubr.f32.mxu0 0.0
        %543 = vmatmul.mubr.f32.gmra.mxu0 %v287
        %v544 = vpop.f32.mrf.mxu0
        %v545 = vadd.f32 0.0, %v544
        %v546 = vpop.f32.mrf.mxu0
        %547 = vmatprep.mubr.f32.mxu0 0.0
        %548 = vmatmul.mubr.f32.gmra.mxu0 %v290
        %v549 = vpop.f32.mrf.mxu0
        %v550 = vadd.f32 0.0, %v549
        %v551 = vpop.f32.mrf.mxu0
        %552 = vdwg.mxu0
        %v553 = vld [vmem:[%s2] sm:$0xff]
        %v554 = vld [vmem:[%s2 + $0x8] sm:$0xff]
        %vm555 = vcmask 31744
        %v557 = vsel %vm555, %v553, 0
        %v560 = vsel %vm555, %v554, 0
        %vm562 = vcmask 1043456
        %v564 = vsel %vm562, %v359, 0
        %566 = vmatprep.subr.mxu0 0.0
        %567 = vmatpush1.msra.mxu0 0.0
        %568 = vmatprep.subr.mxu0 0.0
        %569 = vmatpush1.msra.mxu0 0.0
        %570 = vmatprep.subr.mxu0 0.0
        %571 = vmatpush1.msra.mxu0 0.0
        %572 = vmatprep.subr.mxu0 0.0
        %573 = vmatpush1.msra.mxu0 0.0
        %574 = vmatprep.subr.mxu0 0.0
        %575 = vmatpush1.msra.mxu0 0.0
        %576 = vmatprep.subr.mxu0 0.0
        %577 = vmatpush1.msra.mxu0 0.0
        %578 = vmatprep.subr.mxu0 0.0
        %579 = vmatpush1.msra.mxu0 0.0
        %580 = vmatprep.subr.mxu0 0.0
        %581 = vmatpush1.msra.mxu0 0.0
        %582 = vmatprep.subr.mxu0 0.0
        %583 = vmatpush1.msra.mxu0 0.0
        %584 = vmatprep.subr.mxu0 0.0
        %585 = vmatpush1.msra.mxu0 0.0
        %586 = vmatprep.subr.mxu0 0.0
        %587 = vmatpush1.msra.mxu0 0.0
        %588 = vmatprep.subr.mxu0 0.0
        %589 = vmatpush1.msra.mxu0 0.0
        %590 = vmatprep.subr.mxu0 0.0
        %591 = vmatpush1.msra.mxu0 0.0
        %592 = vmatprep.subr.mxu0 0.0
        %593 = vmatpush1.msra.mxu0 0.0
        %594 = vmatprep.subr.mxu0 0.0
        %595 = vmatpush1.msra.mxu0 0.0
        %596 = vmatprep.subr.mxu0 0.0
        %597 = vmatpush1.msra.mxu0 %v564
        %598 = vmatprep.subr.mxu0 0.0
        %599 = vmatpush2.msra.mxu0 0.0
        %600 = vmatprep.subr.mxu0 0.0
        %601 = vmatpush2.msra.mxu0 0.0
        %602 = vmatprep.subr.mxu0 0.0
        %603 = vmatpush2.msra.mxu0 0.0
        %604 = vmatprep.subr.mxu0 0.0
        %605 = vmatpush2.msra.mxu0 0.0
        %606 = vmatprep.subr.mxu0 0.0
        %607 = vmatpush2.msra.mxu0 0.0
        %608 = vmatprep.subr.mxu0 0.0
        %609 = vmatpush2.msra.mxu0 0.0
        %610 = vmatprep.subr.mxu0 0.0
        %611 = vmatpush2.msra.mxu0 0.0
        %612 = vmatprep.subr.mxu0 0.0
        %613 = vmatpush2.msra.mxu0 0.0
        %614 = vmatprep.subr.mxu0 0.0
        %615 = vmatpush2.msra.mxu0 0.0
        %616 = vmatprep.subr.mxu0 0.0
        %617 = vmatpush2.msra.mxu0 0.0
        %618 = vmatprep.subr.mxu0 0.0
        %619 = vmatpush2.msra.mxu0 0.0
        %620 = vmatprep.subr.mxu0 0.0
        %621 = vmatpush2.msra.mxu0 0.0
        %622 = vmatprep.subr.mxu0 0.0
        %623 = vmatpush2.msra.mxu0 0.0
        %624 = vmatprep.subr.mxu0 0.0
        %625 = vmatpush2.msra.mxu0 0.0
        %626 = vmatprep.subr.mxu0 0.0
        %627 = vmatpush2.msra.mxu0 0.0
        %628 = vmatprep.subr.mxu0 0.0
        %629 = vmatpush2.msra.mxu0 0.0
        %630 = vmatprep.mubr.f32.mxu0 0.0
        %631 = vmatmul.mubr.f32.gmra.mxu0 %v557
        %v632 = vpop.f32.mrf.mxu0
        %v633 = vadd.f32 0.0, %v632
        %v634 = vpop.f32.mrf.mxu0
        %635 = vmatprep.mubr.f32.mxu0 0.0
        %636 = vmatmul.mubr.f32.gmra.mxu0 %v560
        %v637 = vpop.f32.mrf.mxu0
        %v638 = vadd.f32 0.0, %v637
        %v639 = vpop.f32.mrf.mxu0
        %640 = vdwg.mxu0
        %v641 = vadd.f32 %v266, %v633
        %v642 = vadd.f32 %v271, %v638
        %s643 = scalar_lea.vmem %s2, 16
        %v644 = vld [vmem:[%s643] sm:$0xff]
        %v645 = vld [vmem:[%s643 + $0x8] sm:$0xff]
        %v647 = vsel %vm555, %v644, 0
        %v650 = vsel %vm555, %v645, 0
        %v653 = vsel %vm562, %v447, 0
        %655 = vmatprep.subr.mxu0 0.0
        %656 = vmatpush1.msra.mxu0 0.0
        %657 = vmatprep.subr.mxu0 0.0
        %658 = vmatpush1.msra.mxu0 0.0
        %659 = vmatprep.subr.mxu0 0.0
        %660 = vmatpush1.msra.mxu0 0.0
        %661 = vmatprep.subr.mxu0 0.0
        %662 = vmatpush1.msra.mxu0 0.0
        %663 = vmatprep.subr.mxu0 0.0
        %664 = vmatpush1.msra.mxu0 0.0
        %665 = vmatprep.subr.mxu0 0.0
        %666 = vmatpush1.msra.mxu0 0.0
        %667 = vmatprep.subr.mxu0 0.0
        %668 = vmatpush1.msra.mxu0 0.0
        %669 = vmatprep.subr.mxu0 0.0
        %670 = vmatpush1.msra.mxu0 0.0
        %671 = vmatprep.subr.mxu0 0.0
        %672 = vmatpush1.msra.mxu0 0.0
        %673 = vmatprep.subr.mxu0 0.0
        %674 = vmatpush1.msra.mxu0 0.0
        %675 = vmatprep.subr.mxu0 0.0
        %676 = vmatpush1.msra.mxu0 0.0
        %677 = vmatprep.subr.mxu0 0.0
        %678 = vmatpush1.msra.mxu0 0.0
        %679 = vmatprep.subr.mxu0 0.0
        %680 = vmatpush1.msra.mxu0 0.0
        %681 = vmatprep.subr.mxu0 0.0
        %682 = vmatpush1.msra.mxu0 0.0
        %683 = vmatprep.subr.mxu0 0.0
        %684 = vmatpush1.msra.mxu0 0.0
        %685 = vmatprep.subr.mxu0 0.0
        %686 = vmatpush1.msra.mxu0 %v653
        %687 = vmatprep.subr.mxu0 0.0
        %688 = vmatpush2.msra.mxu0 0.0
        %689 = vmatprep.subr.mxu0 0.0
        %690 = vmatpush2.msra.mxu0 0.0
        %691 = vmatprep.subr.mxu0 0.0
        %692 = vmatpush2.msra.mxu0 0.0
        %693 = vmatprep.subr.mxu0 0.0
        %694 = vmatpush2.msra.mxu0 0.0
        %695 = vmatprep.subr.mxu0 0.0
        %696 = vmatpush2.msra.mxu0 0.0
        %697 = vmatprep.subr.mxu0 0.0
        %698 = vmatpush2.msra.mxu0 0.0
        %699 = vmatprep.subr.mxu0 0.0
        %700 = vmatpush2.msra.mxu0 0.0
        %701 = vmatprep.subr.mxu0 0.0
        %702 = vmatpush2.msra.mxu0 0.0
        %703 = vmatprep.subr.mxu0 0.0
        %704 = vmatpush2.msra.mxu0 0.0
        %705 = vmatprep.subr.mxu0 0.0
        %706 = vmatpush2.msra.mxu0 0.0
        %707 = vmatprep.subr.mxu0 0.0
        %708 = vmatpush2.msra.mxu0 0.0
        %709 = vmatprep.subr.mxu0 0.0
        %710 = vmatpush2.msra.mxu0 0.0
        %711 = vmatprep.subr.mxu0 0.0
        %712 = vmatpush2.msra.mxu0 0.0
        %713 = vmatprep.subr.mxu0 0.0
        %714 = vmatpush2.msra.mxu0 0.0
        %715 = vmatprep.subr.mxu0 0.0
        %716 = vmatpush2.msra.mxu0 0.0
        %717 = vmatprep.subr.mxu0 0.0
        %718 = vmatpush2.msra.mxu0 0.0
        %719 = vmatprep.mubr.f32.mxu0 0.0
        %720 = vmatmul.mubr.f32.gmra.mxu0 %v647
        %v721 = vpop.f32.mrf.mxu0
        %v722 = vadd.f32 0.0, %v721
        %v723 = vpop.f32.mrf.mxu0
        %724 = vmatprep.mubr.f32.mxu0 0.0
        %725 = vmatmul.mubr.f32.gmra.mxu0 %v650
        %v726 = vpop.f32.mrf.mxu0
        %v727 = vadd.f32 0.0, %v726
        %v728 = vpop.f32.mrf.mxu0
        %729 = vdwg.mxu0
        %v730 = vadd.f32 %v641, %v722
        %v731 = vadd.f32 %v642, %v727
        %s732 = scalar_lea.vmem %s2, 32
        %v733 = vld [vmem:[%s732] sm:$0xff]
        %v734 = vld [vmem:[%s732 + $0x8] sm:$0xff]
        %v736 = vsel %vm555, %v733, 0
        %v739 = vsel %vm555, %v734, 0
        %v742 = vsel %vm562, %v535, 0
        %744 = vmatprep.subr.mxu0 0.0
        %745 = vmatpush1.msra.mxu0 0.0
        %746 = vmatprep.subr.mxu0 0.0
        %747 = vmatpush1.msra.mxu0 0.0
        %748 = vmatprep.subr.mxu0 0.0
        %749 = vmatpush1.msra.mxu0 0.0
        %750 = vmatprep.subr.mxu0 0.0
        %751 = vmatpush1.msra.mxu0 0.0
        %752 = vmatprep.subr.mxu0 0.0
        %753 = vmatpush1.msra.mxu0 0.0
        %754 = vmatprep.subr.mxu0 0.0
        %755 = vmatpush1.msra.mxu0 0.0
        %756 = vmatprep.subr.mxu0 0.0
        %757 = vmatpush1.msra.mxu0 0.0
        %758 = vmatprep.subr.mxu0 0.0
        %759 = vmatpush1.msra.mxu0 0.0
        %760 = vmatprep.subr.mxu0 0.0
        %761 = vmatpush1.msra.mxu0 0.0
        %762 = vmatprep.subr.mxu0 0.0
        %763 = vmatpush1.msra.mxu0 0.0
        %764 = vmatprep.subr.mxu0 0.0
        %765 = vmatpush1.msra.mxu0 0.0
        %766 = vmatprep.subr.mxu0 0.0
        %767 = vmatpush1.msra.mxu0 0.0
        %768 = vmatprep.subr.mxu0 0.0
        %769 = vmatpush1.msra.mxu0 0.0
        %770 = vmatprep.subr.mxu0 0.0
        %771 = vmatpush1.msra.mxu0 0.0
        %772 = vmatprep.subr.mxu0 0.0
        %773 = vmatpush1.msra.mxu0 0.0
        %774 = vmatprep.subr.mxu0 0.0
        %775 = vmatpush1.msra.mxu0 %v742
        %776 = vmatprep.subr.mxu0 0.0
        %777 = vmatpush2.msra.mxu0 0.0
        %778 = vmatprep.subr.mxu0 0.0
        %779 = vmatpush2.msra.mxu0 0.0
        %780 = vmatprep.subr.mxu0 0.0
        %781 = vmatpush2.msra.mxu0 0.0
        %782 = vmatprep.subr.mxu0 0.0
        %783 = vmatpush2.msra.mxu0 0.0
        %784 = vmatprep.subr.mxu0 0.0
        %785 = vmatpush2.msra.mxu0 0.0
        %786 = vmatprep.subr.mxu0 0.0
        %787 = vmatpush2.msra.mxu0 0.0
        %788 = vmatprep.subr.mxu0 0.0
        %789 = vmatpush2.msra.mxu0 0.0
        %790 = vmatprep.subr.mxu0 0.0
        %791 = vmatpush2.msra.mxu0 0.0
        %792 = vmatprep.subr.mxu0 0.0
        %793 = vmatpush2.msra.mxu0 0.0
        %794 = vmatprep.subr.mxu0 0.0
        %795 = vmatpush2.msra.mxu0 0.0
        %796 = vmatprep.subr.mxu0 0.0
        %797 = vmatpush2.msra.mxu0 0.0
        %798 = vmatprep.subr.mxu0 0.0
        %799 = vmatpush2.msra.mxu0 0.0
        %800 = vmatprep.subr.mxu0 0.0
        %801 = vmatpush2.msra.mxu0 0.0
        %802 = vmatprep.subr.mxu0 0.0
        %803 = vmatpush2.msra.mxu0 0.0
        %804 = vmatprep.subr.mxu0 0.0
        %805 = vmatpush2.msra.mxu0 0.0
        %806 = vmatprep.subr.mxu0 0.0
        %807 = vmatpush2.msra.mxu0 0.0
        %808 = vmatprep.mubr.f32.mxu0 0.0
        %809 = vmatmul.mubr.f32.gmra.mxu0 %v736
        %v810 = vpop.f32.mrf.mxu0
        %v811 = vadd.f32 0.0, %v810
        %v812 = vpop.f32.mrf.mxu0
        %813 = vmatprep.mubr.f32.mxu0 0.0
        %814 = vmatmul.mubr.f32.gmra.mxu0 %v739
        %v815 = vpop.f32.mrf.mxu0
        %v816 = vadd.f32 0.0, %v815
        %v817 = vpop.f32.mrf.mxu0
        %818 = vdwg.mxu0
        %v819 = vadd.f32 %v730, %v811
        %v820 = vadd.f32 %v731, %v816
        %821 = vst.msk [vmem:[#allocation2] sm:$0xff] %vm279, %v819
        %822 = vst.msk [vmem:[#allocation2 + $0x8] sm:$0xff] %vm279, %v820
        %v823 = vld [vmem:[%s2] sm:$0xff]
        %v824 = vld [vmem:[%s2 + $0x8] sm:$0xff]
        %v825 = vrot.slane %v359, 4
        %v827 = vsel %vm555, %v823, 0
        %v830 = vsel %vm555, %v824, 0
        %v832 = vsel %vm562, %v825, 0
        %834 = vmatprep.subr.mxu0 0.0
        %835 = vmatpush1.msra.mxu0 0.0
        %836 = vmatprep.subr.mxu0 0.0
        %837 = vmatpush1.msra.mxu0 0.0
        %838 = vmatprep.subr.mxu0 0.0
        %839 = vmatpush1.msra.mxu0 0.0
        %840 = vmatprep.subr.mxu0 0.0
        %841 = vmatpush1.msra.mxu0 0.0
        %842 = vmatprep.subr.mxu0 0.0
        %843 = vmatpush1.msra.mxu0 0.0
        %844 = vmatprep.subr.mxu0 0.0
        %845 = vmatpush1.msra.mxu0 0.0
        %846 = vmatprep.subr.mxu0 0.0
        %847 = vmatpush1.msra.mxu0 0.0
        %848 = vmatprep.subr.mxu0 0.0
        %849 = vmatpush1.msra.mxu0 0.0
        %850 = vmatprep.subr.mxu0 0.0
        %851 = vmatpush1.msra.mxu0 0.0
        %852 = vmatprep.subr.mxu0 0.0
        %853 = vmatpush1.msra.mxu0 0.0
        %854 = vmatprep.subr.mxu0 0.0
        %855 = vmatpush1.msra.mxu0 0.0
        %856 = vmatprep.subr.mxu0 0.0
        %857 = vmatpush1.msra.mxu0 0.0
        %858 = vmatprep.subr.mxu0 0.0
        %859 = vmatpush1.msra.mxu0 0.0
        %860 = vmatprep.subr.mxu0 0.0
        %861 = vmatpush1.msra.mxu0 0.0
        %862 = vmatprep.subr.mxu0 0.0
        %863 = vmatpush1.msra.mxu0 0.0
        %864 = vmatprep.subr.mxu0 0.0
        %865 = vmatpush1.msra.mxu0 %v832
        %866 = vmatprep.subr.mxu0 0.0
        %867 = vmatpush2.msra.mxu0 0.0
        %868 = vmatprep.subr.mxu0 0.0
        %869 = vmatpush2.msra.mxu0 0.0
        %870 = vmatprep.subr.mxu0 0.0
        %871 = vmatpush2.msra.mxu0 0.0
        %872 = vmatprep.subr.mxu0 0.0
        %873 = vmatpush2.msra.mxu0 0.0
        %874 = vmatprep.subr.mxu0 0.0
        %875 = vmatpush2.msra.mxu0 0.0
        %876 = vmatprep.subr.mxu0 0.0
        %877 = vmatpush2.msra.mxu0 0.0
        %878 = vmatprep.subr.mxu0 0.0
        %879 = vmatpush2.msra.mxu0 0.0
        %880 = vmatprep.subr.mxu0 0.0
        %881 = vmatpush2.msra.mxu0 0.0
        %882 = vmatprep.subr.mxu0 0.0
        %883 = vmatpush2.msra.mxu0 0.0
        %884 = vmatprep.subr.mxu0 0.0
        %885 = vmatpush2.msra.mxu0 0.0
        %886 = vmatprep.subr.mxu0 0.0
        %887 = vmatpush2.msra.mxu0 0.0
        %888 = vmatprep.subr.mxu0 0.0
        %889 = vmatpush2.msra.mxu0 0.0
        %890 = vmatprep.subr.mxu0 0.0
        %891 = vmatpush2.msra.mxu0 0.0
        %892 = vmatprep.subr.mxu0 0.0
        %893 = vmatpush2.msra.mxu0 0.0
        %894 = vmatprep.subr.mxu0 0.0
        %895 = vmatpush2.msra.mxu0 0.0
        %896 = vmatprep.subr.mxu0 0.0
        %897 = vmatpush2.msra.mxu0 0.0
        %898 = vmatprep.mubr.f32.mxu0 0.0
        %899 = vmatmul.mubr.f32.gmra.mxu0 %v827
        %v900 = vpop.f32.mrf.mxu0
        %v901 = vadd.f32 0.0, %v900
        %v902 = vpop.f32.mrf.mxu0
        %903 = vmatprep.mubr.f32.mxu0 0.0
        %904 = vmatmul.mubr.f32.gmra.mxu0 %v830
        %v905 = vpop.f32.mrf.mxu0
        %v906 = vadd.f32 0.0, %v905
        %v907 = vpop.f32.mrf.mxu0
        %908 = vdwg.mxu0
        %v909 = vadd.f32 %v266, %v901
        %v910 = vadd.f32 %v271, %v906
        %v911 = vld [vmem:[%s643] sm:$0xff]
        %v912 = vld [vmem:[%s643 + $0x8] sm:$0xff]
        %v913 = vrot.slane %v447, 4
        %v915 = vsel %vm555, %v911, 0
        %v918 = vsel %vm555, %v912, 0
        %v920 = vsel %vm562, %v913, 0
        %922 = vmatprep.subr.mxu0 0.0
        %923 = vmatpush1.msra.mxu0 0.0
        %924 = vmatprep.subr.mxu0 0.0
        %925 = vmatpush1.msra.mxu0 0.0
        %926 = vmatprep.subr.mxu0 0.0
        %927 = vmatpush1.msra.mxu0 0.0
        %928 = vmatprep.subr.mxu0 0.0
        %929 = vmatpush1.msra.mxu0 0.0
        %930 = vmatprep.subr.mxu0 0.0
        %931 = vmatpush1.msra.mxu0 0.0
        %932 = vmatprep.subr.mxu0 0.0
        %933 = vmatpush1.msra.mxu0 0.0
        %934 = vmatprep.subr.mxu0 0.0
        %935 = vmatpush1.msra.mxu0 0.0
        %936 = vmatprep.subr.mxu0 0.0
        %937 = vmatpush1.msra.mxu0 0.0
        %938 = vmatprep.subr.mxu0 0.0
        %939 = vmatpush1.msra.mxu0 0.0
        %940 = vmatprep.subr.mxu0 0.0
        %941 = vmatpush1.msra.mxu0 0.0
        %942 = vmatprep.subr.mxu0 0.0
        %943 = vmatpush1.msra.mxu0 0.0
        %944 = vmatprep.subr.mxu0 0.0
        %945 = vmatpush1.msra.mxu0 0.0
        %946 = vmatprep.subr.mxu0 0.0
        %947 = vmatpush1.msra.mxu0 0.0
        %948 = vmatprep.subr.mxu0 0.0
        %949 = vmatpush1.msra.mxu0 0.0
        %950 = vmatprep.subr.mxu0 0.0
        %951 = vmatpush1.msra.mxu0 0.0
        %952 = vmatprep.subr.mxu0 0.0
        %953 = vmatpush1.msra.mxu0 %v920
        %954 = vmatprep.subr.mxu0 0.0
        %955 = vmatpush2.msra.mxu0 0.0
        %956 = vmatprep.subr.mxu0 0.0
        %957 = vmatpush2.msra.mxu0 0.0
        %958 = vmatprep.subr.mxu0 0.0
        %959 = vmatpush2.msra.mxu0 0.0
        %960 = vmatprep.subr.mxu0 0.0
        %961 = vmatpush2.msra.mxu0 0.0
        %962 = vmatprep.subr.mxu0 0.0
        %963 = vmatpush2.msra.mxu0 0.0
        %964 = vmatprep.subr.mxu0 0.0
        %965 = vmatpush2.msra.mxu0 0.0
        %966 = vmatprep.subr.mxu0 0.0
        %967 = vmatpush2.msra.mxu0 0.0
        %968 = vmatprep.subr.mxu0 0.0
        %969 = vmatpush2.msra.mxu0 0.0
        %970 = vmatprep.subr.mxu0 0.0
        %971 = vmatpush2.msra.mxu0 0.0
        %972 = vmatprep.subr.mxu0 0.0
        %973 = vmatpush2.msra.mxu0 0.0
        %974 = vmatprep.subr.mxu0 0.0
        %975 = vmatpush2.msra.mxu0 0.0
        %976 = vmatprep.subr.mxu0 0.0
        %977 = vmatpush2.msra.mxu0 0.0
        %978 = vmatprep.subr.mxu0 0.0
        %979 = vmatpush2.msra.mxu0 0.0
        %980 = vmatprep.subr.mxu0 0.0
        %981 = vmatpush2.msra.mxu0 0.0
        %982 = vmatprep.subr.mxu0 0.0
        %983 = vmatpush2.msra.mxu0 0.0
        %984 = vmatprep.subr.mxu0 0.0
        %985 = vmatpush2.msra.mxu0 0.0
        %986 = vmatprep.mubr.f32.mxu0 0.0
        %987 = vmatmul.mubr.f32.gmra.mxu0 %v915
        %v988 = vpop.f32.mrf.mxu0
        %v989 = vadd.f32 0.0, %v988
        %v990 = vpop.f32.mrf.mxu0
        %991 = vmatprep.mubr.f32.mxu0 0.0
        %992 = vmatmul.mubr.f32.gmra.mxu0 %v918
        %v993 = vpop.f32.mrf.mxu0
        %v994 = vadd.f32 0.0, %v993
        %v995 = vpop.f32.mrf.mxu0
        %996 = vdwg.mxu0
        %v997 = vadd.f32 %v909, %v989
        %v998 = vadd.f32 %v910, %v994
        %v999 = vld [vmem:[%s732] sm:$0xff]
        %v1000 = vld [vmem:[%s732 + $0x8] sm:$0xff]
        %v1001 = vrot.slane %v535, 4
        %v1003 = vsel %vm555, %v999, 0
        %v1006 = vsel %vm555, %v1000, 0
        %v1008 = vsel %vm562, %v1001, 0
        %1010 = vmatprep.subr.mxu0 0.0
        %1011 = vmatpush1.msra.mxu0 0.0
        %1012 = vmatprep.subr.mxu0 0.0
        %1013 = vmatpush1.msra.mxu0 0.0
        %1014 = vmatprep.subr.mxu0 0.0
        %1015 = vmatpush1.msra.mxu0 0.0
        %1016 = vmatprep.subr.mxu0 0.0
        %1017 = vmatpush1.msra.mxu0 0.0
        %1018 = vmatprep.subr.mxu0 0.0
        %1019 = vmatpush1.msra.mxu0 0.0
        %1020 = vmatprep.subr.mxu0 0.0
        %1021 = vmatpush1.msra.mxu0 0.0
        %1022 = vmatprep.subr.mxu0 0.0
        %1023 = vmatpush1.msra.mxu0 0.0
        %1024 = vmatprep.subr.mxu0 0.0
        %1025 = vmatpush1.msra.mxu0 0.0
        %1026 = vmatprep.subr.mxu0 0.0
        %1027 = vmatpush1.msra.mxu0 0.0
        %1028 = vmatprep.subr.mxu0 0.0
        %1029 = vmatpush1.msra.mxu0 0.0
        %1030 = vmatprep.subr.mxu0 0.0
        %1031 = vmatpush1.msra.mxu0 0.0
        %1032 = vmatprep.subr.mxu0 0.0
        %1033 = vmatpush1.msra.mxu0 0.0
        %1034 = vmatprep.subr.mxu0 0.0
        %1035 = vmatpush1.msra.mxu0 0.0
        %1036 = vmatprep.subr.mxu0 0.0
        %1037 = vmatpush1.msra.mxu0 0.0
        %1038 = vmatprep.subr.mxu0 0.0
        %1039 = vmatpush1.msra.mxu0 0.0
        %1040 = vmatprep.subr.mxu0 0.0
        %1041 = vmatpush1.msra.mxu0 %v1008
        %1042 = vmatprep.subr.mxu0 0.0
        %1043 = vmatpush2.msra.mxu0 0.0
        %1044 = vmatprep.subr.mxu0 0.0
        %1045 = vmatpush2.msra.mxu0 0.0
        %1046 = vmatprep.subr.mxu0 0.0
        %1047 = vmatpush2.msra.mxu0 0.0
        %1048 = vmatprep.subr.mxu0 0.0
        %1049 = vmatpush2.msra.mxu0 0.0
        %1050 = vmatprep.subr.mxu0 0.0
        %1051 = vmatpush2.msra.mxu0 0.0
        %1052 = vmatprep.subr.mxu0 0.0
        %1053 = vmatpush2.msra.mxu0 0.0
        %1054 = vmatprep.subr.mxu0 0.0
        %1055 = vmatpush2.msra.mxu0 0.0
        %1056 = vmatprep.subr.mxu0 0.0
        %1057 = vmatpush2.msra.mxu0 0.0
        %1058 = vmatprep.subr.mxu0 0.0
        %1059 = vmatpush2.msra.mxu0 0.0
        %1060 = vmatprep.subr.mxu0 0.0
        %1061 = vmatpush2.msra.mxu0 0.0
        %1062 = vmatprep.subr.mxu0 0.0
        %1063 = vmatpush2.msra.mxu0 0.0
        %1064 = vmatprep.subr.mxu0 0.0
        %1065 = vmatpush2.msra.mxu0 0.0
        %1066 = vmatprep.subr.mxu0 0.0
        %1067 = vmatpush2.msra.mxu0 0.0
        %1068 = vmatprep.subr.mxu0 0.0
        %1069 = vmatpush2.msra.mxu0 0.0
        %1070 = vmatprep.subr.mxu0 0.0
        %1071 = vmatpush2.msra.mxu0 0.0
        %1072 = vmatprep.subr.mxu0 0.0
        %1073 = vmatpush2.msra.mxu0 0.0
        %1074 = vmatprep.mubr.f32.mxu0 0.0
        %1075 = vmatmul.mubr.f32.gmra.mxu0 %v1003
        %v1076 = vpop.f32.mrf.mxu0
        %v1077 = vadd.f32 0.0, %v1076
        %v1078 = vpop.f32.mrf.mxu0
        %1079 = vmatprep.mubr.f32.mxu0 0.0
        %1080 = vmatmul.mubr.f32.gmra.mxu0 %v1006
        %v1081 = vpop.f32.mrf.mxu0
        %v1082 = vadd.f32 0.0, %v1081
        %v1083 = vpop.f32.mrf.mxu0
        %1084 = vdwg.mxu0
        %v1085 = vadd.f32 %v997, %v1077
        %v1086 = vadd.f32 %v998, %v1082
        %s1087 = scalar_lea.vmem [#allocation2], 16
        %1088 = vst.msk [vmem:[%s1087] sm:$0xff] %vm279, %v1085
        %1089 = vst.msk [vmem:[%s1087 + $0x8] sm:$0xff] %vm279, %v1086
        %v1090 = vld [vmem:[%s2] sm:$0xff]
        %v1091 = vld [vmem:[%s2 + $0x8] sm:$0xff]
        %v1093 = vsel %vm555, %v1090, 0
        %v1096 = vsel %vm555, %v1091, 0
        %v1099 = vsel %vm562, %v364, 0
        %1101 = vmatprep.subr.mxu0 0.0
        %1102 = vmatpush1.msra.mxu0 0.0
        %1103 = vmatprep.subr.mxu0 0.0
        %1104 = vmatpush1.msra.mxu0 0.0
        %1105 = vmatprep.subr.mxu0 0.0
        %1106 = vmatpush1.msra.mxu0 0.0
        %1107 = vmatprep.subr.mxu0 0.0
        %1108 = vmatpush1.msra.mxu0 0.0
        %1109 = vmatprep.subr.mxu0 0.0
        %1110 = vmatpush1.msra.mxu0 0.0
        %1111 = vmatprep.subr.mxu0 0.0
        %1112 = vmatpush1.msra.mxu0 0.0
        %1113 = vmatprep.subr.mxu0 0.0
        %1114 = vmatpush1.msra.mxu0 0.0
        %1115 = vmatprep.subr.mxu0 0.0
        %1116 = vmatpush1.msra.mxu0 0.0
        %1117 = vmatprep.subr.mxu0 0.0
        %1118 = vmatpush1.msra.mxu0 0.0
        %1119 = vmatprep.subr.mxu0 0.0
        %1120 = vmatpush1.msra.mxu0 0.0
        %1121 = vmatprep.subr.mxu0 0.0
        %1122 = vmatpush1.msra.mxu0 0.0
        %1123 = vmatprep.subr.mxu0 0.0
        %1124 = vmatpush1.msra.mxu0 0.0
        %1125 = vmatprep.subr.mxu0 0.0
        %1126 = vmatpush1.msra.mxu0 0.0
        %1127 = vmatprep.subr.mxu0 0.0
        %1128 = vmatpush1.msra.mxu0 0.0
        %1129 = vmatprep.subr.mxu0 0.0
        %1130 = vmatpush1.msra.mxu0 0.0
        %1131 = vmatprep.subr.mxu0 0.0
        %1132 = vmatpush1.msra.mxu0 %v1099
        %1133 = vmatprep.subr.mxu0 0.0
        %1134 = vmatpush2.msra.mxu0 0.0
        %1135 = vmatprep.subr.mxu0 0.0
        %1136 = vmatpush2.msra.mxu0 0.0
        %1137 = vmatprep.subr.mxu0 0.0
        %1138 = vmatpush2.msra.mxu0 0.0
        %1139 = vmatprep.subr.mxu0 0.0
        %1140 = vmatpush2.msra.mxu0 0.0
        %1141 = vmatprep.subr.mxu0 0.0
        %1142 = vmatpush2.msra.mxu0 0.0
        %1143 = vmatprep.subr.mxu0 0.0
        %1144 = vmatpush2.msra.mxu0 0.0
        %1145 = vmatprep.subr.mxu0 0.0
        %1146 = vmatpush2.msra.mxu0 0.0
        %1147 = vmatprep.subr.mxu0 0.0
        %1148 = vmatpush2.msra.mxu0 0.0
        %1149 = vmatprep.subr.mxu0 0.0
        %1150 = vmatpush2.msra.mxu0 0.0
        %1151 = vmatprep.subr.mxu0 0.0
        %1152 = vmatpush2.msra.mxu0 0.0
        %1153 = vmatprep.subr.mxu0 0.0
        %1154 = vmatpush2.msra.mxu0 0.0
        %1155 = vmatprep.subr.mxu0 0.0
        %1156 = vmatpush2.msra.mxu0 0.0
        %1157 = vmatprep.subr.mxu0 0.0
        %1158 = vmatpush2.msra.mxu0 0.0
        %1159 = vmatprep.subr.mxu0 0.0
        %1160 = vmatpush2.msra.mxu0 0.0
        %1161 = vmatprep.subr.mxu0 0.0
        %1162 = vmatpush2.msra.mxu0 0.0
        %1163 = vmatprep.subr.mxu0 0.0
        %1164 = vmatpush2.msra.mxu0 0.0
        %1165 = vmatprep.mubr.f32.mxu0 0.0
        %1166 = vmatmul.mubr.f32.gmra.mxu0 %v1093
        %v1167 = vpop.f32.mrf.mxu0
        %v1168 = vadd.f32 0.0, %v1167
        %v1169 = vpop.f32.mrf.mxu0
        %1170 = vmatprep.mubr.f32.mxu0 0.0
        %1171 = vmatmul.mubr.f32.gmra.mxu0 %v1096
        %v1172 = vpop.f32.mrf.mxu0
        %v1173 = vadd.f32 0.0, %v1172
        %v1174 = vpop.f32.mrf.mxu0
        %1175 = vdwg.mxu0
        %v1176 = vadd.f32 %v266, %v1168
        %v1177 = vadd.f32 %v271, %v1173
        %v1178 = vld [vmem:[%s643] sm:$0xff]
        %v1179 = vld [vmem:[%s643 + $0x8] sm:$0xff]
        %v1181 = vsel %vm555, %v1178, 0
        %v1184 = vsel %vm555, %v1179, 0
        %v1187 = vsel %vm562, %v452, 0
        %1189 = vmatprep.subr.mxu0 0.0
        %1190 = vmatpush1.msra.mxu0 0.0
        %1191 = vmatprep.subr.mxu0 0.0
        %1192 = vmatpush1.msra.mxu0 0.0
        %1193 = vmatprep.subr.mxu0 0.0
        %1194 = vmatpush1.msra.mxu0 0.0
        %1195 = vmatprep.subr.mxu0 0.0
        %1196 = vmatpush1.msra.mxu0 0.0
        %1197 = vmatprep.subr.mxu0 0.0
        %1198 = vmatpush1.msra.mxu0 0.0
        %1199 = vmatprep.subr.mxu0 0.0
        %1200 = vmatpush1.msra.mxu0 0.0
        %1201 = vmatprep.subr.mxu0 0.0
        %1202 = vmatpush1.msra.mxu0 0.0
        %1203 = vmatprep.subr.mxu0 0.0
        %1204 = vmatpush1.msra.mxu0 0.0
        %1205 = vmatprep.subr.mxu0 0.0
        %1206 = vmatpush1.msra.mxu0 0.0
        %1207 = vmatprep.subr.mxu0 0.0
        %1208 = vmatpush1.msra.mxu0 0.0
        %1209 = vmatprep.subr.mxu0 0.0
        %1210 = vmatpush1.msra.mxu0 0.0
        %1211 = vmatprep.subr.mxu0 0.0
        %1212 = vmatpush1.msra.mxu0 0.0
        %1213 = vmatprep.subr.mxu0 0.0
        %1214 = vmatpush1.msra.mxu0 0.0
        %1215 = vmatprep.subr.mxu0 0.0
        %1216 = vmatpush1.msra.mxu0 0.0
        %1217 = vmatprep.subr.mxu0 0.0
        %1218 = vmatpush1.msra.mxu0 0.0
        %1219 = vmatprep.subr.mxu0 0.0
        %1220 = vmatpush1.msra.mxu0 %v1187
        %1221 = vmatprep.subr.mxu0 0.0
        %1222 = vmatpush2.msra.mxu0 0.0
        %1223 = vmatprep.subr.mxu0 0.0
        %1224 = vmatpush2.msra.mxu0 0.0
        %1225 = vmatprep.subr.mxu0 0.0
        %1226 = vmatpush2.msra.mxu0 0.0
        %1227 = vmatprep.subr.mxu0 0.0
        %1228 = vmatpush2.msra.mxu0 0.0
        %1229 = vmatprep.subr.mxu0 0.0
        %1230 = vmatpush2.msra.mxu0 0.0
        %1231 = vmatprep.subr.mxu0 0.0
        %1232 = vmatpush2.msra.mxu0 0.0
        %1233 = vmatprep.subr.mxu0 0.0
        %1234 = vmatpush2.msra.mxu0 0.0
        %1235 = vmatprep.subr.mxu0 0.0
        %1236 = vmatpush2.msra.mxu0 0.0
        %1237 = vmatprep.subr.mxu0 0.0
        %1238 = vmatpush2.msra.mxu0 0.0
        %1239 = vmatprep.subr.mxu0 0.0
        %1240 = vmatpush2.msra.mxu0 0.0
        %1241 = vmatprep.subr.mxu0 0.0
        %1242 = vmatpush2.msra.mxu0 0.0
        %1243 = vmatprep.subr.mxu0 0.0
        %1244 = vmatpush2.msra.mxu0 0.0
        %1245 = vmatprep.subr.mxu0 0.0
        %1246 = vmatpush2.msra.mxu0 0.0
        %1247 = vmatprep.subr.mxu0 0.0
        %1248 = vmatpush2.msra.mxu0 0.0
        %1249 = vmatprep.subr.mxu0 0.0
        %1250 = vmatpush2.msra.mxu0 0.0
        %1251 = vmatprep.subr.mxu0 0.0
        %1252 = vmatpush2.msra.mxu0 0.0
        %1253 = vmatprep.mubr.f32.mxu0 0.0
        %1254 = vmatmul.mubr.f32.gmra.mxu0 %v1181
        %v1255 = vpop.f32.mrf.mxu0
        %v1256 = vadd.f32 0.0, %v1255
        %v1257 = vpop.f32.mrf.mxu0
        %1258 = vmatprep.mubr.f32.mxu0 0.0
        %1259 = vmatmul.mubr.f32.gmra.mxu0 %v1184
        %v1260 = vpop.f32.mrf.mxu0
        %v1261 = vadd.f32 0.0, %v1260
        %v1262 = vpop.f32.mrf.mxu0
        %1263 = vdwg.mxu0
        %v1264 = vadd.f32 %v1176, %v1256
        %v1265 = vadd.f32 %v1177, %v1261
        %v1266 = vld [vmem:[%s732] sm:$0xff]
        %v1267 = vld [vmem:[%s732 + $0x8] sm:$0xff]
        %v1269 = vsel %vm555, %v1266, 0
        %v1272 = vsel %vm555, %v1267, 0
        %v1275 = vsel %vm562, %v540, 0
        %1277 = vmatprep.subr.mxu0 0.0
        %1278 = vmatpush1.msra.mxu0 0.0
        %1279 = vmatprep.subr.mxu0 0.0
        %1280 = vmatpush1.msra.mxu0 0.0
        %1281 = vmatprep.subr.mxu0 0.0
        %1282 = vmatpush1.msra.mxu0 0.0
        %1283 = vmatprep.subr.mxu0 0.0
        %1284 = vmatpush1.msra.mxu0 0.0
        %1285 = vmatprep.subr.mxu0 0.0
        %1286 = vmatpush1.msra.mxu0 0.0
        %1287 = vmatprep.subr.mxu0 0.0
        %1288 = vmatpush1.msra.mxu0 0.0
        %1289 = vmatprep.subr.mxu0 0.0
        %1290 = vmatpush1.msra.mxu0 0.0
        %1291 = vmatprep.subr.mxu0 0.0
        %1292 = vmatpush1.msra.mxu0 0.0
        %1293 = vmatprep.subr.mxu0 0.0
        %1294 = vmatpush1.msra.mxu0 0.0
        %1295 = vmatprep.subr.mxu0 0.0
        %1296 = vmatpush1.msra.mxu0 0.0
        %1297 = vmatprep.subr.mxu0 0.0
        %1298 = vmatpush1.msra.mxu0 0.0
        %1299 = vmatprep.subr.mxu0 0.0
        %1300 = vmatpush1.msra.mxu0 0.0
        %1301 = vmatprep.subr.mxu0 0.0
        %1302 = vmatpush1.msra.mxu0 0.0
        %1303 = vmatprep.subr.mxu0 0.0
        %1304 = vmatpush1.msra.mxu0 0.0
        %1305 = vmatprep.subr.mxu0 0.0
        %1306 = vmatpush1.msra.mxu0 0.0
        %1307 = vmatprep.subr.mxu0 0.0
        %1308 = vmatpush1.msra.mxu0 %v1275
        %1309 = vmatprep.subr.mxu0 0.0
        %1310 = vmatpush2.msra.mxu0 0.0
        %1311 = vmatprep.subr.mxu0 0.0
        %1312 = vmatpush2.msra.mxu0 0.0
        %1313 = vmatprep.subr.mxu0 0.0
        %1314 = vmatpush2.msra.mxu0 0.0
        %1315 = vmatprep.subr.mxu0 0.0
        %1316 = vmatpush2.msra.mxu0 0.0
        %1317 = vmatprep.subr.mxu0 0.0
        %1318 = vmatpush2.msra.mxu0 0.0
        %1319 = vmatprep.subr.mxu0 0.0
        %1320 = vmatpush2.msra.mxu0 0.0
        %1321 = vmatprep.subr.mxu0 0.0
        %1322 = vmatpush2.msra.mxu0 0.0
        %1323 = vmatprep.subr.mxu0 0.0
        %1324 = vmatpush2.msra.mxu0 0.0
        %1325 = vmatprep.subr.mxu0 0.0
        %1326 = vmatpush2.msra.mxu0 0.0
        %1327 = vmatprep.subr.mxu0 0.0
        %1328 = vmatpush2.msra.mxu0 0.0
        %1329 = vmatprep.subr.mxu0 0.0
        %1330 = vmatpush2.msra.mxu0 0.0
        %1331 = vmatprep.subr.mxu0 0.0
        %1332 = vmatpush2.msra.mxu0 0.0
        %1333 = vmatprep.subr.mxu0 0.0
        %1334 = vmatpush2.msra.mxu0 0.0
        %1335 = vmatprep.subr.mxu0 0.0
        %1336 = vmatpush2.msra.mxu0 0.0
        %1337 = vmatprep.subr.mxu0 0.0
        %1338 = vmatpush2.msra.mxu0 0.0
        %1339 = vmatprep.subr.mxu0 0.0
        %1340 = vmatpush2.msra.mxu0 0.0
        %1341 = vmatprep.mubr.f32.mxu0 0.0
        %1342 = vmatmul.mubr.f32.gmra.mxu0 %v1269
        %v1343 = vpop.f32.mrf.mxu0
        %v1344 = vadd.f32 0.0, %v1343
        %v1345 = vpop.f32.mrf.mxu0
        %1346 = vmatprep.mubr.f32.mxu0 0.0
        %1347 = vmatmul.mubr.f32.gmra.mxu0 %v1272
        %v1348 = vpop.f32.mrf.mxu0
        %v1349 = vadd.f32 0.0, %v1348
        %v1350 = vpop.f32.mrf.mxu0
        %1351 = vdwg.mxu0
        %v1352 = vadd.f32 %v1264, %v1344
        %v1353 = vadd.f32 %v1265, %v1349
        %s1354 = scalar_lea.vmem [#allocation2], 32
        %1355 = vst.msk [vmem:[%s1354] sm:$0xff] %vm279, %v1352
        %1356 = vst.msk [vmem:[%s1354 + $0x8] sm:$0xff] %vm279, %v1353
        %v1357 = vld [vmem:[%s2] sm:$0xff]
        %v1358 = vld [vmem:[%s2 + $0x8] sm:$0xff]
        %v1359 = vrot.slane %v364, 4
        %v1361 = vsel %vm555, %v1357, 0
        %v1364 = vsel %vm555, %v1358, 0
        %v1366 = vsel %vm562, %v1359, 0
        %1368 = vmatprep.subr.mxu0 0.0
        %1369 = vmatpush1.msra.mxu0 0.0
        %1370 = vmatprep.subr.mxu0 0.0
        %1371 = vmatpush1.msra.mxu0 0.0
        %1372 = vmatprep.subr.mxu0 0.0
        %1373 = vmatpush1.msra.mxu0 0.0
        %1374 = vmatprep.subr.mxu0 0.0
        %1375 = vmatpush1.msra.mxu0 0.0
        %1376 = vmatprep.subr.mxu0 0.0
        %1377 = vmatpush1.msra.mxu0 0.0
        %1378 = vmatprep.subr.mxu0 0.0
        %1379 = vmatpush1.msra.mxu0 0.0
        %1380 = vmatprep.subr.mxu0 0.0
        %1381 = vmatpush1.msra.mxu0 0.0
        %1382 = vmatprep.subr.mxu0 0.0
        %1383 = vmatpush1.msra.mxu0 0.0
        %1384 = vmatprep.subr.mxu0 0.0
        %1385 = vmatpush1.msra.mxu0 0.0
        %1386 = vmatprep.subr.mxu0 0.0
        %1387 = vmatpush1.msra.mxu0 0.0
        %1388 = vmatprep.subr.mxu0 0.0
        %1389 = vmatpush1.msra.mxu0 0.0
        %1390 = vmatprep.subr.mxu0 0.0
        %1391 = vmatpush1.msra.mxu0 0.0
        %1392 = vmatprep.subr.mxu0 0.0
        %1393 = vmatpush1.msra.mxu0 0.0
        %1394 = vmatprep.subr.mxu0 0.0
        %1395 = vmatpush1.msra.mxu0 0.0
        %1396 = vmatprep.subr.mxu0 0.0
        %1397 = vmatpush1.msra.mxu0 0.0
        %1398 = vmatprep.subr.mxu0 0.0
        %1399 = vmatpush1.msra.mxu0 %v1366
        %1400 = vmatprep.subr.mxu0 0.0
        %1401 = vmatpush2.msra.mxu0 0.0
        %1402 = vmatprep.subr.mxu0 0.0
        %1403 = vmatpush2.msra.mxu0 0.0
        %1404 = vmatprep.subr.mxu0 0.0
        %1405 = vmatpush2.msra.mxu0 0.0
        %1406 = vmatprep.subr.mxu0 0.0
        %1407 = vmatpush2.msra.mxu0 0.0
        %1408 = vmatprep.subr.mxu0 0.0
        %1409 = vmatpush2.msra.mxu0 0.0
        %1410 = vmatprep.subr.mxu0 0.0
        %1411 = vmatpush2.msra.mxu0 0.0
        %1412 = vmatprep.subr.mxu0 0.0
        %1413 = vmatpush2.msra.mxu0 0.0
        %1414 = vmatprep.subr.mxu0 0.0
        %1415 = vmatpush2.msra.mxu0 0.0
        %1416 = vmatprep.subr.mxu0 0.0
        %1417 = vmatpush2.msra.mxu0 0.0
        %1418 = vmatprep.subr.mxu0 0.0
        %1419 = vmatpush2.msra.mxu0 0.0
        %1420 = vmatprep.subr.mxu0 0.0
        %1421 = vmatpush2.msra.mxu0 0.0
        %1422 = vmatprep.subr.mxu0 0.0
        %1423 = vmatpush2.msra.mxu0 0.0
        %1424 = vmatprep.subr.mxu0 0.0
        %1425 = vmatpush2.msra.mxu0 0.0
        %1426 = vmatprep.subr.mxu0 0.0
        %1427 = vmatpush2.msra.mxu0 0.0
        %1428 = vmatprep.subr.mxu0 0.0
        %1429 = vmatpush2.msra.mxu0 0.0
        %1430 = vmatprep.subr.mxu0 0.0
        %1431 = vmatpush2.msra.mxu0 0.0
        %1432 = vmatprep.mubr.f32.mxu0 0.0
        %1433 = vmatmul.mubr.f32.gmra.mxu0 %v1361
        %v1434 = vpop.f32.mrf.mxu0
        %v1435 = vadd.f32 0.0, %v1434
        %v1436 = vpop.f32.mrf.mxu0
        %1437 = vmatprep.mubr.f32.mxu0 0.0
        %1438 = vmatmul.mubr.f32.gmra.mxu0 %v1364
        %v1439 = vpop.f32.mrf.mxu0
        %v1440 = vadd.f32 0.0, %v1439
        %v1441 = vpop.f32.mrf.mxu0
        %1442 = vdwg.mxu0
        %v1443 = vadd.f32 %v266, %v1435
        %v1444 = vadd.f32 %v271, %v1440
        %v1445 = vld [vmem:[%s643] sm:$0xff]
        %v1446 = vld [vmem:[%s643 + $0x8] sm:$0xff]
        %v1447 = vrot.slane %v452, 4
        %v1449 = vsel %vm555, %v1445, 0
        %v1452 = vsel %vm555, %v1446, 0
        %v1454 = vsel %vm562, %v1447, 0
        %1456 = vmatprep.subr.mxu0 0.0
        %1457 = vmatpush1.msra.mxu0 0.0
        %1458 = vmatprep.subr.mxu0 0.0
        %1459 = vmatpush1.msra.mxu0 0.0
        %1460 = vmatprep.subr.mxu0 0.0
        %1461 = vmatpush1.msra.mxu0 0.0
        %1462 = vmatprep.subr.mxu0 0.0
        %1463 = vmatpush1.msra.mxu0 0.0
        %1464 = vmatprep.subr.mxu0 0.0
        %1465 = vmatpush1.msra.mxu0 0.0
        %1466 = vmatprep.subr.mxu0 0.0
        %1467 = vmatpush1.msra.mxu0 0.0
        %1468 = vmatprep.subr.mxu0 0.0
        %1469 = vmatpush1.msra.mxu0 0.0
        %1470 = vmatprep.subr.mxu0 0.0
        %1471 = vmatpush1.msra.mxu0 0.0
        %1472 = vmatprep.subr.mxu0 0.0
        %1473 = vmatpush1.msra.mxu0 0.0
        %1474 = vmatprep.subr.mxu0 0.0
        %1475 = vmatpush1.msra.mxu0 0.0
        %1476 = vmatprep.subr.mxu0 0.0
        %1477 = vmatpush1.msra.mxu0 0.0
        %1478 = vmatprep.subr.mxu0 0.0
        %1479 = vmatpush1.msra.mxu0 0.0
        %1480 = vmatprep.subr.mxu0 0.0
        %1481 = vmatpush1.msra.mxu0 0.0
        %1482 = vmatprep.subr.mxu0 0.0
        %1483 = vmatpush1.msra.mxu0 0.0
        %1484 = vmatprep.subr.mxu0 0.0
        %1485 = vmatpush1.msra.mxu0 0.0
        %1486 = vmatprep.subr.mxu0 0.0
        %1487 = vmatpush1.msra.mxu0 %v1454
        %1488 = vmatprep.subr.mxu0 0.0
        %1489 = vmatpush2.msra.mxu0 0.0
        %1490 = vmatprep.subr.mxu0 0.0
        %1491 = vmatpush2.msra.mxu0 0.0
        %1492 = vmatprep.subr.mxu0 0.0
        %1493 = vmatpush2.msra.mxu0 0.0
        %1494 = vmatprep.subr.mxu0 0.0
        %1495 = vmatpush2.msra.mxu0 0.0
        %1496 = vmatprep.subr.mxu0 0.0
        %1497 = vmatpush2.msra.mxu0 0.0
        %1498 = vmatprep.subr.mxu0 0.0
        %1499 = vmatpush2.msra.mxu0 0.0
        %1500 = vmatprep.subr.mxu0 0.0
        %1501 = vmatpush2.msra.mxu0 0.0
        %1502 = vmatprep.subr.mxu0 0.0
        %1503 = vmatpush2.msra.mxu0 0.0
        %1504 = vmatprep.subr.mxu0 0.0
        %1505 = vmatpush2.msra.mxu0 0.0
        %1506 = vmatprep.subr.mxu0 0.0
        %1507 = vmatpush2.msra.mxu0 0.0
        %1508 = vmatprep.subr.mxu0 0.0
        %1509 = vmatpush2.msra.mxu0 0.0
        %1510 = vmatprep.subr.mxu0 0.0
        %1511 = vmatpush2.msra.mxu0 0.0
        %1512 = vmatprep.subr.mxu0 0.0
        %1513 = vmatpush2.msra.mxu0 0.0
        %1514 = vmatprep.subr.mxu0 0.0
        %1515 = vmatpush2.msra.mxu0 0.0
        %1516 = vmatprep.subr.mxu0 0.0
        %1517 = vmatpush2.msra.mxu0 0.0
        %1518 = vmatprep.subr.mxu0 0.0
        %1519 = vmatpush2.msra.mxu0 0.0
        %1520 = vmatprep.mubr.f32.mxu0 0.0
        %1521 = vmatmul.mubr.f32.gmra.mxu0 %v1449
        %v1522 = vpop.f32.mrf.mxu0
        %v1523 = vadd.f32 0.0, %v1522
        %v1524 = vpop.f32.mrf.mxu0
        %1525 = vmatprep.mubr.f32.mxu0 0.0
        %1526 = vmatmul.mubr.f32.gmra.mxu0 %v1452
        %v1527 = vpop.f32.mrf.mxu0
        %v1528 = vadd.f32 0.0, %v1527
        %v1529 = vpop.f32.mrf.mxu0
        %1530 = vdwg.mxu0
        %v1531 = vadd.f32 %v1443, %v1523
        %v1532 = vadd.f32 %v1444, %v1528
        %v1533 = vld [vmem:[%s732] sm:$0xff]
        %v1534 = vld [vmem:[%s732 + $0x8] sm:$0xff]
        %v1535 = vrot.slane %v540, 4
        %v1537 = vsel %vm555, %v1533, 0
        %v1540 = vsel %vm555, %v1534, 0
        %v1542 = vsel %vm562, %v1535, 0
        %1544 = vmatprep.subr.mxu0 0.0
        %1545 = vmatpush1.msra.mxu0 0.0
        %1546 = vmatprep.subr.mxu0 0.0
        %1547 = vmatpush1.msra.mxu0 0.0
        %1548 = vmatprep.subr.mxu0 0.0
        %1549 = vmatpush1.msra.mxu0 0.0
        %1550 = vmatprep.subr.mxu0 0.0
        %1551 = vmatpush1.msra.mxu0 0.0
        %1552 = vmatprep.subr.mxu0 0.0
        %1553 = vmatpush1.msra.mxu0 0.0
        %1554 = vmatprep.subr.mxu0 0.0
        %1555 = vmatpush1.msra.mxu0 0.0
        %1556 = vmatprep.subr.mxu0 0.0
        %1557 = vmatpush1.msra.mxu0 0.0
        %1558 = vmatprep.subr.mxu0 0.0
        %1559 = vmatpush1.msra.mxu0 0.0
        %1560 = vmatprep.subr.mxu0 0.0
        %1561 = vmatpush1.msra.mxu0 0.0
        %1562 = vmatprep.subr.mxu0 0.0
        %1563 = vmatpush1.msra.mxu0 0.0
        %1564 = vmatprep.subr.mxu0 0.0
        %1565 = vmatpush1.msra.mxu0 0.0
        %1566 = vmatprep.subr.mxu0 0.0
        %1567 = vmatpush1.msra.mxu0 0.0
        %1568 = vmatprep.subr.mxu0 0.0
        %1569 = vmatpush1.msra.mxu0 0.0
        %1570 = vmatprep.subr.mxu0 0.0
        %1571 = vmatpush1.msra.mxu0 0.0
        %1572 = vmatprep.subr.mxu0 0.0
        %1573 = vmatpush1.msra.mxu0 0.0
        %1574 = vmatprep.subr.mxu0 0.0
        %1575 = vmatpush1.msra.mxu0 %v1542
        %1576 = vmatprep.subr.mxu0 0.0
        %1577 = vmatpush2.msra.mxu0 0.0
        %1578 = vmatprep.subr.mxu0 0.0
        %1579 = vmatpush2.msra.mxu0 0.0
        %1580 = vmatprep.subr.mxu0 0.0
        %1581 = vmatpush2.msra.mxu0 0.0
        %1582 = vmatprep.subr.mxu0 0.0
        %1583 = vmatpush2.msra.mxu0 0.0
        %1584 = vmatprep.subr.mxu0 0.0
        %1585 = vmatpush2.msra.mxu0 0.0
        %1586 = vmatprep.subr.mxu0 0.0
        %1587 = vmatpush2.msra.mxu0 0.0
        %1588 = vmatprep.subr.mxu0 0.0
        %1589 = vmatpush2.msra.mxu0 0.0
        %1590 = vmatprep.subr.mxu0 0.0
        %1591 = vmatpush2.msra.mxu0 0.0
        %1592 = vmatprep.subr.mxu0 0.0
        %1593 = vmatpush2.msra.mxu0 0.0
        %1594 = vmatprep.subr.mxu0 0.0
        %1595 = vmatpush2.msra.mxu0 0.0
        %1596 = vmatprep.subr.mxu0 0.0
        %1597 = vmatpush2.msra.mxu0 0.0
        %1598 = vmatprep.subr.mxu0 0.0
        %1599 = vmatpush2.msra.mxu0 0.0
        %1600 = vmatprep.subr.mxu0 0.0
        %1601 = vmatpush2.msra.mxu0 0.0
        %1602 = vmatprep.subr.mxu0 0.0
        %1603 = vmatpush2.msra.mxu0 0.0
        %1604 = vmatprep.subr.mxu0 0.0
        %1605 = vmatpush2.msra.mxu0 0.0
        %1606 = vmatprep.subr.mxu0 0.0
        %1607 = vmatpush2.msra.mxu0 0.0
        %1608 = vmatprep.mubr.f32.mxu0 0.0
        %1609 = vmatmul.mubr.f32.gmra.mxu0 %v1537
        %v1610 = vpop.f32.mrf.mxu0
        %v1611 = vadd.f32 0.0, %v1610
        %v1612 = vpop.f32.mrf.mxu0
        %1613 = vmatprep.mubr.f32.mxu0 0.0
        %1614 = vmatmul.mubr.f32.gmra.mxu0 %v1540
        %v1615 = vpop.f32.mrf.mxu0
        %v1616 = vadd.f32 0.0, %v1615
        %v1617 = vpop.f32.mrf.mxu0
        %1618 = vdwg.mxu0
        %v1619 = vadd.f32 %v1531, %v1611
        %v1620 = vadd.f32 %v1532, %v1616
        %s1621 = scalar_lea.vmem [#allocation2], 48
        %1622 = vst.msk [vmem:[%s1621] sm:$0xff] %vm279, %v1619
        %1623 = vst.msk [vmem:[%s1621 + $0x8] sm:$0xff] %vm279, %v1620
        %v1624 = vld [vmem:[%s2] sm:$0xff]
        %v1625 = vld [vmem:[%s2 + $0x8] sm:$0xff]
        %v1627 = vsel %vm555, %v1624, 0
        %v1630 = vsel %vm555, %v1625, 0
        %v1633 = vsel %vm562, %v369, 0
        %1635 = vmatprep.subr.mxu0 0.0
        %1636 = vmatpush1.msra.mxu0 0.0
        %1637 = vmatprep.subr.mxu0 0.0
        %1638 = vmatpush1.msra.mxu0 0.0
        %1639 = vmatprep.subr.mxu0 0.0
        %1640 = vmatpush1.msra.mxu0 0.0
        %1641 = vmatprep.subr.mxu0 0.0
        %1642 = vmatpush1.msra.mxu0 0.0
        %1643 = vmatprep.subr.mxu0 0.0
        %1644 = vmatpush1.msra.mxu0 0.0
        %1645 = vmatprep.subr.mxu0 0.0
        %1646 = vmatpush1.msra.mxu0 0.0
        %1647 = vmatprep.subr.mxu0 0.0
        %1648 = vmatpush1.msra.mxu0 0.0
        %1649 = vmatprep.subr.mxu0 0.0
        %1650 = vmatpush1.msra.mxu0 0.0
        %1651 = vmatprep.subr.mxu0 0.0
        %1652 = vmatpush1.msra.mxu0 0.0
        %1653 = vmatprep.subr.mxu0 0.0
        %1654 = vmatpush1.msra.mxu0 0.0
        %1655 = vmatprep.subr.mxu0 0.0
        %1656 = vmatpush1.msra.mxu0 0.0
        %1657 = vmatprep.subr.mxu0 0.0
        %1658 = vmatpush1.msra.mxu0 0.0
        %1659 = vmatprep.subr.mxu0 0.0
        %1660 = vmatpush1.msra.mxu0 0.0
        %1661 = vmatprep.subr.mxu0 0.0
        %1662 = vmatpush1.msra.mxu0 0.0
        %1663 = vmatprep.subr.mxu0 0.0
        %1664 = vmatpush1.msra.mxu0 0.0
        %1665 = vmatprep.subr.mxu0 0.0
        %1666 = vmatpush1.msra.mxu0 %v1633
        %1667 = vmatprep.subr.mxu0 0.0
        %1668 = vmatpush2.msra.mxu0 0.0
        %1669 = vmatprep.subr.mxu0 0.0
        %1670 = vmatpush2.msra.mxu0 0.0
        %1671 = vmatprep.subr.mxu0 0.0
        %1672 = vmatpush2.msra.mxu0 0.0
        %1673 = vmatprep.subr.mxu0 0.0
        %1674 = vmatpush2.msra.mxu0 0.0
        %1675 = vmatprep.subr.mxu0 0.0
        %1676 = vmatpush2.msra.mxu0 0.0
        %1677 = vmatprep.subr.mxu0 0.0
        %1678 = vmatpush2.msra.mxu0 0.0
        %1679 = vmatprep.subr.mxu0 0.0
        %1680 = vmatpush2.msra.mxu0 0.0
        %1681 = vmatprep.subr.mxu0 0.0
        %1682 = vmatpush2.msra.mxu0 0.0
        %1683 = vmatprep.subr.mxu0 0.0
        %1684 = vmatpush2.msra.mxu0 0.0
        %1685 = vmatprep.subr.mxu0 0.0
        %1686 = vmatpush2.msra.mxu0 0.0
        %1687 = vmatprep.subr.mxu0 0.0
        %1688 = vmatpush2.msra.mxu0 0.0
        %1689 = vmatprep.subr.mxu0 0.0
        %1690 = vmatpush2.msra.mxu0 0.0
        %1691 = vmatprep.subr.mxu0 0.0
        %1692 = vmatpush2.msra.mxu0 0.0
        %1693 = vmatprep.subr.mxu0 0.0
        %1694 = vmatpush2.msra.mxu0 0.0
        %1695 = vmatprep.subr.mxu0 0.0
        %1696 = vmatpush2.msra.mxu0 0.0
        %1697 = vmatprep.subr.mxu0 0.0
        %1698 = vmatpush2.msra.mxu0 0.0
        %1699 = vmatprep.mubr.f32.mxu0 0.0
        %1700 = vmatmul.mubr.f32.gmra.mxu0 %v1627
        %v1701 = vpop.f32.mrf.mxu0
        %v1702 = vadd.f32 0.0, %v1701
        %v1703 = vpop.f32.mrf.mxu0
        %1704 = vmatprep.mubr.f32.mxu0 0.0
        %1705 = vmatmul.mubr.f32.gmra.mxu0 %v1630
        %v1706 = vpop.f32.mrf.mxu0
        %v1707 = vadd.f32 0.0, %v1706
        %v1708 = vpop.f32.mrf.mxu0
        %1709 = vdwg.mxu0
        %v1710 = vadd.f32 %v266, %v1702
        %v1711 = vadd.f32 %v271, %v1707
        %v1712 = vld [vmem:[%s643] sm:$0xff]
        %v1713 = vld [vmem:[%s643 + $0x8] sm:$0xff]
        %v1715 = vsel %vm555, %v1712, 0
        %v1718 = vsel %vm555, %v1713, 0
        %v1721 = vsel %vm562, %v457, 0
        %1723 = vmatprep.subr.mxu0 0.0
        %1724 = vmatpush1.msra.mxu0 0.0
        %1725 = vmatprep.subr.mxu0 0.0
        %1726 = vmatpush1.msra.mxu0 0.0
        %1727 = vmatprep.subr.mxu0 0.0
        %1728 = vmatpush1.msra.mxu0 0.0
        %1729 = vmatprep.subr.mxu0 0.0
        %1730 = vmatpush1.msra.mxu0 0.0
        %1731 = vmatprep.subr.mxu0 0.0
        %1732 = vmatpush1.msra.mxu0 0.0
        %1733 = vmatprep.subr.mxu0 0.0
        %1734 = vmatpush1.msra.mxu0 0.0
        %1735 = vmatprep.subr.mxu0 0.0
        %1736 = vmatpush1.msra.mxu0 0.0
        %1737 = vmatprep.subr.mxu0 0.0
        %1738 = vmatpush1.msra.mxu0 0.0
        %1739 = vmatprep.subr.mxu0 0.0
        %1740 = vmatpush1.msra.mxu0 0.0
        %1741 = vmatprep.subr.mxu0 0.0
        %1742 = vmatpush1.msra.mxu0 0.0
        %1743 = vmatprep.subr.mxu0 0.0
        %1744 = vmatpush1.msra.mxu0 0.0
        %1745 = vmatprep.subr.mxu0 0.0
        %1746 = vmatpush1.msra.mxu0 0.0
        %1747 = vmatprep.subr.mxu0 0.0
        %1748 = vmatpush1.msra.mxu0 0.0
        %1749 = vmatprep.subr.mxu0 0.0
        %1750 = vmatpush1.msra.mxu0 0.0
        %1751 = vmatprep.subr.mxu0 0.0
        %1752 = vmatpush1.msra.mxu0 0.0
        %1753 = vmatprep.subr.mxu0 0.0
        %1754 = vmatpush1.msra.mxu0 %v1721
        %1755 = vmatprep.subr.mxu0 0.0
        %1756 = vmatpush2.msra.mxu0 0.0
        %1757 = vmatprep.subr.mxu0 0.0
        %1758 = vmatpush2.msra.mxu0 0.0
        %1759 = vmatprep.subr.mxu0 0.0
        %1760 = vmatpush2.msra.mxu0 0.0
        %1761 = vmatprep.subr.mxu0 0.0
        %1762 = vmatpush2.msra.mxu0 0.0
        %1763 = vmatprep.subr.mxu0 0.0
        %1764 = vmatpush2.msra.mxu0 0.0
        %1765 = vmatprep.subr.mxu0 0.0
        %1766 = vmatpush2.msra.mxu0 0.0
        %1767 = vmatprep.subr.mxu0 0.0
        %1768 = vmatpush2.msra.mxu0 0.0
        %1769 = vmatprep.subr.mxu0 0.0
        %1770 = vmatpush2.msra.mxu0 0.0
        %1771 = vmatprep.subr.mxu0 0.0
        %1772 = vmatpush2.msra.mxu0 0.0
        %1773 = vmatprep.subr.mxu0 0.0
        %1774 = vmatpush2.msra.mxu0 0.0
        %1775 = vmatprep.subr.mxu0 0.0
        %1776 = vmatpush2.msra.mxu0 0.0
        %1777 = vmatprep.subr.mxu0 0.0
        %1778 = vmatpush2.msra.mxu0 0.0
        %1779 = vmatprep.subr.mxu0 0.0
        %1780 = vmatpush2.msra.mxu0 0.0
        %1781 = vmatprep.subr.mxu0 0.0
        %1782 = vmatpush2.msra.mxu0 0.0
        %1783 = vmatprep.subr.mxu0 0.0
        %1784 = vmatpush2.msra.mxu0 0.0
        %1785 = vmatprep.subr.mxu0 0.0
        %1786 = vmatpush2.msra.mxu0 0.0
        %1787 = vmatprep.mubr.f32.mxu0 0.0
        %1788 = vmatmul.mubr.f32.gmra.mxu0 %v1715
        %v1789 = vpop.f32.mrf.mxu0
        %v1790 = vadd.f32 0.0, %v1789
        %v1791 = vpop.f32.mrf.mxu0
        %1792 = vmatprep.mubr.f32.mxu0 0.0
        %1793 = vmatmul.mubr.f32.gmra.mxu0 %v1718
        %v1794 = vpop.f32.mrf.mxu0
        %v1795 = vadd.f32 0.0, %v1794
        %v1796 = vpop.f32.mrf.mxu0
        %1797 = vdwg.mxu0
        %v1798 = vadd.f32 %v1710, %v1790
        %v1799 = vadd.f32 %v1711, %v1795
        %v1800 = vld [vmem:[%s732] sm:$0xff]
        %v1801 = vld [vmem:[%s732 + $0x8] sm:$0xff]
        %v1803 = vsel %vm555, %v1800, 0
        %v1806 = vsel %vm555, %v1801, 0
        %v1809 = vsel %vm562, %v545, 0
        %1811 = vmatprep.subr.mxu0 0.0
        %1812 = vmatpush1.msra.mxu0 0.0
        %1813 = vmatprep.subr.mxu0 0.0
        %1814 = vmatpush1.msra.mxu0 0.0
        %1815 = vmatprep.subr.mxu0 0.0
        %1816 = vmatpush1.msra.mxu0 0.0
        %1817 = vmatprep.subr.mxu0 0.0
        %1818 = vmatpush1.msra.mxu0 0.0
        %1819 = vmatprep.subr.mxu0 0.0
        %1820 = vmatpush1.msra.mxu0 0.0
        %1821 = vmatprep.subr.mxu0 0.0
        %1822 = vmatpush1.msra.mxu0 0.0
        %1823 = vmatprep.subr.mxu0 0.0
        %1824 = vmatpush1.msra.mxu0 0.0
        %1825 = vmatprep.subr.mxu0 0.0
        %1826 = vmatpush1.msra.mxu0 0.0
        %1827 = vmatprep.subr.mxu0 0.0
        %1828 = vmatpush1.msra.mxu0 0.0
        %1829 = vmatprep.subr.mxu0 0.0
        %1830 = vmatpush1.msra.mxu0 0.0
        %1831 = vmatprep.subr.mxu0 0.0
        %1832 = vmatpush1.msra.mxu0 0.0
        %1833 = vmatprep.subr.mxu0 0.0
        %1834 = vmatpush1.msra.mxu0 0.0
        %1835 = vmatprep.subr.mxu0 0.0
        %1836 = vmatpush1.msra.mxu0 0.0
        %1837 = vmatprep.subr.mxu0 0.0
        %1838 = vmatpush1.msra.mxu0 0.0
        %1839 = vmatprep.subr.mxu0 0.0
        %1840 = vmatpush1.msra.mxu0 0.0
        %1841 = vmatprep.subr.mxu0 0.0
        %1842 = vmatpush1.msra.mxu0 %v1809
        %1843 = vmatprep.subr.mxu0 0.0
        %1844 = vmatpush2.msra.mxu0 0.0
        %1845 = vmatprep.subr.mxu0 0.0
        %1846 = vmatpush2.msra.mxu0 0.0
        %1847 = vmatprep.subr.mxu0 0.0
        %1848 = vmatpush2.msra.mxu0 0.0
        %1849 = vmatprep.subr.mxu0 0.0
        %1850 = vmatpush2.msra.mxu0 0.0
        %1851 = vmatprep.subr.mxu0 0.0
        %1852 = vmatpush2.msra.mxu0 0.0
        %1853 = vmatprep.subr.mxu0 0.0
        %1854 = vmatpush2.msra.mxu0 0.0
        %1855 = vmatprep.subr.mxu0 0.0
        %1856 = vmatpush2.msra.mxu0 0.0
        %1857 = vmatprep.subr.mxu0 0.0
        %1858 = vmatpush2.msra.mxu0 0.0
        %1859 = vmatprep.subr.mxu0 0.0
        %1860 = vmatpush2.msra.mxu0 0.0
        %1861 = vmatprep.subr.mxu0 0.0
        %1862 = vmatpush2.msra.mxu0 0.0
        %1863 = vmatprep.subr.mxu0 0.0
        %1864 = vmatpush2.msra.mxu0 0.0
        %1865 = vmatprep.subr.mxu0 0.0
        %1866 = vmatpush2.msra.mxu0 0.0
        %1867 = vmatprep.subr.mxu0 0.0
        %1868 = vmatpush2.msra.mxu0 0.0
        %1869 = vmatprep.subr.mxu0 0.0
        %1870 = vmatpush2.msra.mxu0 0.0
        %1871 = vmatprep.subr.mxu0 0.0
        %1872 = vmatpush2.msra.mxu0 0.0
        %1873 = vmatprep.subr.mxu0 0.0
        %1874 = vmatpush2.msra.mxu0 0.0
        %1875 = vmatprep.mubr.f32.mxu0 0.0
        %1876 = vmatmul.mubr.f32.gmra.mxu0 %v1803
        %v1877 = vpop.f32.mrf.mxu0
        %v1878 = vadd.f32 0.0, %v1877
        %v1879 = vpop.f32.mrf.mxu0
        %1880 = vmatprep.mubr.f32.mxu0 0.0
        %1881 = vmatmul.mubr.f32.gmra.mxu0 %v1806
        %v1882 = vpop.f32.mrf.mxu0
        %v1883 = vadd.f32 0.0, %v1882
        %v1884 = vpop.f32.mrf.mxu0
        %1885 = vdwg.mxu0
        %v1886 = vadd.f32 %v1798, %v1878
        %v1887 = vadd.f32 %v1799, %v1883
        %s1888 = scalar_lea.vmem [#allocation2], 64
        %1889 = vst.msk [vmem:[%s1888] sm:$0xff] %vm279, %v1886
        %1890 = vst.msk [vmem:[%s1888 + $0x8] sm:$0xff] %vm279, %v1887
        %v1891 = vld [vmem:[%s2] sm:$0xff]
        %v1892 = vld [vmem:[%s2 + $0x8] sm:$0xff]
        %v1893 = vrot.slane %v369, 4
        %v1895 = vsel %vm555, %v1891, 0
        %v1898 = vsel %vm555, %v1892, 0
        %v1900 = vsel %vm562, %v1893, 0
        %1902 = vmatprep.subr.mxu0 0.0
        %1903 = vmatpush1.msra.mxu0 0.0
        %1904 = vmatprep.subr.mxu0 0.0
        %1905 = vmatpush1.msra.mxu0 0.0
        %1906 = vmatprep.subr.mxu0 0.0
        %1907 = vmatpush1.msra.mxu0 0.0
        %1908 = vmatprep.subr.mxu0 0.0
        %1909 = vmatpush1.msra.mxu0 0.0
        %1910 = vmatprep.subr.mxu0 0.0
        %1911 = vmatpush1.msra.mxu0 0.0
        %1912 = vmatprep.subr.mxu0 0.0
        %1913 = vmatpush1.msra.mxu0 0.0
        %1914 = vmatprep.subr.mxu0 0.0
        %1915 = vmatpush1.msra.mxu0 0.0
        %1916 = vmatprep.subr.mxu0 0.0
        %1917 = vmatpush1.msra.mxu0 0.0
        %1918 = vmatprep.subr.mxu0 0.0
        %1919 = vmatpush1.msra.mxu0 0.0
        %1920 = vmatprep.subr.mxu0 0.0
        %1921 = vmatpush1.msra.mxu0 0.0
        %1922 = vmatprep.subr.mxu0 0.0
        %1923 = vmatpush1.msra.mxu0 0.0
        %1924 = vmatprep.subr.mxu0 0.0
        %1925 = vmatpush1.msra.mxu0 0.0
        %1926 = vmatprep.subr.mxu0 0.0
        %1927 = vmatpush1.msra.mxu0 0.0
        %1928 = vmatprep.subr.mxu0 0.0
        %1929 = vmatpush1.msra.mxu0 0.0
        %1930 = vmatprep.subr.mxu0 0.0
        %1931 = vmatpush1.msra.mxu0 0.0
        %1932 = vmatprep.subr.mxu0 0.0
        %1933 = vmatpush1.msra.mxu0 %v1900
        %1934 = vmatprep.subr.mxu0 0.0
        %1935 = vmatpush2.msra.mxu0 0.0
        %1936 = vmatprep.subr.mxu0 0.0
        %1937 = vmatpush2.msra.mxu0 0.0
        %1938 = vmatprep.subr.mxu0 0.0
        %1939 = vmatpush2.msra.mxu0 0.0
        %1940 = vmatprep.subr.mxu0 0.0
        %1941 = vmatpush2.msra.mxu0 0.0
        %1942 = vmatprep.subr.mxu0 0.0
        %1943 = vmatpush2.msra.mxu0 0.0
        %1944 = vmatprep.subr.mxu0 0.0
        %1945 = vmatpush2.msra.mxu0 0.0
        %1946 = vmatprep.subr.mxu0 0.0
        %1947 = vmatpush2.msra.mxu0 0.0
        %1948 = vmatprep.subr.mxu0 0.0
        %1949 = vmatpush2.msra.mxu0 0.0
        %1950 = vmatprep.subr.mxu0 0.0
        %1951 = vmatpush2.msra.mxu0 0.0
        %1952 = vmatprep.subr.mxu0 0.0
        %1953 = vmatpush2.msra.mxu0 0.0
        %1954 = vmatprep.subr.mxu0 0.0
        %1955 = vmatpush2.msra.mxu0 0.0
        %1956 = vmatprep.subr.mxu0 0.0
        %1957 = vmatpush2.msra.mxu0 0.0
        %1958 = vmatprep.subr.mxu0 0.0
        %1959 = vmatpush2.msra.mxu0 0.0
        %1960 = vmatprep.subr.mxu0 0.0
        %1961 = vmatpush2.msra.mxu0 0.0
        %1962 = vmatprep.subr.mxu0 0.0
        %1963 = vmatpush2.msra.mxu0 0.0
        %1964 = vmatprep.subr.mxu0 0.0
        %1965 = vmatpush2.msra.mxu0 0.0
        %1966 = vmatprep.mubr.f32.mxu0 0.0
        %1967 = vmatmul.mubr.f32.gmra.mxu0 %v1895
        %v1968 = vpop.f32.mrf.mxu0
        %v1969 = vadd.f32 0.0, %v1968
        %v1970 = vpop.f32.mrf.mxu0
        %1971 = vmatprep.mubr.f32.mxu0 0.0
        %1972 = vmatmul.mubr.f32.gmra.mxu0 %v1898
        %v1973 = vpop.f32.mrf.mxu0
        %v1974 = vadd.f32 0.0, %v1973
        %v1975 = vpop.f32.mrf.mxu0
        %1976 = vdwg.mxu0
        %v1977 = vadd.f32 %v266, %v1969
        %v1978 = vadd.f32 %v271, %v1974
        %v1979 = vld [vmem:[%s643] sm:$0xff]
        %v1980 = vld [vmem:[%s643 + $0x8] sm:$0xff]
        %v1981 = vrot.slane %v457, 4
        %v1983 = vsel %vm555, %v1979, 0
        %v1986 = vsel %vm555, %v1980, 0
        %v1988 = vsel %vm562, %v1981, 0
        %1990 = vmatprep.subr.mxu0 0.0
        %1991 = vmatpush1.msra.mxu0 0.0
        %1992 = vmatprep.subr.mxu0 0.0
        %1993 = vmatpush1.msra.mxu0 0.0
        %1994 = vmatprep.subr.mxu0 0.0
        %1995 = vmatpush1.msra.mxu0 0.0
        %1996 = vmatprep.subr.mxu0 0.0
        %1997 = vmatpush1.msra.mxu0 0.0
        %1998 = vmatprep.subr.mxu0 0.0
        %1999 = vmatpush1.msra.mxu0 0.0
        %2000 = vmatprep.subr.mxu0 0.0
        %2001 = vmatpush1.msra.mxu0 0.0
        %2002 = vmatprep.subr.mxu0 0.0
        %2003 = vmatpush1.msra.mxu0 0.0
        %2004 = vmatprep.subr.mxu0 0.0
        %2005 = vmatpush1.msra.mxu0 0.0
        %2006 = vmatprep.subr.mxu0 0.0
        %2007 = vmatpush1.msra.mxu0 0.0
        %2008 = vmatprep.subr.mxu0 0.0
        %2009 = vmatpush1.msra.mxu0 0.0
        %2010 = vmatprep.subr.mxu0 0.0
        %2011 = vmatpush1.msra.mxu0 0.0
        %2012 = vmatprep.subr.mxu0 0.0
        %2013 = vmatpush1.msra.mxu0 0.0
        %2014 = vmatprep.subr.mxu0 0.0
        %2015 = vmatpush1.msra.mxu0 0.0
        %2016 = vmatprep.subr.mxu0 0.0
        %2017 = vmatpush1.msra.mxu0 0.0
        %2018 = vmatprep.subr.mxu0 0.0
        %2019 = vmatpush1.msra.mxu0 0.0
        %2020 = vmatprep.subr.mxu0 0.0
        %2021 = vmatpush1.msra.mxu0 %v1988
        %2022 = vmatprep.subr.mxu0 0.0
        %2023 = vmatpush2.msra.mxu0 0.0
        %2024 = vmatprep.subr.mxu0 0.0
        %2025 = vmatpush2.msra.mxu0 0.0
        %2026 = vmatprep.subr.mxu0 0.0
        %2027 = vmatpush2.msra.mxu0 0.0
        %2028 = vmatprep.subr.mxu0 0.0
        %2029 = vmatpush2.msra.mxu0 0.0
        %2030 = vmatprep.subr.mxu0 0.0
        %2031 = vmatpush2.msra.mxu0 0.0
        %2032 = vmatprep.subr.mxu0 0.0
        %2033 = vmatpush2.msra.mxu0 0.0
        %2034 = vmatprep.subr.mxu0 0.0
        %2035 = vmatpush2.msra.mxu0 0.0
        %2036 = vmatprep.subr.mxu0 0.0
        %2037 = vmatpush2.msra.mxu0 0.0
        %2038 = vmatprep.subr.mxu0 0.0
        %2039 = vmatpush2.msra.mxu0 0.0
        %2040 = vmatprep.subr.mxu0 0.0
        %2041 = vmatpush2.msra.mxu0 0.0
        %2042 = vmatprep.subr.mxu0 0.0
        %2043 = vmatpush2.msra.mxu0 0.0
        %2044 = vmatprep.subr.mxu0 0.0
        %2045 = vmatpush2.msra.mxu0 0.0
        %2046 = vmatprep.subr.mxu0 0.0
        %2047 = vmatpush2.msra.mxu0 0.0
        %2048 = vmatprep.subr.mxu0 0.0
        %2049 = vmatpush2.msra.mxu0 0.0
        %2050 = vmatprep.subr.mxu0 0.0
        %2051 = vmatpush2.msra.mxu0 0.0
        %2052 = vmatprep.subr.mxu0 0.0
        %2053 = vmatpush2.msra.mxu0 0.0
        %2054 = vmatprep.mubr.f32.mxu0 0.0
        %2055 = vmatmul.mubr.f32.gmra.mxu0 %v1983
        %v2056 = vpop.f32.mrf.mxu0
        %v2057 = vadd.f32 0.0, %v2056
        %v2058 = vpop.f32.mrf.mxu0
        %2059 = vmatprep.mubr.f32.mxu0 0.0
        %2060 = vmatmul.mubr.f32.gmra.mxu0 %v1986
        %v2061 = vpop.f32.mrf.mxu0
        %v2062 = vadd.f32 0.0, %v2061
        %v2063 = vpop.f32.mrf.mxu0
        %2064 = vdwg.mxu0
        %v2065 = vadd.f32 %v1977, %v2057
        %v2066 = vadd.f32 %v1978, %v2062
        %v2067 = vld [vmem:[%s732] sm:$0xff]
        %v2068 = vld [vmem:[%s732 + $0x8] sm:$0xff]
        %v2069 = vrot.slane %v545, 4
        %v2071 = vsel %vm555, %v2067, 0
        %v2074 = vsel %vm555, %v2068, 0
        %v2076 = vsel %vm562, %v2069, 0
        %2078 = vmatprep.subr.mxu0 0.0
        %2079 = vmatpush1.msra.mxu0 0.0
        %2080 = vmatprep.subr.mxu0 0.0
        %2081 = vmatpush1.msra.mxu0 0.0
        %2082 = vmatprep.subr.mxu0 0.0
        %2083 = vmatpush1.msra.mxu0 0.0
        %2084 = vmatprep.subr.mxu0 0.0
        %2085 = vmatpush1.msra.mxu0 0.0
        %2086 = vmatprep.subr.mxu0 0.0
        %2087 = vmatpush1.msra.mxu0 0.0
        %2088 = vmatprep.subr.mxu0 0.0
        %2089 = vmatpush1.msra.mxu0 0.0
        %2090 = vmatprep.subr.mxu0 0.0
        %2091 = vmatpush1.msra.mxu0 0.0
        %2092 = vmatprep.subr.mxu0 0.0
        %2093 = vmatpush1.msra.mxu0 0.0
        %2094 = vmatprep.subr.mxu0 0.0
        %2095 = vmatpush1.msra.mxu0 0.0
        %2096 = vmatprep.subr.mxu0 0.0
        %2097 = vmatpush1.msra.mxu0 0.0
        %2098 = vmatprep.subr.mxu0 0.0
        %2099 = vmatpush1.msra.mxu0 0.0
        %2100 = vmatprep.subr.mxu0 0.0
        %2101 = vmatpush1.msra.mxu0 0.0
        %2102 = vmatprep.subr.mxu0 0.0
        %2103 = vmatpush1.msra.mxu0 0.0
        %2104 = vmatprep.subr.mxu0 0.0
        %2105 = vmatpush1.msra.mxu0 0.0
        %2106 = vmatprep.subr.mxu0 0.0
        %2107 = vmatpush1.msra.mxu0 0.0
        %2108 = vmatprep.subr.mxu0 0.0
        %2109 = vmatpush1.msra.mxu0 %v2076
        %2110 = vmatprep.subr.mxu0 0.0
        %2111 = vmatpush2.msra.mxu0 0.0
        %2112 = vmatprep.subr.mxu0 0.0
        %2113 = vmatpush2.msra.mxu0 0.0
        %2114 = vmatprep.subr.mxu0 0.0
        %2115 = vmatpush2.msra.mxu0 0.0
        %2116 = vmatprep.subr.mxu0 0.0
        %2117 = vmatpush2.msra.mxu0 0.0
        %2118 = vmatprep.subr.mxu0 0.0
        %2119 = vmatpush2.msra.mxu0 0.0
        %2120 = vmatprep.subr.mxu0 0.0
        %2121 = vmatpush2.msra.mxu0 0.0
        %2122 = vmatprep.subr.mxu0 0.0
        %2123 = vmatpush2.msra.mxu0 0.0
        %2124 = vmatprep.subr.mxu0 0.0
        %2125 = vmatpush2.msra.mxu0 0.0
        %2126 = vmatprep.subr.mxu0 0.0
        %2127 = vmatpush2.msra.mxu0 0.0
        %2128 = vmatprep.subr.mxu0 0.0
        %2129 = vmatpush2.msra.mxu0 0.0
        %2130 = vmatprep.subr.mxu0 0.0
        %2131 = vmatpush2.msra.mxu0 0.0
        %2132 = vmatprep.subr.mxu0 0.0
        %2133 = vmatpush2.msra.mxu0 0.0
        %2134 = vmatprep.subr.mxu0 0.0
        %2135 = vmatpush2.msra.mxu0 0.0
        %2136 = vmatprep.subr.mxu0 0.0
        %2137 = vmatpush2.msra.mxu0 0.0
        %2138 = vmatprep.subr.mxu0 0.0
        %2139 = vmatpush2.msra.mxu0 0.0
        %2140 = vmatprep.subr.mxu0 0.0
        %2141 = vmatpush2.msra.mxu0 0.0
        %2142 = vmatprep.mubr.f32.mxu0 0.0
        %2143 = vmatmul.mubr.f32.gmra.mxu0 %v2071
        %v2144 = vpop.f32.mrf.mxu0
        %v2145 = vadd.f32 0.0, %v2144
        %v2146 = vpop.f32.mrf.mxu0
        %2147 = vmatprep.mubr.f32.mxu0 0.0
        %2148 = vmatmul.mubr.f32.gmra.mxu0 %v2074
        %v2149 = vpop.f32.mrf.mxu0
        %v2150 = vadd.f32 0.0, %v2149
        %v2151 = vpop.f32.mrf.mxu0
        %2152 = vdwg.mxu0
        %v2153 = vadd.f32 %v2065, %v2145
        %v2154 = vadd.f32 %v2066, %v2150
        %s2155 = scalar_lea.vmem [#allocation2], 80
        %2156 = vst.msk [vmem:[%s2155] sm:$0xff] %vm279, %v2153
        %2157 = vst.msk [vmem:[%s2155 + $0x8] sm:$0xff] %vm279, %v2154
        %v2158 = vld [vmem:[%s2] sm:$0xff]
        %v2159 = vld [vmem:[%s2 + $0x8] sm:$0xff]
        %v2161 = vsel %vm555, %v2158, 0
        %v2164 = vsel %vm555, %v2159, 0
        %v2167 = vsel %vm562, %v374, 0
        %2169 = vmatprep.subr.mxu0 0.0
        %2170 = vmatpush1.msra.mxu0 0.0
        %2171 = vmatprep.subr.mxu0 0.0
        %2172 = vmatpush1.msra.mxu0 0.0
        %2173 = vmatprep.subr.mxu0 0.0
        %2174 = vmatpush1.msra.mxu0 0.0
        %2175 = vmatprep.subr.mxu0 0.0
        %2176 = vmatpush1.msra.mxu0 0.0
        %2177 = vmatprep.subr.mxu0 0.0
        %2178 = vmatpush1.msra.mxu0 0.0
        %2179 = vmatprep.subr.mxu0 0.0
        %2180 = vmatpush1.msra.mxu0 0.0
        %2181 = vmatprep.subr.mxu0 0.0
        %2182 = vmatpush1.msra.mxu0 0.0
        %2183 = vmatprep.subr.mxu0 0.0
        %2184 = vmatpush1.msra.mxu0 0.0
        %2185 = vmatprep.subr.mxu0 0.0
        %2186 = vmatpush1.msra.mxu0 0.0
        %2187 = vmatprep.subr.mxu0 0.0
        %2188 = vmatpush1.msra.mxu0 0.0
        %2189 = vmatprep.subr.mxu0 0.0
        %2190 = vmatpush1.msra.mxu0 0.0
        %2191 = vmatprep.subr.mxu0 0.0
        %2192 = vmatpush1.msra.mxu0 0.0
        %2193 = vmatprep.subr.mxu0 0.0
        %2194 = vmatpush1.msra.mxu0 0.0
        %2195 = vmatprep.subr.mxu0 0.0
        %2196 = vmatpush1.msra.mxu0 0.0
        %2197 = vmatprep.subr.mxu0 0.0
        %2198 = vmatpush1.msra.mxu0 0.0
        %2199 = vmatprep.subr.mxu0 0.0
        %2200 = vmatpush1.msra.mxu0 %v2167
        %2201 = vmatprep.subr.mxu0 0.0
        %2202 = vmatpush2.msra.mxu0 0.0
        %2203 = vmatprep.subr.mxu0 0.0
        %2204 = vmatpush2.msra.mxu0 0.0
        %2205 = vmatprep.subr.mxu0 0.0
        %2206 = vmatpush2.msra.mxu0 0.0
        %2207 = vmatprep.subr.mxu0 0.0
        %2208 = vmatpush2.msra.mxu0 0.0
        %2209 = vmatprep.subr.mxu0 0.0
        %2210 = vmatpush2.msra.mxu0 0.0
        %2211 = vmatprep.subr.mxu0 0.0
        %2212 = vmatpush2.msra.mxu0 0.0
        %2213 = vmatprep.subr.mxu0 0.0
        %2214 = vmatpush2.msra.mxu0 0.0
        %2215 = vmatprep.subr.mxu0 0.0
        %2216 = vmatpush2.msra.mxu0 0.0
        %2217 = vmatprep.subr.mxu0 0.0
        %2218 = vmatpush2.msra.mxu0 0.0
        %2219 = vmatprep.subr.mxu0 0.0
        %2220 = vmatpush2.msra.mxu0 0.0
        %2221 = vmatprep.subr.mxu0 0.0
        %2222 = vmatpush2.msra.mxu0 0.0
        %2223 = vmatprep.subr.mxu0 0.0
        %2224 = vmatpush2.msra.mxu0 0.0
        %2225 = vmatprep.subr.mxu0 0.0
        %2226 = vmatpush2.msra.mxu0 0.0
        %2227 = vmatprep.subr.mxu0 0.0
        %2228 = vmatpush2.msra.mxu0 0.0
        %2229 = vmatprep.subr.mxu0 0.0
        %2230 = vmatpush2.msra.mxu0 0.0
        %2231 = vmatprep.subr.mxu0 0.0
        %2232 = vmatpush2.msra.mxu0 0.0
        %2233 = vmatprep.mubr.f32.mxu0 0.0
        %2234 = vmatmul.mubr.f32.gmra.mxu0 %v2161
        %v2235 = vpop.f32.mrf.mxu0
        %v2236 = vadd.f32 0.0, %v2235
        %v2237 = vpop.f32.mrf.mxu0
        %2238 = vmatprep.mubr.f32.mxu0 0.0
        %2239 = vmatmul.mubr.f32.gmra.mxu0 %v2164
        %v2240 = vpop.f32.mrf.mxu0
        %v2241 = vadd.f32 0.0, %v2240
        %v2242 = vpop.f32.mrf.mxu0
        %2243 = vdwg.mxu0
        %v2244 = vadd.f32 %v266, %v2236
        %v2245 = vadd.f32 %v271, %v2241
        %v2246 = vld [vmem:[%s643] sm:$0xff]
        %v2247 = vld [vmem:[%s643 + $0x8] sm:$0xff]
        %v2249 = vsel %vm555, %v2246, 0
        %v2252 = vsel %vm555, %v2247, 0
        %v2255 = vsel %vm562, %v462, 0
        %2257 = vmatprep.subr.mxu0 0.0
        %2258 = vmatpush1.msra.mxu0 0.0
        %2259 = vmatprep.subr.mxu0 0.0
        %2260 = vmatpush1.msra.mxu0 0.0
        %2261 = vmatprep.subr.mxu0 0.0
        %2262 = vmatpush1.msra.mxu0 0.0
        %2263 = vmatprep.subr.mxu0 0.0
        %2264 = vmatpush1.msra.mxu0 0.0
        %2265 = vmatprep.subr.mxu0 0.0
        %2266 = vmatpush1.msra.mxu0 0.0
        %2267 = vmatprep.subr.mxu0 0.0
        %2268 = vmatpush1.msra.mxu0 0.0
        %2269 = vmatprep.subr.mxu0 0.0
        %2270 = vmatpush1.msra.mxu0 0.0
        %2271 = vmatprep.subr.mxu0 0.0
        %2272 = vmatpush1.msra.mxu0 0.0
        %2273 = vmatprep.subr.mxu0 0.0
        %2274 = vmatpush1.msra.mxu0 0.0
        %2275 = vmatprep.subr.mxu0 0.0
        %2276 = vmatpush1.msra.mxu0 0.0
        %2277 = vmatprep.subr.mxu0 0.0
        %2278 = vmatpush1.msra.mxu0 0.0
        %2279 = vmatprep.subr.mxu0 0.0
        %2280 = vmatpush1.msra.mxu0 0.0
        %2281 = vmatprep.subr.mxu0 0.0
        %2282 = vmatpush1.msra.mxu0 0.0
        %2283 = vmatprep.subr.mxu0 0.0
        %2284 = vmatpush1.msra.mxu0 0.0
        %2285 = vmatprep.subr.mxu0 0.0
        %2286 = vmatpush1.msra.mxu0 0.0
        %2287 = vmatprep.subr.mxu0 0.0
        %2288 = vmatpush1.msra.mxu0 %v2255
        %2289 = vmatprep.subr.mxu0 0.0
        %2290 = vmatpush2.msra.mxu0 0.0
        %2291 = vmatprep.subr.mxu0 0.0
        %2292 = vmatpush2.msra.mxu0 0.0
        %2293 = vmatprep.subr.mxu0 0.0
        %2294 = vmatpush2.msra.mxu0 0.0
        %2295 = vmatprep.subr.mxu0 0.0
        %2296 = vmatpush2.msra.mxu0 0.0
        %2297 = vmatprep.subr.mxu0 0.0
        %2298 = vmatpush2.msra.mxu0 0.0
        %2299 = vmatprep.subr.mxu0 0.0
        %2300 = vmatpush2.msra.mxu0 0.0
        %2301 = vmatprep.subr.mxu0 0.0
        %2302 = vmatpush2.msra.mxu0 0.0
        %2303 = vmatprep.subr.mxu0 0.0
        %2304 = vmatpush2.msra.mxu0 0.0
        %2305 = vmatprep.subr.mxu0 0.0
        %2306 = vmatpush2.msra.mxu0 0.0
        %2307 = vmatprep.subr.mxu0 0.0
        %2308 = vmatpush2.msra.mxu0 0.0
        %2309 = vmatprep.subr.mxu0 0.0
        %2310 = vmatpush2.msra.mxu0 0.0
        %2311 = vmatprep.subr.mxu0 0.0
        %2312 = vmatpush2.msra.mxu0 0.0
        %2313 = vmatprep.subr.mxu0 0.0
        %2314 = vmatpush2.msra.mxu0 0.0
        %2315 = vmatprep.subr.mxu0 0.0
        %2316 = vmatpush2.msra.mxu0 0.0
        %2317 = vmatprep.subr.mxu0 0.0
        %2318 = vmatpush2.msra.mxu0 0.0
        %2319 = vmatprep.subr.mxu0 0.0
        %2320 = vmatpush2.msra.mxu0 0.0
        %2321 = vmatprep.mubr.f32.mxu0 0.0
        %2322 = vmatmul.mubr.f32.gmra.mxu0 %v2249
        %v2323 = vpop.f32.mrf.mxu0
        %v2324 = vadd.f32 0.0, %v2323
        %v2325 = vpop.f32.mrf.mxu0
        %2326 = vmatprep.mubr.f32.mxu0 0.0
        %2327 = vmatmul.mubr.f32.gmra.mxu0 %v2252
        %v2328 = vpop.f32.mrf.mxu0
        %v2329 = vadd.f32 0.0, %v2328
        %v2330 = vpop.f32.mrf.mxu0
        %2331 = vdwg.mxu0
        %v2332 = vadd.f32 %v2244, %v2324
        %v2333 = vadd.f32 %v2245, %v2329
        %v2334 = vld [vmem:[%s732] sm:$0xff]
        %v2335 = vld [vmem:[%s732 + $0x8] sm:$0xff]
        %v2337 = vsel %vm555, %v2334, 0
        %v2340 = vsel %vm555, %v2335, 0
        %v2343 = vsel %vm562, %v550, 0
        %2345 = vmatprep.subr.mxu0 0.0
        %2346 = vmatpush1.msra.mxu0 0.0
        %2347 = vmatprep.subr.mxu0 0.0
        %2348 = vmatpush1.msra.mxu0 0.0
        %2349 = vmatprep.subr.mxu0 0.0
        %2350 = vmatpush1.msra.mxu0 0.0
        %2351 = vmatprep.subr.mxu0 0.0
        %2352 = vmatpush1.msra.mxu0 0.0
        %2353 = vmatprep.subr.mxu0 0.0
        %2354 = vmatpush1.msra.mxu0 0.0
        %2355 = vmatprep.subr.mxu0 0.0
        %2356 = vmatpush1.msra.mxu0 0.0
        %2357 = vmatprep.subr.mxu0 0.0
        %2358 = vmatpush1.msra.mxu0 0.0
        %2359 = vmatprep.subr.mxu0 0.0
        %2360 = vmatpush1.msra.mxu0 0.0
        %2361 = vmatprep.subr.mxu0 0.0
        %2362 = vmatpush1.msra.mxu0 0.0
        %2363 = vmatprep.subr.mxu0 0.0
        %2364 = vmatpush1.msra.mxu0 0.0
        %2365 = vmatprep.subr.mxu0 0.0
        %2366 = vmatpush1.msra.mxu0 0.0
        %2367 = vmatprep.subr.mxu0 0.0
        %2368 = vmatpush1.msra.mxu0 0.0
        %2369 = vmatprep.subr.mxu0 0.0
        %2370 = vmatpush1.msra.mxu0 0.0
        %2371 = vmatprep.subr.mxu0 0.0
        %2372 = vmatpush1.msra.mxu0 0.0
        %2373 = vmatprep.subr.mxu0 0.0
        %2374 = vmatpush1.msra.mxu0 0.0
        %2375 = vmatprep.subr.mxu0 0.0
        %2376 = vmatpush1.msra.mxu0 %v2343
        %2377 = vmatprep.subr.mxu0 0.0
        %2378 = vmatpush2.msra.mxu0 0.0
        %2379 = vmatprep.subr.mxu0 0.0
        %2380 = vmatpush2.msra.mxu0 0.0
        %2381 = vmatprep.subr.mxu0 0.0
        %2382 = vmatpush2.msra.mxu0 0.0
        %2383 = vmatprep.subr.mxu0 0.0
        %2384 = vmatpush2.msra.mxu0 0.0
        %2385 = vmatprep.subr.mxu0 0.0
        %2386 = vmatpush2.msra.mxu0 0.0
        %2387 = vmatprep.subr.mxu0 0.0
        %2388 = vmatpush2.msra.mxu0 0.0
        %2389 = vmatprep.subr.mxu0 0.0
        %2390 = vmatpush2.msra.mxu0 0.0
        %2391 = vmatprep.subr.mxu0 0.0
        %2392 = vmatpush2.msra.mxu0 0.0
        %2393 = vmatprep.subr.mxu0 0.0
        %2394 = vmatpush2.msra.mxu0 0.0
        %2395 = vmatprep.subr.mxu0 0.0
        %2396 = vmatpush2.msra.mxu0 0.0
        %2397 = vmatprep.subr.mxu0 0.0
        %2398 = vmatpush2.msra.mxu0 0.0
        %2399 = vmatprep.subr.mxu0 0.0
        %2400 = vmatpush2.msra.mxu0 0.0
        %2401 = vmatprep.subr.mxu0 0.0
        %2402 = vmatpush2.msra.mxu0 0.0
        %2403 = vmatprep.subr.mxu0 0.0
        %2404 = vmatpush2.msra.mxu0 0.0
        %2405 = vmatprep.subr.mxu0 0.0
        %2406 = vmatpush2.msra.mxu0 0.0
        %2407 = vmatprep.subr.mxu0 0.0
        %2408 = vmatpush2.msra.mxu0 0.0
        %2409 = vmatprep.mubr.f32.mxu0 0.0
        %2410 = vmatmul.mubr.f32.gmra.mxu0 %v2337
        %v2411 = vpop.f32.mrf.mxu0
        %v2412 = vadd.f32 0.0, %v2411
        %v2413 = vpop.f32.mrf.mxu0
        %2414 = vmatprep.mubr.f32.mxu0 0.0
        %2415 = vmatmul.mubr.f32.gmra.mxu0 %v2340
        %v2416 = vpop.f32.mrf.mxu0
        %v2417 = vadd.f32 0.0, %v2416
        %v2418 = vpop.f32.mrf.mxu0
        %2419 = vdwg.mxu0
        %v2420 = vadd.f32 %v2332, %v2412
        %v2421 = vadd.f32 %v2333, %v2417
        %s2422 = scalar_lea.vmem [#allocation2], 96
        %2423 = vst.msk [vmem:[%s2422] sm:$0xff] %vm279, %v2420
        %2424 = vst.msk [vmem:[%s2422 + $0x8] sm:$0xff] %vm279, %v2421
        %v2425 = vld [vmem:[%s2] sm:$0xff]
        %v2426 = vld [vmem:[%s2 + $0x8] sm:$0xff]
        %v2427 = vrot.slane %v374, 4
        %v2429 = vsel %vm555, %v2425, 0
        %v2432 = vsel %vm555, %v2426, 0
        %v2434 = vsel %vm562, %v2427, 0
        %2436 = vmatprep.subr.mxu0 0.0
        %2437 = vmatpush1.msra.mxu0 0.0
        %2438 = vmatprep.subr.mxu0 0.0
        %2439 = vmatpush1.msra.mxu0 0.0
        %2440 = vmatprep.subr.mxu0 0.0
        %2441 = vmatpush1.msra.mxu0 0.0
        %2442 = vmatprep.subr.mxu0 0.0
        %2443 = vmatpush1.msra.mxu0 0.0
        %2444 = vmatprep.subr.mxu0 0.0
        %2445 = vmatpush1.msra.mxu0 0.0
        %2446 = vmatprep.subr.mxu0 0.0
        %2447 = vmatpush1.msra.mxu0 0.0
        %2448 = vmatprep.subr.mxu0 0.0
        %2449 = vmatpush1.msra.mxu0 0.0
        %2450 = vmatprep.subr.mxu0 0.0
        %2451 = vmatpush1.msra.mxu0 0.0
        %2452 = vmatprep.subr.mxu0 0.0
        %2453 = vmatpush1.msra.mxu0 0.0
        %2454 = vmatprep.subr.mxu0 0.0
        %2455 = vmatpush1.msra.mxu0 0.0
        %2456 = vmatprep.subr.mxu0 0.0
        %2457 = vmatpush1.msra.mxu0 0.0
        %2458 = vmatprep.subr.mxu0 0.0
        %2459 = vmatpush1.msra.mxu0 0.0
        %2460 = vmatprep.subr.mxu0 0.0
        %2461 = vmatpush1.msra.mxu0 0.0
        %2462 = vmatprep.subr.mxu0 0.0
        %2463 = vmatpush1.msra.mxu0 0.0
        %2464 = vmatprep.subr.mxu0 0.0
        %2465 = vmatpush1.msra.mxu0 0.0
        %2466 = vmatprep.subr.mxu0 0.0
        %2467 = vmatpush1.msra.mxu0 %v2434
        %2468 = vmatprep.subr.mxu0 0.0
        %2469 = vmatpush2.msra.mxu0 0.0
        %2470 = vmatprep.subr.mxu0 0.0
        %2471 = vmatpush2.msra.mxu0 0.0
        %2472 = vmatprep.subr.mxu0 0.0
        %2473 = vmatpush2.msra.mxu0 0.0
        %2474 = vmatprep.subr.mxu0 0.0
        %2475 = vmatpush2.msra.mxu0 0.0
        %2476 = vmatprep.subr.mxu0 0.0
        %2477 = vmatpush2.msra.mxu0 0.0
        %2478 = vmatprep.subr.mxu0 0.0
        %2479 = vmatpush2.msra.mxu0 0.0
        %2480 = vmatprep.subr.mxu0 0.0
        %2481 = vmatpush2.msra.mxu0 0.0
        %2482 = vmatprep.subr.mxu0 0.0
        %2483 = vmatpush2.msra.mxu0 0.0
        %2484 = vmatprep.subr.mxu0 0.0
        %2485 = vmatpush2.msra.mxu0 0.0
        %2486 = vmatprep.subr.mxu0 0.0
        %2487 = vmatpush2.msra.mxu0 0.0
        %2488 = vmatprep.subr.mxu0 0.0
        %2489 = vmatpush2.msra.mxu0 0.0
        %2490 = vmatprep.subr.mxu0 0.0
        %2491 = vmatpush2.msra.mxu0 0.0
        %2492 = vmatprep.subr.mxu0 0.0
        %2493 = vmatpush2.msra.mxu0 0.0
        %2494 = vmatprep.subr.mxu0 0.0
        %2495 = vmatpush2.msra.mxu0 0.0
        %2496 = vmatprep.subr.mxu0 0.0
        %2497 = vmatpush2.msra.mxu0 0.0
        %2498 = vmatprep.subr.mxu0 0.0
        %2499 = vmatpush2.msra.mxu0 0.0
        %2500 = vmatprep.mubr.f32.mxu0 0.0
        %2501 = vmatmul.mubr.f32.gmra.mxu0 %v2429
        %v2502 = vpop.f32.mrf.mxu0
        %v2503 = vadd.f32 0.0, %v2502
        %v2504 = vpop.f32.mrf.mxu0
        %2505 = vmatprep.mubr.f32.mxu0 0.0
        %2506 = vmatmul.mubr.f32.gmra.mxu0 %v2432
        %v2507 = vpop.f32.mrf.mxu0
        %v2508 = vadd.f32 0.0, %v2507
        %v2509 = vpop.f32.mrf.mxu0
        %2510 = vdwg.mxu0
        %v2511 = vadd.f32 %v266, %v2503
        %v2512 = vadd.f32 %v271, %v2508
        %v2513 = vld [vmem:[%s643] sm:$0xff]
        %v2514 = vld [vmem:[%s643 + $0x8] sm:$0xff]
        %v2515 = vrot.slane %v462, 4
        %v2517 = vsel %vm555, %v2513, 0
        %v2520 = vsel %vm555, %v2514, 0
        %v2522 = vsel %vm562, %v2515, 0
        %2524 = vmatprep.subr.mxu0 0.0
        %2525 = vmatpush1.msra.mxu0 0.0
        %2526 = vmatprep.subr.mxu0 0.0
        %2527 = vmatpush1.msra.mxu0 0.0
        %2528 = vmatprep.subr.mxu0 0.0
        %2529 = vmatpush1.msra.mxu0 0.0
        %2530 = vmatprep.subr.mxu0 0.0
        %2531 = vmatpush1.msra.mxu0 0.0
        %2532 = vmatprep.subr.mxu0 0.0
        %2533 = vmatpush1.msra.mxu0 0.0
        %2534 = vmatprep.subr.mxu0 0.0
        %2535 = vmatpush1.msra.mxu0 0.0
        %2536 = vmatprep.subr.mxu0 0.0
        %2537 = vmatpush1.msra.mxu0 0.0
        %2538 = vmatprep.subr.mxu0 0.0
        %2539 = vmatpush1.msra.mxu0 0.0
        %2540 = vmatprep.subr.mxu0 0.0
        %2541 = vmatpush1.msra.mxu0 0.0
        %2542 = vmatprep.subr.mxu0 0.0
        %2543 = vmatpush1.msra.mxu0 0.0
        %2544 = vmatprep.subr.mxu0 0.0
        %2545 = vmatpush1.msra.mxu0 0.0
        %2546 = vmatprep.subr.mxu0 0.0
        %2547 = vmatpush1.msra.mxu0 0.0
        %2548 = vmatprep.subr.mxu0 0.0
        %2549 = vmatpush1.msra.mxu0 0.0
        %2550 = vmatprep.subr.mxu0 0.0
        %2551 = vmatpush1.msra.mxu0 0.0
        %2552 = vmatprep.subr.mxu0 0.0
        %2553 = vmatpush1.msra.mxu0 0.0
        %2554 = vmatprep.subr.mxu0 0.0
        %2555 = vmatpush1.msra.mxu0 %v2522
        %2556 = vmatprep.subr.mxu0 0.0
        %2557 = vmatpush2.msra.mxu0 0.0
        %2558 = vmatprep.subr.mxu0 0.0
        %2559 = vmatpush2.msra.mxu0 0.0
        %2560 = vmatprep.subr.mxu0 0.0
        %2561 = vmatpush2.msra.mxu0 0.0
        %2562 = vmatprep.subr.mxu0 0.0
        %2563 = vmatpush2.msra.mxu0 0.0
        %2564 = vmatprep.subr.mxu0 0.0
        %2565 = vmatpush2.msra.mxu0 0.0
        %2566 = vmatprep.subr.mxu0 0.0
        %2567 = vmatpush2.msra.mxu0 0.0
        %2568 = vmatprep.subr.mxu0 0.0
        %2569 = vmatpush2.msra.mxu0 0.0
        %2570 = vmatprep.subr.mxu0 0.0
        %2571 = vmatpush2.msra.mxu0 0.0
        %2572 = vmatprep.subr.mxu0 0.0
        %2573 = vmatpush2.msra.mxu0 0.0
        %2574 = vmatprep.subr.mxu0 0.0
        %2575 = vmatpush2.msra.mxu0 0.0
        %2576 = vmatprep.subr.mxu0 0.0
        %2577 = vmatpush2.msra.mxu0 0.0
        %2578 = vmatprep.subr.mxu0 0.0
        %2579 = vmatpush2.msra.mxu0 0.0
        %2580 = vmatprep.subr.mxu0 0.0
        %2581 = vmatpush2.msra.mxu0 0.0
        %2582 = vmatprep.subr.mxu0 0.0
        %2583 = vmatpush2.msra.mxu0 0.0
        %2584 = vmatprep.subr.mxu0 0.0
        %2585 = vmatpush2.msra.mxu0 0.0
        %2586 = vmatprep.subr.mxu0 0.0
        %2587 = vmatpush2.msra.mxu0 0.0
        %2588 = vmatprep.mubr.f32.mxu0 0.0
        %2589 = vmatmul.mubr.f32.gmra.mxu0 %v2517
        %v2590 = vpop.f32.mrf.mxu0
        %v2591 = vadd.f32 0.0, %v2590
        %v2592 = vpop.f32.mrf.mxu0
        %2593 = vmatprep.mubr.f32.mxu0 0.0
        %2594 = vmatmul.mubr.f32.gmra.mxu0 %v2520
        %v2595 = vpop.f32.mrf.mxu0
        %v2596 = vadd.f32 0.0, %v2595
        %v2597 = vpop.f32.mrf.mxu0
        %2598 = vdwg.mxu0
        %v2599 = vadd.f32 %v2511, %v2591
        %v2600 = vadd.f32 %v2512, %v2596
        %v2601 = vld [vmem:[%s732] sm:$0xff]
        %v2602 = vld [vmem:[%s732 + $0x8] sm:$0xff]
        %v2603 = vrot.slane %v550, 4
        %v2605 = vsel %vm555, %v2601, 0
        %v2608 = vsel %vm555, %v2602, 0
        %v2610 = vsel %vm562, %v2603, 0
        %2612 = vmatprep.subr.mxu0 0.0
        %2613 = vmatpush1.msra.mxu0 0.0
        %2614 = vmatprep.subr.mxu0 0.0
        %2615 = vmatpush1.msra.mxu0 0.0
        %2616 = vmatprep.subr.mxu0 0.0
        %2617 = vmatpush1.msra.mxu0 0.0
        %2618 = vmatprep.subr.mxu0 0.0
        %2619 = vmatpush1.msra.mxu0 0.0
        %2620 = vmatprep.subr.mxu0 0.0
        %2621 = vmatpush1.msra.mxu0 0.0
        %2622 = vmatprep.subr.mxu0 0.0
        %2623 = vmatpush1.msra.mxu0 0.0
        %2624 = vmatprep.subr.mxu0 0.0
        %2625 = vmatpush1.msra.mxu0 0.0
        %2626 = vmatprep.subr.mxu0 0.0
        %2627 = vmatpush1.msra.mxu0 0.0
        %2628 = vmatprep.subr.mxu0 0.0
        %2629 = vmatpush1.msra.mxu0 0.0
        %2630 = vmatprep.subr.mxu0 0.0
        %2631 = vmatpush1.msra.mxu0 0.0
        %2632 = vmatprep.subr.mxu0 0.0
        %2633 = vmatpush1.msra.mxu0 0.0
        %2634 = vmatprep.subr.mxu0 0.0
        %2635 = vmatpush1.msra.mxu0 0.0
        %2636 = vmatprep.subr.mxu0 0.0
        %2637 = vmatpush1.msra.mxu0 0.0
        %2638 = vmatprep.subr.mxu0 0.0
        %2639 = vmatpush1.msra.mxu0 0.0
        %2640 = vmatprep.subr.mxu0 0.0
        %2641 = vmatpush1.msra.mxu0 0.0
        %2642 = vmatprep.subr.mxu0 0.0
        %2643 = vmatpush1.msra.mxu0 %v2610
        %2644 = vmatprep.subr.mxu0 0.0
        %2645 = vmatpush2.msra.mxu0 0.0
        %2646 = vmatprep.subr.mxu0 0.0
        %2647 = vmatpush2.msra.mxu0 0.0
        %2648 = vmatprep.subr.mxu0 0.0
        %2649 = vmatpush2.msra.mxu0 0.0
        %2650 = vmatprep.subr.mxu0 0.0
        %2651 = vmatpush2.msra.mxu0 0.0
        %2652 = vmatprep.subr.mxu0 0.0
        %2653 = vmatpush2.msra.mxu0 0.0
        %2654 = vmatprep.subr.mxu0 0.0
        %2655 = vmatpush2.msra.mxu0 0.0
        %2656 = vmatprep.subr.mxu0 0.0
        %2657 = vmatpush2.msra.mxu0 0.0
        %2658 = vmatprep.subr.mxu0 0.0
        %2659 = vmatpush2.msra.mxu0 0.0
        %2660 = vmatprep.subr.mxu0 0.0
        %2661 = vmatpush2.msra.mxu0 0.0
        %2662 = vmatprep.subr.mxu0 0.0
        %2663 = vmatpush2.msra.mxu0 0.0
        %2664 = vmatprep.subr.mxu0 0.0
        %2665 = vmatpush2.msra.mxu0 0.0
        %2666 = vmatprep.subr.mxu0 0.0
        %2667 = vmatpush2.msra.mxu0 0.0
        %2668 = vmatprep.subr.mxu0 0.0
        %2669 = vmatpush2.msra.mxu0 0.0
        %2670 = vmatprep.subr.mxu0 0.0
        %2671 = vmatpush2.msra.mxu0 0.0
        %2672 = vmatprep.subr.mxu0 0.0
        %2673 = vmatpush2.msra.mxu0 0.0
        %2674 = vmatprep.subr.mxu0 0.0
        %2675 = vmatpush2.msra.mxu0 0.0
        %2676 = vmatprep.mubr.f32.mxu0 0.0
        %2677 = vmatmul.mubr.f32.gmra.mxu0 %v2605
        %v2678 = vpop.f32.mrf.mxu0
        %v2679 = vadd.f32 0.0, %v2678
        %v2680 = vpop.f32.mrf.mxu0
        %2681 = vmatprep.mubr.f32.mxu0 0.0
        %2682 = vmatmul.mubr.f32.gmra.mxu0 %v2608
        %v2683 = vpop.f32.mrf.mxu0
        %v2684 = vadd.f32 0.0, %v2683
        %v2685 = vpop.f32.mrf.mxu0
        %2686 = vdwg.mxu0
        %v2687 = vadd.f32 %v2599, %v2679
        %v2688 = vadd.f32 %v2600, %v2684
        %s2689 = scalar_lea.vmem [#allocation2], 112
        %2690 = vst.msk [vmem:[%s2689] sm:$0xff] %vm279, %v2687
        %2691 = vst.msk [vmem:[%s2689 + $0x8] sm:$0xff] %vm279, %v2688
        %v2692 = vld [vmem:[#allocation3] sm:$0xf]
        %v2693 = vld [vmem:[#allocation4] sm:$0xf]
        %v2694 = vld [vmem:[#allocation2] sm:$0xff]
        %v2695 = vld [vmem:[#allocation2 + $0x8] sm:$0xff]
        %v2696 = vld [vmem:[%s1] sm:$0xff]
        %v2697 = vld [vmem:[%s1 + $0x8] sm:$0xff]
        %v2699 = vsel %vm279, %v2692, 0
        %2701 = vmatprep.subr.mxu0 0.0
        %2702 = vmatpush1.msra.mxu0 0.0
        %2703 = vmatprep.subr.mxu0 0.0
        %2704 = vmatpush1.msra.mxu0 0.0
        %2705 = vmatprep.subr.mxu0 0.0
        %2706 = vmatpush1.msra.mxu0 0.0
        %2707 = vmatprep.subr.mxu0 0.0
        %2708 = vmatpush1.msra.mxu0 0.0
        %2709 = vmatprep.subr.mxu0 0.0
        %2710 = vmatpush1.msra.mxu0 0.0
        %2711 = vmatprep.subr.mxu0 0.0
        %2712 = vmatpush1.msra.mxu0 0.0
        %2713 = vmatprep.subr.mxu0 0.0
        %2714 = vmatpush1.msra.mxu0 0.0
        %2715 = vmatprep.subr.mxu0 0.0
        %2716 = vmatpush1.msra.mxu0 0.0
        %2717 = vmatprep.subr.mxu0 0.0
        %2718 = vmatpush1.msra.mxu0 0.0
        %2719 = vmatprep.subr.mxu0 0.0
        %2720 = vmatpush1.msra.mxu0 0.0
        %2721 = vmatprep.subr.mxu0 0.0
        %2722 = vmatpush1.msra.mxu0 0.0
        %2723 = vmatprep.subr.mxu0 0.0
        %2724 = vmatpush1.msra.mxu0 0.0
        %2725 = vmatprep.subr.mxu0 0.0
        %2726 = vmatpush1.msra.mxu0 0.0
        %2727 = vmatprep.subr.mxu0 0.0
        %2728 = vmatpush1.msra.mxu0 0.0
        %2729 = vmatprep.subr.mxu0 0.0
        %2730 = vmatpush1.msra.mxu0 %v2697
        %2731 = vmatprep.subr.mxu0 0.0
        %2732 = vmatpush1.msra.mxu0 %v2696
        %2733 = vmatprep.subr.mxu0 0.0
        %2734 = vmatpush2.msra.mxu0 0.0
        %2735 = vmatprep.subr.mxu0 0.0
        %2736 = vmatpush2.msra.mxu0 0.0
        %2737 = vmatprep.subr.mxu0 0.0
        %2738 = vmatpush2.msra.mxu0 0.0
        %2739 = vmatprep.subr.mxu0 0.0
        %2740 = vmatpush2.msra.mxu0 0.0
        %2741 = vmatprep.subr.mxu0 0.0
        %2742 = vmatpush2.msra.mxu0 0.0
        %2743 = vmatprep.subr.mxu0 0.0
        %2744 = vmatpush2.msra.mxu0 0.0
        %2745 = vmatprep.subr.mxu0 0.0
        %2746 = vmatpush2.msra.mxu0 0.0
        %2747 = vmatprep.subr.mxu0 0.0
        %2748 = vmatpush2.msra.mxu0 0.0
        %2749 = vmatprep.subr.mxu0 0.0
        %2750 = vmatpush2.msra.mxu0 0.0
        %2751 = vmatprep.subr.mxu0 0.0
        %2752 = vmatpush2.msra.mxu0 0.0
        %2753 = vmatprep.subr.mxu0 0.0
        %2754 = vmatpush2.msra.mxu0 0.0
        %2755 = vmatprep.subr.mxu0 0.0
        %2756 = vmatpush2.msra.mxu0 0.0
        %2757 = vmatprep.subr.mxu0 0.0
        %2758 = vmatpush2.msra.mxu0 0.0
        %2759 = vmatprep.subr.mxu0 0.0
        %2760 = vmatpush2.msra.mxu0 0.0
        %2761 = vmatprep.subr.mxu0 0.0
        %2762 = vmatpush2.msra.mxu0 0.0
        %2763 = vmatprep.subr.mxu0 0.0
        %2764 = vmatpush2.msra.mxu0 0.0
        %2765 = vmatprep.mubr.f32.mxu0 0.0
        %2766 = vmatmul.mubr.f32.gmra.mxu0 %v2699
        %v2767 = vpop.f32.mrf.mxu0
        %v2768 = vadd.f32 0.0, %v2767
        %v2769 = vpop.f32.mrf.mxu0
        %2770 = vdwg.mxu0
        %v2771 = vld [vmem:[%s3] sm:$0xff]
        %v2772 = vld [vmem:[%s3 + $0x8] sm:$0xff]
        %v2774 = vsel %vm555, %v2771, 0
        %v2777 = vsel %vm555, %v2772, 0
        %v2780 = vsel %vm562, %v2768, 0
        %2782 = vmatprep.subr.mxu0 0.0
        %2783 = vmatpush1.msra.mxu0 0.0
        %2784 = vmatprep.subr.mxu0 0.0
        %2785 = vmatpush1.msra.mxu0 0.0
        %2786 = vmatprep.subr.mxu0 0.0
        %2787 = vmatpush1.msra.mxu0 0.0
        %2788 = vmatprep.subr.mxu0 0.0
        %2789 = vmatpush1.msra.mxu0 0.0
        %2790 = vmatprep.subr.mxu0 0.0
        %2791 = vmatpush1.msra.mxu0 0.0
        %2792 = vmatprep.subr.mxu0 0.0
        %2793 = vmatpush1.msra.mxu0 0.0
        %2794 = vmatprep.subr.mxu0 0.0
        %2795 = vmatpush1.msra.mxu0 0.0
        %2796 = vmatprep.subr.mxu0 0.0
        %2797 = vmatpush1.msra.mxu0 0.0
        %2798 = vmatprep.subr.mxu0 0.0
        %2799 = vmatpush1.msra.mxu0 0.0
        %2800 = vmatprep.subr.mxu0 0.0
        %2801 = vmatpush1.msra.mxu0 0.0
        %2802 = vmatprep.subr.mxu0 0.0
        %2803 = vmatpush1.msra.mxu0 0.0
        %2804 = vmatprep.subr.mxu0 0.0
        %2805 = vmatpush1.msra.mxu0 0.0
        %2806 = vmatprep.subr.mxu0 0.0
        %2807 = vmatpush1.msra.mxu0 0.0
        %2808 = vmatprep.subr.mxu0 0.0
        %2809 = vmatpush1.msra.mxu0 0.0
        %2810 = vmatprep.subr.mxu0 0.0
        %2811 = vmatpush1.msra.mxu0 0.0
        %2812 = vmatprep.subr.mxu0 0.0
        %2813 = vmatpush1.msra.mxu0 %v2780
        %2814 = vmatprep.subr.mxu0 0.0
        %2815 = vmatpush2.msra.mxu0 0.0
        %2816 = vmatprep.subr.mxu0 0.0
        %2817 = vmatpush2.msra.mxu0 0.0
        %2818 = vmatprep.subr.mxu0 0.0
        %2819 = vmatpush2.msra.mxu0 0.0
        %2820 = vmatprep.subr.mxu0 0.0
        %2821 = vmatpush2.msra.mxu0 0.0
        %2822 = vmatprep.subr.mxu0 0.0
        %2823 = vmatpush2.msra.mxu0 0.0
        %2824 = vmatprep.subr.mxu0 0.0
        %2825 = vmatpush2.msra.mxu0 0.0
        %2826 = vmatprep.subr.mxu0 0.0
        %2827 = vmatpush2.msra.mxu0 0.0
        %2828 = vmatprep.subr.mxu0 0.0
        %2829 = vmatpush2.msra.mxu0 0.0
        %2830 = vmatprep.subr.mxu0 0.0
        %2831 = vmatpush2.msra.mxu0 0.0
        %2832 = vmatprep.subr.mxu0 0.0
        %2833 = vmatpush2.msra.mxu0 0.0
        %2834 = vmatprep.subr.mxu0 0.0
        %2835 = vmatpush2.msra.mxu0 0.0
        %2836 = vmatprep.subr.mxu0 0.0
        %2837 = vmatpush2.msra.mxu0 0.0
        %2838 = vmatprep.subr.mxu0 0.0
        %2839 = vmatpush2.msra.mxu0 0.0
        %2840 = vmatprep.subr.mxu0 0.0
        %2841 = vmatpush2.msra.mxu0 0.0
        %2842 = vmatprep.subr.mxu0 0.0
        %2843 = vmatpush2.msra.mxu0 0.0
        %2844 = vmatprep.subr.mxu0 0.0
        %2845 = vmatpush2.msra.mxu0 0.0
        %2846 = vmatprep.mubr.f32.mxu0 0.0
        %2847 = vmatmul.mubr.f32.gmra.mxu0 %v2774
        %v2848 = vpop.f32.mrf.mxu0
        %v2849 = vadd.f32 0.0, %v2848
        %v2850 = vpop.f32.mrf.mxu0
        %2851 = vmatprep.mubr.f32.mxu0 0.0
        %2852 = vmatmul.mubr.f32.gmra.mxu0 %v2777
        %v2853 = vpop.f32.mrf.mxu0
        %v2854 = vadd.f32 0.0, %v2853
        %v2855 = vpop.f32.mrf.mxu0
        %2856 = vdwg.mxu0
        %v2857 = vadd.f32 %v2694, %v2849
        %v2858 = vadd.f32 %v2695, %v2854
        %v2859 = vld [vmem:[%s377] sm:$0xff]
        %v2860 = vld [vmem:[%s377 + $0x8] sm:$0xff]
        %2861 = vmatprep.subr.mxu0 0.0
        %2862 = vmatpush1.msra.mxu0 0.0
        %2863 = vmatprep.subr.mxu0 0.0
        %2864 = vmatpush1.msra.mxu0 0.0
        %2865 = vmatprep.subr.mxu0 0.0
        %2866 = vmatpush1.msra.mxu0 0.0
        %2867 = vmatprep.subr.mxu0 0.0
        %2868 = vmatpush1.msra.mxu0 0.0
        %2869 = vmatprep.subr.mxu0 0.0
        %2870 = vmatpush1.msra.mxu0 0.0
        %2871 = vmatprep.subr.mxu0 0.0
        %2872 = vmatpush1.msra.mxu0 0.0
        %2873 = vmatprep.subr.mxu0 0.0
        %2874 = vmatpush1.msra.mxu0 0.0
        %2875 = vmatprep.subr.mxu0 0.0
        %2876 = vmatpush1.msra.mxu0 0.0
        %2877 = vmatprep.subr.mxu0 0.0
        %2878 = vmatpush1.msra.mxu0 0.0
        %2879 = vmatprep.subr.mxu0 0.0
        %2880 = vmatpush1.msra.mxu0 0.0
        %2881 = vmatprep.subr.mxu0 0.0
        %2882 = vmatpush1.msra.mxu0 0.0
        %2883 = vmatprep.subr.mxu0 0.0
        %2884 = vmatpush1.msra.mxu0 0.0
        %2885 = vmatprep.subr.mxu0 0.0
        %2886 = vmatpush1.msra.mxu0 0.0
        %2887 = vmatprep.subr.mxu0 0.0
        %2888 = vmatpush1.msra.mxu0 0.0
        %2889 = vmatprep.subr.mxu0 0.0
        %2890 = vmatpush1.msra.mxu0 %v2860
        %2891 = vmatprep.subr.mxu0 0.0
        %2892 = vmatpush1.msra.mxu0 %v2859
        %2893 = vmatprep.subr.mxu0 0.0
        %2894 = vmatpush2.msra.mxu0 0.0
        %2895 = vmatprep.subr.mxu0 0.0
        %2896 = vmatpush2.msra.mxu0 0.0
        %2897 = vmatprep.subr.mxu0 0.0
        %2898 = vmatpush2.msra.mxu0 0.0
        %2899 = vmatprep.subr.mxu0 0.0
        %2900 = vmatpush2.msra.mxu0 0.0
        %2901 = vmatprep.subr.mxu0 0.0
        %2902 = vmatpush2.msra.mxu0 0.0
        %2903 = vmatprep.subr.mxu0 0.0
        %2904 = vmatpush2.msra.mxu0 0.0
        %2905 = vmatprep.subr.mxu0 0.0
        %2906 = vmatpush2.msra.mxu0 0.0
        %2907 = vmatprep.subr.mxu0 0.0
        %2908 = vmatpush2.msra.mxu0 0.0
        %2909 = vmatprep.subr.mxu0 0.0
        %2910 = vmatpush2.msra.mxu0 0.0
        %2911 = vmatprep.subr.mxu0 0.0
        %2912 = vmatpush2.msra.mxu0 0.0
        %2913 = vmatprep.subr.mxu0 0.0
        %2914 = vmatpush2.msra.mxu0 0.0
        %2915 = vmatprep.subr.mxu0 0.0
        %2916 = vmatpush2.msra.mxu0 0.0
        %2917 = vmatprep.subr.mxu0 0.0
        %2918 = vmatpush2.msra.mxu0 0.0
        %2919 = vmatprep.subr.mxu0 0.0
        %2920 = vmatpush2.msra.mxu0 0.0
        %2921 = vmatprep.subr.mxu0 0.0
        %2922 = vmatpush2.msra.mxu0 0.0
        %2923 = vmatprep.subr.mxu0 0.0
        %2924 = vmatpush2.msra.mxu0 0.0
        %2925 = vmatprep.mubr.f32.mxu0 0.0
        %2926 = vmatmul.mubr.f32.gmra.mxu0 %v2699
        %v2927 = vpop.f32.mrf.mxu0
        %v2928 = vadd.f32 0.0, %v2927
        %v2929 = vpop.f32.mrf.mxu0
        %2930 = vdwg.mxu0
        %s2931 = scalar_lea.vmem %s3, 16
        %v2932 = vld [vmem:[%s2931] sm:$0xff]
        %v2933 = vld [vmem:[%s2931 + $0x8] sm:$0xff]
        %v2935 = vsel %vm555, %v2932, 0
        %v2938 = vsel %vm555, %v2933, 0
        %v2941 = vsel %vm562, %v2928, 0
        %2943 = vmatprep.subr.mxu0 0.0
        %2944 = vmatpush1.msra.mxu0 0.0
        %2945 = vmatprep.subr.mxu0 0.0
        %2946 = vmatpush1.msra.mxu0 0.0
        %2947 = vmatprep.subr.mxu0 0.0
        %2948 = vmatpush1.msra.mxu0 0.0
        %2949 = vmatprep.subr.mxu0 0.0
        %2950 = vmatpush1.msra.mxu0 0.0
        %2951 = vmatprep.subr.mxu0 0.0
        %2952 = vmatpush1.msra.mxu0 0.0
        %2953 = vmatprep.subr.mxu0 0.0
        %2954 = vmatpush1.msra.mxu0 0.0
        %2955 = vmatprep.subr.mxu0 0.0
        %2956 = vmatpush1.msra.mxu0 0.0
        %2957 = vmatprep.subr.mxu0 0.0
        %2958 = vmatpush1.msra.mxu0 0.0
        %2959 = vmatprep.subr.mxu0 0.0
        %2960 = vmatpush1.msra.mxu0 0.0
        %2961 = vmatprep.subr.mxu0 0.0
        %2962 = vmatpush1.msra.mxu0 0.0
        %2963 = vmatprep.subr.mxu0 0.0
        %2964 = vmatpush1.msra.mxu0 0.0
        %2965 = vmatprep.subr.mxu0 0.0
        %2966 = vmatpush1.msra.mxu0 0.0
        %2967 = vmatprep.subr.mxu0 0.0
        %2968 = vmatpush1.msra.mxu0 0.0
        %2969 = vmatprep.subr.mxu0 0.0
        %2970 = vmatpush1.msra.mxu0 0.0
        %2971 = vmatprep.subr.mxu0 0.0
        %2972 = vmatpush1.msra.mxu0 0.0
        %2973 = vmatprep.subr.mxu0 0.0
        %2974 = vmatpush1.msra.mxu0 %v2941
        %2975 = vmatprep.subr.mxu0 0.0
        %2976 = vmatpush2.msra.mxu0 0.0
        %2977 = vmatprep.subr.mxu0 0.0
        %2978 = vmatpush2.msra.mxu0 0.0
        %2979 = vmatprep.subr.mxu0 0.0
        %2980 = vmatpush2.msra.mxu0 0.0
        %2981 = vmatprep.subr.mxu0 0.0
        %2982 = vmatpush2.msra.mxu0 0.0
        %2983 = vmatprep.subr.mxu0 0.0
        %2984 = vmatpush2.msra.mxu0 0.0
        %2985 = vmatprep.subr.mxu0 0.0
        %2986 = vmatpush2.msra.mxu0 0.0
        %2987 = vmatprep.subr.mxu0 0.0
        %2988 = vmatpush2.msra.mxu0 0.0
        %2989 = vmatprep.subr.mxu0 0.0
        %2990 = vmatpush2.msra.mxu0 0.0
        %2991 = vmatprep.subr.mxu0 0.0
        %2992 = vmatpush2.msra.mxu0 0.0
        %2993 = vmatprep.subr.mxu0 0.0
        %2994 = vmatpush2.msra.mxu0 0.0
        %2995 = vmatprep.subr.mxu0 0.0
        %2996 = vmatpush2.msra.mxu0 0.0
        %2997 = vmatprep.subr.mxu0 0.0
        %2998 = vmatpush2.msra.mxu0 0.0
        %2999 = vmatprep.subr.mxu0 0.0
        %3000 = vmatpush2.msra.mxu0 0.0
        %3001 = vmatprep.subr.mxu0 0.0
        %3002 = vmatpush2.msra.mxu0 0.0
        %3003 = vmatprep.subr.mxu0 0.0
        %3004 = vmatpush2.msra.mxu0 0.0
        %3005 = vmatprep.subr.mxu0 0.0
        %3006 = vmatpush2.msra.mxu0 0.0
        %3007 = vmatprep.mubr.f32.mxu0 0.0
        %3008 = vmatmul.mubr.f32.gmra.mxu0 %v2935
        %v3009 = vpop.f32.mrf.mxu0
        %v3010 = vadd.f32 0.0, %v3009
        %v3011 = vpop.f32.mrf.mxu0
        %3012 = vmatprep.mubr.f32.mxu0 0.0
        %3013 = vmatmul.mubr.f32.gmra.mxu0 %v2938
        %v3014 = vpop.f32.mrf.mxu0
        %v3015 = vadd.f32 0.0, %v3014
        %v3016 = vpop.f32.mrf.mxu0
        %3017 = vdwg.mxu0
        %v3018 = vadd.f32 %v2857, %v3010
        %v3019 = vadd.f32 %v2858, %v3015
        %v3020 = vld [vmem:[%s465] sm:$0xff]
        %v3021 = vld [vmem:[%s465 + $0x8] sm:$0xff]
        %3022 = vmatprep.subr.mxu0 0.0
        %3023 = vmatpush1.msra.mxu0 0.0
        %3024 = vmatprep.subr.mxu0 0.0
        %3025 = vmatpush1.msra.mxu0 0.0
        %3026 = vmatprep.subr.mxu0 0.0
        %3027 = vmatpush1.msra.mxu0 0.0
        %3028 = vmatprep.subr.mxu0 0.0
        %3029 = vmatpush1.msra.mxu0 0.0
        %3030 = vmatprep.subr.mxu0 0.0
        %3031 = vmatpush1.msra.mxu0 0.0
        %3032 = vmatprep.subr.mxu0 0.0
        %3033 = vmatpush1.msra.mxu0 0.0
        %3034 = vmatprep.subr.mxu0 0.0
        %3035 = vmatpush1.msra.mxu0 0.0
        %3036 = vmatprep.subr.mxu0 0.0
        %3037 = vmatpush1.msra.mxu0 0.0
        %3038 = vmatprep.subr.mxu0 0.0
        %3039 = vmatpush1.msra.mxu0 0.0
        %3040 = vmatprep.subr.mxu0 0.0
        %3041 = vmatpush1.msra.mxu0 0.0
        %3042 = vmatprep.subr.mxu0 0.0
        %3043 = vmatpush1.msra.mxu0 0.0
        %3044 = vmatprep.subr.mxu0 0.0
        %3045 = vmatpush1.msra.mxu0 0.0
        %3046 = vmatprep.subr.mxu0 0.0
        %3047 = vmatpush1.msra.mxu0 0.0
        %3048 = vmatprep.subr.mxu0 0.0
        %3049 = vmatpush1.msra.mxu0 0.0
        %3050 = vmatprep.subr.mxu0 0.0
        %3051 = vmatpush1.msra.mxu0 %v3021
        %3052 = vmatprep.subr.mxu0 0.0
        %3053 = vmatpush1.msra.mxu0 %v3020
        %3054 = vmatprep.subr.mxu0 0.0
        %3055 = vmatpush2.msra.mxu0 0.0
        %3056 = vmatprep.subr.mxu0 0.0
        %3057 = vmatpush2.msra.mxu0 0.0
        %3058 = vmatprep.subr.mxu0 0.0
        %3059 = vmatpush2.msra.mxu0 0.0
        %3060 = vmatprep.subr.mxu0 0.0
        %3061 = vmatpush2.msra.mxu0 0.0
        %3062 = vmatprep.subr.mxu0 0.0
        %3063 = vmatpush2.msra.mxu0 0.0
        %3064 = vmatprep.subr.mxu0 0.0
        %3065 = vmatpush2.msra.mxu0 0.0
        %3066 = vmatprep.subr.mxu0 0.0
        %3067 = vmatpush2.msra.mxu0 0.0
        %3068 = vmatprep.subr.mxu0 0.0
        %3069 = vmatpush2.msra.mxu0 0.0
        %3070 = vmatprep.subr.mxu0 0.0
        %3071 = vmatpush2.msra.mxu0 0.0
        %3072 = vmatprep.subr.mxu0 0.0
        %3073 = vmatpush2.msra.mxu0 0.0
        %3074 = vmatprep.subr.mxu0 0.0
        %3075 = vmatpush2.msra.mxu0 0.0
        %3076 = vmatprep.subr.mxu0 0.0
        %3077 = vmatpush2.msra.mxu0 0.0
        %3078 = vmatprep.subr.mxu0 0.0
        %3079 = vmatpush2.msra.mxu0 0.0
        %3080 = vmatprep.subr.mxu0 0.0
        %3081 = vmatpush2.msra.mxu0 0.0
        %3082 = vmatprep.subr.mxu0 0.0
        %3083 = vmatpush2.msra.mxu0 0.0
        %3084 = vmatprep.subr.mxu0 0.0
        %3085 = vmatpush2.msra.mxu0 0.0
        %3086 = vmatprep.mubr.f32.mxu0 0.0
        %3087 = vmatmul.mubr.f32.gmra.mxu0 %v2699
        %v3088 = vpop.f32.mrf.mxu0
        %v3089 = vadd.f32 0.0, %v3088
        %v3090 = vpop.f32.mrf.mxu0
        %3091 = vdwg.mxu0
        %s3092 = scalar_lea.vmem %s3, 32
        %v3093 = vld [vmem:[%s3092] sm:$0xff]
        %v3094 = vld [vmem:[%s3092 + $0x8] sm:$0xff]
        %v3096 = vsel %vm555, %v3093, 0
        %v3099 = vsel %vm555, %v3094, 0
        %v3102 = vsel %vm562, %v3089, 0
        %3104 = vmatprep.subr.mxu0 0.0
        %3105 = vmatpush1.msra.mxu0 0.0
        %3106 = vmatprep.subr.mxu0 0.0
        %3107 = vmatpush1.msra.mxu0 0.0
        %3108 = vmatprep.subr.mxu0 0.0
        %3109 = vmatpush1.msra.mxu0 0.0
        %3110 = vmatprep.subr.mxu0 0.0
        %3111 = vmatpush1.msra.mxu0 0.0
        %3112 = vmatprep.subr.mxu0 0.0
        %3113 = vmatpush1.msra.mxu0 0.0
        %3114 = vmatprep.subr.mxu0 0.0
        %3115 = vmatpush1.msra.mxu0 0.0
        %3116 = vmatprep.subr.mxu0 0.0
        %3117 = vmatpush1.msra.mxu0 0.0
        %3118 = vmatprep.subr.mxu0 0.0
        %3119 = vmatpush1.msra.mxu0 0.0
        %3120 = vmatprep.subr.mxu0 0.0
        %3121 = vmatpush1.msra.mxu0 0.0
        %3122 = vmatprep.subr.mxu0 0.0
        %3123 = vmatpush1.msra.mxu0 0.0
        %3124 = vmatprep.subr.mxu0 0.0
        %3125 = vmatpush1.msra.mxu0 0.0
        %3126 = vmatprep.subr.mxu0 0.0
        %3127 = vmatpush1.msra.mxu0 0.0
        %3128 = vmatprep.subr.mxu0 0.0
        %3129 = vmatpush1.msra.mxu0 0.0
        %3130 = vmatprep.subr.mxu0 0.0
        %3131 = vmatpush1.msra.mxu0 0.0
        %3132 = vmatprep.subr.mxu0 0.0
        %3133 = vmatpush1.msra.mxu0 0.0
        %3134 = vmatprep.subr.mxu0 0.0
        %3135 = vmatpush1.msra.mxu0 %v3102
        %3136 = vmatprep.subr.mxu0 0.0
        %3137 = vmatpush2.msra.mxu0 0.0
        %3138 = vmatprep.subr.mxu0 0.0
        %3139 = vmatpush2.msra.mxu0 0.0
        %3140 = vmatprep.subr.mxu0 0.0
        %3141 = vmatpush2.msra.mxu0 0.0
        %3142 = vmatprep.subr.mxu0 0.0
        %3143 = vmatpush2.msra.mxu0 0.0
        %3144 = vmatprep.subr.mxu0 0.0
        %3145 = vmatpush2.msra.mxu0 0.0
        %3146 = vmatprep.subr.mxu0 0.0
        %3147 = vmatpush2.msra.mxu0 0.0
        %3148 = vmatprep.subr.mxu0 0.0
        %3149 = vmatpush2.msra.mxu0 0.0
        %3150 = vmatprep.subr.mxu0 0.0
        %3151 = vmatpush2.msra.mxu0 0.0
        %3152 = vmatprep.subr.mxu0 0.0
        %3153 = vmatpush2.msra.mxu0 0.0
        %3154 = vmatprep.subr.mxu0 0.0
        %3155 = vmatpush2.msra.mxu0 0.0
        %3156 = vmatprep.subr.mxu0 0.0
        %3157 = vmatpush2.msra.mxu0 0.0
        %3158 = vmatprep.subr.mxu0 0.0
        %3159 = vmatpush2.msra.mxu0 0.0
        %3160 = vmatprep.subr.mxu0 0.0
        %3161 = vmatpush2.msra.mxu0 0.0
        %3162 = vmatprep.subr.mxu0 0.0
        %3163 = vmatpush2.msra.mxu0 0.0
        %3164 = vmatprep.subr.mxu0 0.0
        %3165 = vmatpush2.msra.mxu0 0.0
        %3166 = vmatprep.subr.mxu0 0.0
        %3167 = vmatpush2.msra.mxu0 0.0
        %3168 = vmatprep.mubr.f32.mxu0 0.0
        %3169 = vmatmul.mubr.f32.gmra.mxu0 %v3096
        %v3170 = vpop.f32.mrf.mxu0
        %v3171 = vadd.f32 0.0, %v3170
        %v3172 = vpop.f32.mrf.mxu0
        %3173 = vmatprep.mubr.f32.mxu0 0.0
        %3174 = vmatmul.mubr.f32.gmra.mxu0 %v3099
        %v3175 = vpop.f32.mrf.mxu0
        %v3176 = vadd.f32 0.0, %v3175
        %v3177 = vpop.f32.mrf.mxu0
        %3178 = vdwg.mxu0
        %v3179 = vadd.f32 %v3018, %v3171
        %v3180 = vadd.f32 %v3019, %v3176
        %v3181 = vxor.u32 %v3179, 2147483648
        %v3182 = vxor.u32 %v3180, 2147483648
        %v3183 = vmul.f32 %v3181, 1.442695
        %v3184 = vpow.pop %v3183
        %v3185 = vmul.f32 %v3182, 1.442695
        %v3186 = vpow.pop %v3185
        %v3187 = vadd.f32 %v3184, 1.0
        %v3188 = vadd.f32 %v3186, 1.0
        %v3189 = vrcp.pop %v3187
        %v3190 = vmul.f32 1.0, %v3189
        %v3191 = vrcp.pop %v3188
        %v3192 = vmul.f32 1.0, %v3191
        %v3193 = vtanh.pop %v3180
        %v3195 = vrot.slane %v3190, 4
        %v3197 = vmul.f32 %v2693, %v3195
        %v3199 = vrot.slane %v3193, 4
        %v3201 = vmul.f32 %v3190, %v3199
        %v3202 = vadd.f32 %v3197, %v3201
        %v3203 = vtanh.pop %v3202
        %v3204 = vmul.f32 %v3203, %v3192
        %vm3205 = vcmask 125952
        %3206 = vst.msk [vmem:[%s242] sm:$0xf] %vm3205, %v3204
        %v3207 = vld [vmem:[%s1087] sm:$0xff]
        %v3208 = vld [vmem:[%s1087 + $0x8] sm:$0xff]
        %v3209 = vld [vmem:[%s1] sm:$0xff]
        %v3210 = vld [vmem:[%s1 + $0x8] sm:$0xff]
        %v3212 = vsel %vm279, %v3204, 0
        %3214 = vmatprep.subr.mxu0 0.0
        %3215 = vmatpush1.msra.mxu0 0.0
        %3216 = vmatprep.subr.mxu0 0.0
        %3217 = vmatpush1.msra.mxu0 0.0
        %3218 = vmatprep.subr.mxu0 0.0
        %3219 = vmatpush1.msra.mxu0 0.0
        %3220 = vmatprep.subr.mxu0 0.0
        %3221 = vmatpush1.msra.mxu0 0.0
        %3222 = vmatprep.subr.mxu0 0.0
        %3223 = vmatpush1.msra.mxu0 0.0
        %3224 = vmatprep.subr.mxu0 0.0
        %3225 = vmatpush1.msra.mxu0 0.0
        %3226 = vmatprep.subr.mxu0 0.0
        %3227 = vmatpush1.msra.mxu0 0.0
        %3228 = vmatprep.subr.mxu0 0.0
        %3229 = vmatpush1.msra.mxu0 0.0
        %3230 = vmatprep.subr.mxu0 0.0
        %3231 = vmatpush1.msra.mxu0 0.0
        %3232 = vmatprep.subr.mxu0 0.0
        %3233 = vmatpush1.msra.mxu0 0.0
        %3234 = vmatprep.subr.mxu0 0.0
        %3235 = vmatpush1.msra.mxu0 0.0
        %3236 = vmatprep.subr.mxu0 0.0
        %3237 = vmatpush1.msra.mxu0 0.0
        %3238 = vmatprep.subr.mxu0 0.0
        %3239 = vmatpush1.msra.mxu0 0.0
        %3240 = vmatprep.subr.mxu0 0.0
        %3241 = vmatpush1.msra.mxu0 0.0
        %3242 = vmatprep.subr.mxu0 0.0
        %3243 = vmatpush1.msra.mxu0 %v3210
        %3244 = vmatprep.subr.mxu0 0.0
        %3245 = vmatpush1.msra.mxu0 %v3209
        %3246 = vmatprep.subr.mxu0 0.0
        %3247 = vmatpush2.msra.mxu0 0.0
        %3248 = vmatprep.subr.mxu0 0.0
        %3249 = vmatpush2.msra.mxu0 0.0
        %3250 = vmatprep.subr.mxu0 0.0
        %3251 = vmatpush2.msra.mxu0 0.0
        %3252 = vmatprep.subr.mxu0 0.0
        %3253 = vmatpush2.msra.mxu0 0.0
        %3254 = vmatprep.subr.mxu0 0.0
        %3255 = vmatpush2.msra.mxu0 0.0
        %3256 = vmatprep.subr.mxu0 0.0
        %3257 = vmatpush2.msra.mxu0 0.0
        %3258 = vmatprep.subr.mxu0 0.0
        %3259 = vmatpush2.msra.mxu0 0.0
        %3260 = vmatprep.subr.mxu0 0.0
        %3261 = vmatpush2.msra.mxu0 0.0
        %3262 = vmatprep.subr.mxu0 0.0
        %3263 = vmatpush2.msra.mxu0 0.0
        %3264 = vmatprep.subr.mxu0 0.0
        %3265 = vmatpush2.msra.mxu0 0.0
        %3266 = vmatprep.subr.mxu0 0.0
        %3267 = vmatpush2.msra.mxu0 0.0
        %3268 = vmatprep.subr.mxu0 0.0
        %3269 = vmatpush2.msra.mxu0 0.0
        %3270 = vmatprep.subr.mxu0 0.0
        %3271 = vmatpush2.msra.mxu0 0.0
        %3272 = vmatprep.subr.mxu0 0.0
        %3273 = vmatpush2.msra.mxu0 0.0
        %3274 = vmatprep.subr.mxu0 0.0
        %3275 = vmatpush2.msra.mxu0 0.0
        %3276 = vmatprep.subr.mxu0 0.0
        %3277 = vmatpush2.msra.mxu0 0.0
        %3278 = vmatprep.mubr.f32.mxu0 0.0
        %3279 = vmatmul.mubr.f32.gmra.mxu0 %v3212
        %v3280 = vpop.f32.mrf.mxu0
        %v3281 = vadd.f32 0.0, %v3280
        %v3282 = vpop.f32.mrf.mxu0
        %3283 = vdwg.mxu0
        %v3284 = vld [vmem:[%s3] sm:$0xff]
        %v3285 = vld [vmem:[%s3 + $0x8] sm:$0xff]
        %v3287 = vsel %vm555, %v3284, 0
        %v3290 = vsel %vm555, %v3285, 0
        %v3293 = vsel %vm562, %v3281, 0
        %3295 = vmatprep.subr.mxu0 0.0
        %3296 = vmatpush1.msra.mxu0 0.0
        %3297 = vmatprep.subr.mxu0 0.0
        %3298 = vmatpush1.msra.mxu0 0.0
        %3299 = vmatprep.subr.mxu0 0.0
        %3300 = vmatpush1.msra.mxu0 0.0
        %3301 = vmatprep.subr.mxu0 0.0
        %3302 = vmatpush1.msra.mxu0 0.0
        %3303 = vmatprep.subr.mxu0 0.0
        %3304 = vmatpush1.msra.mxu0 0.0
        %3305 = vmatprep.subr.mxu0 0.0
        %3306 = vmatpush1.msra.mxu0 0.0
        %3307 = vmatprep.subr.mxu0 0.0
        %3308 = vmatpush1.msra.mxu0 0.0
        %3309 = vmatprep.subr.mxu0 0.0
        %3310 = vmatpush1.msra.mxu0 0.0
        %3311 = vmatprep.subr.mxu0 0.0
        %3312 = vmatpush1.msra.mxu0 0.0
        %3313 = vmatprep.subr.mxu0 0.0
        %3314 = vmatpush1.msra.mxu0 0.0
        %3315 = vmatprep.subr.mxu0 0.0
        %3316 = vmatpush1.msra.mxu0 0.0
        %3317 = vmatprep.subr.mxu0 0.0
        %3318 = vmatpush1.msra.mxu0 0.0
        %3319 = vmatprep.subr.mxu0 0.0
        %3320 = vmatpush1.msra.mxu0 0.0
        %3321 = vmatprep.subr.mxu0 0.0
        %3322 = vmatpush1.msra.mxu0 0.0
        %3323 = vmatprep.subr.mxu0 0.0
        %3324 = vmatpush1.msra.mxu0 0.0
        %3325 = vmatprep.subr.mxu0 0.0
        %3326 = vmatpush1.msra.mxu0 %v3293
        %3327 = vmatprep.subr.mxu0 0.0
        %3328 = vmatpush2.msra.mxu0 0.0
        %3329 = vmatprep.subr.mxu0 0.0
        %3330 = vmatpush2.msra.mxu0 0.0
        %3331 = vmatprep.subr.mxu0 0.0
        %3332 = vmatpush2.msra.mxu0 0.0
        %3333 = vmatprep.subr.mxu0 0.0
        %3334 = vmatpush2.msra.mxu0 0.0
        %3335 = vmatprep.subr.mxu0 0.0
        %3336 = vmatpush2.msra.mxu0 0.0
        %3337 = vmatprep.subr.mxu0 0.0
        %3338 = vmatpush2.msra.mxu0 0.0
        %3339 = vmatprep.subr.mxu0 0.0
        %3340 = vmatpush2.msra.mxu0 0.0
        %3341 = vmatprep.subr.mxu0 0.0
        %3342 = vmatpush2.msra.mxu0 0.0
        %3343 = vmatprep.subr.mxu0 0.0
        %3344 = vmatpush2.msra.mxu0 0.0
        %3345 = vmatprep.subr.mxu0 0.0
        %3346 = vmatpush2.msra.mxu0 0.0
        %3347 = vmatprep.subr.mxu0 0.0
        %3348 = vmatpush2.msra.mxu0 0.0
        %3349 = vmatprep.subr.mxu0 0.0
        %3350 = vmatpush2.msra.mxu0 0.0
        %3351 = vmatprep.subr.mxu0 0.0
        %3352 = vmatpush2.msra.mxu0 0.0
        %3353 = vmatprep.subr.mxu0 0.0
        %3354 = vmatpush2.msra.mxu0 0.0
        %3355 = vmatprep.subr.mxu0 0.0
        %3356 = vmatpush2.msra.mxu0 0.0
        %3357 = vmatprep.subr.mxu0 0.0
        %3358 = vmatpush2.msra.mxu0 0.0
        %3359 = vmatprep.mubr.f32.mxu0 0.0
        %3360 = vmatmul.mubr.f32.gmra.mxu0 %v3287
        %v3361 = vpop.f32.mrf.mxu0
        %v3362 = vadd.f32 0.0, %v3361
        %v3363 = vpop.f32.mrf.mxu0
        %3364 = vmatprep.mubr.f32.mxu0 0.0
        %3365 = vmatmul.mubr.f32.gmra.mxu0 %v3290
        %v3366 = vpop.f32.mrf.mxu0
        %v3367 = vadd.f32 0.0, %v3366
        %v3368 = vpop.f32.mrf.mxu0
        %3369 = vdwg.mxu0
        %v3370 = vadd.f32 %v3207, %v3362
        %v3371 = vadd.f32 %v3208, %v3367
        %v3372 = vld [vmem:[%s377] sm:$0xff]
        %v3373 = vld [vmem:[%s377 + $0x8] sm:$0xff]
        %3374 = vmatprep.subr.mxu0 0.0
        %3375 = vmatpush1.msra.mxu0 0.0
        %3376 = vmatprep.subr.mxu0 0.0
        %3377 = vmatpush1.msra.mxu0 0.0
        %3378 = vmatprep.subr.mxu0 0.0
        %3379 = vmatpush1.msra.mxu0 0.0
        %3380 = vmatprep.subr.mxu0 0.0
        %3381 = vmatpush1.msra.mxu0 0.0
        %3382 = vmatprep.subr.mxu0 0.0
        %3383 = vmatpush1.msra.mxu0 0.0
        %3384 = vmatprep.subr.mxu0 0.0
        %3385 = vmatpush1.msra.mxu0 0.0
        %3386 = vmatprep.subr.mxu0 0.0
        %3387 = vmatpush1.msra.mxu0 0.0
        %3388 = vmatprep.subr.mxu0 0.0
        %3389 = vmatpush1.msra.mxu0 0.0
        %3390 = vmatprep.subr.mxu0 0.0
        %3391 = vmatpush1.msra.mxu0 0.0
        %3392 = vmatprep.subr.mxu0 0.0
        %3393 = vmatpush1.msra.mxu0 0.0
        %3394 = vmatprep.subr.mxu0 0.0
        %3395 = vmatpush1.msra.mxu0 0.0
        %3396 = vmatprep.subr.mxu0 0.0
        %3397 = vmatpush1.msra.mxu0 0.0
        %3398 = vmatprep.subr.mxu0 0.0
        %3399 = vmatpush1.msra.mxu0 0.0
        %3400 = vmatprep.subr.mxu0 0.0
        %3401 = vmatpush1.msra.mxu0 0.0
        %3402 = vmatprep.subr.mxu0 0.0
        %3403 = vmatpush1.msra.mxu0 %v3373
        %3404 = vmatprep.subr.mxu0 0.0
        %3405 = vmatpush1.msra.mxu0 %v3372
        %3406 = vmatprep.subr.mxu0 0.0
        %3407 = vmatpush2.msra.mxu0 0.0
        %3408 = vmatprep.subr.mxu0 0.0
        %3409 = vmatpush2.msra.mxu0 0.0
        %3410 = vmatprep.subr.mxu0 0.0
        %3411 = vmatpush2.msra.mxu0 0.0
        %3412 = vmatprep.subr.mxu0 0.0
        %3413 = vmatpush2.msra.mxu0 0.0
        %3414 = vmatprep.subr.mxu0 0.0
        %3415 = vmatpush2.msra.mxu0 0.0
        %3416 = vmatprep.subr.mxu0 0.0
        %3417 = vmatpush2.msra.mxu0 0.0
        %3418 = vmatprep.subr.mxu0 0.0
        %3419 = vmatpush2.msra.mxu0 0.0
        %3420 = vmatprep.subr.mxu0 0.0
        %3421 = vmatpush2.msra.mxu0 0.0
        %3422 = vmatprep.subr.mxu0 0.0
        %3423 = vmatpush2.msra.mxu0 0.0
        %3424 = vmatprep.subr.mxu0 0.0
        %3425 = vmatpush2.msra.mxu0 0.0
        %3426 = vmatprep.subr.mxu0 0.0
        %3427 = vmatpush2.msra.mxu0 0.0
        %3428 = vmatprep.subr.mxu0 0.0
        %3429 = vmatpush2.msra.mxu0 0.0
        %3430 = vmatprep.subr.mxu0 0.0
        %3431 = vmatpush2.msra.mxu0 0.0
        %3432 = vmatprep.subr.mxu0 0.0
        %3433 = vmatpush2.msra.mxu0 0.0
        %3434 = vmatprep.subr.mxu0 0.0
        %3435 = vmatpush2.msra.mxu0 0.0
        %3436 = vmatprep.subr.mxu0 0.0
        %3437 = vmatpush2.msra.mxu0 0.0
        %3438 = vmatprep.mubr.f32.mxu0 0.0
        %3439 = vmatmul.mubr.f32.gmra.mxu0 %v3212
        %v3440 = vpop.f32.mrf.mxu0
        %v3441 = vadd.f32 0.0, %v3440
        %v3442 = vpop.f32.mrf.mxu0
        %3443 = vdwg.mxu0
        %v3444 = vld [vmem:[%s2931] sm:$0xff]
        %v3445 = vld [vmem:[%s2931 + $0x8] sm:$0xff]
        %v3447 = vsel %vm555, %v3444, 0
        %v3450 = vsel %vm555, %v3445, 0
        %v3453 = vsel %vm562, %v3441, 0
        %3455 = vmatprep.subr.mxu0 0.0
        %3456 = vmatpush1.msra.mxu0 0.0
        %3457 = vmatprep.subr.mxu0 0.0
        %3458 = vmatpush1.msra.mxu0 0.0
        %3459 = vmatprep.subr.mxu0 0.0
        %3460 = vmatpush1.msra.mxu0 0.0
        %3461 = vmatprep.subr.mxu0 0.0
        %3462 = vmatpush1.msra.mxu0 0.0
        %3463 = vmatprep.subr.mxu0 0.0
        %3464 = vmatpush1.msra.mxu0 0.0
        %3465 = vmatprep.subr.mxu0 0.0
        %3466 = vmatpush1.msra.mxu0 0.0
        %3467 = vmatprep.subr.mxu0 0.0
        %3468 = vmatpush1.msra.mxu0 0.0
        %3469 = vmatprep.subr.mxu0 0.0
        %3470 = vmatpush1.msra.mxu0 0.0
        %3471 = vmatprep.subr.mxu0 0.0
        %3472 = vmatpush1.msra.mxu0 0.0
        %3473 = vmatprep.subr.mxu0 0.0
        %3474 = vmatpush1.msra.mxu0 0.0
        %3475 = vmatprep.subr.mxu0 0.0
        %3476 = vmatpush1.msra.mxu0 0.0
        %3477 = vmatprep.subr.mxu0 0.0
        %3478 = vmatpush1.msra.mxu0 0.0
        %3479 = vmatprep.subr.mxu0 0.0
        %3480 = vmatpush1.msra.mxu0 0.0
        %3481 = vmatprep.subr.mxu0 0.0
        %3482 = vmatpush1.msra.mxu0 0.0
        %3483 = vmatprep.subr.mxu0 0.0
        %3484 = vmatpush1.msra.mxu0 0.0
        %3485 = vmatprep.subr.mxu0 0.0
        %3486 = vmatpush1.msra.mxu0 %v3453
        %3487 = vmatprep.subr.mxu0 0.0
        %3488 = vmatpush2.msra.mxu0 0.0
        %3489 = vmatprep.subr.mxu0 0.0
        %3490 = vmatpush2.msra.mxu0 0.0
        %3491 = vmatprep.subr.mxu0 0.0
        %3492 = vmatpush2.msra.mxu0 0.0
        %3493 = vmatprep.subr.mxu0 0.0
        %3494 = vmatpush2.msra.mxu0 0.0
        %3495 = vmatprep.subr.mxu0 0.0
        %3496 = vmatpush2.msra.mxu0 0.0
        %3497 = vmatprep.subr.mxu0 0.0
        %3498 = vmatpush2.msra.mxu0 0.0
        %3499 = vmatprep.subr.mxu0 0.0
        %3500 = vmatpush2.msra.mxu0 0.0
        %3501 = vmatprep.subr.mxu0 0.0
        %3502 = vmatpush2.msra.mxu0 0.0
        %3503 = vmatprep.subr.mxu0 0.0
        %3504 = vmatpush2.msra.mxu0 0.0
        %3505 = vmatprep.subr.mxu0 0.0
        %3506 = vmatpush2.msra.mxu0 0.0
        %3507 = vmatprep.subr.mxu0 0.0
        %3508 = vmatpush2.msra.mxu0 0.0
        %3509 = vmatprep.subr.mxu0 0.0
        %3510 = vmatpush2.msra.mxu0 0.0
        %3511 = vmatprep.subr.mxu0 0.0
        %3512 = vmatpush2.msra.mxu0 0.0
        %3513 = vmatprep.subr.mxu0 0.0
        %3514 = vmatpush2.msra.mxu0 0.0
        %3515 = vmatprep.subr.mxu0 0.0
        %3516 = vmatpush2.msra.mxu0 0.0
        %3517 = vmatprep.subr.mxu0 0.0
        %3518 = vmatpush2.msra.mxu0 0.0
        %3519 = vmatprep.mubr.f32.mxu0 0.0
        %3520 = vmatmul.mubr.f32.gmra.mxu0 %v3447
        %v3521 = vpop.f32.mrf.mxu0
        %v3522 = vadd.f32 0.0, %v3521
        %v3523 = vpop.f32.mrf.mxu0
        %3524 = vmatprep.mubr.f32.mxu0 0.0
        %3525 = vmatmul.mubr.f32.gmra.mxu0 %v3450
        %v3526 = vpop.f32.mrf.mxu0
        %v3527 = vadd.f32 0.0, %v3526
        %v3528 = vpop.f32.mrf.mxu0
        %3529 = vdwg.mxu0
        %v3530 = vadd.f32 %v3370, %v3522
        %v3531 = vadd.f32 %v3371, %v3527
        %v3532 = vld [vmem:[%s465] sm:$0xff]
        %v3533 = vld [vmem:[%s465 + $0x8] sm:$0xff]
        %3534 = vmatprep.subr.mxu0 0.0
        %3535 = vmatpush1.msra.mxu0 0.0
        %3536 = vmatprep.subr.mxu0 0.0
        %3537 = vmatpush1.msra.mxu0 0.0
        %3538 = vmatprep.subr.mxu0 0.0
        %3539 = vmatpush1.msra.mxu0 0.0
        %3540 = vmatprep.subr.mxu0 0.0
        %3541 = vmatpush1.msra.mxu0 0.0
        %3542 = vmatprep.subr.mxu0 0.0
        %3543 = vmatpush1.msra.mxu0 0.0
        %3544 = vmatprep.subr.mxu0 0.0
        %3545 = vmatpush1.msra.mxu0 0.0
        %3546 = vmatprep.subr.mxu0 0.0
        %3547 = vmatpush1.msra.mxu0 0.0
        %3548 = vmatprep.subr.mxu0 0.0
        %3549 = vmatpush1.msra.mxu0 0.0
        %3550 = vmatprep.subr.mxu0 0.0
        %3551 = vmatpush1.msra.mxu0 0.0
        %3552 = vmatprep.subr.mxu0 0.0
        %3553 = vmatpush1.msra.mxu0 0.0
        %3554 = vmatprep.subr.mxu0 0.0
        %3555 = vmatpush1.msra.mxu0 0.0
        %3556 = vmatprep.subr.mxu0 0.0
        %3557 = vmatpush1.msra.mxu0 0.0
        %3558 = vmatprep.subr.mxu0 0.0
        %3559 = vmatpush1.msra.mxu0 0.0
        %3560 = vmatprep.subr.mxu0 0.0
        %3561 = vmatpush1.msra.mxu0 0.0
        %3562 = vmatprep.subr.mxu0 0.0
        %3563 = vmatpush1.msra.mxu0 %v3533
        %3564 = vmatprep.subr.mxu0 0.0
        %3565 = vmatpush1.msra.mxu0 %v3532
        %3566 = vmatprep.subr.mxu0 0.0
        %3567 = vmatpush2.msra.mxu0 0.0
        %3568 = vmatprep.subr.mxu0 0.0
        %3569 = vmatpush2.msra.mxu0 0.0
        %3570 = vmatprep.subr.mxu0 0.0
        %3571 = vmatpush2.msra.mxu0 0.0
        %3572 = vmatprep.subr.mxu0 0.0
        %3573 = vmatpush2.msra.mxu0 0.0
        %3574 = vmatprep.subr.mxu0 0.0
        %3575 = vmatpush2.msra.mxu0 0.0
        %3576 = vmatprep.subr.mxu0 0.0
        %3577 = vmatpush2.msra.mxu0 0.0
        %3578 = vmatprep.subr.mxu0 0.0
        %3579 = vmatpush2.msra.mxu0 0.0
        %3580 = vmatprep.subr.mxu0 0.0
        %3581 = vmatpush2.msra.mxu0 0.0
        %3582 = vmatprep.subr.mxu0 0.0
        %3583 = vmatpush2.msra.mxu0 0.0
        %3584 = vmatprep.subr.mxu0 0.0
        %3585 = vmatpush2.msra.mxu0 0.0
        %3586 = vmatprep.subr.mxu0 0.0
        %3587 = vmatpush2.msra.mxu0 0.0
        %3588 = vmatprep.subr.mxu0 0.0
        %3589 = vmatpush2.msra.mxu0 0.0
        %3590 = vmatprep.subr.mxu0 0.0
        %3591 = vmatpush2.msra.mxu0 0.0
        %3592 = vmatprep.subr.mxu0 0.0
        %3593 = vmatpush2.msra.mxu0 0.0
        %3594 = vmatprep.subr.mxu0 0.0
        %3595 = vmatpush2.msra.mxu0 0.0
        %3596 = vmatprep.subr.mxu0 0.0
        %3597 = vmatpush2.msra.mxu0 0.0
        %3598 = vmatprep.mubr.f32.mxu0 0.0
        %3599 = vmatmul.mubr.f32.gmra.mxu0 %v3212
        %v3600 = vpop.f32.mrf.mxu0
        %v3601 = vadd.f32 0.0, %v3600
        %v3602 = vpop.f32.mrf.mxu0
        %3603 = vdwg.mxu0
        %v3604 = vld [vmem:[%s3092] sm:$0xff]
        %v3605 = vld [vmem:[%s3092 + $0x8] sm:$0xff]
        %v3607 = vsel %vm555, %v3604, 0
        %v3610 = vsel %vm555, %v3605, 0
        %v3613 = vsel %vm562, %v3601, 0
        %3615 = vmatprep.subr.mxu0 0.0
        %3616 = vmatpush1.msra.mxu0 0.0
        %3617 = vmatprep.subr.mxu0 0.0
        %3618 = vmatpush1.msra.mxu0 0.0
        %3619 = vmatprep.subr.mxu0 0.0
        %3620 = vmatpush1.msra.mxu0 0.0
        %3621 = vmatprep.subr.mxu0 0.0
        %3622 = vmatpush1.msra.mxu0 0.0
        %3623 = vmatprep.subr.mxu0 0.0
        %3624 = vmatpush1.msra.mxu0 0.0
        %3625 = vmatprep.subr.mxu0 0.0
        %3626 = vmatpush1.msra.mxu0 0.0
        %3627 = vmatprep.subr.mxu0 0.0
        %3628 = vmatpush1.msra.mxu0 0.0
        %3629 = vmatprep.subr.mxu0 0.0
        %3630 = vmatpush1.msra.mxu0 0.0
        %3631 = vmatprep.subr.mxu0 0.0
        %3632 = vmatpush1.msra.mxu0 0.0
        %3633 = vmatprep.subr.mxu0 0.0
        %3634 = vmatpush1.msra.mxu0 0.0
        %3635 = vmatprep.subr.mxu0 0.0
        %3636 = vmatpush1.msra.mxu0 0.0
        %3637 = vmatprep.subr.mxu0 0.0
        %3638 = vmatpush1.msra.mxu0 0.0
        %3639 = vmatprep.subr.mxu0 0.0
        %3640 = vmatpush1.msra.mxu0 0.0
        %3641 = vmatprep.subr.mxu0 0.0
        %3642 = vmatpush1.msra.mxu0 0.0
        %3643 = vmatprep.subr.mxu0 0.0
        %3644 = vmatpush1.msra.mxu0 0.0
        %3645 = vmatprep.subr.mxu0 0.0
        %3646 = vmatpush1.msra.mxu0 %v3613
        %3647 = vmatprep.subr.mxu0 0.0
        %3648 = vmatpush2.msra.mxu0 0.0
        %3649 = vmatprep.subr.mxu0 0.0
        %3650 = vmatpush2.msra.mxu0 0.0
        %3651 = vmatprep.subr.mxu0 0.0
        %3652 = vmatpush2.msra.mxu0 0.0
        %3653 = vmatprep.subr.mxu0 0.0
        %3654 = vmatpush2.msra.mxu0 0.0
        %3655 = vmatprep.subr.mxu0 0.0
        %3656 = vmatpush2.msra.mxu0 0.0
        %3657 = vmatprep.subr.mxu0 0.0
        %3658 = vmatpush2.msra.mxu0 0.0
        %3659 = vmatprep.subr.mxu0 0.0
        %3660 = vmatpush2.msra.mxu0 0.0
        %3661 = vmatprep.subr.mxu0 0.0
        %3662 = vmatpush2.msra.mxu0 0.0
        %3663 = vmatprep.subr.mxu0 0.0
        %3664 = vmatpush2.msra.mxu0 0.0
        %3665 = vmatprep.subr.mxu0 0.0
        %3666 = vmatpush2.msra.mxu0 0.0
        %3667 = vmatprep.subr.mxu0 0.0
        %3668 = vmatpush2.msra.mxu0 0.0
        %3669 = vmatprep.subr.mxu0 0.0
        %3670 = vmatpush2.msra.mxu0 0.0
        %3671 = vmatprep.subr.mxu0 0.0
        %3672 = vmatpush2.msra.mxu0 0.0
        %3673 = vmatprep.subr.mxu0 0.0
        %3674 = vmatpush2.msra.mxu0 0.0
        %3675 = vmatprep.subr.mxu0 0.0
        %3676 = vmatpush2.msra.mxu0 0.0
        %3677 = vmatprep.subr.mxu0 0.0
        %3678 = vmatpush2.msra.mxu0 0.0
        %3679 = vmatprep.mubr.f32.mxu0 0.0
        %3680 = vmatmul.mubr.f32.gmra.mxu0 %v3607
        %v3681 = vpop.f32.mrf.mxu0
        %v3682 = vadd.f32 0.0, %v3681
        %v3683 = vpop.f32.mrf.mxu0
        %3684 = vmatprep.mubr.f32.mxu0 0.0
        %3685 = vmatmul.mubr.f32.gmra.mxu0 %v3610
        %v3686 = vpop.f32.mrf.mxu0
        %v3687 = vadd.f32 0.0, %v3686
        %v3688 = vpop.f32.mrf.mxu0
        %3689 = vdwg.mxu0
        %v3690 = vadd.f32 %v3530, %v3682
        %v3691 = vadd.f32 %v3531, %v3687
        %v3692 = vxor.u32 %v3690, 2147483648
        %v3693 = vxor.u32 %v3691, 2147483648
        %v3694 = vmul.f32 %v3692, 1.442695
        %v3695 = vpow.pop %v3694
        %v3696 = vmul.f32 %v3693, 1.442695
        %v3697 = vpow.pop %v3696
        %v3698 = vadd.f32 %v3695, 1.0
        %v3699 = vadd.f32 %v3697, 1.0
        %v3700 = vrcp.pop %v3698
        %v3701 = vmul.f32 1.0, %v3700
        %v3702 = vrcp.pop %v3699
        %v3703 = vmul.f32 1.0, %v3702
        %v3704 = vtanh.pop %v3691
        %v3706 = vrot.slane %v3701, 4
        %v3708 = vmul.f32 %v3202, %v3706
        %v3710 = vrot.slane %v3704, 4
        %v3712 = vmul.f32 %v3701, %v3710
        %v3713 = vadd.f32 %v3708, %v3712
        %v3714 = vtanh.pop %v3713
        %v3715 = vmul.f32 %v3714, %v3703
        %s3716 = scalar_lea.vmem %s242, 4 [#allocation5]
        %3717 = vst.msk [vmem:[%s3716] sm:$0xf] %vm3205, %v3715
        %v3718 = vld [vmem:[%s1354] sm:$0xff]
        %v3719 = vld [vmem:[%s1354 + $0x8] sm:$0xff]
        %v3720 = vld [vmem:[%s1] sm:$0xff]
        %v3721 = vld [vmem:[%s1 + $0x8] sm:$0xff]
        %v3723 = vsel %vm279, %v3715, 0
        %3725 = vmatprep.subr.mxu0 0.0
        %3726 = vmatpush1.msra.mxu0 0.0
        %3727 = vmatprep.subr.mxu0 0.0
        %3728 = vmatpush1.msra.mxu0 0.0
        %3729 = vmatprep.subr.mxu0 0.0
        %3730 = vmatpush1.msra.mxu0 0.0
        %3731 = vmatprep.subr.mxu0 0.0
        %3732 = vmatpush1.msra.mxu0 0.0
        %3733 = vmatprep.subr.mxu0 0.0
        %3734 = vmatpush1.msra.mxu0 0.0
        %3735 = vmatprep.subr.mxu0 0.0
        %3736 = vmatpush1.msra.mxu0 0.0
        %3737 = vmatprep.subr.mxu0 0.0
        %3738 = vmatpush1.msra.mxu0 0.0
        %3739 = vmatprep.subr.mxu0 0.0
        %3740 = vmatpush1.msra.mxu0 0.0
        %3741 = vmatprep.subr.mxu0 0.0
        %3742 = vmatpush1.msra.mxu0 0.0
        %3743 = vmatprep.subr.mxu0 0.0
        %3744 = vmatpush1.msra.mxu0 0.0
        %3745 = vmatprep.subr.mxu0 0.0
        %3746 = vmatpush1.msra.mxu0 0.0
        %3747 = vmatprep.subr.mxu0 0.0
        %3748 = vmatpush1.msra.mxu0 0.0
        %3749 = vmatprep.subr.mxu0 0.0
        %3750 = vmatpush1.msra.mxu0 0.0
        %3751 = vmatprep.subr.mxu0 0.0
        %3752 = vmatpush1.msra.mxu0 0.0
        %3753 = vmatprep.subr.mxu0 0.0
        %3754 = vmatpush1.msra.mxu0 %v3721
        %3755 = vmatprep.subr.mxu0 0.0
        %3756 = vmatpush1.msra.mxu0 %v3720
        %3757 = vmatprep.subr.mxu0 0.0
        %3758 = vmatpush2.msra.mxu0 0.0
        %3759 = vmatprep.subr.mxu0 0.0
        %3760 = vmatpush2.msra.mxu0 0.0
        %3761 = vmatprep.subr.mxu0 0.0
        %3762 = vmatpush2.msra.mxu0 0.0
        %3763 = vmatprep.subr.mxu0 0.0
        %3764 = vmatpush2.msra.mxu0 0.0
        %3765 = vmatprep.subr.mxu0 0.0
        %3766 = vmatpush2.msra.mxu0 0.0
        %3767 = vmatprep.subr.mxu0 0.0
        %3768 = vmatpush2.msra.mxu0 0.0
        %3769 = vmatprep.subr.mxu0 0.0
        %3770 = vmatpush2.msra.mxu0 0.0
        %3771 = vmatprep.subr.mxu0 0.0
        %3772 = vmatpush2.msra.mxu0 0.0
        %3773 = vmatprep.subr.mxu0 0.0
        %3774 = vmatpush2.msra.mxu0 0.0
        %3775 = vmatprep.subr.mxu0 0.0
        %3776 = vmatpush2.msra.mxu0 0.0
        %3777 = vmatprep.subr.mxu0 0.0
        %3778 = vmatpush2.msra.mxu0 0.0
        %3779 = vmatprep.subr.mxu0 0.0
        %3780 = vmatpush2.msra.mxu0 0.0
        %3781 = vmatprep.subr.mxu0 0.0
        %3782 = vmatpush2.msra.mxu0 0.0
        %3783 = vmatprep.subr.mxu0 0.0
        %3784 = vmatpush2.msra.mxu0 0.0
        %3785 = vmatprep.subr.mxu0 0.0
        %3786 = vmatpush2.msra.mxu0 0.0
        %3787 = vmatprep.subr.mxu0 0.0
        %3788 = vmatpush2.msra.mxu0 0.0
        %3789 = vmatprep.mubr.f32.mxu0 0.0
        %3790 = vmatmul.mubr.f32.gmra.mxu0 %v3723
        %v3791 = vpop.f32.mrf.mxu0
        %v3792 = vadd.f32 0.0, %v3791
        %v3793 = vpop.f32.mrf.mxu0
        %3794 = vdwg.mxu0
        %v3795 = vld [vmem:[%s3] sm:$0xff]
        %v3796 = vld [vmem:[%s3 + $0x8] sm:$0xff]
        %v3798 = vsel %vm555, %v3795, 0
        %v3801 = vsel %vm555, %v3796, 0
        %v3804 = vsel %vm562, %v3792, 0
        %3806 = vmatprep.subr.mxu0 0.0
        %3807 = vmatpush1.msra.mxu0 0.0
        %3808 = vmatprep.subr.mxu0 0.0
        %3809 = vmatpush1.msra.mxu0 0.0
        %3810 = vmatprep.subr.mxu0 0.0
        %3811 = vmatpush1.msra.mxu0 0.0
        %3812 = vmatprep.subr.mxu0 0.0
        %3813 = vmatpush1.msra.mxu0 0.0
        %3814 = vmatprep.subr.mxu0 0.0
        %3815 = vmatpush1.msra.mxu0 0.0
        %3816 = vmatprep.subr.mxu0 0.0
        %3817 = vmatpush1.msra.mxu0 0.0
        %3818 = vmatprep.subr.mxu0 0.0
        %3819 = vmatpush1.msra.mxu0 0.0
        %3820 = vmatprep.subr.mxu0 0.0
        %3821 = vmatpush1.msra.mxu0 0.0
        %3822 = vmatprep.subr.mxu0 0.0
        %3823 = vmatpush1.msra.mxu0 0.0
        %3824 = vmatprep.subr.mxu0 0.0
        %3825 = vmatpush1.msra.mxu0 0.0
        %3826 = vmatprep.subr.mxu0 0.0
        %3827 = vmatpush1.msra.mxu0 0.0
        %3828 = vmatprep.subr.mxu0 0.0
        %3829 = vmatpush1.msra.mxu0 0.0
        %3830 = vmatprep.subr.mxu0 0.0
        %3831 = vmatpush1.msra.mxu0 0.0
        %3832 = vmatprep.subr.mxu0 0.0
        %3833 = vmatpush1.msra.mxu0 0.0
        %3834 = vmatprep.subr.mxu0 0.0
        %3835 = vmatpush1.msra.mxu0 0.0
        %3836 = vmatprep.subr.mxu0 0.0
        %3837 = vmatpush1.msra.mxu0 %v3804
        %3838 = vmatprep.subr.mxu0 0.0
        %3839 = vmatpush2.msra.mxu0 0.0
        %3840 = vmatprep.subr.mxu0 0.0
        %3841 = vmatpush2.msra.mxu0 0.0
        %3842 = vmatprep.subr.mxu0 0.0
        %3843 = vmatpush2.msra.mxu0 0.0
        %3844 = vmatprep.subr.mxu0 0.0
        %3845 = vmatpush2.msra.mxu0 0.0
        %3846 = vmatprep.subr.mxu0 0.0
        %3847 = vmatpush2.msra.mxu0 0.0
        %3848 = vmatprep.subr.mxu0 0.0
        %3849 = vmatpush2.msra.mxu0 0.0
        %3850 = vmatprep.subr.mxu0 0.0
        %3851 = vmatpush2.msra.mxu0 0.0
        %3852 = vmatprep.subr.mxu0 0.0
        %3853 = vmatpush2.msra.mxu0 0.0
        %3854 = vmatprep.subr.mxu0 0.0
        %3855 = vmatpush2.msra.mxu0 0.0
        %3856 = vmatprep.subr.mxu0 0.0
        %3857 = vmatpush2.msra.mxu0 0.0
        %3858 = vmatprep.subr.mxu0 0.0
        %3859 = vmatpush2.msra.mxu0 0.0
        %3860 = vmatprep.subr.mxu0 0.0
        %3861 = vmatpush2.msra.mxu0 0.0
        %3862 = vmatprep.subr.mxu0 0.0
        %3863 = vmatpush2.msra.mxu0 0.0
        %3864 = vmatprep.subr.mxu0 0.0
        %3865 = vmatpush2.msra.mxu0 0.0
        %3866 = vmatprep.subr.mxu0 0.0
        %3867 = vmatpush2.msra.mxu0 0.0
        %3868 = vmatprep.subr.mxu0 0.0
        %3869 = vmatpush2.msra.mxu0 0.0
        %3870 = vmatprep.mubr.f32.mxu0 0.0
        %3871 = vmatmul.mubr.f32.gmra.mxu0 %v3798
        %v3872 = vpop.f32.mrf.mxu0
        %v3873 = vadd.f32 0.0, %v3872
        %v3874 = vpop.f32.mrf.mxu0
        %3875 = vmatprep.mubr.f32.mxu0 0.0
        %3876 = vmatmul.mubr.f32.gmra.mxu0 %v3801
        %v3877 = vpop.f32.mrf.mxu0
        %v3878 = vadd.f32 0.0, %v3877
        %v3879 = vpop.f32.mrf.mxu0
        %3880 = vdwg.mxu0
        %v3881 = vadd.f32 %v3718, %v3873
        %v3882 = vadd.f32 %v3719, %v3878
        %v3883 = vld [vmem:[%s377] sm:$0xff]
        %v3884 = vld [vmem:[%s377 + $0x8] sm:$0xff]
        %3885 = vmatprep.subr.mxu0 0.0
        %3886 = vmatpush1.msra.mxu0 0.0
        %3887 = vmatprep.subr.mxu0 0.0
        %3888 = vmatpush1.msra.mxu0 0.0
        %3889 = vmatprep.subr.mxu0 0.0
        %3890 = vmatpush1.msra.mxu0 0.0
        %3891 = vmatprep.subr.mxu0 0.0
        %3892 = vmatpush1.msra.mxu0 0.0
        %3893 = vmatprep.subr.mxu0 0.0
        %3894 = vmatpush1.msra.mxu0 0.0
        %3895 = vmatprep.subr.mxu0 0.0
        %3896 = vmatpush1.msra.mxu0 0.0
        %3897 = vmatprep.subr.mxu0 0.0
        %3898 = vmatpush1.msra.mxu0 0.0
        %3899 = vmatprep.subr.mxu0 0.0
        %3900 = vmatpush1.msra.mxu0 0.0
        %3901 = vmatprep.subr.mxu0 0.0
        %3902 = vmatpush1.msra.mxu0 0.0
        %3903 = vmatprep.subr.mxu0 0.0
        %3904 = vmatpush1.msra.mxu0 0.0
        %3905 = vmatprep.subr.mxu0 0.0
        %3906 = vmatpush1.msra.mxu0 0.0
        %3907 = vmatprep.subr.mxu0 0.0
        %3908 = vmatpush1.msra.mxu0 0.0
        %3909 = vmatprep.subr.mxu0 0.0
        %3910 = vmatpush1.msra.mxu0 0.0
        %3911 = vmatprep.subr.mxu0 0.0
        %3912 = vmatpush1.msra.mxu0 0.0
        %3913 = vmatprep.subr.mxu0 0.0
        %3914 = vmatpush1.msra.mxu0 %v3884
        %3915 = vmatprep.subr.mxu0 0.0
        %3916 = vmatpush1.msra.mxu0 %v3883
        %3917 = vmatprep.subr.mxu0 0.0
        %3918 = vmatpush2.msra.mxu0 0.0
        %3919 = vmatprep.subr.mxu0 0.0
        %3920 = vmatpush2.msra.mxu0 0.0
        %3921 = vmatprep.subr.mxu0 0.0
        %3922 = vmatpush2.msra.mxu0 0.0
        %3923 = vmatprep.subr.mxu0 0.0
        %3924 = vmatpush2.msra.mxu0 0.0
        %3925 = vmatprep.subr.mxu0 0.0
        %3926 = vmatpush2.msra.mxu0 0.0
        %3927 = vmatprep.subr.mxu0 0.0
        %3928 = vmatpush2.msra.mxu0 0.0
        %3929 = vmatprep.subr.mxu0 0.0
        %3930 = vmatpush2.msra.mxu0 0.0
        %3931 = vmatprep.subr.mxu0 0.0
        %3932 = vmatpush2.msra.mxu0 0.0
        %3933 = vmatprep.subr.mxu0 0.0
        %3934 = vmatpush2.msra.mxu0 0.0
        %3935 = vmatprep.subr.mxu0 0.0
        %3936 = vmatpush2.msra.mxu0 0.0
        %3937 = vmatprep.subr.mxu0 0.0
        %3938 = vmatpush2.msra.mxu0 0.0
        %3939 = vmatprep.subr.mxu0 0.0
        %3940 = vmatpush2.msra.mxu0 0.0
        %3941 = vmatprep.subr.mxu0 0.0
        %3942 = vmatpush2.msra.mxu0 0.0
        %3943 = vmatprep.subr.mxu0 0.0
        %3944 = vmatpush2.msra.mxu0 0.0
        %3945 = vmatprep.subr.mxu0 0.0
        %3946 = vmatpush2.msra.mxu0 0.0
        %3947 = vmatprep.subr.mxu0 0.0
        %3948 = vmatpush2.msra.mxu0 0.0
        %3949 = vmatprep.mubr.f32.mxu0 0.0
        %3950 = vmatmul.mubr.f32.gmra.mxu0 %v3723
        %v3951 = vpop.f32.mrf.mxu0
        %v3952 = vadd.f32 0.0, %v3951
        %v3953 = vpop.f32.mrf.mxu0
        %3954 = vdwg.mxu0
        %v3955 = vld [vmem:[%s2931] sm:$0xff]
        %v3956 = vld [vmem:[%s2931 + $0x8] sm:$0xff]
        %v3958 = vsel %vm555, %v3955, 0
        %v3961 = vsel %vm555, %v3956, 0
        %v3964 = vsel %vm562, %v3952, 0
        %3966 = vmatprep.subr.mxu0 0.0
        %3967 = vmatpush1.msra.mxu0 0.0
        %3968 = vmatprep.subr.mxu0 0.0
        %3969 = vmatpush1.msra.mxu0 0.0
        %3970 = vmatprep.subr.mxu0 0.0
        %3971 = vmatpush1.msra.mxu0 0.0
        %3972 = vmatprep.subr.mxu0 0.0
        %3973 = vmatpush1.msra.mxu0 0.0
        %3974 = vmatprep.subr.mxu0 0.0
        %3975 = vmatpush1.msra.mxu0 0.0
        %3976 = vmatprep.subr.mxu0 0.0
        %3977 = vmatpush1.msra.mxu0 0.0
        %3978 = vmatprep.subr.mxu0 0.0
        %3979 = vmatpush1.msra.mxu0 0.0
        %3980 = vmatprep.subr.mxu0 0.0
        %3981 = vmatpush1.msra.mxu0 0.0
        %3982 = vmatprep.subr.mxu0 0.0
        %3983 = vmatpush1.msra.mxu0 0.0
        %3984 = vmatprep.subr.mxu0 0.0
        %3985 = vmatpush1.msra.mxu0 0.0
        %3986 = vmatprep.subr.mxu0 0.0
        %3987 = vmatpush1.msra.mxu0 0.0
        %3988 = vmatprep.subr.mxu0 0.0
        %3989 = vmatpush1.msra.mxu0 0.0
        %3990 = vmatprep.subr.mxu0 0.0
        %3991 = vmatpush1.msra.mxu0 0.0
        %3992 = vmatprep.subr.mxu0 0.0
        %3993 = vmatpush1.msra.mxu0 0.0
        %3994 = vmatprep.subr.mxu0 0.0
        %3995 = vmatpush1.msra.mxu0 0.0
        %3996 = vmatprep.subr.mxu0 0.0
        %3997 = vmatpush1.msra.mxu0 %v3964
        %3998 = vmatprep.subr.mxu0 0.0
        %3999 = vmatpush2.msra.mxu0 0.0
        %4000 = vmatprep.subr.mxu0 0.0
        %4001 = vmatpush2.msra.mxu0 0.0
        %4002 = vmatprep.subr.mxu0 0.0
        %4003 = vmatpush2.msra.mxu0 0.0
        %4004 = vmatprep.subr.mxu0 0.0
        %4005 = vmatpush2.msra.mxu0 0.0
        %4006 = vmatprep.subr.mxu0 0.0
        %4007 = vmatpush2.msra.mxu0 0.0
        %4008 = vmatprep.subr.mxu0 0.0
        %4009 = vmatpush2.msra.mxu0 0.0
        %4010 = vmatprep.subr.mxu0 0.0
        %4011 = vmatpush2.msra.mxu0 0.0
        %4012 = vmatprep.subr.mxu0 0.0
        %4013 = vmatpush2.msra.mxu0 0.0
        %4014 = vmatprep.subr.mxu0 0.0
        %4015 = vmatpush2.msra.mxu0 0.0
        %4016 = vmatprep.subr.mxu0 0.0
        %4017 = vmatpush2.msra.mxu0 0.0
        %4018 = vmatprep.subr.mxu0 0.0
        %4019 = vmatpush2.msra.mxu0 0.0
        %4020 = vmatprep.subr.mxu0 0.0
        %4021 = vmatpush2.msra.mxu0 0.0
        %4022 = vmatprep.subr.mxu0 0.0
        %4023 = vmatpush2.msra.mxu0 0.0
        %4024 = vmatprep.subr.mxu0 0.0
        %4025 = vmatpush2.msra.mxu0 0.0
        %4026 = vmatprep.subr.mxu0 0.0
        %4027 = vmatpush2.msra.mxu0 0.0
        %4028 = vmatprep.subr.mxu0 0.0
        %4029 = vmatpush2.msra.mxu0 0.0
        %4030 = vmatprep.mubr.f32.mxu0 0.0
        %4031 = vmatmul.mubr.f32.gmra.mxu0 %v3958
        %v4032 = vpop.f32.mrf.mxu0
        %v4033 = vadd.f32 0.0, %v4032
        %v4034 = vpop.f32.mrf.mxu0
        %4035 = vmatprep.mubr.f32.mxu0 0.0
        %4036 = vmatmul.mubr.f32.gmra.mxu0 %v3961
        %v4037 = vpop.f32.mrf.mxu0
        %v4038 = vadd.f32 0.0, %v4037
        %v4039 = vpop.f32.mrf.mxu0
        %4040 = vdwg.mxu0
        %v4041 = vadd.f32 %v3881, %v4033
        %v4042 = vadd.f32 %v3882, %v4038
        %v4043 = vld [vmem:[%s465] sm:$0xff]
        %v4044 = vld [vmem:[%s465 + $0x8] sm:$0xff]
        %4045 = vmatprep.subr.mxu0 0.0
        %4046 = vmatpush1.msra.mxu0 0.0
        %4047 = vmatprep.subr.mxu0 0.0
        %4048 = vmatpush1.msra.mxu0 0.0
        %4049 = vmatprep.subr.mxu0 0.0
        %4050 = vmatpush1.msra.mxu0 0.0
        %4051 = vmatprep.subr.mxu0 0.0
        %4052 = vmatpush1.msra.mxu0 0.0
        %4053 = vmatprep.subr.mxu0 0.0
        %4054 = vmatpush1.msra.mxu0 0.0
        %4055 = vmatprep.subr.mxu0 0.0
        %4056 = vmatpush1.msra.mxu0 0.0
        %4057 = vmatprep.subr.mxu0 0.0
        %4058 = vmatpush1.msra.mxu0 0.0
        %4059 = vmatprep.subr.mxu0 0.0
        %4060 = vmatpush1.msra.mxu0 0.0
        %4061 = vmatprep.subr.mxu0 0.0
        %4062 = vmatpush1.msra.mxu0 0.0
        %4063 = vmatprep.subr.mxu0 0.0
        %4064 = vmatpush1.msra.mxu0 0.0
        %4065 = vmatprep.subr.mxu0 0.0
        %4066 = vmatpush1.msra.mxu0 0.0
        %4067 = vmatprep.subr.mxu0 0.0
        %4068 = vmatpush1.msra.mxu0 0.0
        %4069 = vmatprep.subr.mxu0 0.0
        %4070 = vmatpush1.msra.mxu0 0.0
        %4071 = vmatprep.subr.mxu0 0.0
        %4072 = vmatpush1.msra.mxu0 0.0
        %4073 = vmatprep.subr.mxu0 0.0
        %4074 = vmatpush1.msra.mxu0 %v4044
        %4075 = vmatprep.subr.mxu0 0.0
        %4076 = vmatpush1.msra.mxu0 %v4043
        %4077 = vmatprep.subr.mxu0 0.0
        %4078 = vmatpush2.msra.mxu0 0.0
        %4079 = vmatprep.subr.mxu0 0.0
        %4080 = vmatpush2.msra.mxu0 0.0
        %4081 = vmatprep.subr.mxu0 0.0
        %4082 = vmatpush2.msra.mxu0 0.0
        %4083 = vmatprep.subr.mxu0 0.0
        %4084 = vmatpush2.msra.mxu0 0.0
        %4085 = vmatprep.subr.mxu0 0.0
        %4086 = vmatpush2.msra.mxu0 0.0
        %4087 = vmatprep.subr.mxu0 0.0
        %4088 = vmatpush2.msra.mxu0 0.0
        %4089 = vmatprep.subr.mxu0 0.0
        %4090 = vmatpush2.msra.mxu0 0.0
        %4091 = vmatprep.subr.mxu0 0.0
        %4092 = vmatpush2.msra.mxu0 0.0
        %4093 = vmatprep.subr.mxu0 0.0
        %4094 = vmatpush2.msra.mxu0 0.0
        %4095 = vmatprep.subr.mxu0 0.0
        %4096 = vmatpush2.msra.mxu0 0.0
        %4097 = vmatprep.subr.mxu0 0.0
        %4098 = vmatpush2.msra.mxu0 0.0
        %4099 = vmatprep.subr.mxu0 0.0
        %4100 = vmatpush2.msra.mxu0 0.0
        %4101 = vmatprep.subr.mxu0 0.0
        %4102 = vmatpush2.msra.mxu0 0.0
        %4103 = vmatprep.subr.mxu0 0.0
        %4104 = vmatpush2.msra.mxu0 0.0
        %4105 = vmatprep.subr.mxu0 0.0
        %4106 = vmatpush2.msra.mxu0 0.0
        %4107 = vmatprep.subr.mxu0 0.0
        %4108 = vmatpush2.msra.mxu0 0.0
        %4109 = vmatprep.mubr.f32.mxu0 0.0
        %4110 = vmatmul.mubr.f32.gmra.mxu0 %v3723
        %v4111 = vpop.f32.mrf.mxu0
        %v4112 = vadd.f32 0.0, %v4111
        %v4113 = vpop.f32.mrf.mxu0
        %4114 = vdwg.mxu0
        %v4115 = vld [vmem:[%s3092] sm:$0xff]
        %v4116 = vld [vmem:[%s3092 + $0x8] sm:$0xff]
        %v4118 = vsel %vm555, %v4115, 0
        %v4121 = vsel %vm555, %v4116, 0
        %v4124 = vsel %vm562, %v4112, 0
        %4126 = vmatprep.subr.mxu0 0.0
        %4127 = vmatpush1.msra.mxu0 0.0
        %4128 = vmatprep.subr.mxu0 0.0
        %4129 = vmatpush1.msra.mxu0 0.0
        %4130 = vmatprep.subr.mxu0 0.0
        %4131 = vmatpush1.msra.mxu0 0.0
        %4132 = vmatprep.subr.mxu0 0.0
        %4133 = vmatpush1.msra.mxu0 0.0
        %4134 = vmatprep.subr.mxu0 0.0
        %4135 = vmatpush1.msra.mxu0 0.0
        %4136 = vmatprep.subr.mxu0 0.0
        %4137 = vmatpush1.msra.mxu0 0.0
        %4138 = vmatprep.subr.mxu0 0.0
        %4139 = vmatpush1.msra.mxu0 0.0
        %4140 = vmatprep.subr.mxu0 0.0
        %4141 = vmatpush1.msra.mxu0 0.0
        %4142 = vmatprep.subr.mxu0 0.0
        %4143 = vmatpush1.msra.mxu0 0.0
        %4144 = vmatprep.subr.mxu0 0.0
        %4145 = vmatpush1.msra.mxu0 0.0
        %4146 = vmatprep.subr.mxu0 0.0
        %4147 = vmatpush1.msra.mxu0 0.0
        %4148 = vmatprep.subr.mxu0 0.0
        %4149 = vmatpush1.msra.mxu0 0.0
        %4150 = vmatprep.subr.mxu0 0.0
        %4151 = vmatpush1.msra.mxu0 0.0
        %4152 = vmatprep.subr.mxu0 0.0
        %4153 = vmatpush1.msra.mxu0 0.0
        %4154 = vmatprep.subr.mxu0 0.0
        %4155 = vmatpush1.msra.mxu0 0.0
        %4156 = vmatprep.subr.mxu0 0.0
        %4157 = vmatpush1.msra.mxu0 %v4124
        %4158 = vmatprep.subr.mxu0 0.0
        %4159 = vmatpush2.msra.mxu0 0.0
        %4160 = vmatprep.subr.mxu0 0.0
        %4161 = vmatpush2.msra.mxu0 0.0
        %4162 = vmatprep.subr.mxu0 0.0
        %4163 = vmatpush2.msra.mxu0 0.0
        %4164 = vmatprep.subr.mxu0 0.0
        %4165 = vmatpush2.msra.mxu0 0.0
        %4166 = vmatprep.subr.mxu0 0.0
        %4167 = vmatpush2.msra.mxu0 0.0
        %4168 = vmatprep.subr.mxu0 0.0
        %4169 = vmatpush2.msra.mxu0 0.0
        %4170 = vmatprep.subr.mxu0 0.0
        %4171 = vmatpush2.msra.mxu0 0.0
        %4172 = vmatprep.subr.mxu0 0.0
        %4173 = vmatpush2.msra.mxu0 0.0
        %4174 = vmatprep.subr.mxu0 0.0
        %4175 = vmatpush2.msra.mxu0 0.0
        %4176 = vmatprep.subr.mxu0 0.0
        %4177 = vmatpush2.msra.mxu0 0.0
        %4178 = vmatprep.subr.mxu0 0.0
        %4179 = vmatpush2.msra.mxu0 0.0
        %4180 = vmatprep.subr.mxu0 0.0
        %4181 = vmatpush2.msra.mxu0 0.0
        %4182 = vmatprep.subr.mxu0 0.0
        %4183 = vmatpush2.msra.mxu0 0.0
        %4184 = vmatprep.subr.mxu0 0.0
        %4185 = vmatpush2.msra.mxu0 0.0
        %4186 = vmatprep.subr.mxu0 0.0
        %4187 = vmatpush2.msra.mxu0 0.0
        %4188 = vmatprep.subr.mxu0 0.0
        %4189 = vmatpush2.msra.mxu0 0.0
        %4190 = vmatprep.mubr.f32.mxu0 0.0
        %4191 = vmatmul.mubr.f32.gmra.mxu0 %v4118
        %v4192 = vpop.f32.mrf.mxu0
        %v4193 = vadd.f32 0.0, %v4192
        %v4194 = vpop.f32.mrf.mxu0
        %4195 = vmatprep.mubr.f32.mxu0 0.0
        %4196 = vmatmul.mubr.f32.gmra.mxu0 %v4121
        %v4197 = vpop.f32.mrf.mxu0
        %v4198 = vadd.f32 0.0, %v4197
        %v4199 = vpop.f32.mrf.mxu0
        %4200 = vdwg.mxu0
        %v4201 = vadd.f32 %v4041, %v4193
        %v4202 = vadd.f32 %v4042, %v4198
        %v4203 = vxor.u32 %v4201, 2147483648
        %v4204 = vxor.u32 %v4202, 2147483648
        %v4205 = vmul.f32 %v4203, 1.442695
        %v4206 = vpow.pop %v4205
        %v4207 = vmul.f32 %v4204, 1.442695
        %v4208 = vpow.pop %v4207
        %v4209 = vadd.f32 %v4206, 1.0
        %v4210 = vadd.f32 %v4208, 1.0
        %v4211 = vrcp.pop %v4209
        %v4212 = vmul.f32 1.0, %v4211
        %v4213 = vrcp.pop %v4210
        %v4214 = vmul.f32 1.0, %v4213
        %v4215 = vtanh.pop %v4202
        %v4217 = vrot.slane %v4212, 4
        %v4219 = vmul.f32 %v3713, %v4217
        %v4221 = vrot.slane %v4215, 4
        %v4223 = vmul.f32 %v4212, %v4221
        %v4224 = vadd.f32 %v4219, %v4223
        %v4225 = vtanh.pop %v4224
        %v4226 = vmul.f32 %v4225, %v4214
        %s4227 = scalar_lea.vmem %s242, 8 [#allocation5]
        %4228 = vst.msk [vmem:[%s4227] sm:$0xf] %vm3205, %v4226
        %v4229 = vld [vmem:[%s1621] sm:$0xff]
        %v4230 = vld [vmem:[%s1621 + $0x8] sm:$0xff]
        %v4231 = vld [vmem:[%s1] sm:$0xff]
        %v4232 = vld [vmem:[%s1 + $0x8] sm:$0xff]
        %v4234 = vsel %vm279, %v4226, 0
        %4236 = vmatprep.subr.mxu0 0.0
        %4237 = vmatpush1.msra.mxu0 0.0
        %4238 = vmatprep.subr.mxu0 0.0
        %4239 = vmatpush1.msra.mxu0 0.0
        %4240 = vmatprep.subr.mxu0 0.0
        %4241 = vmatpush1.msra.mxu0 0.0
        %4242 = vmatprep.subr.mxu0 0.0
        %4243 = vmatpush1.msra.mxu0 0.0
        %4244 = vmatprep.subr.mxu0 0.0
        %4245 = vmatpush1.msra.mxu0 0.0
        %4246 = vmatprep.subr.mxu0 0.0
        %4247 = vmatpush1.msra.mxu0 0.0
        %4248 = vmatprep.subr.mxu0 0.0
        %4249 = vmatpush1.msra.mxu0 0.0
        %4250 = vmatprep.subr.mxu0 0.0
        %4251 = vmatpush1.msra.mxu0 0.0
        %4252 = vmatprep.subr.mxu0 0.0
        %4253 = vmatpush1.msra.mxu0 0.0
        %4254 = vmatprep.subr.mxu0 0.0
        %4255 = vmatpush1.msra.mxu0 0.0
        %4256 = vmatprep.subr.mxu0 0.0
        %4257 = vmatpush1.msra.mxu0 0.0
        %4258 = vmatprep.subr.mxu0 0.0
        %4259 = vmatpush1.msra.mxu0 0.0
        %4260 = vmatprep.subr.mxu0 0.0
        %4261 = vmatpush1.msra.mxu0 0.0
        %4262 = vmatprep.subr.mxu0 0.0
        %4263 = vmatpush1.msra.mxu0 0.0
        %4264 = vmatprep.subr.mxu0 0.0
        %4265 = vmatpush1.msra.mxu0 %v4232
        %4266 = vmatprep.subr.mxu0 0.0
        %4267 = vmatpush1.msra.mxu0 %v4231
        %4268 = vmatprep.subr.mxu0 0.0
        %4269 = vmatpush2.msra.mxu0 0.0
        %4270 = vmatprep.subr.mxu0 0.0
        %4271 = vmatpush2.msra.mxu0 0.0
        %4272 = vmatprep.subr.mxu0 0.0
        %4273 = vmatpush2.msra.mxu0 0.0
        %4274 = vmatprep.subr.mxu0 0.0
        %4275 = vmatpush2.msra.mxu0 0.0
        %4276 = vmatprep.subr.mxu0 0.0
        %4277 = vmatpush2.msra.mxu0 0.0
        %4278 = vmatprep.subr.mxu0 0.0
        %4279 = vmatpush2.msra.mxu0 0.0
        %4280 = vmatprep.subr.mxu0 0.0
        %4281 = vmatpush2.msra.mxu0 0.0
        %4282 = vmatprep.subr.mxu0 0.0
        %4283 = vmatpush2.msra.mxu0 0.0
        %4284 = vmatprep.subr.mxu0 0.0
        %4285 = vmatpush2.msra.mxu0 0.0
        %4286 = vmatprep.subr.mxu0 0.0
        %4287 = vmatpush2.msra.mxu0 0.0
        %4288 = vmatprep.subr.mxu0 0.0
        %4289 = vmatpush2.msra.mxu0 0.0
        %4290 = vmatprep.subr.mxu0 0.0
        %4291 = vmatpush2.msra.mxu0 0.0
        %4292 = vmatprep.subr.mxu0 0.0
        %4293 = vmatpush2.msra.mxu0 0.0
        %4294 = vmatprep.subr.mxu0 0.0
        %4295 = vmatpush2.msra.mxu0 0.0
        %4296 = vmatprep.subr.mxu0 0.0
        %4297 = vmatpush2.msra.mxu0 0.0
        %4298 = vmatprep.subr.mxu0 0.0
        %4299 = vmatpush2.msra.mxu0 0.0
        %4300 = vmatprep.mubr.f32.mxu0 0.0
        %4301 = vmatmul.mubr.f32.gmra.mxu0 %v4234
        %v4302 = vpop.f32.mrf.mxu0
        %v4303 = vadd.f32 0.0, %v4302
        %v4304 = vpop.f32.mrf.mxu0
        %4305 = vdwg.mxu0
        %v4306 = vld [vmem:[%s3] sm:$0xff]
        %v4307 = vld [vmem:[%s3 + $0x8] sm:$0xff]
        %v4309 = vsel %vm555, %v4306, 0
        %v4312 = vsel %vm555, %v4307, 0
        %v4315 = vsel %vm562, %v4303, 0
        %4317 = vmatprep.subr.mxu0 0.0
        %4318 = vmatpush1.msra.mxu0 0.0
        %4319 = vmatprep.subr.mxu0 0.0
        %4320 = vmatpush1.msra.mxu0 0.0
        %4321 = vmatprep.subr.mxu0 0.0
        %4322 = vmatpush1.msra.mxu0 0.0
        %4323 = vmatprep.subr.mxu0 0.0
        %4324 = vmatpush1.msra.mxu0 0.0
        %4325 = vmatprep.subr.mxu0 0.0
        %4326 = vmatpush1.msra.mxu0 0.0
        %4327 = vmatprep.subr.mxu0 0.0
        %4328 = vmatpush1.msra.mxu0 0.0
        %4329 = vmatprep.subr.mxu0 0.0
        %4330 = vmatpush1.msra.mxu0 0.0
        %4331 = vmatprep.subr.mxu0 0.0
        %4332 = vmatpush1.msra.mxu0 0.0
        %4333 = vmatprep.subr.mxu0 0.0
        %4334 = vmatpush1.msra.mxu0 0.0
        %4335 = vmatprep.subr.mxu0 0.0
        %4336 = vmatpush1.msra.mxu0 0.0
        %4337 = vmatprep.subr.mxu0 0.0
        %4338 = vmatpush1.msra.mxu0 0.0
        %4339 = vmatprep.subr.mxu0 0.0
        %4340 = vmatpush1.msra.mxu0 0.0
        %4341 = vmatprep.subr.mxu0 0.0
        %4342 = vmatpush1.msra.mxu0 0.0
        %4343 = vmatprep.subr.mxu0 0.0
        %4344 = vmatpush1.msra.mxu0 0.0
        %4345 = vmatprep.subr.mxu0 0.0
        %4346 = vmatpush1.msra.mxu0 0.0
        %4347 = vmatprep.subr.mxu0 0.0
        %4348 = vmatpush1.msra.mxu0 %v4315
        %4349 = vmatprep.subr.mxu0 0.0
        %4350 = vmatpush2.msra.mxu0 0.0
        %4351 = vmatprep.subr.mxu0 0.0
        %4352 = vmatpush2.msra.mxu0 0.0
        %4353 = vmatprep.subr.mxu0 0.0
        %4354 = vmatpush2.msra.mxu0 0.0
        %4355 = vmatprep.subr.mxu0 0.0
        %4356 = vmatpush2.msra.mxu0 0.0
        %4357 = vmatprep.subr.mxu0 0.0
        %4358 = vmatpush2.msra.mxu0 0.0
        %4359 = vmatprep.subr.mxu0 0.0
        %4360 = vmatpush2.msra.mxu0 0.0
        %4361 = vmatprep.subr.mxu0 0.0
        %4362 = vmatpush2.msra.mxu0 0.0
        %4363 = vmatprep.subr.mxu0 0.0
        %4364 = vmatpush2.msra.mxu0 0.0
        %4365 = vmatprep.subr.mxu0 0.0
        %4366 = vmatpush2.msra.mxu0 0.0
        %4367 = vmatprep.subr.mxu0 0.0
        %4368 = vmatpush2.msra.mxu0 0.0
        %4369 = vmatprep.subr.mxu0 0.0
        %4370 = vmatpush2.msra.mxu0 0.0
        %4371 = vmatprep.subr.mxu0 0.0
        %4372 = vmatpush2.msra.mxu0 0.0
        %4373 = vmatprep.subr.mxu0 0.0
        %4374 = vmatpush2.msra.mxu0 0.0
        %4375 = vmatprep.subr.mxu0 0.0
        %4376 = vmatpush2.msra.mxu0 0.0
        %4377 = vmatprep.subr.mxu0 0.0
        %4378 = vmatpush2.msra.mxu0 0.0
        %4379 = vmatprep.subr.mxu0 0.0
        %4380 = vmatpush2.msra.mxu0 0.0
        %4381 = vmatprep.mubr.f32.mxu0 0.0
        %4382 = vmatmul.mubr.f32.gmra.mxu0 %v4309
        %v4383 = vpop.f32.mrf.mxu0
        %v4384 = vadd.f32 0.0, %v4383
        %v4385 = vpop.f32.mrf.mxu0
        %4386 = vmatprep.mubr.f32.mxu0 0.0
        %4387 = vmatmul.mubr.f32.gmra.mxu0 %v4312
        %v4388 = vpop.f32.mrf.mxu0
        %v4389 = vadd.f32 0.0, %v4388
        %v4390 = vpop.f32.mrf.mxu0
        %4391 = vdwg.mxu0
        %v4392 = vadd.f32 %v4229, %v4384
        %v4393 = vadd.f32 %v4230, %v4389
        %v4394 = vld [vmem:[%s377] sm:$0xff]
        %v4395 = vld [vmem:[%s377 + $0x8] sm:$0xff]
        %4396 = vmatprep.subr.mxu0 0.0
        %4397 = vmatpush1.msra.mxu0 0.0
        %4398 = vmatprep.subr.mxu0 0.0
        %4399 = vmatpush1.msra.mxu0 0.0
        %4400 = vmatprep.subr.mxu0 0.0
        %4401 = vmatpush1.msra.mxu0 0.0
        %4402 = vmatprep.subr.mxu0 0.0
        %4403 = vmatpush1.msra.mxu0 0.0
        %4404 = vmatprep.subr.mxu0 0.0
        %4405 = vmatpush1.msra.mxu0 0.0
        %4406 = vmatprep.subr.mxu0 0.0
        %4407 = vmatpush1.msra.mxu0 0.0
        %4408 = vmatprep.subr.mxu0 0.0
        %4409 = vmatpush1.msra.mxu0 0.0
        %4410 = vmatprep.subr.mxu0 0.0
        %4411 = vmatpush1.msra.mxu0 0.0
        %4412 = vmatprep.subr.mxu0 0.0
        %4413 = vmatpush1.msra.mxu0 0.0
        %4414 = vmatprep.subr.mxu0 0.0
        %4415 = vmatpush1.msra.mxu0 0.0
        %4416 = vmatprep.subr.mxu0 0.0
        %4417 = vmatpush1.msra.mxu0 0.0
        %4418 = vmatprep.subr.mxu0 0.0
        %4419 = vmatpush1.msra.mxu0 0.0
        %4420 = vmatprep.subr.mxu0 0.0
        %4421 = vmatpush1.msra.mxu0 0.0
        %4422 = vmatprep.subr.mxu0 0.0
        %4423 = vmatpush1.msra.mxu0 0.0
        %4424 = vmatprep.subr.mxu0 0.0
        %4425 = vmatpush1.msra.mxu0 %v4395
        %4426 = vmatprep.subr.mxu0 0.0
        %4427 = vmatpush1.msra.mxu0 %v4394
        %4428 = vmatprep.subr.mxu0 0.0
        %4429 = vmatpush2.msra.mxu0 0.0
        %4430 = vmatprep.subr.mxu0 0.0
        %4431 = vmatpush2.msra.mxu0 0.0
        %4432 = vmatprep.subr.mxu0 0.0
        %4433 = vmatpush2.msra.mxu0 0.0
        %4434 = vmatprep.subr.mxu0 0.0
        %4435 = vmatpush2.msra.mxu0 0.0
        %4436 = vmatprep.subr.mxu0 0.0
        %4437 = vmatpush2.msra.mxu0 0.0
        %4438 = vmatprep.subr.mxu0 0.0
        %4439 = vmatpush2.msra.mxu0 0.0
        %4440 = vmatprep.subr.mxu0 0.0
        %4441 = vmatpush2.msra.mxu0 0.0
        %4442 = vmatprep.subr.mxu0 0.0
        %4443 = vmatpush2.msra.mxu0 0.0
        %4444 = vmatprep.subr.mxu0 0.0
        %4445 = vmatpush2.msra.mxu0 0.0
        %4446 = vmatprep.subr.mxu0 0.0
        %4447 = vmatpush2.msra.mxu0 0.0
        %4448 = vmatprep.subr.mxu0 0.0
        %4449 = vmatpush2.msra.mxu0 0.0
        %4450 = vmatprep.subr.mxu0 0.0
        %4451 = vmatpush2.msra.mxu0 0.0
        %4452 = vmatprep.subr.mxu0 0.0
        %4453 = vmatpush2.msra.mxu0 0.0
        %4454 = vmatprep.subr.mxu0 0.0
        %4455 = vmatpush2.msra.mxu0 0.0
        %4456 = vmatprep.subr.mxu0 0.0
        %4457 = vmatpush2.msra.mxu0 0.0
        %4458 = vmatprep.subr.mxu0 0.0
        %4459 = vmatpush2.msra.mxu0 0.0
        %4460 = vmatprep.mubr.f32.mxu0 0.0
        %4461 = vmatmul.mubr.f32.gmra.mxu0 %v4234
        %v4462 = vpop.f32.mrf.mxu0
        %v4463 = vadd.f32 0.0, %v4462
        %v4464 = vpop.f32.mrf.mxu0
        %4465 = vdwg.mxu0
        %v4466 = vld [vmem:[%s2931] sm:$0xff]
        %v4467 = vld [vmem:[%s2931 + $0x8] sm:$0xff]
        %v4469 = vsel %vm555, %v4466, 0
        %v4472 = vsel %vm555, %v4467, 0
        %v4475 = vsel %vm562, %v4463, 0
        %4477 = vmatprep.subr.mxu0 0.0
        %4478 = vmatpush1.msra.mxu0 0.0
        %4479 = vmatprep.subr.mxu0 0.0
        %4480 = vmatpush1.msra.mxu0 0.0
        %4481 = vmatprep.subr.mxu0 0.0
        %4482 = vmatpush1.msra.mxu0 0.0
        %4483 = vmatprep.subr.mxu0 0.0
        %4484 = vmatpush1.msra.mxu0 0.0
        %4485 = vmatprep.subr.mxu0 0.0
        %4486 = vmatpush1.msra.mxu0 0.0
        %4487 = vmatprep.subr.mxu0 0.0
        %4488 = vmatpush1.msra.mxu0 0.0
        %4489 = vmatprep.subr.mxu0 0.0
        %4490 = vmatpush1.msra.mxu0 0.0
        %4491 = vmatprep.subr.mxu0 0.0
        %4492 = vmatpush1.msra.mxu0 0.0
        %4493 = vmatprep.subr.mxu0 0.0
        %4494 = vmatpush1.msra.mxu0 0.0
        %4495 = vmatprep.subr.mxu0 0.0
        %4496 = vmatpush1.msra.mxu0 0.0
        %4497 = vmatprep.subr.mxu0 0.0
        %4498 = vmatpush1.msra.mxu0 0.0
        %4499 = vmatprep.subr.mxu0 0.0
        %4500 = vmatpush1.msra.mxu0 0.0
        %4501 = vmatprep.subr.mxu0 0.0
        %4502 = vmatpush1.msra.mxu0 0.0
        %4503 = vmatprep.subr.mxu0 0.0
        %4504 = vmatpush1.msra.mxu0 0.0
        %4505 = vmatprep.subr.mxu0 0.0
        %4506 = vmatpush1.msra.mxu0 0.0
        %4507 = vmatprep.subr.mxu0 0.0
        %4508 = vmatpush1.msra.mxu0 %v4475
        %4509 = vmatprep.subr.mxu0 0.0
        %4510 = vmatpush2.msra.mxu0 0.0
        %4511 = vmatprep.subr.mxu0 0.0
        %4512 = vmatpush2.msra.mxu0 0.0
        %4513 = vmatprep.subr.mxu0 0.0
        %4514 = vmatpush2.msra.mxu0 0.0
        %4515 = vmatprep.subr.mxu0 0.0
        %4516 = vmatpush2.msra.mxu0 0.0
        %4517 = vmatprep.subr.mxu0 0.0
        %4518 = vmatpush2.msra.mxu0 0.0
        %4519 = vmatprep.subr.mxu0 0.0
        %4520 = vmatpush2.msra.mxu0 0.0
        %4521 = vmatprep.subr.mxu0 0.0
        %4522 = vmatpush2.msra.mxu0 0.0
        %4523 = vmatprep.subr.mxu0 0.0
        %4524 = vmatpush2.msra.mxu0 0.0
        %4525 = vmatprep.subr.mxu0 0.0
        %4526 = vmatpush2.msra.mxu0 0.0
        %4527 = vmatprep.subr.mxu0 0.0
        %4528 = vmatpush2.msra.mxu0 0.0
        %4529 = vmatprep.subr.mxu0 0.0
        %4530 = vmatpush2.msra.mxu0 0.0
        %4531 = vmatprep.subr.mxu0 0.0
        %4532 = vmatpush2.msra.mxu0 0.0
        %4533 = vmatprep.subr.mxu0 0.0
        %4534 = vmatpush2.msra.mxu0 0.0
        %4535 = vmatprep.subr.mxu0 0.0
        %4536 = vmatpush2.msra.mxu0 0.0
        %4537 = vmatprep.subr.mxu0 0.0
        %4538 = vmatpush2.msra.mxu0 0.0
        %4539 = vmatprep.subr.mxu0 0.0
        %4540 = vmatpush2.msra.mxu0 0.0
        %4541 = vmatprep.mubr.f32.mxu0 0.0
        %4542 = vmatmul.mubr.f32.gmra.mxu0 %v4469
        %v4543 = vpop.f32.mrf.mxu0
        %v4544 = vadd.f32 0.0, %v4543
        %v4545 = vpop.f32.mrf.mxu0
        %4546 = vmatprep.mubr.f32.mxu0 0.0
        %4547 = vmatmul.mubr.f32.gmra.mxu0 %v4472
        %v4548 = vpop.f32.mrf.mxu0
        %v4549 = vadd.f32 0.0, %v4548
        %v4550 = vpop.f32.mrf.mxu0
        %4551 = vdwg.mxu0
        %v4552 = vadd.f32 %v4392, %v4544
        %v4553 = vadd.f32 %v4393, %v4549
        %v4554 = vld [vmem:[%s465] sm:$0xff]
        %v4555 = vld [vmem:[%s465 + $0x8] sm:$0xff]
        %4556 = vmatprep.subr.mxu0 0.0
        %4557 = vmatpush1.msra.mxu0 0.0
        %4558 = vmatprep.subr.mxu0 0.0
        %4559 = vmatpush1.msra.mxu0 0.0
        %4560 = vmatprep.subr.mxu0 0.0
        %4561 = vmatpush1.msra.mxu0 0.0
        %4562 = vmatprep.subr.mxu0 0.0
        %4563 = vmatpush1.msra.mxu0 0.0
        %4564 = vmatprep.subr.mxu0 0.0
        %4565 = vmatpush1.msra.mxu0 0.0
        %4566 = vmatprep.subr.mxu0 0.0
        %4567 = vmatpush1.msra.mxu0 0.0
        %4568 = vmatprep.subr.mxu0 0.0
        %4569 = vmatpush1.msra.mxu0 0.0
        %4570 = vmatprep.subr.mxu0 0.0
        %4571 = vmatpush1.msra.mxu0 0.0
        %4572 = vmatprep.subr.mxu0 0.0
        %4573 = vmatpush1.msra.mxu0 0.0
        %4574 = vmatprep.subr.mxu0 0.0
        %4575 = vmatpush1.msra.mxu0 0.0
        %4576 = vmatprep.subr.mxu0 0.0
        %4577 = vmatpush1.msra.mxu0 0.0
        %4578 = vmatprep.subr.mxu0 0.0
        %4579 = vmatpush1.msra.mxu0 0.0
        %4580 = vmatprep.subr.mxu0 0.0
        %4581 = vmatpush1.msra.mxu0 0.0
        %4582 = vmatprep.subr.mxu0 0.0
        %4583 = vmatpush1.msra.mxu0 0.0
        %4584 = vmatprep.subr.mxu0 0.0
        %4585 = vmatpush1.msra.mxu0 %v4555
        %4586 = vmatprep.subr.mxu0 0.0
        %4587 = vmatpush1.msra.mxu0 %v4554
        %4588 = vmatprep.subr.mxu0 0.0
        %4589 = vmatpush2.msra.mxu0 0.0
        %4590 = vmatprep.subr.mxu0 0.0
        %4591 = vmatpush2.msra.mxu0 0.0
        %4592 = vmatprep.subr.mxu0 0.0
        %4593 = vmatpush2.msra.mxu0 0.0
        %4594 = vmatprep.subr.mxu0 0.0
        %4595 = vmatpush2.msra.mxu0 0.0
        %4596 = vmatprep.subr.mxu0 0.0
        %4597 = vmatpush2.msra.mxu0 0.0
        %4598 = vmatprep.subr.mxu0 0.0
        %4599 = vmatpush2.msra.mxu0 0.0
        %4600 = vmatprep.subr.mxu0 0.0
        %4601 = vmatpush2.msra.mxu0 0.0
        %4602 = vmatprep.subr.mxu0 0.0
        %4603 = vmatpush2.msra.mxu0 0.0
        %4604 = vmatprep.subr.mxu0 0.0
        %4605 = vmatpush2.msra.mxu0 0.0
        %4606 = vmatprep.subr.mxu0 0.0
        %4607 = vmatpush2.msra.mxu0 0.0
        %4608 = vmatprep.subr.mxu0 0.0
        %4609 = vmatpush2.msra.mxu0 0.0
        %4610 = vmatprep.subr.mxu0 0.0
        %4611 = vmatpush2.msra.mxu0 0.0
        %4612 = vmatprep.subr.mxu0 0.0
        %4613 = vmatpush2.msra.mxu0 0.0
        %4614 = vmatprep.subr.mxu0 0.0
        %4615 = vmatpush2.msra.mxu0 0.0
        %4616 = vmatprep.subr.mxu0 0.0
        %4617 = vmatpush2.msra.mxu0 0.0
        %4618 = vmatprep.subr.mxu0 0.0
        %4619 = vmatpush2.msra.mxu0 0.0
        %4620 = vmatprep.mubr.f32.mxu0 0.0
        %4621 = vmatmul.mubr.f32.gmra.mxu0 %v4234
        %v4622 = vpop.f32.mrf.mxu0
        %v4623 = vadd.f32 0.0, %v4622
        %v4624 = vpop.f32.mrf.mxu0
        %4625 = vdwg.mxu0
        %v4626 = vld [vmem:[%s3092] sm:$0xff]
        %v4627 = vld [vmem:[%s3092 + $0x8] sm:$0xff]
        %v4629 = vsel %vm555, %v4626, 0
        %v4632 = vsel %vm555, %v4627, 0
        %v4635 = vsel %vm562, %v4623, 0
        %4637 = vmatprep.subr.mxu0 0.0
        %4638 = vmatpush1.msra.mxu0 0.0
        %4639 = vmatprep.subr.mxu0 0.0
        %4640 = vmatpush1.msra.mxu0 0.0
        %4641 = vmatprep.subr.mxu0 0.0
        %4642 = vmatpush1.msra.mxu0 0.0
        %4643 = vmatprep.subr.mxu0 0.0
        %4644 = vmatpush1.msra.mxu0 0.0
        %4645 = vmatprep.subr.mxu0 0.0
        %4646 = vmatpush1.msra.mxu0 0.0
        %4647 = vmatprep.subr.mxu0 0.0
        %4648 = vmatpush1.msra.mxu0 0.0
        %4649 = vmatprep.subr.mxu0 0.0
        %4650 = vmatpush1.msra.mxu0 0.0
        %4651 = vmatprep.subr.mxu0 0.0
        %4652 = vmatpush1.msra.mxu0 0.0
        %4653 = vmatprep.subr.mxu0 0.0
        %4654 = vmatpush1.msra.mxu0 0.0
        %4655 = vmatprep.subr.mxu0 0.0
        %4656 = vmatpush1.msra.mxu0 0.0
        %4657 = vmatprep.subr.mxu0 0.0
        %4658 = vmatpush1.msra.mxu0 0.0
        %4659 = vmatprep.subr.mxu0 0.0
        %4660 = vmatpush1.msra.mxu0 0.0
        %4661 = vmatprep.subr.mxu0 0.0
        %4662 = vmatpush1.msra.mxu0 0.0
        %4663 = vmatprep.subr.mxu0 0.0
        %4664 = vmatpush1.msra.mxu0 0.0
        %4665 = vmatprep.subr.mxu0 0.0
        %4666 = vmatpush1.msra.mxu0 0.0
        %4667 = vmatprep.subr.mxu0 0.0
        %4668 = vmatpush1.msra.mxu0 %v4635
        %4669 = vmatprep.subr.mxu0 0.0
        %4670 = vmatpush2.msra.mxu0 0.0
        %4671 = vmatprep.subr.mxu0 0.0
        %4672 = vmatpush2.msra.mxu0 0.0
        %4673 = vmatprep.subr.mxu0 0.0
        %4674 = vmatpush2.msra.mxu0 0.0
        %4675 = vmatprep.subr.mxu0 0.0
        %4676 = vmatpush2.msra.mxu0 0.0
        %4677 = vmatprep.subr.mxu0 0.0
        %4678 = vmatpush2.msra.mxu0 0.0
        %4679 = vmatprep.subr.mxu0 0.0
        %4680 = vmatpush2.msra.mxu0 0.0
        %4681 = vmatprep.subr.mxu0 0.0
        %4682 = vmatpush2.msra.mxu0 0.0
        %4683 = vmatprep.subr.mxu0 0.0
        %4684 = vmatpush2.msra.mxu0 0.0
        %4685 = vmatprep.subr.mxu0 0.0
        %4686 = vmatpush2.msra.mxu0 0.0
        %4687 = vmatprep.subr.mxu0 0.0
        %4688 = vmatpush2.msra.mxu0 0.0
        %4689 = vmatprep.subr.mxu0 0.0
        %4690 = vmatpush2.msra.mxu0 0.0
        %4691 = vmatprep.subr.mxu0 0.0
        %4692 = vmatpush2.msra.mxu0 0.0
        %4693 = vmatprep.subr.mxu0 0.0
        %4694 = vmatpush2.msra.mxu0 0.0
        %4695 = vmatprep.subr.mxu0 0.0
        %4696 = vmatpush2.msra.mxu0 0.0
        %4697 = vmatprep.subr.mxu0 0.0
        %4698 = vmatpush2.msra.mxu0 0.0
        %4699 = vmatprep.subr.mxu0 0.0
        %4700 = vmatpush2.msra.mxu0 0.0
        %4701 = vmatprep.mubr.f32.mxu0 0.0
        %4702 = vmatmul.mubr.f32.gmra.mxu0 %v4629
        %v4703 = vpop.f32.mrf.mxu0
        %v4704 = vadd.f32 0.0, %v4703
        %v4705 = vpop.f32.mrf.mxu0
        %4706 = vmatprep.mubr.f32.mxu0 0.0
        %4707 = vmatmul.mubr.f32.gmra.mxu0 %v4632
        %v4708 = vpop.f32.mrf.mxu0
        %v4709 = vadd.f32 0.0, %v4708
        %v4710 = vpop.f32.mrf.mxu0
        %4711 = vdwg.mxu0
        %v4712 = vadd.f32 %v4552, %v4704
        %v4713 = vadd.f32 %v4553, %v4709
        %v4714 = vxor.u32 %v4712, 2147483648
        %v4715 = vxor.u32 %v4713, 2147483648
        %v4716 = vmul.f32 %v4714, 1.442695
        %v4717 = vpow.pop %v4716
        %v4718 = vmul.f32 %v4715, 1.442695
        %v4719 = vpow.pop %v4718
        %v4720 = vadd.f32 %v4717, 1.0
        %v4721 = vadd.f32 %v4719, 1.0
        %v4722 = vrcp.pop %v4720
        %v4723 = vmul.f32 1.0, %v4722
        %v4724 = vrcp.pop %v4721
        %v4725 = vmul.f32 1.0, %v4724
        %v4726 = vtanh.pop %v4713
        %v4728 = vrot.slane %v4723, 4
        %v4730 = vmul.f32 %v4224, %v4728
        %v4732 = vrot.slane %v4726, 4
        %v4734 = vmul.f32 %v4723, %v4732
        %v4735 = vadd.f32 %v4730, %v4734
        %v4736 = vtanh.pop %v4735
        %v4737 = vmul.f32 %v4736, %v4725
        %s4738 = scalar_lea.vmem %s242, 12 [#allocation5]
        %4739 = vst.msk [vmem:[%s4738] sm:$0xf] %vm3205, %v4737
        %v4740 = vld [vmem:[%s1888] sm:$0xff]
        %v4741 = vld [vmem:[%s1888 + $0x8] sm:$0xff]
        %v4742 = vld [vmem:[%s1] sm:$0xff]
        %v4743 = vld [vmem:[%s1 + $0x8] sm:$0xff]
        %v4745 = vsel %vm279, %v4737, 0
        %4747 = vmatprep.subr.mxu0 0.0
        %4748 = vmatpush1.msra.mxu0 0.0
        %4749 = vmatprep.subr.mxu0 0.0
        %4750 = vmatpush1.msra.mxu0 0.0
        %4751 = vmatprep.subr.mxu0 0.0
        %4752 = vmatpush1.msra.mxu0 0.0
        %4753 = vmatprep.subr.mxu0 0.0
        %4754 = vmatpush1.msra.mxu0 0.0
        %4755 = vmatprep.subr.mxu0 0.0
        %4756 = vmatpush1.msra.mxu0 0.0
        %4757 = vmatprep.subr.mxu0 0.0
        %4758 = vmatpush1.msra.mxu0 0.0
        %4759 = vmatprep.subr.mxu0 0.0
        %4760 = vmatpush1.msra.mxu0 0.0
        %4761 = vmatprep.subr.mxu0 0.0
        %4762 = vmatpush1.msra.mxu0 0.0
        %4763 = vmatprep.subr.mxu0 0.0
        %4764 = vmatpush1.msra.mxu0 0.0
        %4765 = vmatprep.subr.mxu0 0.0
        %4766 = vmatpush1.msra.mxu0 0.0
        %4767 = vmatprep.subr.mxu0 0.0
        %4768 = vmatpush1.msra.mxu0 0.0
        %4769 = vmatprep.subr.mxu0 0.0
        %4770 = vmatpush1.msra.mxu0 0.0
        %4771 = vmatprep.subr.mxu0 0.0
        %4772 = vmatpush1.msra.mxu0 0.0
        %4773 = vmatprep.subr.mxu0 0.0
        %4774 = vmatpush1.msra.mxu0 0.0
        %4775 = vmatprep.subr.mxu0 0.0
        %4776 = vmatpush1.msra.mxu0 %v4743
        %4777 = vmatprep.subr.mxu0 0.0
        %4778 = vmatpush1.msra.mxu0 %v4742
        %4779 = vmatprep.subr.mxu0 0.0
        %4780 = vmatpush2.msra.mxu0 0.0
        %4781 = vmatprep.subr.mxu0 0.0
        %4782 = vmatpush2.msra.mxu0 0.0
        %4783 = vmatprep.subr.mxu0 0.0
        %4784 = vmatpush2.msra.mxu0 0.0
        %4785 = vmatprep.subr.mxu0 0.0
        %4786 = vmatpush2.msra.mxu0 0.0
        %4787 = vmatprep.subr.mxu0 0.0
        %4788 = vmatpush2.msra.mxu0 0.0
        %4789 = vmatprep.subr.mxu0 0.0
        %4790 = vmatpush2.msra.mxu0 0.0
        %4791 = vmatprep.subr.mxu0 0.0
        %4792 = vmatpush2.msra.mxu0 0.0
        %4793 = vmatprep.subr.mxu0 0.0
        %4794 = vmatpush2.msra.mxu0 0.0
        %4795 = vmatprep.subr.mxu0 0.0
        %4796 = vmatpush2.msra.mxu0 0.0
        %4797 = vmatprep.subr.mxu0 0.0
        %4798 = vmatpush2.msra.mxu0 0.0
        %4799 = vmatprep.subr.mxu0 0.0
        %4800 = vmatpush2.msra.mxu0 0.0
        %4801 = vmatprep.subr.mxu0 0.0
        %4802 = vmatpush2.msra.mxu0 0.0
        %4803 = vmatprep.subr.mxu0 0.0
        %4804 = vmatpush2.msra.mxu0 0.0
        %4805 = vmatprep.subr.mxu0 0.0
        %4806 = vmatpush2.msra.mxu0 0.0
        %4807 = vmatprep.subr.mxu0 0.0
        %4808 = vmatpush2.msra.mxu0 0.0
        %4809 = vmatprep.subr.mxu0 0.0
        %4810 = vmatpush2.msra.mxu0 0.0
        %4811 = vmatprep.mubr.f32.mxu0 0.0
        %4812 = vmatmul.mubr.f32.gmra.mxu0 %v4745
        %v4813 = vpop.f32.mrf.mxu0
        %v4814 = vadd.f32 0.0, %v4813
        %v4815 = vpop.f32.mrf.mxu0
        %4816 = vdwg.mxu0
        %v4817 = vld [vmem:[%s3] sm:$0xff]
        %v4818 = vld [vmem:[%s3 + $0x8] sm:$0xff]
        %v4820 = vsel %vm555, %v4817, 0
        %v4823 = vsel %vm555, %v4818, 0
        %v4826 = vsel %vm562, %v4814, 0
        %4828 = vmatprep.subr.mxu0 0.0
        %4829 = vmatpush1.msra.mxu0 0.0
        %4830 = vmatprep.subr.mxu0 0.0
        %4831 = vmatpush1.msra.mxu0 0.0
        %4832 = vmatprep.subr.mxu0 0.0
        %4833 = vmatpush1.msra.mxu0 0.0
        %4834 = vmatprep.subr.mxu0 0.0
        %4835 = vmatpush1.msra.mxu0 0.0
        %4836 = vmatprep.subr.mxu0 0.0
        %4837 = vmatpush1.msra.mxu0 0.0
        %4838 = vmatprep.subr.mxu0 0.0
        %4839 = vmatpush1.msra.mxu0 0.0
        %4840 = vmatprep.subr.mxu0 0.0
        %4841 = vmatpush1.msra.mxu0 0.0
        %4842 = vmatprep.subr.mxu0 0.0
        %4843 = vmatpush1.msra.mxu0 0.0
        %4844 = vmatprep.subr.mxu0 0.0
        %4845 = vmatpush1.msra.mxu0 0.0
        %4846 = vmatprep.subr.mxu0 0.0
        %4847 = vmatpush1.msra.mxu0 0.0
        %4848 = vmatprep.subr.mxu0 0.0
        %4849 = vmatpush1.msra.mxu0 0.0
        %4850 = vmatprep.subr.mxu0 0.0
        %4851 = vmatpush1.msra.mxu0 0.0
        %4852 = vmatprep.subr.mxu0 0.0
        %4853 = vmatpush1.msra.mxu0 0.0
        %4854 = vmatprep.subr.mxu0 0.0
        %4855 = vmatpush1.msra.mxu0 0.0
        %4856 = vmatprep.subr.mxu0 0.0
        %4857 = vmatpush1.msra.mxu0 0.0
        %4858 = vmatprep.subr.mxu0 0.0
        %4859 = vmatpush1.msra.mxu0 %v4826
        %4860 = vmatprep.subr.mxu0 0.0
        %4861 = vmatpush2.msra.mxu0 0.0
        %4862 = vmatprep.subr.mxu0 0.0
        %4863 = vmatpush2.msra.mxu0 0.0
        %4864 = vmatprep.subr.mxu0 0.0
        %4865 = vmatpush2.msra.mxu0 0.0
        %4866 = vmatprep.subr.mxu0 0.0
        %4867 = vmatpush2.msra.mxu0 0.0
        %4868 = vmatprep.subr.mxu0 0.0
        %4869 = vmatpush2.msra.mxu0 0.0
        %4870 = vmatprep.subr.mxu0 0.0
        %4871 = vmatpush2.msra.mxu0 0.0
        %4872 = vmatprep.subr.mxu0 0.0
        %4873 = vmatpush2.msra.mxu0 0.0
        %4874 = vmatprep.subr.mxu0 0.0
        %4875 = vmatpush2.msra.mxu0 0.0
        %4876 = vmatprep.subr.mxu0 0.0
        %4877 = vmatpush2.msra.mxu0 0.0
        %4878 = vmatprep.subr.mxu0 0.0
        %4879 = vmatpush2.msra.mxu0 0.0
        %4880 = vmatprep.subr.mxu0 0.0
        %4881 = vmatpush2.msra.mxu0 0.0
        %4882 = vmatprep.subr.mxu0 0.0
        %4883 = vmatpush2.msra.mxu0 0.0
        %4884 = vmatprep.subr.mxu0 0.0
        %4885 = vmatpush2.msra.mxu0 0.0
        %4886 = vmatprep.subr.mxu0 0.0
        %4887 = vmatpush2.msra.mxu0 0.0
        %4888 = vmatprep.subr.mxu0 0.0
        %4889 = vmatpush2.msra.mxu0 0.0
        %4890 = vmatprep.subr.mxu0 0.0
        %4891 = vmatpush2.msra.mxu0 0.0
        %4892 = vmatprep.mubr.f32.mxu0 0.0
        %4893 = vmatmul.mubr.f32.gmra.mxu0 %v4820
        %v4894 = vpop.f32.mrf.mxu0
        %v4895 = vadd.f32 0.0, %v4894
        %v4896 = vpop.f32.mrf.mxu0
        %4897 = vmatprep.mubr.f32.mxu0 0.0
        %4898 = vmatmul.mubr.f32.gmra.mxu0 %v4823
        %v4899 = vpop.f32.mrf.mxu0
        %v4900 = vadd.f32 0.0, %v4899
        %v4901 = vpop.f32.mrf.mxu0
        %4902 = vdwg.mxu0
        %v4903 = vadd.f32 %v4740, %v4895
        %v4904 = vadd.f32 %v4741, %v4900
        %v4905 = vld [vmem:[%s377] sm:$0xff]
        %v4906 = vld [vmem:[%s377 + $0x8] sm:$0xff]
        %4907 = vmatprep.subr.mxu0 0.0
        %4908 = vmatpush1.msra.mxu0 0.0
        %4909 = vmatprep.subr.mxu0 0.0
        %4910 = vmatpush1.msra.mxu0 0.0
        %4911 = vmatprep.subr.mxu0 0.0
        %4912 = vmatpush1.msra.mxu0 0.0
        %4913 = vmatprep.subr.mxu0 0.0
        %4914 = vmatpush1.msra.mxu0 0.0
        %4915 = vmatprep.subr.mxu0 0.0
        %4916 = vmatpush1.msra.mxu0 0.0
        %4917 = vmatprep.subr.mxu0 0.0
        %4918 = vmatpush1.msra.mxu0 0.0
        %4919 = vmatprep.subr.mxu0 0.0
        %4920 = vmatpush1.msra.mxu0 0.0
        %4921 = vmatprep.subr.mxu0 0.0
        %4922 = vmatpush1.msra.mxu0 0.0
        %4923 = vmatprep.subr.mxu0 0.0
        %4924 = vmatpush1.msra.mxu0 0.0
        %4925 = vmatprep.subr.mxu0 0.0
        %4926 = vmatpush1.msra.mxu0 0.0
        %4927 = vmatprep.subr.mxu0 0.0
        %4928 = vmatpush1.msra.mxu0 0.0
        %4929 = vmatprep.subr.mxu0 0.0
        %4930 = vmatpush1.msra.mxu0 0.0
        %4931 = vmatprep.subr.mxu0 0.0
        %4932 = vmatpush1.msra.mxu0 0.0
        %4933 = vmatprep.subr.mxu0 0.0
        %4934 = vmatpush1.msra.mxu0 0.0
        %4935 = vmatprep.subr.mxu0 0.0
        %4936 = vmatpush1.msra.mxu0 %v4906
        %4937 = vmatprep.subr.mxu0 0.0
        %4938 = vmatpush1.msra.mxu0 %v4905
        %4939 = vmatprep.subr.mxu0 0.0
        %4940 = vmatpush2.msra.mxu0 0.0
        %4941 = vmatprep.subr.mxu0 0.0
        %4942 = vmatpush2.msra.mxu0 0.0
        %4943 = vmatprep.subr.mxu0 0.0
        %4944 = vmatpush2.msra.mxu0 0.0
        %4945 = vmatprep.subr.mxu0 0.0
        %4946 = vmatpush2.msra.mxu0 0.0
        %4947 = vmatprep.subr.mxu0 0.0
        %4948 = vmatpush2.msra.mxu0 0.0
        %4949 = vmatprep.subr.mxu0 0.0
        %4950 = vmatpush2.msra.mxu0 0.0
        %4951 = vmatprep.subr.mxu0 0.0
        %4952 = vmatpush2.msra.mxu0 0.0
        %4953 = vmatprep.subr.mxu0 0.0
        %4954 = vmatpush2.msra.mxu0 0.0
        %4955 = vmatprep.subr.mxu0 0.0
        %4956 = vmatpush2.msra.mxu0 0.0
        %4957 = vmatprep.subr.mxu0 0.0
        %4958 = vmatpush2.msra.mxu0 0.0
        %4959 = vmatprep.subr.mxu0 0.0
        %4960 = vmatpush2.msra.mxu0 0.0
        %4961 = vmatprep.subr.mxu0 0.0
        %4962 = vmatpush2.msra.mxu0 0.0
        %4963 = vmatprep.subr.mxu0 0.0
        %4964 = vmatpush2.msra.mxu0 0.0
        %4965 = vmatprep.subr.mxu0 0.0
        %4966 = vmatpush2.msra.mxu0 0.0
        %4967 = vmatprep.subr.mxu0 0.0
        %4968 = vmatpush2.msra.mxu0 0.0
        %4969 = vmatprep.subr.mxu0 0.0
        %4970 = vmatpush2.msra.mxu0 0.0
        %4971 = vmatprep.mubr.f32.mxu0 0.0
        %4972 = vmatmul.mubr.f32.gmra.mxu0 %v4745
        %v4973 = vpop.f32.mrf.mxu0
        %v4974 = vadd.f32 0.0, %v4973
        %v4975 = vpop.f32.mrf.mxu0
        %4976 = vdwg.mxu0
        %v4977 = vld [vmem:[%s2931] sm:$0xff]
        %v4978 = vld [vmem:[%s2931 + $0x8] sm:$0xff]
        %v4980 = vsel %vm555, %v4977, 0
        %v4983 = vsel %vm555, %v4978, 0
        %v4986 = vsel %vm562, %v4974, 0
        %4988 = vmatprep.subr.mxu0 0.0
        %4989 = vmatpush1.msra.mxu0 0.0
        %4990 = vmatprep.subr.mxu0 0.0
        %4991 = vmatpush1.msra.mxu0 0.0
        %4992 = vmatprep.subr.mxu0 0.0
        %4993 = vmatpush1.msra.mxu0 0.0
        %4994 = vmatprep.subr.mxu0 0.0
        %4995 = vmatpush1.msra.mxu0 0.0
        %4996 = vmatprep.subr.mxu0 0.0
        %4997 = vmatpush1.msra.mxu0 0.0
        %4998 = vmatprep.subr.mxu0 0.0
        %4999 = vmatpush1.msra.mxu0 0.0
        %5000 = vmatprep.subr.mxu0 0.0
        %5001 = vmatpush1.msra.mxu0 0.0
        %5002 = vmatprep.subr.mxu0 0.0
        %5003 = vmatpush1.msra.mxu0 0.0
        %5004 = vmatprep.subr.mxu0 0.0
        %5005 = vmatpush1.msra.mxu0 0.0
        %5006 = vmatprep.subr.mxu0 0.0
        %5007 = vmatpush1.msra.mxu0 0.0
        %5008 = vmatprep.subr.mxu0 0.0
        %5009 = vmatpush1.msra.mxu0 0.0
        %5010 = vmatprep.subr.mxu0 0.0
        %5011 = vmatpush1.msra.mxu0 0.0
        %5012 = vmatprep.subr.mxu0 0.0
        %5013 = vmatpush1.msra.mxu0 0.0
        %5014 = vmatprep.subr.mxu0 0.0
        %5015 = vmatpush1.msra.mxu0 0.0
        %5016 = vmatprep.subr.mxu0 0.0
        %5017 = vmatpush1.msra.mxu0 0.0
        %5018 = vmatprep.subr.mxu0 0.0
        %5019 = vmatpush1.msra.mxu0 %v4986
        %5020 = vmatprep.subr.mxu0 0.0
        %5021 = vmatpush2.msra.mxu0 0.0
        %5022 = vmatprep.subr.mxu0 0.0
        %5023 = vmatpush2.msra.mxu0 0.0
        %5024 = vmatprep.subr.mxu0 0.0
        %5025 = vmatpush2.msra.mxu0 0.0
        %5026 = vmatprep.subr.mxu0 0.0
        %5027 = vmatpush2.msra.mxu0 0.0
        %5028 = vmatprep.subr.mxu0 0.0
        %5029 = vmatpush2.msra.mxu0 0.0
        %5030 = vmatprep.subr.mxu0 0.0
        %5031 = vmatpush2.msra.mxu0 0.0
        %5032 = vmatprep.subr.mxu0 0.0
        %5033 = vmatpush2.msra.mxu0 0.0
        %5034 = vmatprep.subr.mxu0 0.0
        %5035 = vmatpush2.msra.mxu0 0.0
        %5036 = vmatprep.subr.mxu0 0.0
        %5037 = vmatpush2.msra.mxu0 0.0
        %5038 = vmatprep.subr.mxu0 0.0
        %5039 = vmatpush2.msra.mxu0 0.0
        %5040 = vmatprep.subr.mxu0 0.0
        %5041 = vmatpush2.msra.mxu0 0.0
        %5042 = vmatprep.subr.mxu0 0.0
        %5043 = vmatpush2.msra.mxu0 0.0
        %5044 = vmatprep.subr.mxu0 0.0
        %5045 = vmatpush2.msra.mxu0 0.0
        %5046 = vmatprep.subr.mxu0 0.0
        %5047 = vmatpush2.msra.mxu0 0.0
        %5048 = vmatprep.subr.mxu0 0.0
        %5049 = vmatpush2.msra.mxu0 0.0
        %5050 = vmatprep.subr.mxu0 0.0
        %5051 = vmatpush2.msra.mxu0 0.0
        %5052 = vmatprep.mubr.f32.mxu0 0.0
        %5053 = vmatmul.mubr.f32.gmra.mxu0 %v4980
        %v5054 = vpop.f32.mrf.mxu0
        %v5055 = vadd.f32 0.0, %v5054
        %v5056 = vpop.f32.mrf.mxu0
        %5057 = vmatprep.mubr.f32.mxu0 0.0
        %5058 = vmatmul.mubr.f32.gmra.mxu0 %v4983
        %v5059 = vpop.f32.mrf.mxu0
        %v5060 = vadd.f32 0.0, %v5059
        %v5061 = vpop.f32.mrf.mxu0
        %5062 = vdwg.mxu0
        %v5063 = vadd.f32 %v4903, %v5055
        %v5064 = vadd.f32 %v4904, %v5060
        %v5065 = vld [vmem:[%s465] sm:$0xff]
        %v5066 = vld [vmem:[%s465 + $0x8] sm:$0xff]
        %5067 = vmatprep.subr.mxu0 0.0
        %5068 = vmatpush1.msra.mxu0 0.0
        %5069 = vmatprep.subr.mxu0 0.0
        %5070 = vmatpush1.msra.mxu0 0.0
        %5071 = vmatprep.subr.mxu0 0.0
        %5072 = vmatpush1.msra.mxu0 0.0
        %5073 = vmatprep.subr.mxu0 0.0
        %5074 = vmatpush1.msra.mxu0 0.0
        %5075 = vmatprep.subr.mxu0 0.0
        %5076 = vmatpush1.msra.mxu0 0.0
        %5077 = vmatprep.subr.mxu0 0.0
        %5078 = vmatpush1.msra.mxu0 0.0
        %5079 = vmatprep.subr.mxu0 0.0
        %5080 = vmatpush1.msra.mxu0 0.0
        %5081 = vmatprep.subr.mxu0 0.0
        %5082 = vmatpush1.msra.mxu0 0.0
        %5083 = vmatprep.subr.mxu0 0.0
        %5084 = vmatpush1.msra.mxu0 0.0
        %5085 = vmatprep.subr.mxu0 0.0
        %5086 = vmatpush1.msra.mxu0 0.0
        %5087 = vmatprep.subr.mxu0 0.0
        %5088 = vmatpush1.msra.mxu0 0.0
        %5089 = vmatprep.subr.mxu0 0.0
        %5090 = vmatpush1.msra.mxu0 0.0
        %5091 = vmatprep.subr.mxu0 0.0
        %5092 = vmatpush1.msra.mxu0 0.0
        %5093 = vmatprep.subr.mxu0 0.0
        %5094 = vmatpush1.msra.mxu0 0.0
        %5095 = vmatprep.subr.mxu0 0.0
        %5096 = vmatpush1.msra.mxu0 %v5066
        %5097 = vmatprep.subr.mxu0 0.0
        %5098 = vmatpush1.msra.mxu0 %v5065
        %5099 = vmatprep.subr.mxu0 0.0
        %5100 = vmatpush2.msra.mxu0 0.0
        %5101 = vmatprep.subr.mxu0 0.0
        %5102 = vmatpush2.msra.mxu0 0.0
        %5103 = vmatprep.subr.mxu0 0.0
        %5104 = vmatpush2.msra.mxu0 0.0
        %5105 = vmatprep.subr.mxu0 0.0
        %5106 = vmatpush2.msra.mxu0 0.0
        %5107 = vmatprep.subr.mxu0 0.0
        %5108 = vmatpush2.msra.mxu0 0.0
        %5109 = vmatprep.subr.mxu0 0.0
        %5110 = vmatpush2.msra.mxu0 0.0
        %5111 = vmatprep.subr.mxu0 0.0
        %5112 = vmatpush2.msra.mxu0 0.0
        %5113 = vmatprep.subr.mxu0 0.0
        %5114 = vmatpush2.msra.mxu0 0.0
        %5115 = vmatprep.subr.mxu0 0.0
        %5116 = vmatpush2.msra.mxu0 0.0
        %5117 = vmatprep.subr.mxu0 0.0
        %5118 = vmatpush2.msra.mxu0 0.0
        %5119 = vmatprep.subr.mxu0 0.0
        %5120 = vmatpush2.msra.mxu0 0.0
        %5121 = vmatprep.subr.mxu0 0.0
        %5122 = vmatpush2.msra.mxu0 0.0
        %5123 = vmatprep.subr.mxu0 0.0
        %5124 = vmatpush2.msra.mxu0 0.0
        %5125 = vmatprep.subr.mxu0 0.0
        %5126 = vmatpush2.msra.mxu0 0.0
        %5127 = vmatprep.subr.mxu0 0.0
        %5128 = vmatpush2.msra.mxu0 0.0
        %5129 = vmatprep.subr.mxu0 0.0
        %5130 = vmatpush2.msra.mxu0 0.0
        %5131 = vmatprep.mubr.f32.mxu0 0.0
        %5132 = vmatmul.mubr.f32.gmra.mxu0 %v4745
        %v5133 = vpop.f32.mrf.mxu0
        %v5134 = vadd.f32 0.0, %v5133
        %v5135 = vpop.f32.mrf.mxu0
        %5136 = vdwg.mxu0
        %v5137 = vld [vmem:[%s3092] sm:$0xff]
        %v5138 = vld [vmem:[%s3092 + $0x8] sm:$0xff]
        %v5140 = vsel %vm555, %v5137, 0
        %v5143 = vsel %vm555, %v5138, 0
        %v5146 = vsel %vm562, %v5134, 0
        %5148 = vmatprep.subr.mxu0 0.0
        %5149 = vmatpush1.msra.mxu0 0.0
        %5150 = vmatprep.subr.mxu0 0.0
        %5151 = vmatpush1.msra.mxu0 0.0
        %5152 = vmatprep.subr.mxu0 0.0
        %5153 = vmatpush1.msra.mxu0 0.0
        %5154 = vmatprep.subr.mxu0 0.0
        %5155 = vmatpush1.msra.mxu0 0.0
        %5156 = vmatprep.subr.mxu0 0.0
        %5157 = vmatpush1.msra.mxu0 0.0
        %5158 = vmatprep.subr.mxu0 0.0
        %5159 = vmatpush1.msra.mxu0 0.0
        %5160 = vmatprep.subr.mxu0 0.0
        %5161 = vmatpush1.msra.mxu0 0.0
        %5162 = vmatprep.subr.mxu0 0.0
        %5163 = vmatpush1.msra.mxu0 0.0
        %5164 = vmatprep.subr.mxu0 0.0
        %5165 = vmatpush1.msra.mxu0 0.0
        %5166 = vmatprep.subr.mxu0 0.0
        %5167 = vmatpush1.msra.mxu0 0.0
        %5168 = vmatprep.subr.mxu0 0.0
        %5169 = vmatpush1.msra.mxu0 0.0
        %5170 = vmatprep.subr.mxu0 0.0
        %5171 = vmatpush1.msra.mxu0 0.0
        %5172 = vmatprep.subr.mxu0 0.0
        %5173 = vmatpush1.msra.mxu0 0.0
        %5174 = vmatprep.subr.mxu0 0.0
        %5175 = vmatpush1.msra.mxu0 0.0
        %5176 = vmatprep.subr.mxu0 0.0
        %5177 = vmatpush1.msra.mxu0 0.0
        %5178 = vmatprep.subr.mxu0 0.0
        %5179 = vmatpush1.msra.mxu0 %v5146
        %5180 = vmatprep.subr.mxu0 0.0
        %5181 = vmatpush2.msra.mxu0 0.0
        %5182 = vmatprep.subr.mxu0 0.0
        %5183 = vmatpush2.msra.mxu0 0.0
        %5184 = vmatprep.subr.mxu0 0.0
        %5185 = vmatpush2.msra.mxu0 0.0
        %5186 = vmatprep.subr.mxu0 0.0
        %5187 = vmatpush2.msra.mxu0 0.0
        %5188 = vmatprep.subr.mxu0 0.0
        %5189 = vmatpush2.msra.mxu0 0.0
        %5190 = vmatprep.subr.mxu0 0.0
        %5191 = vmatpush2.msra.mxu0 0.0
        %5192 = vmatprep.subr.mxu0 0.0
        %5193 = vmatpush2.msra.mxu0 0.0
        %5194 = vmatprep.subr.mxu0 0.0
        %5195 = vmatpush2.msra.mxu0 0.0
        %5196 = vmatprep.subr.mxu0 0.0
        %5197 = vmatpush2.msra.mxu0 0.0
        %5198 = vmatprep.subr.mxu0 0.0
        %5199 = vmatpush2.msra.mxu0 0.0
        %5200 = vmatprep.subr.mxu0 0.0
        %5201 = vmatpush2.msra.mxu0 0.0
        %5202 = vmatprep.subr.mxu0 0.0
        %5203 = vmatpush2.msra.mxu0 0.0
        %5204 = vmatprep.subr.mxu0 0.0
        %5205 = vmatpush2.msra.mxu0 0.0
        %5206 = vmatprep.subr.mxu0 0.0
        %5207 = vmatpush2.msra.mxu0 0.0
        %5208 = vmatprep.subr.mxu0 0.0
        %5209 = vmatpush2.msra.mxu0 0.0
        %5210 = vmatprep.subr.mxu0 0.0
        %5211 = vmatpush2.msra.mxu0 0.0
        %5212 = vmatprep.mubr.f32.mxu0 0.0
        %5213 = vmatmul.mubr.f32.gmra.mxu0 %v5140
        %v5214 = vpop.f32.mrf.mxu0
        %v5215 = vadd.f32 0.0, %v5214
        %v5216 = vpop.f32.mrf.mxu0
        %5217 = vmatprep.mubr.f32.mxu0 0.0
        %5218 = vmatmul.mubr.f32.gmra.mxu0 %v5143
        %v5219 = vpop.f32.mrf.mxu0
        %v5220 = vadd.f32 0.0, %v5219
        %v5221 = vpop.f32.mrf.mxu0
        %5222 = vdwg.mxu0
        %v5223 = vadd.f32 %v5063, %v5215
        %v5224 = vadd.f32 %v5064, %v5220
        %v5225 = vxor.u32 %v5223, 2147483648
        %v5226 = vxor.u32 %v5224, 2147483648
        %v5227 = vmul.f32 %v5225, 1.442695
        %v5228 = vpow.pop %v5227
        %v5229 = vmul.f32 %v5226, 1.442695
        %v5230 = vpow.pop %v5229
        %v5231 = vadd.f32 %v5228, 1.0
        %v5232 = vadd.f32 %v5230, 1.0
        %v5233 = vrcp.pop %v5231
        %v5234 = vmul.f32 1.0, %v5233
        %v5235 = vrcp.pop %v5232
        %v5236 = vmul.f32 1.0, %v5235
        %v5237 = vtanh.pop %v5224
        %v5239 = vrot.slane %v5234, 4
        %v5241 = vmul.f32 %v4735, %v5239
        %v5243 = vrot.slane %v5237, 4
        %v5245 = vmul.f32 %v5234, %v5243
        %v5246 = vadd.f32 %v5241, %v5245
        %v5247 = vtanh.pop %v5246
        %v5248 = vmul.f32 %v5247, %v5236
        %s5249 = scalar_lea.vmem %s242, 16 [#allocation5]
        %5250 = vst.msk [vmem:[%s5249] sm:$0xf] %vm3205, %v5248
        %v5251 = vld [vmem:[%s2155] sm:$0xff]
        %v5252 = vld [vmem:[%s2155 + $0x8] sm:$0xff]
        %v5253 = vld [vmem:[%s1] sm:$0xff]
        %v5254 = vld [vmem:[%s1 + $0x8] sm:$0xff]
        %v5256 = vsel %vm279, %v5248, 0
        %5258 = vmatprep.subr.mxu0 0.0
        %5259 = vmatpush1.msra.mxu0 0.0
        %5260 = vmatprep.subr.mxu0 0.0
        %5261 = vmatpush1.msra.mxu0 0.0
        %5262 = vmatprep.subr.mxu0 0.0
        %5263 = vmatpush1.msra.mxu0 0.0
        %5264 = vmatprep.subr.mxu0 0.0
        %5265 = vmatpush1.msra.mxu0 0.0
        %5266 = vmatprep.subr.mxu0 0.0
        %5267 = vmatpush1.msra.mxu0 0.0
        %5268 = vmatprep.subr.mxu0 0.0
        %5269 = vmatpush1.msra.mxu0 0.0
        %5270 = vmatprep.subr.mxu0 0.0
        %5271 = vmatpush1.msra.mxu0 0.0
        %5272 = vmatprep.subr.mxu0 0.0
        %5273 = vmatpush1.msra.mxu0 0.0
        %5274 = vmatprep.subr.mxu0 0.0
        %5275 = vmatpush1.msra.mxu0 0.0
        %5276 = vmatprep.subr.mxu0 0.0
        %5277 = vmatpush1.msra.mxu0 0.0
        %5278 = vmatprep.subr.mxu0 0.0
        %5279 = vmatpush1.msra.mxu0 0.0
        %5280 = vmatprep.subr.mxu0 0.0
        %5281 = vmatpush1.msra.mxu0 0.0
        %5282 = vmatprep.subr.mxu0 0.0
        %5283 = vmatpush1.msra.mxu0 0.0
        %5284 = vmatprep.subr.mxu0 0.0
        %5285 = vmatpush1.msra.mxu0 0.0
        %5286 = vmatprep.subr.mxu0 0.0
        %5287 = vmatpush1.msra.mxu0 %v5254
        %5288 = vmatprep.subr.mxu0 0.0
        %5289 = vmatpush1.msra.mxu0 %v5253
        %5290 = vmatprep.subr.mxu0 0.0
        %5291 = vmatpush2.msra.mxu0 0.0
        %5292 = vmatprep.subr.mxu0 0.0
        %5293 = vmatpush2.msra.mxu0 0.0
        %5294 = vmatprep.subr.mxu0 0.0
        %5295 = vmatpush2.msra.mxu0 0.0
        %5296 = vmatprep.subr.mxu0 0.0
        %5297 = vmatpush2.msra.mxu0 0.0
        %5298 = vmatprep.subr.mxu0 0.0
        %5299 = vmatpush2.msra.mxu0 0.0
        %5300 = vmatprep.subr.mxu0 0.0
        %5301 = vmatpush2.msra.mxu0 0.0
        %5302 = vmatprep.subr.mxu0 0.0
        %5303 = vmatpush2.msra.mxu0 0.0
        %5304 = vmatprep.subr.mxu0 0.0
        %5305 = vmatpush2.msra.mxu0 0.0
        %5306 = vmatprep.subr.mxu0 0.0
        %5307 = vmatpush2.msra.mxu0 0.0
        %5308 = vmatprep.subr.mxu0 0.0
        %5309 = vmatpush2.msra.mxu0 0.0
        %5310 = vmatprep.subr.mxu0 0.0
        %5311 = vmatpush2.msra.mxu0 0.0
        %5312 = vmatprep.subr.mxu0 0.0
        %5313 = vmatpush2.msra.mxu0 0.0
        %5314 = vmatprep.subr.mxu0 0.0
        %5315 = vmatpush2.msra.mxu0 0.0
        %5316 = vmatprep.subr.mxu0 0.0
        %5317 = vmatpush2.msra.mxu0 0.0
        %5318 = vmatprep.subr.mxu0 0.0
        %5319 = vmatpush2.msra.mxu0 0.0
        %5320 = vmatprep.subr.mxu0 0.0
        %5321 = vmatpush2.msra.mxu0 0.0
        %5322 = vmatprep.mubr.f32.mxu0 0.0
        %5323 = vmatmul.mubr.f32.gmra.mxu0 %v5256
        %v5324 = vpop.f32.mrf.mxu0
        %v5325 = vadd.f32 0.0, %v5324
        %v5326 = vpop.f32.mrf.mxu0
        %5327 = vdwg.mxu0
        %v5328 = vld [vmem:[%s3] sm:$0xff]
        %v5329 = vld [vmem:[%s3 + $0x8] sm:$0xff]
        %v5331 = vsel %vm555, %v5328, 0
        %v5334 = vsel %vm555, %v5329, 0
        %v5337 = vsel %vm562, %v5325, 0
        %5339 = vmatprep.subr.mxu0 0.0
        %5340 = vmatpush1.msra.mxu0 0.0
        %5341 = vmatprep.subr.mxu0 0.0
        %5342 = vmatpush1.msra.mxu0 0.0
        %5343 = vmatprep.subr.mxu0 0.0
        %5344 = vmatpush1.msra.mxu0 0.0
        %5345 = vmatprep.subr.mxu0 0.0
        %5346 = vmatpush1.msra.mxu0 0.0
        %5347 = vmatprep.subr.mxu0 0.0
        %5348 = vmatpush1.msra.mxu0 0.0
        %5349 = vmatprep.subr.mxu0 0.0
        %5350 = vmatpush1.msra.mxu0 0.0
        %5351 = vmatprep.subr.mxu0 0.0
        %5352 = vmatpush1.msra.mxu0 0.0
        %5353 = vmatprep.subr.mxu0 0.0
        %5354 = vmatpush1.msra.mxu0 0.0
        %5355 = vmatprep.subr.mxu0 0.0
        %5356 = vmatpush1.msra.mxu0 0.0
        %5357 = vmatprep.subr.mxu0 0.0
        %5358 = vmatpush1.msra.mxu0 0.0
        %5359 = vmatprep.subr.mxu0 0.0
        %5360 = vmatpush1.msra.mxu0 0.0
        %5361 = vmatprep.subr.mxu0 0.0
        %5362 = vmatpush1.msra.mxu0 0.0
        %5363 = vmatprep.subr.mxu0 0.0
        %5364 = vmatpush1.msra.mxu0 0.0
        %5365 = vmatprep.subr.mxu0 0.0
        %5366 = vmatpush1.msra.mxu0 0.0
        %5367 = vmatprep.subr.mxu0 0.0
        %5368 = vmatpush1.msra.mxu0 0.0
        %5369 = vmatprep.subr.mxu0 0.0
        %5370 = vmatpush1.msra.mxu0 %v5337
        %5371 = vmatprep.subr.mxu0 0.0
        %5372 = vmatpush2.msra.mxu0 0.0
        %5373 = vmatprep.subr.mxu0 0.0
        %5374 = vmatpush2.msra.mxu0 0.0
        %5375 = vmatprep.subr.mxu0 0.0
        %5376 = vmatpush2.msra.mxu0 0.0
        %5377 = vmatprep.subr.mxu0 0.0
        %5378 = vmatpush2.msra.mxu0 0.0
        %5379 = vmatprep.subr.mxu0 0.0
        %5380 = vmatpush2.msra.mxu0 0.0
        %5381 = vmatprep.subr.mxu0 0.0
        %5382 = vmatpush2.msra.mxu0 0.0
        %5383 = vmatprep.subr.mxu0 0.0
        %5384 = vmatpush2.msra.mxu0 0.0
        %5385 = vmatprep.subr.mxu0 0.0
        %5386 = vmatpush2.msra.mxu0 0.0
        %5387 = vmatprep.subr.mxu0 0.0
        %5388 = vmatpush2.msra.mxu0 0.0
        %5389 = vmatprep.subr.mxu0 0.0
        %5390 = vmatpush2.msra.mxu0 0.0
        %5391 = vmatprep.subr.mxu0 0.0
        %5392 = vmatpush2.msra.mxu0 0.0
        %5393 = vmatprep.subr.mxu0 0.0
        %5394 = vmatpush2.msra.mxu0 0.0
        %5395 = vmatprep.subr.mxu0 0.0
        %5396 = vmatpush2.msra.mxu0 0.0
        %5397 = vmatprep.subr.mxu0 0.0
        %5398 = vmatpush2.msra.mxu0 0.0
        %5399 = vmatprep.subr.mxu0 0.0
        %5400 = vmatpush2.msra.mxu0 0.0
        %5401 = vmatprep.subr.mxu0 0.0
        %5402 = vmatpush2.msra.mxu0 0.0
        %5403 = vmatprep.mubr.f32.mxu0 0.0
        %5404 = vmatmul.mubr.f32.gmra.mxu0 %v5331
        %v5405 = vpop.f32.mrf.mxu0
        %v5406 = vadd.f32 0.0, %v5405
        %v5407 = vpop.f32.mrf.mxu0
        %5408 = vmatprep.mubr.f32.mxu0 0.0
        %5409 = vmatmul.mubr.f32.gmra.mxu0 %v5334
        %v5410 = vpop.f32.mrf.mxu0
        %v5411 = vadd.f32 0.0, %v5410
        %v5412 = vpop.f32.mrf.mxu0
        %5413 = vdwg.mxu0
        %v5414 = vadd.f32 %v5251, %v5406
        %v5415 = vadd.f32 %v5252, %v5411
        %v5416 = vld [vmem:[%s377] sm:$0xff]
        %v5417 = vld [vmem:[%s377 + $0x8] sm:$0xff]
        %5418 = vmatprep.subr.mxu0 0.0
        %5419 = vmatpush1.msra.mxu0 0.0
        %5420 = vmatprep.subr.mxu0 0.0
        %5421 = vmatpush1.msra.mxu0 0.0
        %5422 = vmatprep.subr.mxu0 0.0
        %5423 = vmatpush1.msra.mxu0 0.0
        %5424 = vmatprep.subr.mxu0 0.0
        %5425 = vmatpush1.msra.mxu0 0.0
        %5426 = vmatprep.subr.mxu0 0.0
        %5427 = vmatpush1.msra.mxu0 0.0
        %5428 = vmatprep.subr.mxu0 0.0
        %5429 = vmatpush1.msra.mxu0 0.0
        %5430 = vmatprep.subr.mxu0 0.0
        %5431 = vmatpush1.msra.mxu0 0.0
        %5432 = vmatprep.subr.mxu0 0.0
        %5433 = vmatpush1.msra.mxu0 0.0
        %5434 = vmatprep.subr.mxu0 0.0
        %5435 = vmatpush1.msra.mxu0 0.0
        %5436 = vmatprep.subr.mxu0 0.0
        %5437 = vmatpush1.msra.mxu0 0.0
        %5438 = vmatprep.subr.mxu0 0.0
        %5439 = vmatpush1.msra.mxu0 0.0
        %5440 = vmatprep.subr.mxu0 0.0
        %5441 = vmatpush1.msra.mxu0 0.0
        %5442 = vmatprep.subr.mxu0 0.0
        %5443 = vmatpush1.msra.mxu0 0.0
        %5444 = vmatprep.subr.mxu0 0.0
        %5445 = vmatpush1.msra.mxu0 0.0
        %5446 = vmatprep.subr.mxu0 0.0
        %5447 = vmatpush1.msra.mxu0 %v5417
        %5448 = vmatprep.subr.mxu0 0.0
        %5449 = vmatpush1.msra.mxu0 %v5416
        %5450 = vmatprep.subr.mxu0 0.0
        %5451 = vmatpush2.msra.mxu0 0.0
        %5452 = vmatprep.subr.mxu0 0.0
        %5453 = vmatpush2.msra.mxu0 0.0
        %5454 = vmatprep.subr.mxu0 0.0
        %5455 = vmatpush2.msra.mxu0 0.0
        %5456 = vmatprep.subr.mxu0 0.0
        %5457 = vmatpush2.msra.mxu0 0.0
        %5458 = vmatprep.subr.mxu0 0.0
        %5459 = vmatpush2.msra.mxu0 0.0
        %5460 = vmatprep.subr.mxu0 0.0
        %5461 = vmatpush2.msra.mxu0 0.0
        %5462 = vmatprep.subr.mxu0 0.0
        %5463 = vmatpush2.msra.mxu0 0.0
        %5464 = vmatprep.subr.mxu0 0.0
        %5465 = vmatpush2.msra.mxu0 0.0
        %5466 = vmatprep.subr.mxu0 0.0
        %5467 = vmatpush2.msra.mxu0 0.0
        %5468 = vmatprep.subr.mxu0 0.0
        %5469 = vmatpush2.msra.mxu0 0.0
        %5470 = vmatprep.subr.mxu0 0.0
        %5471 = vmatpush2.msra.mxu0 0.0
        %5472 = vmatprep.subr.mxu0 0.0
        %5473 = vmatpush2.msra.mxu0 0.0
        %5474 = vmatprep.subr.mxu0 0.0
        %5475 = vmatpush2.msra.mxu0 0.0
        %5476 = vmatprep.subr.mxu0 0.0
        %5477 = vmatpush2.msra.mxu0 0.0
        %5478 = vmatprep.subr.mxu0 0.0
        %5479 = vmatpush2.msra.mxu0 0.0
        %5480 = vmatprep.subr.mxu0 0.0
        %5481 = vmatpush2.msra.mxu0 0.0
        %5482 = vmatprep.mubr.f32.mxu0 0.0
        %5483 = vmatmul.mubr.f32.gmra.mxu0 %v5256
        %v5484 = vpop.f32.mrf.mxu0
        %v5485 = vadd.f32 0.0, %v5484
        %v5486 = vpop.f32.mrf.mxu0
        %5487 = vdwg.mxu0
        %v5488 = vld [vmem:[%s2931] sm:$0xff]
        %v5489 = vld [vmem:[%s2931 + $0x8] sm:$0xff]
        %v5491 = vsel %vm555, %v5488, 0
        %v5494 = vsel %vm555, %v5489, 0
        %v5497 = vsel %vm562, %v5485, 0
        %5499 = vmatprep.subr.mxu0 0.0
        %5500 = vmatpush1.msra.mxu0 0.0
        %5501 = vmatprep.subr.mxu0 0.0
        %5502 = vmatpush1.msra.mxu0 0.0
        %5503 = vmatprep.subr.mxu0 0.0
        %5504 = vmatpush1.msra.mxu0 0.0
        %5505 = vmatprep.subr.mxu0 0.0
        %5506 = vmatpush1.msra.mxu0 0.0
        %5507 = vmatprep.subr.mxu0 0.0
        %5508 = vmatpush1.msra.mxu0 0.0
        %5509 = vmatprep.subr.mxu0 0.0
        %5510 = vmatpush1.msra.mxu0 0.0
        %5511 = vmatprep.subr.mxu0 0.0
        %5512 = vmatpush1.msra.mxu0 0.0
        %5513 = vmatprep.subr.mxu0 0.0
        %5514 = vmatpush1.msra.mxu0 0.0
        %5515 = vmatprep.subr.mxu0 0.0
        %5516 = vmatpush1.msra.mxu0 0.0
        %5517 = vmatprep.subr.mxu0 0.0
        %5518 = vmatpush1.msra.mxu0 0.0
        %5519 = vmatprep.subr.mxu0 0.0
        %5520 = vmatpush1.msra.mxu0 0.0
        %5521 = vmatprep.subr.mxu0 0.0
        %5522 = vmatpush1.msra.mxu0 0.0
        %5523 = vmatprep.subr.mxu0 0.0
        %5524 = vmatpush1.msra.mxu0 0.0
        %5525 = vmatprep.subr.mxu0 0.0
        %5526 = vmatpush1.msra.mxu0 0.0
        %5527 = vmatprep.subr.mxu0 0.0
        %5528 = vmatpush1.msra.mxu0 0.0
        %5529 = vmatprep.subr.mxu0 0.0
        %5530 = vmatpush1.msra.mxu0 %v5497
        %5531 = vmatprep.subr.mxu0 0.0
        %5532 = vmatpush2.msra.mxu0 0.0
        %5533 = vmatprep.subr.mxu0 0.0
        %5534 = vmatpush2.msra.mxu0 0.0
        %5535 = vmatprep.subr.mxu0 0.0
        %5536 = vmatpush2.msra.mxu0 0.0
        %5537 = vmatprep.subr.mxu0 0.0
        %5538 = vmatpush2.msra.mxu0 0.0
        %5539 = vmatprep.subr.mxu0 0.0
        %5540 = vmatpush2.msra.mxu0 0.0
        %5541 = vmatprep.subr.mxu0 0.0
        %5542 = vmatpush2.msra.mxu0 0.0
        %5543 = vmatprep.subr.mxu0 0.0
        %5544 = vmatpush2.msra.mxu0 0.0
        %5545 = vmatprep.subr.mxu0 0.0
        %5546 = vmatpush2.msra.mxu0 0.0
        %5547 = vmatprep.subr.mxu0 0.0
        %5548 = vmatpush2.msra.mxu0 0.0
        %5549 = vmatprep.subr.mxu0 0.0
        %5550 = vmatpush2.msra.mxu0 0.0
        %5551 = vmatprep.subr.mxu0 0.0
        %5552 = vmatpush2.msra.mxu0 0.0
        %5553 = vmatprep.subr.mxu0 0.0
        %5554 = vmatpush2.msra.mxu0 0.0
        %5555 = vmatprep.subr.mxu0 0.0
        %5556 = vmatpush2.msra.mxu0 0.0
        %5557 = vmatprep.subr.mxu0 0.0
        %5558 = vmatpush2.msra.mxu0 0.0
        %5559 = vmatprep.subr.mxu0 0.0
        %5560 = vmatpush2.msra.mxu0 0.0
        %5561 = vmatprep.subr.mxu0 0.0
        %5562 = vmatpush2.msra.mxu0 0.0
        %5563 = vmatprep.mubr.f32.mxu0 0.0
        %5564 = vmatmul.mubr.f32.gmra.mxu0 %v5491
        %v5565 = vpop.f32.mrf.mxu0
        %v5566 = vadd.f32 0.0, %v5565
        %v5567 = vpop.f32.mrf.mxu0
        %5568 = vmatprep.mubr.f32.mxu0 0.0
        %5569 = vmatmul.mubr.f32.gmra.mxu0 %v5494
        %v5570 = vpop.f32.mrf.mxu0
        %v5571 = vadd.f32 0.0, %v5570
        %v5572 = vpop.f32.mrf.mxu0
        %5573 = vdwg.mxu0
        %v5574 = vadd.f32 %v5414, %v5566
        %v5575 = vadd.f32 %v5415, %v5571
        %v5576 = vld [vmem:[%s465] sm:$0xff]
        %v5577 = vld [vmem:[%s465 + $0x8] sm:$0xff]
        %5578 = vmatprep.subr.mxu0 0.0
        %5579 = vmatpush1.msra.mxu0 0.0
        %5580 = vmatprep.subr.mxu0 0.0
        %5581 = vmatpush1.msra.mxu0 0.0
        %5582 = vmatprep.subr.mxu0 0.0
        %5583 = vmatpush1.msra.mxu0 0.0
        %5584 = vmatprep.subr.mxu0 0.0
        %5585 = vmatpush1.msra.mxu0 0.0
        %5586 = vmatprep.subr.mxu0 0.0
        %5587 = vmatpush1.msra.mxu0 0.0
        %5588 = vmatprep.subr.mxu0 0.0
        %5589 = vmatpush1.msra.mxu0 0.0
        %5590 = vmatprep.subr.mxu0 0.0
        %5591 = vmatpush1.msra.mxu0 0.0
        %5592 = vmatprep.subr.mxu0 0.0
        %5593 = vmatpush1.msra.mxu0 0.0
        %5594 = vmatprep.subr.mxu0 0.0
        %5595 = vmatpush1.msra.mxu0 0.0
        %5596 = vmatprep.subr.mxu0 0.0
        %5597 = vmatpush1.msra.mxu0 0.0
        %5598 = vmatprep.subr.mxu0 0.0
        %5599 = vmatpush1.msra.mxu0 0.0
        %5600 = vmatprep.subr.mxu0 0.0
        %5601 = vmatpush1.msra.mxu0 0.0
        %5602 = vmatprep.subr.mxu0 0.0
        %5603 = vmatpush1.msra.mxu0 0.0
        %5604 = vmatprep.subr.mxu0 0.0
        %5605 = vmatpush1.msra.mxu0 0.0
        %5606 = vmatprep.subr.mxu0 0.0
        %5607 = vmatpush1.msra.mxu0 %v5577
        %5608 = vmatprep.subr.mxu0 0.0
        %5609 = vmatpush1.msra.mxu0 %v5576
        %5610 = vmatprep.subr.mxu0 0.0
        %5611 = vmatpush2.msra.mxu0 0.0
        %5612 = vmatprep.subr.mxu0 0.0
        %5613 = vmatpush2.msra.mxu0 0.0
        %5614 = vmatprep.subr.mxu0 0.0
        %5615 = vmatpush2.msra.mxu0 0.0
        %5616 = vmatprep.subr.mxu0 0.0
        %5617 = vmatpush2.msra.mxu0 0.0
        %5618 = vmatprep.subr.mxu0 0.0
        %5619 = vmatpush2.msra.mxu0 0.0
        %5620 = vmatprep.subr.mxu0 0.0
        %5621 = vmatpush2.msra.mxu0 0.0
        %5622 = vmatprep.subr.mxu0 0.0
        %5623 = vmatpush2.msra.mxu0 0.0
        %5624 = vmatprep.subr.mxu0 0.0
        %5625 = vmatpush2.msra.mxu0 0.0
        %5626 = vmatprep.subr.mxu0 0.0
        %5627 = vmatpush2.msra.mxu0 0.0
        %5628 = vmatprep.subr.mxu0 0.0
        %5629 = vmatpush2.msra.mxu0 0.0
        %5630 = vmatprep.subr.mxu0 0.0
        %5631 = vmatpush2.msra.mxu0 0.0
        %5632 = vmatprep.subr.mxu0 0.0
        %5633 = vmatpush2.msra.mxu0 0.0
        %5634 = vmatprep.subr.mxu0 0.0
        %5635 = vmatpush2.msra.mxu0 0.0
        %5636 = vmatprep.subr.mxu0 0.0
        %5637 = vmatpush2.msra.mxu0 0.0
        %5638 = vmatprep.subr.mxu0 0.0
        %5639 = vmatpush2.msra.mxu0 0.0
        %5640 = vmatprep.subr.mxu0 0.0
        %5641 = vmatpush2.msra.mxu0 0.0
        %5642 = vmatprep.mubr.f32.mxu0 0.0
        %5643 = vmatmul.mubr.f32.gmra.mxu0 %v5256
        %v5644 = vpop.f32.mrf.mxu0
        %v5645 = vadd.f32 0.0, %v5644
        %v5646 = vpop.f32.mrf.mxu0
        %5647 = vdwg.mxu0
        %v5648 = vld [vmem:[%s3092] sm:$0xff]
        %v5649 = vld [vmem:[%s3092 + $0x8] sm:$0xff]
        %v5651 = vsel %vm555, %v5648, 0
        %v5654 = vsel %vm555, %v5649, 0
        %v5657 = vsel %vm562, %v5645, 0
        %5659 = vmatprep.subr.mxu0 0.0
        %5660 = vmatpush1.msra.mxu0 0.0
        %5661 = vmatprep.subr.mxu0 0.0
        %5662 = vmatpush1.msra.mxu0 0.0
        %5663 = vmatprep.subr.mxu0 0.0
        %5664 = vmatpush1.msra.mxu0 0.0
        %5665 = vmatprep.subr.mxu0 0.0
        %5666 = vmatpush1.msra.mxu0 0.0
        %5667 = vmatprep.subr.mxu0 0.0
        %5668 = vmatpush1.msra.mxu0 0.0
        %5669 = vmatprep.subr.mxu0 0.0
        %5670 = vmatpush1.msra.mxu0 0.0
        %5671 = vmatprep.subr.mxu0 0.0
        %5672 = vmatpush1.msra.mxu0 0.0
        %5673 = vmatprep.subr.mxu0 0.0
        %5674 = vmatpush1.msra.mxu0 0.0
        %5675 = vmatprep.subr.mxu0 0.0
        %5676 = vmatpush1.msra.mxu0 0.0
        %5677 = vmatprep.subr.mxu0 0.0
        %5678 = vmatpush1.msra.mxu0 0.0
        %5679 = vmatprep.subr.mxu0 0.0
        %5680 = vmatpush1.msra.mxu0 0.0
        %5681 = vmatprep.subr.mxu0 0.0
        %5682 = vmatpush1.msra.mxu0 0.0
        %5683 = vmatprep.subr.mxu0 0.0
        %5684 = vmatpush1.msra.mxu0 0.0
        %5685 = vmatprep.subr.mxu0 0.0
        %5686 = vmatpush1.msra.mxu0 0.0
        %5687 = vmatprep.subr.mxu0 0.0
        %5688 = vmatpush1.msra.mxu0 0.0
        %5689 = vmatprep.subr.mxu0 0.0
        %5690 = vmatpush1.msra.mxu0 %v5657
        %5691 = vmatprep.subr.mxu0 0.0
        %5692 = vmatpush2.msra.mxu0 0.0
        %5693 = vmatprep.subr.mxu0 0.0
        %5694 = vmatpush2.msra.mxu0 0.0
        %5695 = vmatprep.subr.mxu0 0.0
        %5696 = vmatpush2.msra.mxu0 0.0
        %5697 = vmatprep.subr.mxu0 0.0
        %5698 = vmatpush2.msra.mxu0 0.0
        %5699 = vmatprep.subr.mxu0 0.0
        %5700 = vmatpush2.msra.mxu0 0.0
        %5701 = vmatprep.subr.mxu0 0.0
        %5702 = vmatpush2.msra.mxu0 0.0
        %5703 = vmatprep.subr.mxu0 0.0
        %5704 = vmatpush2.msra.mxu0 0.0
        %5705 = vmatprep.subr.mxu0 0.0
        %5706 = vmatpush2.msra.mxu0 0.0
        %5707 = vmatprep.subr.mxu0 0.0
        %5708 = vmatpush2.msra.mxu0 0.0
        %5709 = vmatprep.subr.mxu0 0.0
        %5710 = vmatpush2.msra.mxu0 0.0
        %5711 = vmatprep.subr.mxu0 0.0
        %5712 = vmatpush2.msra.mxu0 0.0
        %5713 = vmatprep.subr.mxu0 0.0
        %5714 = vmatpush2.msra.mxu0 0.0
        %5715 = vmatprep.subr.mxu0 0.0
        %5716 = vmatpush2.msra.mxu0 0.0
        %5717 = vmatprep.subr.mxu0 0.0
        %5718 = vmatpush2.msra.mxu0 0.0
        %5719 = vmatprep.subr.mxu0 0.0
        %5720 = vmatpush2.msra.mxu0 0.0
        %5721 = vmatprep.subr.mxu0 0.0
        %5722 = vmatpush2.msra.mxu0 0.0
        %5723 = vmatprep.mubr.f32.mxu0 0.0
        %5724 = vmatmul.mubr.f32.gmra.mxu0 %v5651
        %v5725 = vpop.f32.mrf.mxu0
        %v5726 = vadd.f32 0.0, %v5725
        %v5727 = vpop.f32.mrf.mxu0
        %5728 = vmatprep.mubr.f32.mxu0 0.0
        %5729 = vmatmul.mubr.f32.gmra.mxu0 %v5654
        %v5730 = vpop.f32.mrf.mxu0
        %v5731 = vadd.f32 0.0, %v5730
        %v5732 = vpop.f32.mrf.mxu0
        %5733 = vdwg.mxu0
        %v5734 = vadd.f32 %v5574, %v5726
        %v5735 = vadd.f32 %v5575, %v5731
        %v5736 = vxor.u32 %v5734, 2147483648
        %v5737 = vxor.u32 %v5735, 2147483648
        %v5738 = vmul.f32 %v5736, 1.442695
        %v5739 = vpow.pop %v5738
        %v5740 = vmul.f32 %v5737, 1.442695
        %v5741 = vpow.pop %v5740
        %v5742 = vadd.f32 %v5739, 1.0
        %v5743 = vadd.f32 %v5741, 1.0
        %v5744 = vrcp.pop %v5742
        %v5745 = vmul.f32 1.0, %v5744
        %v5746 = vrcp.pop %v5743
        %v5747 = vmul.f32 1.0, %v5746
        %v5748 = vtanh.pop %v5735
        %v5750 = vrot.slane %v5745, 4
        %v5752 = vmul.f32 %v5246, %v5750
        %v5754 = vrot.slane %v5748, 4
        %v5756 = vmul.f32 %v5745, %v5754
        %v5757 = vadd.f32 %v5752, %v5756
        %v5758 = vtanh.pop %v5757
        %v5759 = vmul.f32 %v5758, %v5747
        %s5760 = scalar_lea.vmem %s242, 20 [#allocation5]
        %5761 = vst.msk [vmem:[%s5760] sm:$0xf] %vm3205, %v5759
        %v5762 = vld [vmem:[%s2422] sm:$0xff]
        %v5763 = vld [vmem:[%s2422 + $0x8] sm:$0xff]
        %v5764 = vld [vmem:[%s1] sm:$0xff]
        %v5765 = vld [vmem:[%s1 + $0x8] sm:$0xff]
        %v5767 = vsel %vm279, %v5759, 0
        %5769 = vmatprep.subr.mxu0 0.0
        %5770 = vmatpush1.msra.mxu0 0.0
        %5771 = vmatprep.subr.mxu0 0.0
        %5772 = vmatpush1.msra.mxu0 0.0
        %5773 = vmatprep.subr.mxu0 0.0
        %5774 = vmatpush1.msra.mxu0 0.0
        %5775 = vmatprep.subr.mxu0 0.0
        %5776 = vmatpush1.msra.mxu0 0.0
        %5777 = vmatprep.subr.mxu0 0.0
        %5778 = vmatpush1.msra.mxu0 0.0
        %5779 = vmatprep.subr.mxu0 0.0
        %5780 = vmatpush1.msra.mxu0 0.0
        %5781 = vmatprep.subr.mxu0 0.0
        %5782 = vmatpush1.msra.mxu0 0.0
        %5783 = vmatprep.subr.mxu0 0.0
        %5784 = vmatpush1.msra.mxu0 0.0
        %5785 = vmatprep.subr.mxu0 0.0
        %5786 = vmatpush1.msra.mxu0 0.0
        %5787 = vmatprep.subr.mxu0 0.0
        %5788 = vmatpush1.msra.mxu0 0.0
        %5789 = vmatprep.subr.mxu0 0.0
        %5790 = vmatpush1.msra.mxu0 0.0
        %5791 = vmatprep.subr.mxu0 0.0
        %5792 = vmatpush1.msra.mxu0 0.0
        %5793 = vmatprep.subr.mxu0 0.0
        %5794 = vmatpush1.msra.mxu0 0.0
        %5795 = vmatprep.subr.mxu0 0.0
        %5796 = vmatpush1.msra.mxu0 0.0
        %5797 = vmatprep.subr.mxu0 0.0
        %5798 = vmatpush1.msra.mxu0 %v5765
        %5799 = vmatprep.subr.mxu0 0.0
        %5800 = vmatpush1.msra.mxu0 %v5764
        %5801 = vmatprep.subr.mxu0 0.0
        %5802 = vmatpush2.msra.mxu0 0.0
        %5803 = vmatprep.subr.mxu0 0.0
        %5804 = vmatpush2.msra.mxu0 0.0
        %5805 = vmatprep.subr.mxu0 0.0
        %5806 = vmatpush2.msra.mxu0 0.0
        %5807 = vmatprep.subr.mxu0 0.0
        %5808 = vmatpush2.msra.mxu0 0.0
        %5809 = vmatprep.subr.mxu0 0.0
        %5810 = vmatpush2.msra.mxu0 0.0
        %5811 = vmatprep.subr.mxu0 0.0
        %5812 = vmatpush2.msra.mxu0 0.0
        %5813 = vmatprep.subr.mxu0 0.0
        %5814 = vmatpush2.msra.mxu0 0.0
        %5815 = vmatprep.subr.mxu0 0.0
        %5816 = vmatpush2.msra.mxu0 0.0
        %5817 = vmatprep.subr.mxu0 0.0
        %5818 = vmatpush2.msra.mxu0 0.0
        %5819 = vmatprep.subr.mxu0 0.0
        %5820 = vmatpush2.msra.mxu0 0.0
        %5821 = vmatprep.subr.mxu0 0.0
        %5822 = vmatpush2.msra.mxu0 0.0
        %5823 = vmatprep.subr.mxu0 0.0
        %5824 = vmatpush2.msra.mxu0 0.0
        %5825 = vmatprep.subr.mxu0 0.0
        %5826 = vmatpush2.msra.mxu0 0.0
        %5827 = vmatprep.subr.mxu0 0.0
        %5828 = vmatpush2.msra.mxu0 0.0
        %5829 = vmatprep.subr.mxu0 0.0
        %5830 = vmatpush2.msra.mxu0 0.0
        %5831 = vmatprep.subr.mxu0 0.0
        %5832 = vmatpush2.msra.mxu0 0.0
        %5833 = vmatprep.mubr.f32.mxu0 0.0
        %5834 = vmatmul.mubr.f32.gmra.mxu0 %v5767
        %v5835 = vpop.f32.mrf.mxu0
        %v5836 = vadd.f32 0.0, %v5835
        %v5837 = vpop.f32.mrf.mxu0
        %5838 = vdwg.mxu0
        %v5839 = vld [vmem:[%s3] sm:$0xff]
        %v5840 = vld [vmem:[%s3 + $0x8] sm:$0xff]
        %v5842 = vsel %vm555, %v5839, 0
        %v5845 = vsel %vm555, %v5840, 0
        %v5848 = vsel %vm562, %v5836, 0
        %5850 = vmatprep.subr.mxu0 0.0
        %5851 = vmatpush1.msra.mxu0 0.0
        %5852 = vmatprep.subr.mxu0 0.0
        %5853 = vmatpush1.msra.mxu0 0.0
        %5854 = vmatprep.subr.mxu0 0.0
        %5855 = vmatpush1.msra.mxu0 0.0
        %5856 = vmatprep.subr.mxu0 0.0
        %5857 = vmatpush1.msra.mxu0 0.0
        %5858 = vmatprep.subr.mxu0 0.0
        %5859 = vmatpush1.msra.mxu0 0.0
        %5860 = vmatprep.subr.mxu0 0.0
        %5861 = vmatpush1.msra.mxu0 0.0
        %5862 = vmatprep.subr.mxu0 0.0
        %5863 = vmatpush1.msra.mxu0 0.0
        %5864 = vmatprep.subr.mxu0 0.0
        %5865 = vmatpush1.msra.mxu0 0.0
        %5866 = vmatprep.subr.mxu0 0.0
        %5867 = vmatpush1.msra.mxu0 0.0
        %5868 = vmatprep.subr.mxu0 0.0
        %5869 = vmatpush1.msra.mxu0 0.0
        %5870 = vmatprep.subr.mxu0 0.0
        %5871 = vmatpush1.msra.mxu0 0.0
        %5872 = vmatprep.subr.mxu0 0.0
        %5873 = vmatpush1.msra.mxu0 0.0
        %5874 = vmatprep.subr.mxu0 0.0
        %5875 = vmatpush1.msra.mxu0 0.0
        %5876 = vmatprep.subr.mxu0 0.0
        %5877 = vmatpush1.msra.mxu0 0.0
        %5878 = vmatprep.subr.mxu0 0.0
        %5879 = vmatpush1.msra.mxu0 0.0
        %5880 = vmatprep.subr.mxu0 0.0
        %5881 = vmatpush1.msra.mxu0 %v5848
        %5882 = vmatprep.subr.mxu0 0.0
        %5883 = vmatpush2.msra.mxu0 0.0
        %5884 = vmatprep.subr.mxu0 0.0
        %5885 = vmatpush2.msra.mxu0 0.0
        %5886 = vmatprep.subr.mxu0 0.0
        %5887 = vmatpush2.msra.mxu0 0.0
        %5888 = vmatprep.subr.mxu0 0.0
        %5889 = vmatpush2.msra.mxu0 0.0
        %5890 = vmatprep.subr.mxu0 0.0
        %5891 = vmatpush2.msra.mxu0 0.0
        %5892 = vmatprep.subr.mxu0 0.0
        %5893 = vmatpush2.msra.mxu0 0.0
        %5894 = vmatprep.subr.mxu0 0.0
        %5895 = vmatpush2.msra.mxu0 0.0
        %5896 = vmatprep.subr.mxu0 0.0
        %5897 = vmatpush2.msra.mxu0 0.0
        %5898 = vmatprep.subr.mxu0 0.0
        %5899 = vmatpush2.msra.mxu0 0.0
        %5900 = vmatprep.subr.mxu0 0.0
        %5901 = vmatpush2.msra.mxu0 0.0
        %5902 = vmatprep.subr.mxu0 0.0
        %5903 = vmatpush2.msra.mxu0 0.0
        %5904 = vmatprep.subr.mxu0 0.0
        %5905 = vmatpush2.msra.mxu0 0.0
        %5906 = vmatprep.subr.mxu0 0.0
        %5907 = vmatpush2.msra.mxu0 0.0
        %5908 = vmatprep.subr.mxu0 0.0
        %5909 = vmatpush2.msra.mxu0 0.0
        %5910 = vmatprep.subr.mxu0 0.0
        %5911 = vmatpush2.msra.mxu0 0.0
        %5912 = vmatprep.subr.mxu0 0.0
        %5913 = vmatpush2.msra.mxu0 0.0
        %5914 = vmatprep.mubr.f32.mxu0 0.0
        %5915 = vmatmul.mubr.f32.gmra.mxu0 %v5842
        %v5916 = vpop.f32.mrf.mxu0
        %v5917 = vadd.f32 0.0, %v5916
        %v5918 = vpop.f32.mrf.mxu0
        %5919 = vmatprep.mubr.f32.mxu0 0.0
        %5920 = vmatmul.mubr.f32.gmra.mxu0 %v5845
        %v5921 = vpop.f32.mrf.mxu0
        %v5922 = vadd.f32 0.0, %v5921
        %v5923 = vpop.f32.mrf.mxu0
        %5924 = vdwg.mxu0
        %v5925 = vadd.f32 %v5762, %v5917
        %v5926 = vadd.f32 %v5763, %v5922
        %v5927 = vld [vmem:[%s377] sm:$0xff]
        %v5928 = vld [vmem:[%s377 + $0x8] sm:$0xff]
        %5929 = vmatprep.subr.mxu0 0.0
        %5930 = vmatpush1.msra.mxu0 0.0
        %5931 = vmatprep.subr.mxu0 0.0
        %5932 = vmatpush1.msra.mxu0 0.0
        %5933 = vmatprep.subr.mxu0 0.0
        %5934 = vmatpush1.msra.mxu0 0.0
        %5935 = vmatprep.subr.mxu0 0.0
        %5936 = vmatpush1.msra.mxu0 0.0
        %5937 = vmatprep.subr.mxu0 0.0
        %5938 = vmatpush1.msra.mxu0 0.0
        %5939 = vmatprep.subr.mxu0 0.0
        %5940 = vmatpush1.msra.mxu0 0.0
        %5941 = vmatprep.subr.mxu0 0.0
        %5942 = vmatpush1.msra.mxu0 0.0
        %5943 = vmatprep.subr.mxu0 0.0
        %5944 = vmatpush1.msra.mxu0 0.0
        %5945 = vmatprep.subr.mxu0 0.0
        %5946 = vmatpush1.msra.mxu0 0.0
        %5947 = vmatprep.subr.mxu0 0.0
        %5948 = vmatpush1.msra.mxu0 0.0
        %5949 = vmatprep.subr.mxu0 0.0
        %5950 = vmatpush1.msra.mxu0 0.0
        %5951 = vmatprep.subr.mxu0 0.0
        %5952 = vmatpush1.msra.mxu0 0.0
        %5953 = vmatprep.subr.mxu0 0.0
        %5954 = vmatpush1.msra.mxu0 0.0
        %5955 = vmatprep.subr.mxu0 0.0
        %5956 = vmatpush1.msra.mxu0 0.0
        %5957 = vmatprep.subr.mxu0 0.0
        %5958 = vmatpush1.msra.mxu0 %v5928
        %5959 = vmatprep.subr.mxu0 0.0
        %5960 = vmatpush1.msra.mxu0 %v5927
        %5961 = vmatprep.subr.mxu0 0.0
        %5962 = vmatpush2.msra.mxu0 0.0
        %5963 = vmatprep.subr.mxu0 0.0
        %5964 = vmatpush2.msra.mxu0 0.0
        %5965 = vmatprep.subr.mxu0 0.0
        %5966 = vmatpush2.msra.mxu0 0.0
        %5967 = vmatprep.subr.mxu0 0.0
        %5968 = vmatpush2.msra.mxu0 0.0
        %5969 = vmatprep.subr.mxu0 0.0
        %5970 = vmatpush2.msra.mxu0 0.0
        %5971 = vmatprep.subr.mxu0 0.0
        %5972 = vmatpush2.msra.mxu0 0.0
        %5973 = vmatprep.subr.mxu0 0.0
        %5974 = vmatpush2.msra.mxu0 0.0
        %5975 = vmatprep.subr.mxu0 0.0
        %5976 = vmatpush2.msra.mxu0 0.0
        %5977 = vmatprep.subr.mxu0 0.0
        %5978 = vmatpush2.msra.mxu0 0.0
        %5979 = vmatprep.subr.mxu0 0.0
        %5980 = vmatpush2.msra.mxu0 0.0
        %5981 = vmatprep.subr.mxu0 0.0
        %5982 = vmatpush2.msra.mxu0 0.0
        %5983 = vmatprep.subr.mxu0 0.0
        %5984 = vmatpush2.msra.mxu0 0.0
        %5985 = vmatprep.subr.mxu0 0.0
        %5986 = vmatpush2.msra.mxu0 0.0
        %5987 = vmatprep.subr.mxu0 0.0
        %5988 = vmatpush2.msra.mxu0 0.0
        %5989 = vmatprep.subr.mxu0 0.0
        %5990 = vmatpush2.msra.mxu0 0.0
        %5991 = vmatprep.subr.mxu0 0.0
        %5992 = vmatpush2.msra.mxu0 0.0
        %5993 = vmatprep.mubr.f32.mxu0 0.0
        %5994 = vmatmul.mubr.f32.gmra.mxu0 %v5767
        %v5995 = vpop.f32.mrf.mxu0
        %v5996 = vadd.f32 0.0, %v5995
        %v5997 = vpop.f32.mrf.mxu0
        %5998 = vdwg.mxu0
        %v5999 = vld [vmem:[%s2931] sm:$0xff]
        %v6000 = vld [vmem:[%s2931 + $0x8] sm:$0xff]
        %v6002 = vsel %vm555, %v5999, 0
        %v6005 = vsel %vm555, %v6000, 0
        %v6008 = vsel %vm562, %v5996, 0
        %6010 = vmatprep.subr.mxu0 0.0
        %6011 = vmatpush1.msra.mxu0 0.0
        %6012 = vmatprep.subr.mxu0 0.0
        %6013 = vmatpush1.msra.mxu0 0.0
        %6014 = vmatprep.subr.mxu0 0.0
        %6015 = vmatpush1.msra.mxu0 0.0
        %6016 = vmatprep.subr.mxu0 0.0
        %6017 = vmatpush1.msra.mxu0 0.0
        %6018 = vmatprep.subr.mxu0 0.0
        %6019 = vmatpush1.msra.mxu0 0.0
        %6020 = vmatprep.subr.mxu0 0.0
        %6021 = vmatpush1.msra.mxu0 0.0
        %6022 = vmatprep.subr.mxu0 0.0
        %6023 = vmatpush1.msra.mxu0 0.0
        %6024 = vmatprep.subr.mxu0 0.0
        %6025 = vmatpush1.msra.mxu0 0.0
        %6026 = vmatprep.subr.mxu0 0.0
        %6027 = vmatpush1.msra.mxu0 0.0
        %6028 = vmatprep.subr.mxu0 0.0
        %6029 = vmatpush1.msra.mxu0 0.0
        %6030 = vmatprep.subr.mxu0 0.0
        %6031 = vmatpush1.msra.mxu0 0.0
        %6032 = vmatprep.subr.mxu0 0.0
        %6033 = vmatpush1.msra.mxu0 0.0
        %6034 = vmatprep.subr.mxu0 0.0
        %6035 = vmatpush1.msra.mxu0 0.0
        %6036 = vmatprep.subr.mxu0 0.0
        %6037 = vmatpush1.msra.mxu0 0.0
        %6038 = vmatprep.subr.mxu0 0.0
        %6039 = vmatpush1.msra.mxu0 0.0
        %6040 = vmatprep.subr.mxu0 0.0
        %6041 = vmatpush1.msra.mxu0 %v6008
        %6042 = vmatprep.subr.mxu0 0.0
        %6043 = vmatpush2.msra.mxu0 0.0
        %6044 = vmatprep.subr.mxu0 0.0
        %6045 = vmatpush2.msra.mxu0 0.0
        %6046 = vmatprep.subr.mxu0 0.0
        %6047 = vmatpush2.msra.mxu0 0.0
        %6048 = vmatprep.subr.mxu0 0.0
        %6049 = vmatpush2.msra.mxu0 0.0
        %6050 = vmatprep.subr.mxu0 0.0
        %6051 = vmatpush2.msra.mxu0 0.0
        %6052 = vmatprep.subr.mxu0 0.0
        %6053 = vmatpush2.msra.mxu0 0.0
        %6054 = vmatprep.subr.mxu0 0.0
        %6055 = vmatpush2.msra.mxu0 0.0
        %6056 = vmatprep.subr.mxu0 0.0
        %6057 = vmatpush2.msra.mxu0 0.0
        %6058 = vmatprep.subr.mxu0 0.0
        %6059 = vmatpush2.msra.mxu0 0.0
        %6060 = vmatprep.subr.mxu0 0.0
        %6061 = vmatpush2.msra.mxu0 0.0
        %6062 = vmatprep.subr.mxu0 0.0
        %6063 = vmatpush2.msra.mxu0 0.0
        %6064 = vmatprep.subr.mxu0 0.0
        %6065 = vmatpush2.msra.mxu0 0.0
        %6066 = vmatprep.subr.mxu0 0.0
        %6067 = vmatpush2.msra.mxu0 0.0
        %6068 = vmatprep.subr.mxu0 0.0
        %6069 = vmatpush2.msra.mxu0 0.0
        %6070 = vmatprep.subr.mxu0 0.0
        %6071 = vmatpush2.msra.mxu0 0.0
        %6072 = vmatprep.subr.mxu0 0.0
        %6073 = vmatpush2.msra.mxu0 0.0
        %6074 = vmatprep.mubr.f32.mxu0 0.0
        %6075 = vmatmul.mubr.f32.gmra.mxu0 %v6002
        %v6076 = vpop.f32.mrf.mxu0
        %v6077 = vadd.f32 0.0, %v6076
        %v6078 = vpop.f32.mrf.mxu0
        %6079 = vmatprep.mubr.f32.mxu0 0.0
        %6080 = vmatmul.mubr.f32.gmra.mxu0 %v6005
        %v6081 = vpop.f32.mrf.mxu0
        %v6082 = vadd.f32 0.0, %v6081
        %v6083 = vpop.f32.mrf.mxu0
        %6084 = vdwg.mxu0
        %v6085 = vadd.f32 %v5925, %v6077
        %v6086 = vadd.f32 %v5926, %v6082
        %v6087 = vld [vmem:[%s465] sm:$0xff]
        %v6088 = vld [vmem:[%s465 + $0x8] sm:$0xff]
        %6089 = vmatprep.subr.mxu0 0.0
        %6090 = vmatpush1.msra.mxu0 0.0
        %6091 = vmatprep.subr.mxu0 0.0
        %6092 = vmatpush1.msra.mxu0 0.0
        %6093 = vmatprep.subr.mxu0 0.0
        %6094 = vmatpush1.msra.mxu0 0.0
        %6095 = vmatprep.subr.mxu0 0.0
        %6096 = vmatpush1.msra.mxu0 0.0
        %6097 = vmatprep.subr.mxu0 0.0
        %6098 = vmatpush1.msra.mxu0 0.0
        %6099 = vmatprep.subr.mxu0 0.0
        %6100 = vmatpush1.msra.mxu0 0.0
        %6101 = vmatprep.subr.mxu0 0.0
        %6102 = vmatpush1.msra.mxu0 0.0
        %6103 = vmatprep.subr.mxu0 0.0
        %6104 = vmatpush1.msra.mxu0 0.0
        %6105 = vmatprep.subr.mxu0 0.0
        %6106 = vmatpush1.msra.mxu0 0.0
        %6107 = vmatprep.subr.mxu0 0.0
        %6108 = vmatpush1.msra.mxu0 0.0
        %6109 = vmatprep.subr.mxu0 0.0
        %6110 = vmatpush1.msra.mxu0 0.0
        %6111 = vmatprep.subr.mxu0 0.0
        %6112 = vmatpush1.msra.mxu0 0.0
        %6113 = vmatprep.subr.mxu0 0.0
        %6114 = vmatpush1.msra.mxu0 0.0
        %6115 = vmatprep.subr.mxu0 0.0
        %6116 = vmatpush1.msra.mxu0 0.0
        %6117 = vmatprep.subr.mxu0 0.0
        %6118 = vmatpush1.msra.mxu0 %v6088
        %6119 = vmatprep.subr.mxu0 0.0
        %6120 = vmatpush1.msra.mxu0 %v6087
        %6121 = vmatprep.subr.mxu0 0.0
        %6122 = vmatpush2.msra.mxu0 0.0
        %6123 = vmatprep.subr.mxu0 0.0
        %6124 = vmatpush2.msra.mxu0 0.0
        %6125 = vmatprep.subr.mxu0 0.0
        %6126 = vmatpush2.msra.mxu0 0.0
        %6127 = vmatprep.subr.mxu0 0.0
        %6128 = vmatpush2.msra.mxu0 0.0
        %6129 = vmatprep.subr.mxu0 0.0
        %6130 = vmatpush2.msra.mxu0 0.0
        %6131 = vmatprep.subr.mxu0 0.0
        %6132 = vmatpush2.msra.mxu0 0.0
        %6133 = vmatprep.subr.mxu0 0.0
        %6134 = vmatpush2.msra.mxu0 0.0
        %6135 = vmatprep.subr.mxu0 0.0
        %6136 = vmatpush2.msra.mxu0 0.0
        %6137 = vmatprep.subr.mxu0 0.0
        %6138 = vmatpush2.msra.mxu0 0.0
        %6139 = vmatprep.subr.mxu0 0.0
        %6140 = vmatpush2.msra.mxu0 0.0
        %6141 = vmatprep.subr.mxu0 0.0
        %6142 = vmatpush2.msra.mxu0 0.0
        %6143 = vmatprep.subr.mxu0 0.0
        %6144 = vmatpush2.msra.mxu0 0.0
        %6145 = vmatprep.subr.mxu0 0.0
        %6146 = vmatpush2.msra.mxu0 0.0
        %6147 = vmatprep.subr.mxu0 0.0
        %6148 = vmatpush2.msra.mxu0 0.0
        %6149 = vmatprep.subr.mxu0 0.0
        %6150 = vmatpush2.msra.mxu0 0.0
        %6151 = vmatprep.subr.mxu0 0.0
        %6152 = vmatpush2.msra.mxu0 0.0
        %6153 = vmatprep.mubr.f32.mxu0 0.0
        %6154 = vmatmul.mubr.f32.gmra.mxu0 %v5767
        %v6155 = vpop.f32.mrf.mxu0
        %v6156 = vadd.f32 0.0, %v6155
        %v6157 = vpop.f32.mrf.mxu0
        %6158 = vdwg.mxu0
        %v6159 = vld [vmem:[%s3092] sm:$0xff]
        %v6160 = vld [vmem:[%s3092 + $0x8] sm:$0xff]
        %v6162 = vsel %vm555, %v6159, 0
        %v6165 = vsel %vm555, %v6160, 0
        %v6168 = vsel %vm562, %v6156, 0
        %6170 = vmatprep.subr.mxu0 0.0
        %6171 = vmatpush1.msra.mxu0 0.0
        %6172 = vmatprep.subr.mxu0 0.0
        %6173 = vmatpush1.msra.mxu0 0.0
        %6174 = vmatprep.subr.mxu0 0.0
        %6175 = vmatpush1.msra.mxu0 0.0
        %6176 = vmatprep.subr.mxu0 0.0
        %6177 = vmatpush1.msra.mxu0 0.0
        %6178 = vmatprep.subr.mxu0 0.0
        %6179 = vmatpush1.msra.mxu0 0.0
        %6180 = vmatprep.subr.mxu0 0.0
        %6181 = vmatpush1.msra.mxu0 0.0
        %6182 = vmatprep.subr.mxu0 0.0
        %6183 = vmatpush1.msra.mxu0 0.0
        %6184 = vmatprep.subr.mxu0 0.0
        %6185 = vmatpush1.msra.mxu0 0.0
        %6186 = vmatprep.subr.mxu0 0.0
        %6187 = vmatpush1.msra.mxu0 0.0
        %6188 = vmatprep.subr.mxu0 0.0
        %6189 = vmatpush1.msra.mxu0 0.0
        %6190 = vmatprep.subr.mxu0 0.0
        %6191 = vmatpush1.msra.mxu0 0.0
        %6192 = vmatprep.subr.mxu0 0.0
        %6193 = vmatpush1.msra.mxu0 0.0
        %6194 = vmatprep.subr.mxu0 0.0
        %6195 = vmatpush1.msra.mxu0 0.0
        %6196 = vmatprep.subr.mxu0 0.0
        %6197 = vmatpush1.msra.mxu0 0.0
        %6198 = vmatprep.subr.mxu0 0.0
        %6199 = vmatpush1.msra.mxu0 0.0
        %6200 = vmatprep.subr.mxu0 0.0
        %6201 = vmatpush1.msra.mxu0 %v6168
        %6202 = vmatprep.subr.mxu0 0.0
        %6203 = vmatpush2.msra.mxu0 0.0
        %6204 = vmatprep.subr.mxu0 0.0
        %6205 = vmatpush2.msra.mxu0 0.0
        %6206 = vmatprep.subr.mxu0 0.0
        %6207 = vmatpush2.msra.mxu0 0.0
        %6208 = vmatprep.subr.mxu0 0.0
        %6209 = vmatpush2.msra.mxu0 0.0
        %6210 = vmatprep.subr.mxu0 0.0
        %6211 = vmatpush2.msra.mxu0 0.0
        %6212 = vmatprep.subr.mxu0 0.0
        %6213 = vmatpush2.msra.mxu0 0.0
        %6214 = vmatprep.subr.mxu0 0.0
        %6215 = vmatpush2.msra.mxu0 0.0
        %6216 = vmatprep.subr.mxu0 0.0
        %6217 = vmatpush2.msra.mxu0 0.0
        %6218 = vmatprep.subr.mxu0 0.0
        %6219 = vmatpush2.msra.mxu0 0.0
        %6220 = vmatprep.subr.mxu0 0.0
        %6221 = vmatpush2.msra.mxu0 0.0
        %6222 = vmatprep.subr.mxu0 0.0
        %6223 = vmatpush2.msra.mxu0 0.0
        %6224 = vmatprep.subr.mxu0 0.0
        %6225 = vmatpush2.msra.mxu0 0.0
        %6226 = vmatprep.subr.mxu0 0.0
        %6227 = vmatpush2.msra.mxu0 0.0
        %6228 = vmatprep.subr.mxu0 0.0
        %6229 = vmatpush2.msra.mxu0 0.0
        %6230 = vmatprep.subr.mxu0 0.0
        %6231 = vmatpush2.msra.mxu0 0.0
        %6232 = vmatprep.subr.mxu0 0.0
        %6233 = vmatpush2.msra.mxu0 0.0
        %6234 = vmatprep.mubr.f32.mxu0 0.0
        %6235 = vmatmul.mubr.f32.gmra.mxu0 %v6162
        %v6236 = vpop.f32.mrf.mxu0
        %v6237 = vadd.f32 0.0, %v6236
        %v6238 = vpop.f32.mrf.mxu0
        %6239 = vmatprep.mubr.f32.mxu0 0.0
        %6240 = vmatmul.mubr.f32.gmra.mxu0 %v6165
        %v6241 = vpop.f32.mrf.mxu0
        %v6242 = vadd.f32 0.0, %v6241
        %v6243 = vpop.f32.mrf.mxu0
        %6244 = vdwg.mxu0
        %v6245 = vadd.f32 %v6085, %v6237
        %v6246 = vadd.f32 %v6086, %v6242
        %v6247 = vxor.u32 %v6245, 2147483648
        %v6248 = vxor.u32 %v6246, 2147483648
        %v6249 = vmul.f32 %v6247, 1.442695
        %v6250 = vpow.pop %v6249
        %v6251 = vmul.f32 %v6248, 1.442695
        %v6252 = vpow.pop %v6251
        %v6253 = vadd.f32 %v6250, 1.0
        %v6254 = vadd.f32 %v6252, 1.0
        %v6255 = vrcp.pop %v6253
        %v6256 = vmul.f32 1.0, %v6255
        %v6257 = vrcp.pop %v6254
        %v6258 = vmul.f32 1.0, %v6257
        %v6259 = vtanh.pop %v6246
        %v6261 = vrot.slane %v6256, 4
        %v6263 = vmul.f32 %v5757, %v6261
        %v6265 = vrot.slane %v6259, 4
        %v6267 = vmul.f32 %v6256, %v6265
        %v6268 = vadd.f32 %v6263, %v6267
        %v6269 = vtanh.pop %v6268
        %v6270 = vmul.f32 %v6269, %v6258
        %s6271 = scalar_lea.vmem %s242, 24 [#allocation5]
        %6272 = vst.msk [vmem:[%s6271] sm:$0xf] %vm3205, %v6270
        %v6273 = vld [vmem:[%s2689] sm:$0xff]
        %v6274 = vld [vmem:[%s2689 + $0x8] sm:$0xff]
        %v6275 = vld [vmem:[%s1] sm:$0xff]
        %v6276 = vld [vmem:[%s1 + $0x8] sm:$0xff]
        %v6278 = vsel %vm279, %v6270, 0
        %6280 = vmatprep.subr.mxu0 0.0
        %6281 = vmatpush1.msra.mxu0 0.0
        %6282 = vmatprep.subr.mxu0 0.0
        %6283 = vmatpush1.msra.mxu0 0.0
        %6284 = vmatprep.subr.mxu0 0.0
        %6285 = vmatpush1.msra.mxu0 0.0
        %6286 = vmatprep.subr.mxu0 0.0
        %6287 = vmatpush1.msra.mxu0 0.0
        %6288 = vmatprep.subr.mxu0 0.0
        %6289 = vmatpush1.msra.mxu0 0.0
        %6290 = vmatprep.subr.mxu0 0.0
        %6291 = vmatpush1.msra.mxu0 0.0
        %6292 = vmatprep.subr.mxu0 0.0
        %6293 = vmatpush1.msra.mxu0 0.0
        %6294 = vmatprep.subr.mxu0 0.0
        %6295 = vmatpush1.msra.mxu0 0.0
        %6296 = vmatprep.subr.mxu0 0.0
        %6297 = vmatpush1.msra.mxu0 0.0
        %6298 = vmatprep.subr.mxu0 0.0
        %6299 = vmatpush1.msra.mxu0 0.0
        %6300 = vmatprep.subr.mxu0 0.0
        %6301 = vmatpush1.msra.mxu0 0.0
        %6302 = vmatprep.subr.mxu0 0.0
        %6303 = vmatpush1.msra.mxu0 0.0
        %6304 = vmatprep.subr.mxu0 0.0
        %6305 = vmatpush1.msra.mxu0 0.0
        %6306 = vmatprep.subr.mxu0 0.0
        %6307 = vmatpush1.msra.mxu0 0.0
        %6308 = vmatprep.subr.mxu0 0.0
        %6309 = vmatpush1.msra.mxu0 %v6276
        %6310 = vmatprep.subr.mxu0 0.0
        %6311 = vmatpush1.msra.mxu0 %v6275
        %6312 = vmatprep.subr.mxu0 0.0
        %6313 = vmatpush2.msra.mxu0 0.0
        %6314 = vmatprep.subr.mxu0 0.0
        %6315 = vmatpush2.msra.mxu0 0.0
        %6316 = vmatprep.subr.mxu0 0.0
        %6317 = vmatpush2.msra.mxu0 0.0
        %6318 = vmatprep.subr.mxu0 0.0
        %6319 = vmatpush2.msra.mxu0 0.0
        %6320 = vmatprep.subr.mxu0 0.0
        %6321 = vmatpush2.msra.mxu0 0.0
        %6322 = vmatprep.subr.mxu0 0.0
        %6323 = vmatpush2.msra.mxu0 0.0
        %6324 = vmatprep.subr.mxu0 0.0
        %6325 = vmatpush2.msra.mxu0 0.0
        %6326 = vmatprep.subr.mxu0 0.0
        %6327 = vmatpush2.msra.mxu0 0.0
        %6328 = vmatprep.subr.mxu0 0.0
        %6329 = vmatpush2.msra.mxu0 0.0
        %6330 = vmatprep.subr.mxu0 0.0
        %6331 = vmatpush2.msra.mxu0 0.0
        %6332 = vmatprep.subr.mxu0 0.0
        %6333 = vmatpush2.msra.mxu0 0.0
        %6334 = vmatprep.subr.mxu0 0.0
        %6335 = vmatpush2.msra.mxu0 0.0
        %6336 = vmatprep.subr.mxu0 0.0
        %6337 = vmatpush2.msra.mxu0 0.0
        %6338 = vmatprep.subr.mxu0 0.0
        %6339 = vmatpush2.msra.mxu0 0.0
        %6340 = vmatprep.subr.mxu0 0.0
        %6341 = vmatpush2.msra.mxu0 0.0
        %6342 = vmatprep.subr.mxu0 0.0
        %6343 = vmatpush2.msra.mxu0 0.0
        %6344 = vmatprep.mubr.f32.mxu0 0.0
        %6345 = vmatmul.mubr.f32.gmra.mxu0 %v6278
        %v6346 = vpop.f32.mrf.mxu0
        %v6347 = vadd.f32 0.0, %v6346
        %v6348 = vpop.f32.mrf.mxu0
        %6349 = vdwg.mxu0
        %v6350 = vld [vmem:[%s3] sm:$0xff]
        %v6351 = vld [vmem:[%s3 + $0x8] sm:$0xff]
        %v6353 = vsel %vm555, %v6350, 0
        %v6356 = vsel %vm555, %v6351, 0
        %v6359 = vsel %vm562, %v6347, 0
        %6361 = vmatprep.subr.mxu0 0.0
        %6362 = vmatpush1.msra.mxu0 0.0
        %6363 = vmatprep.subr.mxu0 0.0
        %6364 = vmatpush1.msra.mxu0 0.0
        %6365 = vmatprep.subr.mxu0 0.0
        %6366 = vmatpush1.msra.mxu0 0.0
        %6367 = vmatprep.subr.mxu0 0.0
        %6368 = vmatpush1.msra.mxu0 0.0
        %6369 = vmatprep.subr.mxu0 0.0
        %6370 = vmatpush1.msra.mxu0 0.0
        %6371 = vmatprep.subr.mxu0 0.0
        %6372 = vmatpush1.msra.mxu0 0.0
        %6373 = vmatprep.subr.mxu0 0.0
        %6374 = vmatpush1.msra.mxu0 0.0
        %6375 = vmatprep.subr.mxu0 0.0
        %6376 = vmatpush1.msra.mxu0 0.0
        %6377 = vmatprep.subr.mxu0 0.0
        %6378 = vmatpush1.msra.mxu0 0.0
        %6379 = vmatprep.subr.mxu0 0.0
        %6380 = vmatpush1.msra.mxu0 0.0
        %6381 = vmatprep.subr.mxu0 0.0
        %6382 = vmatpush1.msra.mxu0 0.0
        %6383 = vmatprep.subr.mxu0 0.0
        %6384 = vmatpush1.msra.mxu0 0.0
        %6385 = vmatprep.subr.mxu0 0.0
        %6386 = vmatpush1.msra.mxu0 0.0
        %6387 = vmatprep.subr.mxu0 0.0
        %6388 = vmatpush1.msra.mxu0 0.0
        %6389 = vmatprep.subr.mxu0 0.0
        %6390 = vmatpush1.msra.mxu0 0.0
        %6391 = vmatprep.subr.mxu0 0.0
        %6392 = vmatpush1.msra.mxu0 %v6359
        %6393 = vmatprep.subr.mxu0 0.0
        %6394 = vmatpush2.msra.mxu0 0.0
        %6395 = vmatprep.subr.mxu0 0.0
        %6396 = vmatpush2.msra.mxu0 0.0
        %6397 = vmatprep.subr.mxu0 0.0
        %6398 = vmatpush2.msra.mxu0 0.0
        %6399 = vmatprep.subr.mxu0 0.0
        %6400 = vmatpush2.msra.mxu0 0.0
        %6401 = vmatprep.subr.mxu0 0.0
        %6402 = vmatpush2.msra.mxu0 0.0
        %6403 = vmatprep.subr.mxu0 0.0
        %6404 = vmatpush2.msra.mxu0 0.0
        %6405 = vmatprep.subr.mxu0 0.0
        %6406 = vmatpush2.msra.mxu0 0.0
        %6407 = vmatprep.subr.mxu0 0.0
        %6408 = vmatpush2.msra.mxu0 0.0
        %6409 = vmatprep.subr.mxu0 0.0
        %6410 = vmatpush2.msra.mxu0 0.0
        %6411 = vmatprep.subr.mxu0 0.0
        %6412 = vmatpush2.msra.mxu0 0.0
        %6413 = vmatprep.subr.mxu0 0.0
        %6414 = vmatpush2.msra.mxu0 0.0
        %6415 = vmatprep.subr.mxu0 0.0
        %6416 = vmatpush2.msra.mxu0 0.0
        %6417 = vmatprep.subr.mxu0 0.0
        %6418 = vmatpush2.msra.mxu0 0.0
        %6419 = vmatprep.subr.mxu0 0.0
        %6420 = vmatpush2.msra.mxu0 0.0
        %6421 = vmatprep.subr.mxu0 0.0
        %6422 = vmatpush2.msra.mxu0 0.0
        %6423 = vmatprep.subr.mxu0 0.0
        %6424 = vmatpush2.msra.mxu0 0.0
        %6425 = vmatprep.mubr.f32.mxu0 0.0
        %6426 = vmatmul.mubr.f32.gmra.mxu0 %v6353
        %v6427 = vpop.f32.mrf.mxu0
        %v6428 = vadd.f32 0.0, %v6427
        %v6429 = vpop.f32.mrf.mxu0
        %6430 = vmatprep.mubr.f32.mxu0 0.0
        %6431 = vmatmul.mubr.f32.gmra.mxu0 %v6356
        %v6432 = vpop.f32.mrf.mxu0
        %v6433 = vadd.f32 0.0, %v6432
        %v6434 = vpop.f32.mrf.mxu0
        %6435 = vdwg.mxu0
        %v6436 = vadd.f32 %v6273, %v6428
        %v6437 = vadd.f32 %v6274, %v6433
        %v6438 = vld [vmem:[%s377] sm:$0xff]
        %v6439 = vld [vmem:[%s377 + $0x8] sm:$0xff]
        %6440 = vmatprep.subr.mxu0 0.0
        %6441 = vmatpush1.msra.mxu0 0.0
        %6442 = vmatprep.subr.mxu0 0.0
        %6443 = vmatpush1.msra.mxu0 0.0
        %6444 = vmatprep.subr.mxu0 0.0
        %6445 = vmatpush1.msra.mxu0 0.0
        %6446 = vmatprep.subr.mxu0 0.0
        %6447 = vmatpush1.msra.mxu0 0.0
        %6448 = vmatprep.subr.mxu0 0.0
        %6449 = vmatpush1.msra.mxu0 0.0
        %6450 = vmatprep.subr.mxu0 0.0
        %6451 = vmatpush1.msra.mxu0 0.0
        %6452 = vmatprep.subr.mxu0 0.0
        %6453 = vmatpush1.msra.mxu0 0.0
        %6454 = vmatprep.subr.mxu0 0.0
        %6455 = vmatpush1.msra.mxu0 0.0
        %6456 = vmatprep.subr.mxu0 0.0
        %6457 = vmatpush1.msra.mxu0 0.0
        %6458 = vmatprep.subr.mxu0 0.0
        %6459 = vmatpush1.msra.mxu0 0.0
        %6460 = vmatprep.subr.mxu0 0.0
        %6461 = vmatpush1.msra.mxu0 0.0
        %6462 = vmatprep.subr.mxu0 0.0
        %6463 = vmatpush1.msra.mxu0 0.0
        %6464 = vmatprep.subr.mxu0 0.0
        %6465 = vmatpush1.msra.mxu0 0.0
        %6466 = vmatprep.subr.mxu0 0.0
        %6467 = vmatpush1.msra.mxu0 0.0
        %6468 = vmatprep.subr.mxu0 0.0
        %6469 = vmatpush1.msra.mxu0 %v6439
        %6470 = vmatprep.subr.mxu0 0.0
        %6471 = vmatpush1.msra.mxu0 %v6438
        %6472 = vmatprep.subr.mxu0 0.0
        %6473 = vmatpush2.msra.mxu0 0.0
        %6474 = vmatprep.subr.mxu0 0.0
        %6475 = vmatpush2.msra.mxu0 0.0
        %6476 = vmatprep.subr.mxu0 0.0
        %6477 = vmatpush2.msra.mxu0 0.0
        %6478 = vmatprep.subr.mxu0 0.0
        %6479 = vmatpush2.msra.mxu0 0.0
        %6480 = vmatprep.subr.mxu0 0.0
        %6481 = vmatpush2.msra.mxu0 0.0
        %6482 = vmatprep.subr.mxu0 0.0
        %6483 = vmatpush2.msra.mxu0 0.0
        %6484 = vmatprep.subr.mxu0 0.0
        %6485 = vmatpush2.msra.mxu0 0.0
        %6486 = vmatprep.subr.mxu0 0.0
        %6487 = vmatpush2.msra.mxu0 0.0
        %6488 = vmatprep.subr.mxu0 0.0
        %6489 = vmatpush2.msra.mxu0 0.0
        %6490 = vmatprep.subr.mxu0 0.0
        %6491 = vmatpush2.msra.mxu0 0.0
        %6492 = vmatprep.subr.mxu0 0.0
        %6493 = vmatpush2.msra.mxu0 0.0
        %6494 = vmatprep.subr.mxu0 0.0
        %6495 = vmatpush2.msra.mxu0 0.0
        %6496 = vmatprep.subr.mxu0 0.0
        %6497 = vmatpush2.msra.mxu0 0.0
        %6498 = vmatprep.subr.mxu0 0.0
        %6499 = vmatpush2.msra.mxu0 0.0
        %6500 = vmatprep.subr.mxu0 0.0
        %6501 = vmatpush2.msra.mxu0 0.0
        %6502 = vmatprep.subr.mxu0 0.0
        %6503 = vmatpush2.msra.mxu0 0.0
        %6504 = vmatprep.mubr.f32.mxu0 0.0
        %6505 = vmatmul.mubr.f32.gmra.mxu0 %v6278
        %v6506 = vpop.f32.mrf.mxu0
        %v6507 = vadd.f32 0.0, %v6506
        %v6508 = vpop.f32.mrf.mxu0
        %6509 = vdwg.mxu0
        %v6510 = vld [vmem:[%s2931] sm:$0xff]
        %v6511 = vld [vmem:[%s2931 + $0x8] sm:$0xff]
        %v6513 = vsel %vm555, %v6510, 0
        %v6516 = vsel %vm555, %v6511, 0
        %v6519 = vsel %vm562, %v6507, 0
        %6521 = vmatprep.subr.mxu0 0.0
        %6522 = vmatpush1.msra.mxu0 0.0
        %6523 = vmatprep.subr.mxu0 0.0
        %6524 = vmatpush1.msra.mxu0 0.0
        %6525 = vmatprep.subr.mxu0 0.0
        %6526 = vmatpush1.msra.mxu0 0.0
        %6527 = vmatprep.subr.mxu0 0.0
        %6528 = vmatpush1.msra.mxu0 0.0
        %6529 = vmatprep.subr.mxu0 0.0
        %6530 = vmatpush1.msra.mxu0 0.0
        %6531 = vmatprep.subr.mxu0 0.0
        %6532 = vmatpush1.msra.mxu0 0.0
        %6533 = vmatprep.subr.mxu0 0.0
        %6534 = vmatpush1.msra.mxu0 0.0
        %6535 = vmatprep.subr.mxu0 0.0
        %6536 = vmatpush1.msra.mxu0 0.0
        %6537 = vmatprep.subr.mxu0 0.0
        %6538 = vmatpush1.msra.mxu0 0.0
        %6539 = vmatprep.subr.mxu0 0.0
        %6540 = vmatpush1.msra.mxu0 0.0
        %6541 = vmatprep.subr.mxu0 0.0
        %6542 = vmatpush1.msra.mxu0 0.0
        %6543 = vmatprep.subr.mxu0 0.0
        %6544 = vmatpush1.msra.mxu0 0.0
        %6545 = vmatprep.subr.mxu0 0.0
        %6546 = vmatpush1.msra.mxu0 0.0
        %6547 = vmatprep.subr.mxu0 0.0
        %6548 = vmatpush1.msra.mxu0 0.0
        %6549 = vmatprep.subr.mxu0 0.0
        %6550 = vmatpush1.msra.mxu0 0.0
        %6551 = vmatprep.subr.mxu0 0.0
        %6552 = vmatpush1.msra.mxu0 %v6519
        %6553 = vmatprep.subr.mxu0 0.0
        %6554 = vmatpush2.msra.mxu0 0.0
        %6555 = vmatprep.subr.mxu0 0.0
        %6556 = vmatpush2.msra.mxu0 0.0
        %6557 = vmatprep.subr.mxu0 0.0
        %6558 = vmatpush2.msra.mxu0 0.0
        %6559 = vmatprep.subr.mxu0 0.0
        %6560 = vmatpush2.msra.mxu0 0.0
        %6561 = vmatprep.subr.mxu0 0.0
        %6562 = vmatpush2.msra.mxu0 0.0
        %6563 = vmatprep.subr.mxu0 0.0
        %6564 = vmatpush2.msra.mxu0 0.0
        %6565 = vmatprep.subr.mxu0 0.0
        %6566 = vmatpush2.msra.mxu0 0.0
        %6567 = vmatprep.subr.mxu0 0.0
        %6568 = vmatpush2.msra.mxu0 0.0
        %6569 = vmatprep.subr.mxu0 0.0
        %6570 = vmatpush2.msra.mxu0 0.0
        %6571 = vmatprep.subr.mxu0 0.0
        %6572 = vmatpush2.msra.mxu0 0.0
        %6573 = vmatprep.subr.mxu0 0.0
        %6574 = vmatpush2.msra.mxu0 0.0
        %6575 = vmatprep.subr.mxu0 0.0
        %6576 = vmatpush2.msra.mxu0 0.0
        %6577 = vmatprep.subr.mxu0 0.0
        %6578 = vmatpush2.msra.mxu0 0.0
        %6579 = vmatprep.subr.mxu0 0.0
        %6580 = vmatpush2.msra.mxu0 0.0
        %6581 = vmatprep.subr.mxu0 0.0
        %6582 = vmatpush2.msra.mxu0 0.0
        %6583 = vmatprep.subr.mxu0 0.0
        %6584 = vmatpush2.msra.mxu0 0.0
        %6585 = vmatprep.mubr.f32.mxu0 0.0
        %6586 = vmatmul.mubr.f32.gmra.mxu0 %v6513
        %v6587 = vpop.f32.mrf.mxu0
        %v6588 = vadd.f32 0.0, %v6587
        %v6589 = vpop.f32.mrf.mxu0
        %6590 = vmatprep.mubr.f32.mxu0 0.0
        %6591 = vmatmul.mubr.f32.gmra.mxu0 %v6516
        %v6592 = vpop.f32.mrf.mxu0
        %v6593 = vadd.f32 0.0, %v6592
        %v6594 = vpop.f32.mrf.mxu0
        %6595 = vdwg.mxu0
        %v6596 = vadd.f32 %v6436, %v6588
        %v6597 = vadd.f32 %v6437, %v6593
        %v6598 = vld [vmem:[%s465] sm:$0xff]
        %v6599 = vld [vmem:[%s465 + $0x8] sm:$0xff]
        %6600 = vmatprep.subr.mxu0 0.0
        %6601 = vmatpush1.msra.mxu0 0.0
        %6602 = vmatprep.subr.mxu0 0.0
        %6603 = vmatpush1.msra.mxu0 0.0
        %6604 = vmatprep.subr.mxu0 0.0
        %6605 = vmatpush1.msra.mxu0 0.0
        %6606 = vmatprep.subr.mxu0 0.0
        %6607 = vmatpush1.msra.mxu0 0.0
        %6608 = vmatprep.subr.mxu0 0.0
        %6609 = vmatpush1.msra.mxu0 0.0
        %6610 = vmatprep.subr.mxu0 0.0
        %6611 = vmatpush1.msra.mxu0 0.0
        %6612 = vmatprep.subr.mxu0 0.0
        %6613 = vmatpush1.msra.mxu0 0.0
        %6614 = vmatprep.subr.mxu0 0.0
        %6615 = vmatpush1.msra.mxu0 0.0
        %6616 = vmatprep.subr.mxu0 0.0
        %6617 = vmatpush1.msra.mxu0 0.0
        %6618 = vmatprep.subr.mxu0 0.0
        %6619 = vmatpush1.msra.mxu0 0.0
        %6620 = vmatprep.subr.mxu0 0.0
        %6621 = vmatpush1.msra.mxu0 0.0
        %6622 = vmatprep.subr.mxu0 0.0
        %6623 = vmatpush1.msra.mxu0 0.0
        %6624 = vmatprep.subr.mxu0 0.0
        %6625 = vmatpush1.msra.mxu0 0.0
        %6626 = vmatprep.subr.mxu0 0.0
        %6627 = vmatpush1.msra.mxu0 0.0
        %6628 = vmatprep.subr.mxu0 0.0
        %6629 = vmatpush1.msra.mxu0 %v6599
        %6630 = vmatprep.subr.mxu0 0.0
        %6631 = vmatpush1.msra.mxu0 %v6598
        %6632 = vmatprep.subr.mxu0 0.0
        %6633 = vmatpush2.msra.mxu0 0.0
        %6634 = vmatprep.subr.mxu0 0.0
        %6635 = vmatpush2.msra.mxu0 0.0
        %6636 = vmatprep.subr.mxu0 0.0
        %6637 = vmatpush2.msra.mxu0 0.0
        %6638 = vmatprep.subr.mxu0 0.0
        %6639 = vmatpush2.msra.mxu0 0.0
        %6640 = vmatprep.subr.mxu0 0.0
        %6641 = vmatpush2.msra.mxu0 0.0
        %6642 = vmatprep.subr.mxu0 0.0
        %6643 = vmatpush2.msra.mxu0 0.0
        %6644 = vmatprep.subr.mxu0 0.0
        %6645 = vmatpush2.msra.mxu0 0.0
        %6646 = vmatprep.subr.mxu0 0.0
        %6647 = vmatpush2.msra.mxu0 0.0
        %6648 = vmatprep.subr.mxu0 0.0
        %6649 = vmatpush2.msra.mxu0 0.0
        %6650 = vmatprep.subr.mxu0 0.0
        %6651 = vmatpush2.msra.mxu0 0.0
        %6652 = vmatprep.subr.mxu0 0.0
        %6653 = vmatpush2.msra.mxu0 0.0
        %6654 = vmatprep.subr.mxu0 0.0
        %6655 = vmatpush2.msra.mxu0 0.0
        %6656 = vmatprep.subr.mxu0 0.0
        %6657 = vmatpush2.msra.mxu0 0.0
        %6658 = vmatprep.subr.mxu0 0.0
        %6659 = vmatpush2.msra.mxu0 0.0
        %6660 = vmatprep.subr.mxu0 0.0
        %6661 = vmatpush2.msra.mxu0 0.0
        %6662 = vmatprep.subr.mxu0 0.0
        %6663 = vmatpush2.msra.mxu0 0.0
        %6664 = vmatprep.mubr.f32.mxu0 0.0
        %6665 = vmatmul.mubr.f32.gmra.mxu0 %v6278
        %v6666 = vpop.f32.mrf.mxu0
        %v6667 = vadd.f32 0.0, %v6666
        %v6668 = vpop.f32.mrf.mxu0
        %6669 = vdwg.mxu0
        %v6670 = vld [vmem:[%s3092] sm:$0xff]
        %v6671 = vld [vmem:[%s3092 + $0x8] sm:$0xff]
        %v6673 = vsel %vm555, %v6670, 0
        %v6676 = vsel %vm555, %v6671, 0
        %v6679 = vsel %vm562, %v6667, 0
        %6681 = vmatprep.subr.mxu0 0.0
        %6682 = vmatpush1.msra.mxu0 0.0
        %6683 = vmatprep.subr.mxu0 0.0
        %6684 = vmatpush1.msra.mxu0 0.0
        %6685 = vmatprep.subr.mxu0 0.0
        %6686 = vmatpush1.msra.mxu0 0.0
        %6687 = vmatprep.subr.mxu0 0.0
        %6688 = vmatpush1.msra.mxu0 0.0
        %6689 = vmatprep.subr.mxu0 0.0
        %6690 = vmatpush1.msra.mxu0 0.0
        %6691 = vmatprep.subr.mxu0 0.0
        %6692 = vmatpush1.msra.mxu0 0.0
        %6693 = vmatprep.subr.mxu0 0.0
        %6694 = vmatpush1.msra.mxu0 0.0
        %6695 = vmatprep.subr.mxu0 0.0
        %6696 = vmatpush1.msra.mxu0 0.0
        %6697 = vmatprep.subr.mxu0 0.0
        %6698 = vmatpush1.msra.mxu0 0.0
        %6699 = vmatprep.subr.mxu0 0.0
        %6700 = vmatpush1.msra.mxu0 0.0
        %6701 = vmatprep.subr.mxu0 0.0
        %6702 = vmatpush1.msra.mxu0 0.0
        %6703 = vmatprep.subr.mxu0 0.0
        %6704 = vmatpush1.msra.mxu0 0.0
        %6705 = vmatprep.subr.mxu0 0.0
        %6706 = vmatpush1.msra.mxu0 0.0
        %6707 = vmatprep.subr.mxu0 0.0
        %6708 = vmatpush1.msra.mxu0 0.0
        %6709 = vmatprep.subr.mxu0 0.0
        %6710 = vmatpush1.msra.mxu0 0.0
        %6711 = vmatprep.subr.mxu0 0.0
        %6712 = vmatpush1.msra.mxu0 %v6679
        %6713 = vmatprep.subr.mxu0 0.0
        %6714 = vmatpush2.msra.mxu0 0.0
        %6715 = vmatprep.subr.mxu0 0.0
        %6716 = vmatpush2.msra.mxu0 0.0
        %6717 = vmatprep.subr.mxu0 0.0
        %6718 = vmatpush2.msra.mxu0 0.0
        %6719 = vmatprep.subr.mxu0 0.0
        %6720 = vmatpush2.msra.mxu0 0.0
        %6721 = vmatprep.subr.mxu0 0.0
        %6722 = vmatpush2.msra.mxu0 0.0
        %6723 = vmatprep.subr.mxu0 0.0
        %6724 = vmatpush2.msra.mxu0 0.0
        %6725 = vmatprep.subr.mxu0 0.0
        %6726 = vmatpush2.msra.mxu0 0.0
        %6727 = vmatprep.subr.mxu0 0.0
        %6728 = vmatpush2.msra.mxu0 0.0
        %6729 = vmatprep.subr.mxu0 0.0
        %6730 = vmatpush2.msra.mxu0 0.0
        %6731 = vmatprep.subr.mxu0 0.0
        %6732 = vmatpush2.msra.mxu0 0.0
        %6733 = vmatprep.subr.mxu0 0.0
        %6734 = vmatpush2.msra.mxu0 0.0
        %6735 = vmatprep.subr.mxu0 0.0
        %6736 = vmatpush2.msra.mxu0 0.0
        %6737 = vmatprep.subr.mxu0 0.0
        %6738 = vmatpush2.msra.mxu0 0.0
        %6739 = vmatprep.subr.mxu0 0.0
        %6740 = vmatpush2.msra.mxu0 0.0
        %6741 = vmatprep.subr.mxu0 0.0
        %6742 = vmatpush2.msra.mxu0 0.0
        %6743 = vmatprep.subr.mxu0 0.0
        %6744 = vmatpush2.msra.mxu0 0.0
        %6745 = vmatprep.mubr.f32.mxu0 0.0
        %6746 = vmatmul.mubr.f32.gmra.mxu0 %v6673
        %v6747 = vpop.f32.mrf.mxu0
        %v6748 = vadd.f32 0.0, %v6747
        %v6749 = vpop.f32.mrf.mxu0
        %6750 = vmatprep.mubr.f32.mxu0 0.0
        %6751 = vmatmul.mubr.f32.gmra.mxu0 %v6676
        %v6752 = vpop.f32.mrf.mxu0
        %v6753 = vadd.f32 0.0, %v6752
        %v6754 = vpop.f32.mrf.mxu0
        %6755 = vdwg.mxu0
        %v6756 = vadd.f32 %v6596, %v6748
        %v6757 = vadd.f32 %v6597, %v6753
        %v6758 = vxor.u32 %v6756, 2147483648
        %v6759 = vxor.u32 %v6757, 2147483648
        %v6760 = vmul.f32 %v6758, 1.442695
        %v6761 = vpow.pop %v6760
        %v6762 = vmul.f32 %v6759, 1.442695
        %v6763 = vpow.pop %v6762
        %v6764 = vadd.f32 %v6761, 1.0
        %v6765 = vadd.f32 %v6763, 1.0
        %v6766 = vrcp.pop %v6764
        %v6767 = vmul.f32 1.0, %v6766
        %v6768 = vrcp.pop %v6765
        %v6769 = vmul.f32 1.0, %v6768
        %v6770 = vtanh.pop %v6757
        %v6772 = vrot.slane %v6767, 4
        %v6774 = vmul.f32 %v6268, %v6772
        %v6776 = vrot.slane %v6770, 4
        %v6778 = vmul.f32 %v6767, %v6776
        %v6779 = vadd.f32 %v6774, %v6778
        %v6780 = vtanh.pop %v6779
        %v6781 = vmul.f32 %v6780, %v6769
        %s6782 = scalar_lea.vmem %s242, 28 [#allocation5]
        %6783 = vst.msk [vmem:[%s6782] sm:$0xf] %vm3205, %v6781
        %6784 = vst.msk [vmem:[#allocation3] sm:$0xf] %vm3205, %v6781
        %6785 = vst.msk [vmem:[#allocation4] sm:$0xf] %vm3205, %v6779
        %s6786 = sand.u32 %s153, 1
        %s6787 = scalar_lea.sflag [#allocation6], %s6786
        %s6788 = sand.u32 %s153, 1
        %s6789 = smul.addr %s6788, 32
        %s6790 = scalar_lea.vmem [#allocation5], %s6789
        // Predicated region
        $region45: #{tpu_custom_call.1} parent=39 // pred_check
          %p6791 = pneg %p163
        $region46: #{tpu_custom_call.1} parent=39 // pred_check_branch
          %6793 = sbr.rel (%p6791) target = $region48
        $region47: #{tpu_custom_call.1} parent=39 // pred_region
          %s6794 = smul.u32 8, %s24
          %s6796 = ssub.s32 512, 512
          %6797 = vsyncadd %s6787, %s6796
          %s6798 = smul.addr %s23, 8
          %s6799 = sadd.s32 %s6794, %s6798
          %s6800 = smul.addr %s6799, 64
          %s6801 = scalar_lea.hbm %s5, %s6800
          %s6802 = sshll.u32 %s6790, 4
          %s6803 = int_to_ptr.vmem [resolvable:$true] %s6802
          %6808 = dma.vmem_to_hbm [thread:$0]  %s6803, 512, %s6801, %s6787, 64, 64, 4
        $region48: #{tpu_custom_call.1} parent=39 // pred_fallthru
          _
      $region40: #{tpu_custom_call.1} parent=5 // pred_fallthru
        _
      %p6809 = scmp.le.s32.totalorder 2, %s14
      // Predicated region
      $region49: #{tpu_custom_call.1} parent=5 // pred_check
        %p6810 = pneg %p6809
      $region50: #{tpu_custom_call.1} parent=5 // pred_check_branch
        %6812 = sbr.rel (%p6810) target = $region52
      $region51: #{tpu_custom_call.1} parent=5 // pred_region
        %s6813 = ssub.s32 %s14, 2
        // Predicated region
        $region53: #{tpu_custom_call.1} parent=51 // pred_check
          %p6814 = pneg %p169
        $region54: #{tpu_custom_call.1} parent=51 // pred_check_branch
          %6816 = sbr.rel (%p6814) target = $region56
        $region55: #{tpu_custom_call.1} parent=51 // pred_region
          %s6817 = sand.u32 %s154, 1
          %s6818 = scalar_lea.sflag [#allocation6], %s6817
          %s6819 = sand.u32 %s154, 1
          %s6820 = smul.addr %s6819, 32
          %s6821 = scalar_lea.vmem [#allocation5], %s6820
          %6822 = dma.done %s6818, 512
        $region56: #{tpu_custom_call.1} parent=51 // pred_fallthru
          _
      $region52: #{tpu_custom_call.1} parent=5 // pred_fallthru
        _
    $region6: #{tpu_custom_call.1} parent=1 // loop_footer
      %s18 = sadd.s32 1, %s14
    $region7: #{tpu_custom_call.1} parent=1 // loop_footer_branch
      %13 = sbr.rel target = $region3
    $region8: #{tpu_custom_call.1} parent=1 // loop_exit
      _
    %6823 = vsyncpa [#allocation6], 1
    %s6824 = scalar_lea.sflag [#allocation6], 1
    %6825 = vsyncpa %s6824, 1

</llo_original>
